<compile_context>
chip_gen: v7x
topology: tpu7x:2x2x1
jax: 0.10.0
libtpu: 0.0.40
codegen_flags: <defaults>
</compile_context>

<pallas_src>
import functools

import numpy as np
import jax
import jax.numpy as jnp
from jax import lax
from jax.experimental import pallas as pl
from jax.experimental.pallas import tpu as pltpu


# ----------------------------------------------------------------------------
# Bilinear (align_corners=True) interpolation helpers -- tiny host-side data
# ----------------------------------------------------------------------------
def bilinear_taps_1d(n_in, n_out):
    """Per output position: 2 source indices + 2 weights (weights sum to 1)."""
    idx = np.zeros((n_out, 2), np.int32)
    wgt = np.zeros((n_out, 2), np.float32)
    if n_out == 1:
        idx[0] = (0, 0)
        wgt[0] = (1.0, 0.0)
        return idx, wgt
    scale = (n_in - 1) / (n_out - 1)
    for o in range(n_out):
        src = o * scale
        i0 = min(int(np.floor(src)), n_in - 1)
        i1 = min(i0 + 1, n_in - 1)
        w1 = src - i0
        idx[o] = (i0, i1)
        wgt[o] = (1.0 - w1, w1)
    return idx, wgt


def bilinear_matrix_1d(n_in, n_out):
    idx, wgt = bilinear_taps_1d(n_in, n_out)
    U = np.zeros((n_out, n_in), np.float32)
    for o in range(n_out):
        U[o, idx[o, 0]] += wgt[o, 0]
        U[o, idx[o, 1]] += wgt[o, 1]
    return U


# ----------------------------------------------------------------------------
# Row-tile picker: largest divisor of `nrows` that is a multiple of `multiple`,
# fits the byte target, and leaves >= min_tiles grid steps for pipelining.
# ----------------------------------------------------------------------------
def _pick_row_tile(nrows, bytes_per_row, multiple, target_bytes=2 * 1024 * 1024,
                   min_tiles=4):
    max_rows = max(multiple, nrows // min_tiles)
    best = None
    smallest = None
    for d in range(multiple, nrows + 1, multiple):
        if nrows % d:
            continue
        if smallest is None:
            smallest = d
        if d <= max_rows and d * bytes_per_row <= target_bytes:
            best = d
    if best is not None:
        return best
    return smallest if smallest is not None else nrows


# ----------------------------------------------------------------------------
# Kernel 1: 2x2 max pool, NHWC tiles, no windowed copy.
#   Input is the free host view (B, H, W//2, 2C): the W-pair max is a lane-half
#   maximum; the H-pair max is a leading-dim reshape + maximum.
# ----------------------------------------------------------------------------
def _pool2x2_kernel(x_ref, o_ref):
    c = o_ref.shape[-1]
    v = x_ref[...]                                   # (th, w2, 2c)
    vw = jnp.maximum(v[:, :, :c], v[:, :, c:])       # max over W pairs
    vr = vw.reshape(o_ref.shape[0], 2, vw.shape[1], c)
    o_ref[...] = jnp.maximum(vr[:, 0], vr[:, 1])     # max over H pairs


def maxpool2x2(x_nhwc, *, target_block_bytes=2 * 1024 * 1024):
    B, H, W, C = x_nhwc.shape
    xv = x_nhwc.reshape(B, H, W // 2, 2 * C)         # free row-major view
    itemsize = jnp.dtype(x_nhwc.dtype).itemsize
    th = _pick_row_tile(H, (W // 2) * 2 * C * itemsize, multiple=2,
                        target_bytes=target_block_bytes)
    return pl.pallas_call(
        _pool2x2_kernel,
        out_shape=jax.ShapeDtypeStruct((B, H // 2, W // 2, C), x_nhwc.dtype),
        grid_spec=pltpu.PrefetchScalarGridSpec(
            num_scalar_prefetch=0,
            grid=(B, H // th),
            in_specs=[pl.BlockSpec((None, th, W // 2, 2 * C),
                                   lambda b, i: (b, i, 0, 0))],
            out_specs=pl.BlockSpec((None, th // 2, W // 2, C),
                                   lambda b, i: (b, i, 0, 0)),
        ),
        compiler_params=pltpu.CompilerParams(
            dimension_semantics=("parallel", "parallel")),
    )(xv)


# ----------------------------------------------------------------------------
# Kernel 2: W-direction 2x max only (pool5 tail; H-direction is fused upstream)
# ----------------------------------------------------------------------------
def _pool_w2_kernel(x_ref, o_ref):
    c = o_ref.shape[-1]
    v = x_ref[...]
    o_ref[...] = jnp.maximum(v[:, :, :c], v[:, :, c:])


def maxpool_w2(x_nhwc, *, target_block_bytes=2 * 1024 * 1024):
    B, R, W, C = x_nhwc.shape
    xv = x_nhwc.reshape(B, R, W // 2, 2 * C)
    itemsize = jnp.dtype(x_nhwc.dtype).itemsize
    tr = _pick_row_tile(R, (W // 2) * 2 * C * itemsize, multiple=1,
                        target_bytes=target_block_bytes)
    return pl.pallas_call(
        _pool_w2_kernel,
        out_shape=jax.ShapeDtypeStruct((B, R, W // 2, C), x_nhwc.dtype),
        grid_spec=pltpu.PrefetchScalarGridSpec(
            num_scalar_prefetch=0,
            grid=(B, R // tr),
            in_specs=[pl.BlockSpec((None, tr, W // 2, 2 * C),
                                   lambda b, i: (b, i, 0, 0))],
            out_specs=pl.BlockSpec((None, tr, W // 2, C),
                                   lambda b, i: (b, i, 0, 0)),
        ),
        compiler_params=pltpu.CompilerParams(
            dimension_semantics=("parallel", "parallel")),
    )(xv)


# ----------------------------------------------------------------------------
# Kernel 3: per-branch folded weight + W-direction upsample on pooled maps.
#   s_k[b, h, :, :] = Uw_k @ (p_k[b, h] @ Wfold_k)        shape (W, C)
#   Pooled maps are small; a static per-row loop keeps everything as clean 2D
#   MXU matmuls with no in-kernel reshapes.
# ----------------------------------------------------------------------------
def _branch_fold_upw_kernel(p_ref, w_ref, uw_ref, o_ref):
    wmat = w_ref[...]                                 # (C, C)
    uw = uw_ref[...]                                  # (W, wk)
    hk = p_ref.shape[0]
    # NOTE: for very large H one would switch this to lax.fori_loop with
    # dynamic first-axis ref indexing; hk <= H/2 is small here.
    for h in range(hk):
        t = jnp.dot(p_ref[h], wmat, preferred_element_type=jnp.float32)
        o_ref[h] = jnp.dot(uw, t,
                           preferred_element_type=jnp.float32).astype(o_ref.dtype)


def branch_fold_upsample_w(p, w_fold, uw, out_dtype):
    B, hk, wk, C = p.shape
    W = uw.shape[0]
    return pl.pallas_call(
        _branch_fold_upw_kernel,
        out_shape=jax.ShapeDtypeStruct((B, hk, W, C), out_dtype),
        grid_spec=pltpu.PrefetchScalarGridSpec(
            num_scalar_prefetch=0,
            grid=(B,),
            in_specs=[pl.BlockSpec((None, hk, wk, C), lambda b: (b, 0, 0, 0)),
                      pl.BlockSpec((C, C), lambda b: (0, 0)),
                      pl.BlockSpec((W, wk), lambda b: (0, 0))],
            out_specs=pl.BlockSpec((None, hk, W, C), lambda b: (b, 0, 0, 0)),
        ),
        compiler_params=pltpu.CompilerParams(dimension_semantics=("parallel",)),
    )(p, w_fold, uw)


# ----------------------------------------------------------------------------
# Kernel 4: fused DR conv + H-direction upsample taps + bias + pool5 H-max.
#   Per output row h:  x6[h] = x[h] @ Wx' + b'
#                              + sum_k sum_{tap} wgt * s_k[idx]      (2 taps/k)
#   Epilogue: max over row pairs (pool5 along H) -> output (TH/2, W, C) tile.
# ----------------------------------------------------------------------------
def _fused_dr_pool_kernel(idx_ref, wgt_ref, x_ref, s2_ref, s4_ref, s8_ref,
                          wx_ref, b_ref, o_ref, *, H, TH):
    i = pl.program_id(1)
    W = x_ref.shape[1]
    C = x_ref.shape[2]
    f32 = jnp.float32
    wx = wx_ref[...]                                          # (C, C), hoisted
    bias = jnp.broadcast_to(b_ref[...], (W, C)).astype(f32)   # single broadcast
    s_refs = (s2_ref, s4_ref, s8_ref)

    def x6_row(h_local):
        row = jnp.dot(x_ref[h_local], wx, preferred_element_type=f32) + bias
        h_glob = i * TH + h_local
        for k_idx in range(3):
            s_ref = s_refs[k_idx]
            for tap in range(2):
                off = (2 * k_idx + tap) * H + h_glob
                src = idx_ref[off]          # SMEM scalar read (dynamic)
                wt = wgt_ref[off]           # SMEM scalar read (dynamic)
                row = row + wt * s_ref[src].astype(f32)
        return row

    for r in range(TH // 2):                # fused pool5: H-direction max
        o_ref[r] = jnp.maximum(x6_row(2 * r),
                               x6_row(2 * r + 1)).astype(o_ref.dtype)


def fused_dr_pool(x_nhwc, s2, s4, s8, wx, b_fused, idx_tab, wgt_tab,
                  *, target_block_bytes=2 * 1024 * 1024):
    B, H, W, C = x_nhwc.shape
    itemsize = jnp.dtype(x_nhwc.dtype).itemsize
    th = _pick_row_tile(H, W * C * itemsize, multiple=2,
                        target_bytes=target_block_bytes)
    h2, h4, h8 = H // 2, H // 4, H // 8
    kern = functools.partial(_fused_dr_pool_kernel, H=H, TH=th)
    # NOTE: s2/s4/s8 are kept fully VMEM-resident per batch (re-fetched only
    # when the batch index changes).  For very large H*W*C they could also be
    # row-tiled via a prefetch-driven index map.
    return pl.pallas_call(
        kern,
        out_shape=jax.ShapeDtypeStruct((B, H // 2, W, C), x_nhwc.dtype),
        grid_spec=pltpu.PrefetchScalarGridSpec(
            num_scalar_prefetch=0,
            grid=(B, H // th),
            in_specs=[
                pl.BlockSpec(memory_space=pltpu.MemorySpace.SMEM),   # idx_tab
                pl.BlockSpec(memory_space=pltpu.MemorySpace.SMEM),   # wgt_tab
                pl.BlockSpec((None, th, W, C), lambda b, i: (b, i, 0, 0)),
                pl.BlockSpec((None, h2, W, C), lambda b, i: (b, 0, 0, 0)),
                pl.BlockSpec((None, h4, W, C), lambda b, i: (b, 0, 0, 0)),
                pl.BlockSpec((None, h8, W, C), lambda b, i: (b, 0, 0, 0)),
                pl.BlockSpec((C, C), lambda b, i: (0, 0)),
                pl.BlockSpec((1, C), lambda b, i: (0, 0)),
            ],
            out_specs=pl.BlockSpec((None, th // 2, W, C),
                                   lambda b, i: (b, i, 0, 0)),
        ),
        compiler_params=pltpu.CompilerParams(
            dimension_semantics=("parallel", "parallel")),
    )(idx_tab, wgt_tab, x_nhwc, s2, s4, s8, wx, b_fused)


# ----------------------------------------------------------------------------
# PSPool forward (public wrapper, NCHW in / NCHW out)
# ----------------------------------------------------------------------------
def pspool_forward(x_nchw, cw, cb, dw, db, *, target_block_bytes=2 * 1024 * 1024):
    B, C, H, W = x_nchw.shape
    C4 = C // 4
    assert H % 8 == 0 and W % 8 == 0 and C % 4 == 0
    dt = x_nchw.dtype
    hi = lax.Precision.HIGHEST

    # --- host-side (tiny) weight folding: branch 1x1 conv folded into DR ---
    wx_ = dw[:C]
    w1 = dw[C:C + C4]
    w2 = dw[C + C4:C + 2 * C4]
    w4 = dw[C + 2 * C4:C + 3 * C4]
    w8 = dw[C + 3 * C4:]
    Wx = (wx_ + jnp.dot(cw, w1, precision=hi)).astype(dt)
    W2f = jnp.dot(cw, w2, precision=hi).astype(dt)
    W4f = jnp.dot(cw, w4, precision=hi).astype(dt)
    W8f = jnp.dot(cw, w8, precision=hi).astype(dt)
    b_fused = (db + jnp.dot(cb, w1 + w2 + w4 + w8,
                            precision=hi)).astype(jnp.float32)

    # --- separable bilinear operators (align_corners=True), tiny host data ---
    Uw2 = jnp.asarray(bilinear_matrix_1d(W // 2, W))
    Uw4 = jnp.asarray(bilinear_matrix_1d(W // 4, W))
    Uw8 = jnp.asarray(bilinear_matrix_1d(W // 8, W))
    idx_np, wgt_np = [], []
    for k in (2, 4, 8):
        idx_k, wgt_k = bilinear_taps_1d(H // k, H)
        idx_np += [idx_k[:, 0], idx_k[:, 1]]
        wgt_np += [wgt_k[:, 0], wgt_k[:, 1]]
    idx_tab = jnp.asarray(np.concatenate(idx_np).astype(np.int32))
    wgt_tab = jnp.asarray(np.concatenate(wgt_np).astype(np.float32))

    # --- NCHW -> NHWC (layout glue) ---
    x = jnp.transpose(x_nchw, (0, 2, 3, 1))                   # (B, H, W, C)

    # --- cascaded max pools (Pallas, direct NHWC tiles) ---
    p2 = maxpool2x2(x, target_block_bytes=target_block_bytes)   # (B, H/2, W/2, C)
    p4 = maxpool2x2(p2, target_block_bytes=target_block_bytes)  # (B, H/4, W/4, C)
    p8 = maxpool2x2(p4, target_block_bytes=target_block_bytes)  # (B, H/8, W/8, C)

    # --- per-branch folded weight + W-direction upsample (small maps) ---
    s2 = branch_fold_upsample_w(p2, W2f, Uw2, dt)               # (B, H/2, W, C)
    s4 = branch_fold_upsample_w(p4, W4f, Uw4, dt)               # (B, H/4, W, C)
    s8 = branch_fold_upsample_w(p8, W8f, Uw8, dt)               # (B, H/8, W, C)

    # --- fused DR + H-direction upsample + bias + pool5 H-max ---
    x6h = fused_dr_pool(x, s2, s4, s8, Wx, b_fused, idx_tab, wgt_tab,
                        target_block_bytes=target_block_bytes)  # (B, H/2, W, C)

    # --- pool5 W-direction max ---
    x7 = maxpool_w2(x6h, target_block_bytes=target_block_bytes)  # (B, H/2, W/2, C)
    return jnp.transpose(x7, (0, 3, 1, 2))                       # NCHW


# ----------------------------------------------------------------------------
# Deterministic parameter init (shapes implied by the module __init__)
# ----------------------------------------------------------------------------
def init_params(key, C):
    C4 = C // 4
    k1, k2, k3, k4 = jax.random.split(key, 4)
    b1 = 1.0 / np.sqrt(C)
    b2 = 1.0 / np.sqrt(2 * C)
    # stored transposed relative to torch's (out, in, 1, 1) so y = x @ w + b
    cw = jax.random.uniform(k1, (C, C4), jnp.float32, -b1, b1)       # conv
    cb = jax.random.uniform(k2, (1, C4), jnp.float32, -b1, b1)
    dw = jax.random.uniform(k3, (2 * C, C), jnp.float32, -b2, b2)    # DR
    db = jax.random.uniform(k4, (1, C), jnp.float32, -b2, b2)
    return cw, cb, dw, db


# ----------------------------------------------------------------------------
# Pure-JAX reference (independent formulation) for validation
# ----------------------------------------------------------------------------
def reference_forward(x_nchw, cw, cb, dw, db):
    hi = lax.Precision.HIGHEST
    B, C, H, W = x_nchw.shape
    x = jnp.transpose(x_nchw, (0, 2, 3, 1)).astype(jnp.float32)

    def maxpool(z, k):
        return lax.reduce_window(z, -np.inf, lax.max,
                                 (1, k, k, 1), (1, k, k, 1), 'VALID')

    def conv1x1(z, w, b):
        return jnp.einsum('bhwi,io->bhwo', z, w, precision=hi) + b.reshape(1, 1, 1, -1)

    def upsample(z):
        _, h, w, _ = z.shape
        Uh = jnp.asarray(bilinear_matrix_1d(h, H))
        Uw = jnp.asarray(bilinear_matrix_1d(w, W))
        return jnp.einsum('Hh,Ww,bhwc->bHWc', Uh, Uw, z, precision=hi)

    x1 = conv1x1(x, cw, cb[0])
    x2 = upsample(conv1x1(maxpool(x, 2), cw, cb[0]))
    x3 = upsample(conv1x1(maxpool(x, 4), cw, cb[0]))
    x4 = upsample(conv1x1(maxpool(x, 8), cw, cb[0]))
    x5 = jnp.concatenate([x, x1, x2, x3, x4], axis=-1)
    x6 = conv1x1(x5, dw, db[0])
    x7 = maxpool(x6, 2)
    return jnp.transpose(x7, (0, 3, 1, 2))


if __name__ == "__main__":
    # C >= 128 (lane-dense) and H, W >= 32, per review, while still small/fast.
    B, C, H, W = 2, 128, 32, 32
    key = jax.random.PRNGKey(0)
    kx, kp = jax.random.split(key)
    x = jax.random.normal(kx, (B, C, H, W), jnp.float32)      # NCHW like PyTorch
    cw, cb, dw, db = init_params(kp, C)

    fwd = jax.jit(pspool_forward)
    out = jax.block_until_ready(fwd(x, cw, cb, dw, db))
    assert out.shape == (B, C, H // 2, W // 2), out.shape

    ref = reference_forward(x, cw, cb, dw, db)
    np.testing.assert_allclose(np.asarray(out), np.asarray(ref),
                               rtol=2e-3, atol=2e-3)

    # bf16 activation / folded-weight path (f32 accumulation inside kernels).
    out_bf16 = jax.block_until_ready(fwd(x.astype(jnp.bfloat16), cw, cb, dw, db))
    np.testing.assert_allclose(np.asarray(out_bf16.astype(jnp.float32)),
                               np.asarray(ref), rtol=5e-2, atol=5e-2)
    print("KERNEL_OK")
</pallas_src>

<mosaic_0001>
module attributes {stable_mosaic.version = 11 : i64} {
  func.func @_pool2x2_kernel(%arg0: i32, %arg1: i32, %arg2: memref<1x8x16x256xf32, #tpu.memory_space<vmem>>, %arg3: memref<1x4x16x128xf32, #tpu.memory_space<vmem>>) attributes {dimension_semantics = [#tpu.dimension_semantics<parallel>, #tpu.dimension_semantics<parallel>], iteration_bounds = array<i64: 2, 4>, scalar_prefetch = 0 : i64, scratch_operands = 0 : i64, tpu.core_type = #tpu.core_type<tc>, window_params = [{transform_indices = @transform_0, window_bounds = array<i64: 1, 8, 16, 256>}, {transform_indices = @transform_1, window_bounds = array<i64: 1, 4, 16, 128>}]} {
    %c0 = arith.constant 0 : index
    %c0_0 = arith.constant 0 : index
    %c0_1 = arith.constant 0 : index
    %c0_2 = arith.constant 0 : index
    %0 = vector.load %arg2[%c0, %c0_0, %c0_1, %c0_2] : memref<1x8x16x256xf32, #tpu.memory_space<vmem>>, vector<1x8x16x256xf32>
    %1 = vector.shape_cast %0 : vector<1x8x16x256xf32> to vector<8x16x256xf32>
    %2 = vector.extract_strided_slice %1 {offsets = [0, 0, 0], sizes = [8, 16, 128], strides = [1, 1, 1]} : vector<8x16x256xf32> to vector<8x16x128xf32>
    %3 = vector.extract_strided_slice %1 {offsets = [0, 0, 128], sizes = [8, 16, 128], strides = [1, 1, 1]} : vector<8x16x256xf32> to vector<8x16x128xf32>
    %4 = arith.maximumf %2, %3 : vector<8x16x128xf32>
    %5 = vector.shape_cast %4 : vector<8x16x128xf32> to vector<4x2x16x128xf32>
    %6 = vector.extract_strided_slice %5 {offsets = [0, 0, 0, 0], sizes = [4, 1, 16, 128], strides = [1, 1, 1, 1]} : vector<4x2x16x128xf32> to vector<4x1x16x128xf32>
    %7 = vector.shape_cast %6 : vector<4x1x16x128xf32> to vector<4x16x128xf32>
    %8 = vector.extract_strided_slice %5 {offsets = [0, 1, 0, 0], sizes = [4, 1, 16, 128], strides = [1, 1, 1, 1]} : vector<4x2x16x128xf32> to vector<4x1x16x128xf32>
    %9 = vector.shape_cast %8 : vector<4x1x16x128xf32> to vector<4x16x128xf32>
    %10 = arith.maximumf %7, %9 : vector<4x16x128xf32>
    %c0_3 = arith.constant 0 : index
    %c0_4 = arith.constant 0 : index
    %c0_5 = arith.constant 0 : index
    %c0_6 = arith.constant 0 : index
    %11 = vector.load %arg3[%c0_3, %c0_4, %c0_5, %c0_6] : memref<1x4x16x128xf32, #tpu.memory_space<vmem>>, vector<1x4x16x128xf32>
    %12 = vector.shape_cast %11 : vector<1x4x16x128xf32> to vector<4x16x128xf32>
    %13 = vector.shape_cast %10 : vector<4x16x128xf32> to vector<1x4x16x128xf32>
    tpu.vector_store %arg3[%c0_3, %c0_4, %c0_5, %c0_6], %13 {strides = array<i32>} : memref<1x4x16x128xf32, #tpu.memory_space<vmem>>, vector<1x4x16x128xf32>,
    return
  }
  func.func @transform_0(%arg0: i32, %arg1: i32) -> (i32, i32, i32, i32) {
    %c0_i32 = arith.constant 0 : i32
    %c0_i32_0 = arith.constant 0 : i32
    %c0_i32_1 = arith.constant 0 : i32
    return %arg0, %arg1, %c0_i32, %c0_i32_0 : i32, i32, i32, i32
  }
  func.func @transform_1(%arg0: i32, %arg1: i32) -> (i32, i32, i32, i32) {
    %c0_i32 = arith.constant 0 : i32
    %c0_i32_0 = arith.constant 0 : i32
    %c0_i32_1 = arith.constant 0 : i32
    return %arg0, %arg1, %c0_i32, %c0_i32_0 : i32, i32, i32, i32
  }
}

module attributes {stable_mosaic.version = 11 : i64} {
  func.func @_pool2x2_kernel(%arg0: i32, %arg1: i32, %arg2: memref<1x4x8x256xf32, #tpu.memory_space<vmem>>, %arg3: memref<1x2x8x128xf32, #tpu.memory_space<vmem>>) attributes {dimension_semantics = [#tpu.dimension_semantics<parallel>, #tpu.dimension_semantics<parallel>], iteration_bounds = array<i64: 2, 4>, scalar_prefetch = 0 : i64, scratch_operands = 0 : i64, tpu.core_type = #tpu.core_type<tc>, window_params = [{transform_indices = @transform_0, window_bounds = array<i64: 1, 4, 8, 256>}, {transform_indices = @transform_1, window_bounds = array<i64: 1, 2, 8, 128>}]} {
    %c0 = arith.constant 0 : index
    %c0_0 = arith.constant 0 : index
    %c0_1 = arith.constant 0 : index
    %c0_2 = arith.constant 0 : index
    %0 = vector.load %arg2[%c0, %c0_0, %c0_1, %c0_2] : memref<1x4x8x256xf32, #tpu.memory_space<vmem>>, vector<1x4x8x256xf32>
    %1 = vector.shape_cast %0 : vector<1x4x8x256xf32> to vector<4x8x256xf32>
    %2 = vector.extract_strided_slice %1 {offsets = [0, 0, 0], sizes = [4, 8, 128], strides = [1, 1, 1]} : vector<4x8x256xf32> to vector<4x8x128xf32>
    %3 = vector.extract_strided_slice %1 {offsets = [0, 0, 128], sizes = [4, 8, 128], strides = [1, 1, 1]} : vector<4x8x256xf32> to vector<4x8x128xf32>
    %4 = arith.maximumf %2, %3 : vector<4x8x128xf32>
    %5 = vector.shape_cast %4 : vector<4x8x128xf32> to vector<2x2x8x128xf32>
    %6 = vector.extract_strided_slice %5 {offsets = [0, 0, 0, 0], sizes = [2, 1, 8, 128], strides = [1, 1, 1, 1]} : vector<2x2x8x128xf32> to vector<2x1x8x128xf32>
    %7 = vector.shape_cast %6 : vector<2x1x8x128xf32> to vector<2x8x128xf32>
    %8 = vector.extract_strided_slice %5 {offsets = [0, 1, 0, 0], sizes = [2, 1, 8, 128], strides = [1, 1, 1, 1]} : vector<2x2x8x128xf32> to vector<2x1x8x128xf32>
    %9 = vector.shape_cast %8 : vector<2x1x8x128xf32> to vector<2x8x128xf32>
    %10 = arith.maximumf %7, %9 : vector<2x8x128xf32>
    %c0_3 = arith.constant 0 : index
    %c0_4 = arith.constant 0 : index
    %c0_5 = arith.constant 0 : index
    %c0_6 = arith.constant 0 : index
    %11 = vector.load %arg3[%c0_3, %c0_4, %c0_5, %c0_6] : memref<1x2x8x128xf32, #tpu.memory_space<vmem>>, vector<1x2x8x128xf32>
    %12 = vector.shape_cast %11 : vector<1x2x8x128xf32> to vector<2x8x128xf32>
    %13 = vector.shape_cast %10 : vector<2x8x128xf32> to vector<1x2x8x128xf32>
    tpu.vector_store %arg3[%c0_3, %c0_4, %c0_5, %c0_6], %13 {strides = array<i32>} : memref<1x2x8x128xf32, #tpu.memory_space<vmem>>, vector<1x2x8x128xf32>,
    return
  }
  func.func @transform_0(%arg0: i32, %arg1: i32) -> (i32, i32, i32, i32) {
    %c0_i32 = arith.constant 0 : i32
    %c0_i32_0 = arith.constant 0 : i32
    %c0_i32_1 = arith.constant 0 : i32
    return %arg0, %arg1, %c0_i32, %c0_i32_0 : i32, i32, i32, i32
  }
  func.func @transform_1(%arg0: i32, %arg1: i32) -> (i32, i32, i32, i32) {
    %c0_i32 = arith.constant 0 : i32
    %c0_i32_0 = arith.constant 0 : i32
    %c0_i32_1 = arith.constant 0 : i32
    return %arg0, %arg1, %c0_i32, %c0_i32_0 : i32, i32, i32, i32
  }
}

module attributes {stable_mosaic.version = 11 : i64} {
  func.func @_branch_fold_upw_kernel(%arg0: i32, %arg1: memref<1x8x8x128xf32, #tpu.memory_space<vmem>>, %arg2: memref<128x128xf32, #tpu.memory_space<vmem>>, %arg3: memref<32x8xf32, #tpu.memory_space<vmem>>, %arg4: memref<1x8x32x128xf32, #tpu.memory_space<vmem>>) attributes {dimension_semantics = [#tpu.dimension_semantics<parallel>], iteration_bounds = array<i64: 2>, scalar_prefetch = 0 : i64, scratch_operands = 0 : i64, tpu.core_type = #tpu.core_type<tc>, window_params = [{transform_indices = @transform_0, window_bounds = array<i64: 1, 8, 8, 128>}, {pipeline_mode = #tpu.pipeline_mode<synchronous>, transform_indices = @transform_1, window_bounds = array<i64: 128, 128>}, {pipeline_mode = #tpu.pipeline_mode<synchronous>, transform_indices = @transform_2, window_bounds = array<i64: 32, 8>}, {transform_indices = @transform_3, window_bounds = array<i64: 1, 8, 32, 128>}]} {
    %c0 = arith.constant 0 : index
    %c0_0 = arith.constant 0 : index
    %0 = vector.load %arg2[%c0, %c0_0] : memref<128x128xf32, #tpu.memory_space<vmem>>, vector<128x128xf32>
    %c0_1 = arith.constant 0 : index
    %c0_2 = arith.constant 0 : index
    %1 = vector.load %arg3[%c0_1, %c0_2] : memref<32x8xf32, #tpu.memory_space<vmem>>, vector<32x8xf32>
    %c0_3 = arith.constant 0 : index
    %c0_4 = arith.constant 0 : index
    %c0_5 = arith.constant 0 : index
    %c0_6 = arith.constant 0 : index
    %2 = vector.load %arg1[%c0_3, %c0_4, %c0_5, %c0_6] : memref<1x8x8x128xf32, #tpu.memory_space<vmem>>, vector<1x1x8x128xf32>
    %3 = vector.shape_cast %2 : vector<1x1x8x128xf32> to vector<8x128xf32>
    %cst = arith.constant dense<0.000000e+00> : vector<8x128xf32>
    %4 = tpu.matmul %3, %0, %cst {dimension_numbers = #tpu.dot_dimension_numbers<[1], [0], [0], [1], [0, 0, 1, 1], [], []>} : vector<8x128xf32>, vector<128x128xf32>, vector<8x128xf32> -> vector<8x128xf32>
    %cst_7 = arith.constant dense<0.000000e+00> : vector<32x128xf32>
    %5 = tpu.matmul %1, %4, %cst_7 {dimension_numbers = #tpu.dot_dimension_numbers<[1], [0], [0], [1], [0, 0, 1, 1], [], []>} : vector<32x8xf32>, vector<8x128xf32>, vector<32x128xf32> -> vector<32x128xf32>
    %c0_8 = arith.constant 0 : index
    %c0_9 = arith.constant 0 : index
    %c0_10 = arith.constant 0 : index
    %c0_11 = arith.constant 0 : index
    %6 = vector.load %arg4[%c0_8, %c0_9, %c0_10, %c0_11] : memref<1x8x32x128xf32, #tpu.memory_space<vmem>>, vector<1x1x32x128xf32>
    %7 = vector.shape_cast %6 : vector<1x1x32x128xf32> to vector<32x128xf32>
    %8 = vector.shape_cast %5 : vector<32x128xf32> to vector<1x1x32x128xf32>
    tpu.vector_store %arg4[%c0_8, %c0_9, %c0_10, %c0_11], %8 {strides = array<i32>} : memref<1x8x32x128xf32, #tpu.memory_space<vmem>>, vector<1x1x32x128xf32>,
    %c0_12 = arith.constant 0 : index
    %c1 = arith.constant 1 : index
    %c0_13 = arith.constant 0 : index
    %c0_14 = arith.constant 0 : index
    %9 = vector.load %arg1[%c0_12, %c1, %c0_13, %c0_14] : memref<1x8x8x128xf32, #tpu.memory_space<vmem>>, vector<1x1x8x128xf32>
    %10 = vector.shape_cast %9 : vector<1x1x8x128xf32> to vector<8x128xf32>
    %cst_15 = arith.constant dense<0.000000e+00> : vector<8x128xf32>
    %11 = tpu.matmul %10, %0, %cst_15 {dimension_numbers = #tpu.dot_dimension_numbers<[1], [0], [0], [1], [0, 0, 1, 1], [], []>} : vector<8x128xf32>, vector<128x128xf32>, vector<8x128xf32> -> vector<8x128xf32>
    %cst_16 = arith.constant dense<0.000000e+00> : vector<32x128xf32>
    %12 = tpu.matmul %1, %11, %cst_16 {dimension_numbers = #tpu.dot_dimension_numbers<[1], [0], [0], [1], [0, 0, 1, 1], [], []>} : vector<32x8xf32>, vector<8x128xf32>, vector<32x128xf32> -> vector<32x128xf32>
    %c0_17 = arith.constant 0 : index
    %c1_18 = arith.constant 1 : index
    %c0_19 = arith.constant 0 : index
    %c0_20 = arith.constant 0 : index
    %13 = vector.load %arg4[%c0_17, %c1_18, %c0_19, %c0_20] : memref<1x8x32x128xf32, #tpu.memory_space<vmem>>, vector<1x1x32x128xf32>
    %14 = vector.shape_cast %13 : vector<1x1x32x128xf32> to vector<32x128xf32>
    %15 = vector.shape_cast %12 : vector<32x128xf32> to vector<1x1x32x128xf32>
    tpu.vector_store %arg4[%c0_17, %c1_18, %c0_19, %c0_20], %15 {strides = array<i32>} : memref<1x8x32x128xf32, #tpu.memory_space<vmem>>, vector<1x1x32x128xf32>,
    %c0_21 = arith.constant 0 : index
    %c2 = arith.constant 2 : index
    %c0_22 = arith.constant 0 : index
    %c0_23 = arith.constant 0 : index
    %16 = vector.load %arg1[%c0_21, %c2, %c0_22, %c0_23] : memref<1x8x8x128xf32, #tpu.memory_space<vmem>>, vector<1x1x8x128xf32>
    %17 = vector.shape_cast %16 : vector<1x1x8x128xf32> to vector<8x128xf32>
    %cst_24 = arith.constant dense<0.000000e+00> : vector<8x128xf32>
    %18 = tpu.matmul %17, %0, %cst_24 {dimension_numbers = #tpu.dot_dimension_numbers<[1], [0], [0], [1], [0, 0, 1, 1], [], []>} : vector<8x128xf32>, vector<128x128xf32>, vector<8x128xf32> -> vector<8x128xf32>
    %cst_25 = arith.constant dense<0.000000e+00> : vector<32x128xf32>
    %19 = tpu.matmul %1, %18, %cst_25 {dimension_numbers = #tpu.dot_dimension_numbers<[1], [0], [0], [1], [0, 0, 1, 1], [], []>} : vector<32x8xf32>, vector<8x128xf32>, vector<32x128xf32> -> vector<32x128xf32>
    %c0_26 = arith.constant 0 : index
    %c2_27 = arith.constant 2 : index
    %c0_28 = arith.constant 0 : index
    %c0_29 = arith.constant 0 : index
    %20 = vector.load %arg4[%c0_26, %c2_27, %c0_28, %c0_29] : memref<1x8x32x128xf32, #tpu.memory_space<vmem>>, vector<1x1x32x128xf32>
    %21 = vector.shape_cast %20 : vector<1x1x32x128xf32> to vector<32x128xf32>
    %22 = vector.shape_cast %19 : vector<32x128xf32> to vector<1x1x32x128xf32>
    tpu.vector_store %arg4[%c0_26, %c2_27, %c0_28, %c0_29], %22 {strides = array<i32>} : memref<1x8x32x128xf32, #tpu.memory_space<vmem>>, vector<1x1x32x128xf32>,
    %c0_30 = arith.constant 0 : index
    %c3 = arith.constant 3 : index
    %c0_31 = arith.constant 0 : index
    %c0_32 = arith.constant 0 : index
    %23 = vector.load %arg1[%c0_30, %c3, %c0_31, %c0_32] : memref<1x8x8x128xf32, #tpu.memory_space<vmem>>, vector<1x1x8x128xf32>
    %24 = vector.shape_cast %23 : vector<1x1x8x128xf32> to vector<8x128xf32>
    %cst_33 = arith.constant dense<0.000000e+00> : vector<8x128xf32>
    %25 = tpu.matmul %24, %0, %cst_33 {dimension_numbers = #tpu.dot_dimension_numbers<[1], [0], [0], [1], [0, 0, 1, 1], [], []>} : vector<8x128xf32>, vector<128x128xf32>, vector<8x128xf32> -> vector<8x128xf32>
    %cst_34 = arith.constant dense<0.000000e+00> : vector<32x128xf32>
    %26 = tpu.matmul %1, %25, %cst_34 {dimension_numbers = #tpu.dot_dimension_numbers<[1], [0], [0], [1], [0, 0, 1, 1], [], []>} : vector<32x8xf32>, vector<8x128xf32>, vector<32x128xf32> -> vector<32x128xf32>
    %c0_35 = arith.constant 0 : index
    %c3_36 = arith.constant 3 : index
    %c0_37 = arith.constant 0 : index
    %c0_38 = arith.constant 0 : index
    %27 = vector.load %arg4[%c0_35, %c3_36, %c0_37, %c0_38] : memref<1x8x32x128xf32, #tpu.memory_space<vmem>>, vector<1x1x32x128xf32>
    %28 = vector.shape_cast %27 : vector<1x1x32x128xf32> to vector<32x128xf32>
    %29 = vector.shape_cast %26 : vector<32x128xf32> to vector<1x1x32x128xf32>
    tpu.vector_store %arg4[%c0_35, %c3_36, %c0_37, %c0_38], %29 {strides = array<i32>} : memref<1x8x32x128xf32, #tpu.memory_space<vmem>>, vector<1x1x32x128xf32>,
    %c0_39 = arith.constant 0 : index
    %c4 = arith.constant 4 : index
    %c0_40 = arith.constant 0 : index
    %c0_41 = arith.constant 0 : index
    %30 = vector.load %arg1[%c0_39, %c4, %c0_40, %c0_41] : memref<1x8x8x128xf32, #tpu.memory_space<vmem>>, vector<1x1x8x128xf32>
    %31 = vector.shape_cast %30 : vector<1x1x8x128xf32> to vector<8x128xf32>
    %cst_42 = arith.constant dense<0.000000e+00> : vector<8x128xf32>
    %32 = tpu.matmul %31, %0, %cst_42 {dimension_numbers = #tpu.dot_dimension_numbers<[1], [0], [0], [1], [0, 0, 1, 1], [], []>} : vector<8x128xf32>, vector<128x128xf32>, vector<8x128xf32> -> vector<8x128xf32>
    %cst_43 = arith.constant dense<0.000000e+00> : vector<32x128xf32>
    %33 = tpu.matmul %1, %32, %cst_43 {dimension_numbers = #tpu.dot_dimension_numbers<[1], [0], [0], [1], [0, 0, 1, 1], [], []>} : vector<32x8xf32>, vector<8x128xf32>, vector<32x128xf32> -> vector<32x128xf32>
    %c0_44 = arith.constant 0 : index
    %c4_45 = arith.constant 4 : index
    %c0_46 = arith.constant 0 : index
    %c0_47 = arith.constant 0 : index
    %34 = vector.load %arg4[%c0_44, %c4_45, %c0_46, %c0_47] : memref<1x8x32x128xf32, #tpu.memory_space<vmem>>, vector<1x1x32x128xf32>
    %35 = vector.shape_cast %34 : vector<1x1x32x128xf32> to vector<32x128xf32>
    %36 = vector.shape_cast %33 : vector<32x128xf32> to vector<1x1x32x128xf32>
    tpu.vector_store %arg4[%c0_44, %c4_45, %c0_46, %c0_47], %36 {strides = array<i32>} : memref<1x8x32x128xf32, #tpu.memory_space<vmem>>, vector<1x1x32x128xf32>,
    %c0_48 = arith.constant 0 : index
    %c5 = arith.constant 5 : index
    %c0_49 = arith.constant 0 : index
    %c0_50 = arith.constant 0 : index
    %37 = vector.load %arg1[%c0_48, %c5, %c0_49, %c0_50] : memref<1x8x8x128xf32, #tpu.memory_space<vmem>>, vector<1x1x8x128xf32>
    %38 = vector.shape_cast %37 : vector<1x1x8x128xf32> to vector<8x128xf32>
    %cst_51 = arith.constant dense<0.000000e+00> : vector<8x128xf32>
    %39 = tpu.matmul %38, %0, %cst_51 {dimension_numbers = #tpu.dot_dimension_numbers<[1], [0], [0], [1], [0, 0, 1, 1], [], []>} : vector<8x128xf32>, vector<128x128xf32>, vector<8x128xf32> -> vector<8x128xf32>
    %cst_52 = arith.constant dense<0.000000e+00> : vector<32x128xf32>
    %40 = tpu.matmul %1, %39, %cst_52 {dimension_numbers = #tpu.dot_dimension_numbers<[1], [0], [0], [1], [0, 0, 1, 1], [], []>} : vector<32x8xf32>, vector<8x128xf32>, vector<32x128xf32> -> vector<32x128xf32>
    %c0_53 = arith.constant 0 : index
    %c5_54 = arith.constant 5 : index
    %c0_55 = arith.constant 0 : index
    %c0_56 = arith.constant 0 : index
    %41 = vector.load %arg4[%c0_53, %c5_54, %c0_55, %c0_56] : memref<1x8x32x128xf32, #tpu.memory_space<vmem>>, vector<1x1x32x128xf32>
    %42 = vector.shape_cast %41 : vector<1x1x32x128xf32> to vector<32x128xf32>
    %43 = vector.shape_cast %40 : vector<32x128xf32> to vector<1x1x32x128xf32>
    tpu.vector_store %arg4[%c0_53, %c5_54, %c0_55, %c0_56], %43 {strides = array<i32>} : memref<1x8x32x128xf32, #tpu.memory_space<vmem>>, vector<1x1x32x128xf32>,
    %c0_57 = arith.constant 0 : index
    %c6 = arith.constant 6 : index
    %c0_58 = arith.constant 0 : index
    %c0_59 = arith.constant 0 : index
    %44 = vector.load %arg1[%c0_57, %c6, %c0_58, %c0_59] : memref<1x8x8x128xf32, #tpu.memory_space<vmem>>, vector<1x1x8x128xf32>
    %45 = vector.shape_cast %44 : vector<1x1x8x128xf32> to vector<8x128xf32>
    %cst_60 = arith.constant dense<0.000000e+00> : vector<8x128xf32>
    %46 = tpu.matmul %45, %0, %cst_60 {dimension_numbers = #tpu.dot_dimension_numbers<[1], [0], [0], [1], [0, 0, 1, 1], [], []>} : vector<8x128xf32>, vector<128x128xf32>, vector<8x128xf32> -> vector<8x128xf32>
    %cst_61 = arith.constant dense<0.000000e+00> : vector<32x128xf32>
    %47 = tpu.matmul %1, %46, %cst_61 {dimension_numbers = #tpu.dot_dimension_numbers<[1], [0], [0], [1], [0, 0, 1, 1], [], []>} : vector<32x8xf32>, vector<8x128xf32>, vector<32x128xf32> -> vector<32x128xf32>
    %c0_62 = arith.constant 0 : index
    %c6_63 = arith.constant 6 : index
    %c0_64 = arith.constant 0 : index
    %c0_65 = arith.constant 0 : index
    %48 = vector.load %arg4[%c0_62, %c6_63, %c0_64, %c0_65] : memref<1x8x32x128xf32, #tpu.memory_space<vmem>>, vector<1x1x32x128xf32>
    %49 = vector.shape_cast %48 : vector<1x1x32x128xf32> to vector<32x128xf32>
    %50 = vector.shape_cast %47 : vector<32x128xf32> to vector<1x1x32x128xf32>
    tpu.vector_store %arg4[%c0_62, %c6_63, %c0_64, %c0_65], %50 {strides = array<i32>} : memref<1x8x32x128xf32, #tpu.memory_space<vmem>>, vector<1x1x32x128xf32>,
    %c0_66 = arith.constant 0 : index
    %c7 = arith.constant 7 : index
    %c0_67 = arith.constant 0 : index
    %c0_68 = arith.constant 0 : index
    %51 = vector.load %arg1[%c0_66, %c7, %c0_67, %c0_68] : memref<1x8x8x128xf32, #tpu.memory_space<vmem>>, vector<1x1x8x128xf32>
    %52 = vector.shape_cast %51 : vector<1x1x8x128xf32> to vector<8x128xf32>
    %cst_69 = arith.constant dense<0.000000e+00> : vector<8x128xf32>
    %53 = tpu.matmul %52, %0, %cst_69 {dimension_numbers = #tpu.dot_dimension_numbers<[1], [0], [0], [1], [0, 0, 1, 1], [], []>} : vector<8x128xf32>, vector<128x128xf32>, vector<8x128xf32> -> vector<8x128xf32>
    %cst_70 = arith.constant dense<0.000000e+00> : vector<32x128xf32>
    %54 = tpu.matmul %1, %53, %cst_70 {dimension_numbers = #tpu.dot_dimension_numbers<[1], [0], [0], [1], [0, 0, 1, 1], [], []>} : vector<32x8xf32>, vector<8x128xf32>, vector<32x128xf32> -> vector<32x128xf32>
    %c0_71 = arith.constant 0 : index
    %c7_72 = arith.constant 7 : index
    %c0_73 = arith.constant 0 : index
    %c0_74 = arith.constant 0 : index
    %55 = vector.load %arg4[%c0_71, %c7_72, %c0_73, %c0_74] : memref<1x8x32x128xf32, #tpu.memory_space<vmem>>, vector<1x1x32x128xf32>
    %56 = vector.shape_cast %55 : vector<1x1x32x128xf32> to vector<32x128xf32>
    %57 = vector.shape_cast %54 : vector<32x128xf32> to vector<1x1x32x128xf32>
    tpu.vector_store %arg4[%c0_71, %c7_72, %c0_73, %c0_74], %57 {strides = array<i32>} : memref<1x8x32x128xf32, #tpu.memory_space<vmem>>, vector<1x1x32x128xf32>,
    return
  }
  func.func @transform_0(%arg0: i32) -> (i32, i32, i32, i32) {
    %c0_i32 = arith.constant 0 : i32
    %c0_i32_0 = arith.constant 0 : i32
    %c0_i32_1 = arith.constant 0 : i32
    %c0_i32_2 = arith.constant 0 : i32
    return %arg0, %c0_i32, %c0_i32_0, %c0_i32_1 : i32, i32, i32, i32
  }
  func.func @transform_1(%arg0: i32) -> (i32, i32) {
    %c0_i32 = arith.constant 0 : i32
    %c0_i32_0 = arith.constant 0 : i32
    %c0_i32_1 = arith.constant 0 : i32
    return %c0_i32, %c0_i32_0 : i32, i32
  }
  func.func @transform_2(%arg0: i32) -> (i32, i32) {
    %c0_i32 = arith.constant 0 : i32
    %c0_i32_0 = arith.constant 0 : i32
    %c0_i32_1 = arith.constant 0 : i32
    return %c0_i32, %c0_i32_0 : i32, i32
  }
  func.func @transform_3(%arg0: i32) -> (i32, i32, i32, i32) {
    %c0_i32 = arith.constant 0 : i32
    %c0_i32_0 = arith.constant 0 : i32
    %c0_i32_1 = arith.constant 0 : i32
    %c0_i32_2 = arith.constant 0 : i32
    return %arg0, %c0_i32, %c0_i32_0, %c0_i32_1 : i32, i32, i32, i32
  }
}

module attributes {stable_mosaic.version = 11 : i64} {
  func.func @_pool2x2_kernel(%arg0: i32, %arg1: i32, %arg2: memref<1x2x4x256xf32, #tpu.memory_space<vmem>>, %arg3: memref<1x1x4x128xf32, #tpu.memory_space<vmem>>) attributes {dimension_semantics = [#tpu.dimension_semantics<parallel>, #tpu.dimension_semantics<parallel>], iteration_bounds = array<i64: 2, 4>, scalar_prefetch = 0 : i64, scratch_operands = 0 : i64, tpu.core_type = #tpu.core_type<tc>, window_params = [{transform_indices = @transform_0, window_bounds = array<i64: 1, 2, 4, 256>}, {transform_indices = @transform_1, window_bounds = array<i64: 1, 1, 4, 128>}]} {
    %c0 = arith.constant 0 : index
    %c0_0 = arith.constant 0 : index
    %c0_1 = arith.constant 0 : index
    %c0_2 = arith.constant 0 : index
    %0 = vector.load %arg2[%c0, %c0_0, %c0_1, %c0_2] : memref<1x2x4x256xf32, #tpu.memory_space<vmem>>, vector<1x2x4x256xf32>
    %1 = vector.shape_cast %0 : vector<1x2x4x256xf32> to vector<2x4x256xf32>
    %2 = vector.extract_strided_slice %1 {offsets = [0, 0, 0], sizes = [2, 4, 128], strides = [1, 1, 1]} : vector<2x4x256xf32> to vector<2x4x128xf32>
    %3 = vector.extract_strided_slice %1 {offsets = [0, 0, 128], sizes = [2, 4, 128], strides = [1, 1, 1]} : vector<2x4x256xf32> to vector<2x4x128xf32>
    %4 = arith.maximumf %2, %3 : vector<2x4x128xf32>
    %5 = vector.shape_cast %4 : vector<2x4x128xf32> to vector<1x2x4x128xf32>
    %6 = vector.extract_strided_slice %5 {offsets = [0, 0, 0, 0], sizes = [1, 1, 4, 128], strides = [1, 1, 1, 1]} : vector<1x2x4x128xf32> to vector<1x1x4x128xf32>
    %7 = vector.shape_cast %6 : vector<1x1x4x128xf32> to vector<1x4x128xf32>
    %8 = vector.extract_strided_slice %5 {offsets = [0, 1, 0, 0], sizes = [1, 1, 4, 128], strides = [1, 1, 1, 1]} : vector<1x2x4x128xf32> to vector<1x1x4x128xf32>
    %9 = vector.shape_cast %8 : vector<1x1x4x128xf32> to vector<1x4x128xf32>
    %10 = arith.maximumf %7, %9 : vector<1x4x128xf32>
    %c0_3 = arith.constant 0 : index
    %c0_4 = arith.constant 0 : index
    %c0_5 = arith.constant 0 : index
    %c0_6 = arith.constant 0 : index
    %11 = vector.load %arg3[%c0_3, %c0_4, %c0_5, %c0_6] : memref<1x1x4x128xf32, #tpu.memory_space<vmem>>, vector<1x1x4x128xf32>
    %12 = vector.shape_cast %11 : vector<1x1x4x128xf32> to vector<1x4x128xf32>
    %13 = vector.shape_cast %10 : vector<1x4x128xf32> to vector<1x1x4x128xf32>
    tpu.vector_store %arg3[%c0_3, %c0_4, %c0_5, %c0_6], %13 {strides = array<i32>} : memref<1x1x4x128xf32, #tpu.memory_space<vmem>>, vector<1x1x4x128xf32>,
    return
  }
  func.func @transform_0(%arg0: i32, %arg1: i32) -> (i32, i32, i32, i32) {
    %c0_i32 = arith.constant 0 : i32
    %c0_i32_0 = arith.constant 0 : i32
    %c0_i32_1 = arith.constant 0 : i32
    return %arg0, %arg1, %c0_i32, %c0_i32_0 : i32, i32, i32, i32
  }
  func.func @transform_1(%arg0: i32, %arg1: i32) -> (i32, i32, i32, i32) {
    %c0_i32 = arith.constant 0 : i32
    %c0_i32_0 = arith.constant 0 : i32
    %c0_i32_1 = arith.constant 0 : i32
    return %arg0, %arg1, %c0_i32, %c0_i32_0 : i32, i32, i32, i32
  }
}

module attributes {stable_mosaic.version = 11 : i64} {
  func.func @_branch_fold_upw_kernel(%arg0: i32, %arg1: memref<1x4x4x128xf32, #tpu.memory_space<vmem>>, %arg2: memref<128x128xf32, #tpu.memory_space<vmem>>, %arg3: memref<32x4xf32, #tpu.memory_space<vmem>>, %arg4: memref<1x4x32x128xf32, #tpu.memory_space<vmem>>) attributes {dimension_semantics = [#tpu.dimension_semantics<parallel>], iteration_bounds = array<i64: 2>, scalar_prefetch = 0 : i64, scratch_operands = 0 : i64, tpu.core_type = #tpu.core_type<tc>, window_params = [{transform_indices = @transform_0, window_bounds = array<i64: 1, 4, 4, 128>}, {pipeline_mode = #tpu.pipeline_mode<synchronous>, transform_indices = @transform_1, window_bounds = array<i64: 128, 128>}, {pipeline_mode = #tpu.pipeline_mode<synchronous>, transform_indices = @transform_2, window_bounds = array<i64: 32, 4>}, {transform_indices = @transform_3, window_bounds = array<i64: 1, 4, 32, 128>}]} {
    %c0 = arith.constant 0 : index
    %c0_0 = arith.constant 0 : index
    %0 = vector.load %arg2[%c0, %c0_0] : memref<128x128xf32, #tpu.memory_space<vmem>>, vector<128x128xf32>
    %c0_1 = arith.constant 0 : index
    %c0_2 = arith.constant 0 : index
    %1 = vector.load %arg3[%c0_1, %c0_2] : memref<32x4xf32, #tpu.memory_space<vmem>>, vector<32x4xf32>
    %c0_3 = arith.constant 0 : index
    %c0_4 = arith.constant 0 : index
    %c0_5 = arith.constant 0 : index
    %c0_6 = arith.constant 0 : index
    %2 = vector.load %arg1[%c0_3, %c0_4, %c0_5, %c0_6] : memref<1x4x4x128xf32, #tpu.memory_space<vmem>>, vector<1x1x4x128xf32>
    %3 = vector.shape_cast %2 : vector<1x1x4x128xf32> to vector<4x128xf32>
    %cst = arith.constant dense<0.000000e+00> : vector<4x128xf32>
    %4 = tpu.matmul %3, %0, %cst {dimension_numbers = #tpu.dot_dimension_numbers<[1], [0], [0], [1], [0, 0, 1, 1], [], []>} : vector<4x128xf32>, vector<128x128xf32>, vector<4x128xf32> -> vector<4x128xf32>
    %cst_7 = arith.constant dense<0.000000e+00> : vector<32x128xf32>
    %5 = tpu.matmul %1, %4, %cst_7 {dimension_numbers = #tpu.dot_dimension_numbers<[1], [0], [0], [1], [0, 0, 1, 1], [], []>} : vector<32x4xf32>, vector<4x128xf32>, vector<32x128xf32> -> vector<32x128xf32>
    %c0_8 = arith.constant 0 : index
    %c0_9 = arith.constant 0 : index
    %c0_10 = arith.constant 0 : index
    %c0_11 = arith.constant 0 : index
    %6 = vector.load %arg4[%c0_8, %c0_9, %c0_10, %c0_11] : memref<1x4x32x128xf32, #tpu.memory_space<vmem>>, vector<1x1x32x128xf32>
    %7 = vector.shape_cast %6 : vector<1x1x32x128xf32> to vector<32x128xf32>
    %8 = vector.shape_cast %5 : vector<32x128xf32> to vector<1x1x32x128xf32>
    tpu.vector_store %arg4[%c0_8, %c0_9, %c0_10, %c0_11], %8 {strides = array<i32>} : memref<1x4x32x128xf32, #tpu.memory_space<vmem>>, vector<1x1x32x128xf32>,
    %c0_12 = arith.constant 0 : index
    %c1 = arith.constant 1 : index
    %c0_13 = arith.constant 0 : index
    %c0_14 = arith.constant 0 : index
    %9 = vector.load %arg1[%c0_12, %c1, %c0_13, %c0_14] : memref<1x4x4x128xf32, #tpu.memory_space<vmem>>, vector<1x1x4x128xf32>
    %10 = vector.shape_cast %9 : vector<1x1x4x128xf32> to vector<4x128xf32>
    %cst_15 = arith.constant dense<0.000000e+00> : vector<4x128xf32>
    %11 = tpu.matmul %10, %0, %cst_15 {dimension_numbers = #tpu.dot_dimension_numbers<[1], [0], [0], [1], [0, 0, 1, 1], [], []>} : vector<4x128xf32>, vector<128x128xf32>, vector<4x128xf32> -> vector<4x128xf32>
    %cst_16 = arith.constant dense<0.000000e+00> : vector<32x128xf32>
    %12 = tpu.matmul %1, %11, %cst_16 {dimension_numbers = #tpu.dot_dimension_numbers<[1], [0], [0], [1], [0, 0, 1, 1], [], []>} : vector<32x4xf32>, vector<4x128xf32>, vector<32x128xf32> -> vector<32x128xf32>
    %c0_17 = arith.constant 0 : index
    %c1_18 = arith.constant 1 : index
    %c0_19 = arith.constant 0 : index
    %c0_20 = arith.constant 0 : index
    %13 = vector.load %arg4[%c0_17, %c1_18, %c0_19, %c0_20] : memref<1x4x32x128xf32, #tpu.memory_space<vmem>>, vector<1x1x32x128xf32>
    %14 = vector.shape_cast %13 : vector<1x1x32x128xf32> to vector<32x128xf32>
    %15 = vector.shape_cast %12 : vector<32x128xf32> to vector<1x1x32x128xf32>
    tpu.vector_store %arg4[%c0_17, %c1_18, %c0_19, %c0_20], %15 {strides = array<i32>} : memref<1x4x32x128xf32, #tpu.memory_space<vmem>>, vector<1x1x32x128xf32>,
    %c0_21 = arith.constant 0 : index
    %c2 = arith.constant 2 : index
    %c0_22 = arith.constant 0 : index
    %c0_23 = arith.constant 0 : index
    %16 = vector.load %arg1[%c0_21, %c2, %c0_22, %c0_23] : memref<1x4x4x128xf32, #tpu.memory_space<vmem>>, vector<1x1x4x128xf32>
    %17 = vector.shape_cast %16 : vector<1x1x4x128xf32> to vector<4x128xf32>
    %cst_24 = arith.constant dense<0.000000e+00> : vector<4x128xf32>
    %18 = tpu.matmul %17, %0, %cst_24 {dimension_numbers = #tpu.dot_dimension_numbers<[1], [0], [0], [1], [0, 0, 1, 1], [], []>} : vector<4x128xf32>, vector<128x128xf32>, vector<4x128xf32> -> vector<4x128xf32>
    %cst_25 = arith.constant dense<0.000000e+00> : vector<32x128xf32>
    %19 = tpu.matmul %1, %18, %cst_25 {dimension_numbers = #tpu.dot_dimension_numbers<[1], [0], [0], [1], [0, 0, 1, 1], [], []>} : vector<32x4xf32>, vector<4x128xf32>, vector<32x128xf32> -> vector<32x128xf32>
    %c0_26 = arith.constant 0 : index
    %c2_27 = arith.constant 2 : index
    %c0_28 = arith.constant 0 : index
    %c0_29 = arith.constant 0 : index
    %20 = vector.load %arg4[%c0_26, %c2_27, %c0_28, %c0_29] : memref<1x4x32x128xf32, #tpu.memory_space<vmem>>, vector<1x1x32x128xf32>
    %21 = vector.shape_cast %20 : vector<1x1x32x128xf32> to vector<32x128xf32>
    %22 = vector.shape_cast %19 : vector<32x128xf32> to vector<1x1x32x128xf32>
    tpu.vector_store %arg4[%c0_26, %c2_27, %c0_28, %c0_29], %22 {strides = array<i32>} : memref<1x4x32x128xf32, #tpu.memory_space<vmem>>, vector<1x1x32x128xf32>,
    %c0_30 = arith.constant 0 : index
    %c3 = arith.constant 3 : index
    %c0_31 = arith.constant 0 : index
    %c0_32 = arith.constant 0 : index
    %23 = vector.load %arg1[%c0_30, %c3, %c0_31, %c0_32] : memref<1x4x4x128xf32, #tpu.memory_space<vmem>>, vector<1x1x4x128xf32>
    %24 = vector.shape_cast %23 : vector<1x1x4x128xf32> to vector<4x128xf32>
    %cst_33 = arith.constant dense<0.000000e+00> : vector<4x128xf32>
    %25 = tpu.matmul %24, %0, %cst_33 {dimension_numbers = #tpu.dot_dimension_numbers<[1], [0], [0], [1], [0, 0, 1, 1], [], []>} : vector<4x128xf32>, vector<128x128xf32>, vector<4x128xf32> -> vector<4x128xf32>
    %cst_34 = arith.constant dense<0.000000e+00> : vector<32x128xf32>
    %26 = tpu.matmul %1, %25, %cst_34 {dimension_numbers = #tpu.dot_dimension_numbers<[1], [0], [0], [1], [0, 0, 1, 1], [], []>} : vector<32x4xf32>, vector<4x128xf32>, vector<32x128xf32> -> vector<32x128xf32>
    %c0_35 = arith.constant 0 : index
    %c3_36 = arith.constant 3 : index
    %c0_37 = arith.constant 0 : index
    %c0_38 = arith.constant 0 : index
    %27 = vector.load %arg4[%c0_35, %c3_36, %c0_37, %c0_38] : memref<1x4x32x128xf32, #tpu.memory_space<vmem>>, vector<1x1x32x128xf32>
    %28 = vector.shape_cast %27 : vector<1x1x32x128xf32> to vector<32x128xf32>
    %29 = vector.shape_cast %26 : vector<32x128xf32> to vector<1x1x32x128xf32>
    tpu.vector_store %arg4[%c0_35, %c3_36, %c0_37, %c0_38], %29 {strides = array<i32>} : memref<1x4x32x128xf32, #tpu.memory_space<vmem>>, vector<1x1x32x128xf32>,
    return
  }
  func.func @transform_0(%arg0: i32) -> (i32, i32, i32, i32) {
    %c0_i32 = arith.constant 0 : i32
    %c0_i32_0 = arith.constant 0 : i32
    %c0_i32_1 = arith.constant 0 : i32
    %c0_i32_2 = arith.constant 0 : i32
    return %arg0, %c0_i32, %c0_i32_0, %c0_i32_1 : i32, i32, i32, i32
  }
  func.func @transform_1(%arg0: i32) -> (i32, i32) {
    %c0_i32 = arith.constant 0 : i32
    %c0_i32_0 = arith.constant 0 : i32
    %c0_i32_1 = arith.constant 0 : i32
    return %c0_i32, %c0_i32_0 : i32, i32
  }
  func.func @transform_2(%arg0: i32) -> (i32, i32) {
    %c0_i32 = arith.constant 0 : i32
    %c0_i32_0 = arith.constant 0 : i32
    %c0_i32_1 = arith.constant 0 : i32
    return %c0_i32, %c0_i32_0 : i32, i32
  }
  func.func @transform_3(%arg0: i32) -> (i32, i32, i32, i32) {
    %c0_i32 = arith.constant 0 : i32
    %c0_i32_0 = arith.constant 0 : i32
    %c0_i32_1 = arith.constant 0 : i32
    %c0_i32_2 = arith.constant 0 : i32
    return %arg0, %c0_i32, %c0_i32_0, %c0_i32_1 : i32, i32, i32, i32
  }
}

module attributes {stable_mosaic.version = 11 : i64} {
  func.func @_branch_fold_upw_kernel(%arg0: i32, %arg1: memref<1x16x16x128xf32, #tpu.memory_space<vmem>>, %arg2: memref<128x128xf32, #tpu.memory_space<vmem>>, %arg3: memref<32x16xf32, #tpu.memory_space<vmem>>, %arg4: memref<1x16x32x128xf32, #tpu.memory_space<vmem>>) attributes {dimension_semantics = [#tpu.dimension_semantics<parallel>], iteration_bounds = array<i64: 2>, scalar_prefetch = 0 : i64, scratch_operands = 0 : i64, tpu.core_type = #tpu.core_type<tc>, window_params = [{transform_indices = @transform_0, window_bounds = array<i64: 1, 16, 16, 128>}, {pipeline_mode = #tpu.pipeline_mode<synchronous>, transform_indices = @transform_1, window_bounds = array<i64: 128, 128>}, {pipeline_mode = #tpu.pipeline_mode<synchronous>, transform_indices = @transform_2, window_bounds = array<i64: 32, 16>}, {transform_indices = @transform_3, window_bounds = array<i64: 1, 16, 32, 128>}]} {
    %c0 = arith.constant 0 : index
    %c0_0 = arith.constant 0 : index
    %0 = vector.load %arg2[%c0, %c0_0] : memref<128x128xf32, #tpu.memory_space<vmem>>, vector<128x128xf32>
    %c0_1 = arith.constant 0 : index
    %c0_2 = arith.constant 0 : index
    %1 = vector.load %arg3[%c0_1, %c0_2] : memref<32x16xf32, #tpu.memory_space<vmem>>, vector<32x16xf32>
    %c0_3 = arith.constant 0 : index
    %c0_4 = arith.constant 0 : index
    %c0_5 = arith.constant 0 : index
    %c0_6 = arith.constant 0 : index
    %2 = vector.load %arg1[%c0_3, %c0_4, %c0_5, %c0_6] : memref<1x16x16x128xf32, #tpu.memory_space<vmem>>, vector<1x1x16x128xf32>
    %3 = vector.shape_cast %2 : vector<1x1x16x128xf32> to vector<16x128xf32>
    %cst = arith.constant dense<0.000000e+00> : vector<16x128xf32>
    %4 = tpu.matmul %3, %0, %cst {dimension_numbers = #tpu.dot_dimension_numbers<[1], [0], [0], [1], [0, 0, 1, 1], [], []>} : vector<16x128xf32>, vector<128x128xf32>, vector<16x128xf32> -> vector<16x128xf32>
    %cst_7 = arith.constant dense<0.000000e+00> : vector<32x128xf32>
    %5 = tpu.matmul %1, %4, %cst_7 {dimension_numbers = #tpu.dot_dimension_numbers<[1], [0], [0], [1], [0, 0, 1, 1], [], []>} : vector<32x16xf32>, vector<16x128xf32>, vector<32x128xf32> -> vector<32x128xf32>
    %c0_8 = arith.constant 0 : index
    %c0_9 = arith.constant 0 : index
    %c0_10 = arith.constant 0 : index
    %c0_11 = arith.constant 0 : index
    %6 = vector.load %arg4[%c0_8, %c0_9, %c0_10, %c0_11] : memref<1x16x32x128xf32, #tpu.memory_space<vmem>>, vector<1x1x32x128xf32>
    %7 = vector.shape_cast %6 : vector<1x1x32x128xf32> to vector<32x128xf32>
    %8 = vector.shape_cast %5 : vector<32x128xf32> to vector<1x1x32x128xf32>
    tpu.vector_store %arg4[%c0_8, %c0_9, %c0_10, %c0_11], %8 {strides = array<i32>} : memref<1x16x32x128xf32, #tpu.memory_space<vmem>>, vector<1x1x32x128xf32>,
    %c0_12 = arith.constant 0 : index
    %c1 = arith.constant 1 : index
    %c0_13 = arith.constant 0 : index
    %c0_14 = arith.constant 0 : index
    %9 = vector.load %arg1[%c0_12, %c1, %c0_13, %c0_14] : memref<1x16x16x128xf32, #tpu.memory_space<vmem>>, vector<1x1x16x128xf32>
    %10 = vector.shape_cast %9 : vector<1x1x16x128xf32> to vector<16x128xf32>
    %cst_15 = arith.constant dense<0.000000e+00> : vector<16x128xf32>
    %11 = tpu.matmul %10, %0, %cst_15 {dimension_numbers = #tpu.dot_dimension_numbers<[1], [0], [0], [1], [0, 0, 1, 1], [], []>} : vector<16x128xf32>, vector<128x128xf32>, vector<16x128xf32> -> vector<16x128xf32>
    %cst_16 = arith.constant dense<0.000000e+00> : vector<32x128xf32>
    %12 = tpu.matmul %1, %11, %cst_16 {dimension_numbers = #tpu.dot_dimension_numbers<[1], [0], [0], [1], [0, 0, 1, 1], [], []>} : vector<32x16xf32>, vector<16x128xf32>, vector<32x128xf32> -> vector<32x128xf32>
    %c0_17 = arith.constant 0 : index
    %c1_18 = arith.constant 1 : index
    %c0_19 = arith.constant 0 : index
    %c0_20 = arith.constant 0 : index
    %13 = vector.load %arg4[%c0_17, %c1_18, %c0_19, %c0_20] : memref<1x16x32x128xf32, #tpu.memory_space<vmem>>, vector<1x1x32x128xf32>
    %14 = vector.shape_cast %13 : vector<1x1x32x128xf32> to vector<32x128xf32>
    %15 = vector.shape_cast %12 : vector<32x128xf32> to vector<1x1x32x128xf32>
    tpu.vector_store %arg4[%c0_17, %c1_18, %c0_19, %c0_20], %15 {strides = array<i32>} : memref<1x16x32x128xf32, #tpu.memory_space<vmem>>, vector<1x1x32x128xf32>,
    %c0_21 = arith.constant 0 : index
    %c2 = arith.constant 2 : index
    %c0_22 = arith.constant 0 : index
    %c0_23 = arith.constant 0 : index
    %16 = vector.load %arg1[%c0_21, %c2, %c0_22, %c0_23] : memref<1x16x16x128xf32, #tpu.memory_space<vmem>>, vector<1x1x16x128xf32>
    %17 = vector.shape_cast %16 : vector<1x1x16x128xf32> to vector<16x128xf32>
    %cst_24 = arith.constant dense<0.000000e+00> : vector<16x128xf32>
    %18 = tpu.matmul %17, %0, %cst_24 {dimension_numbers = #tpu.dot_dimension_numbers<[1], [0], [0], [1], [0, 0, 1, 1], [], []>} : vector<16x128xf32>, vector<128x128xf32>, vector<16x128xf32> -> vector<16x128xf32>
    %cst_25 = arith.constant dense<0.000000e+00> : vector<32x128xf32>
    %19 = tpu.matmul %1, %18, %cst_25 {dimension_numbers = #tpu.dot_dimension_numbers<[1], [0], [0], [1], [0, 0, 1, 1], [], []>} : vector<32x16xf32>, vector<16x128xf32>, vector<32x128xf32> -> vector<32x128xf32>
    %c0_26 = arith.constant 0 : index
    %c2_27 = arith.constant 2 : index
    %c0_28 = arith.constant 0 : index
    %c0_29 = arith.constant 0 : index
    %20 = vector.load %arg4[%c0_26, %c2_27, %c0_28, %c0_29] : memref<1x16x32x128xf32, #tpu.memory_space<vmem>>, vector<1x1x32x128xf32>
    %21 = vector.shape_cast %20 : vector<1x1x32x128xf32> to vector<32x128xf32>
    %22 = vector.shape_cast %19 : vector<32x128xf32> to vector<1x1x32x128xf32>
    tpu.vector_store %arg4[%c0_26, %c2_27, %c0_28, %c0_29], %22 {strides = array<i32>} : memref<1x16x32x128xf32, #tpu.memory_space<vmem>>, vector<1x1x32x128xf32>,
    %c0_30 = arith.constant 0 : index
    %c3 = arith.constant 3 : index
    %c0_31 = arith.constant 0 : index
    %c0_32 = arith.constant 0 : index
    %23 = vector.load %arg1[%c0_30, %c3, %c0_31, %c0_32] : memref<1x16x16x128xf32, #tpu.memory_space<vmem>>, vector<1x1x16x128xf32>
    %24 = vector.shape_cast %23 : vector<1x1x16x128xf32> to vector<16x128xf32>
    %cst_33 = arith.constant dense<0.000000e+00> : vector<16x128xf32>
    %25 = tpu.matmul %24, %0, %cst_33 {dimension_numbers = #tpu.dot_dimension_numbers<[1], [0], [0], [1], [0, 0, 1, 1], [], []>} : vector<16x128xf32>, vector<128x128xf32>, vector<16x128xf32> -> vector<16x128xf32>
    %cst_34 = arith.constant dense<0.000000e+00> : vector<32x128xf32>
    %26 = tpu.matmul %1, %25, %cst_34 {dimension_numbers = #tpu.dot_dimension_numbers<[1], [0], [0], [1], [0, 0, 1, 1], [], []>} : vector<32x16xf32>, vector<16x128xf32>, vector<32x128xf32> -> vector<32x128xf32>
    %c0_35 = arith.constant 0 : index
    %c3_36 = arith.constant 3 : index
    %c0_37 = arith.constant 0 : index
    %c0_38 = arith.constant 0 : index
    %27 = vector.load %arg4[%c0_35, %c3_36, %c0_37, %c0_38] : memref<1x16x32x128xf32, #tpu.memory_space<vmem>>, vector<1x1x32x128xf32>
    %28 = vector.shape_cast %27 : vector<1x1x32x128xf32> to vector<32x128xf32>
    %29 = vector.shape_cast %26 : vector<32x128xf32> to vector<1x1x32x128xf32>
    tpu.vector_store %arg4[%c0_35, %c3_36, %c0_37, %c0_38], %29 {strides = array<i32>} : memref<1x16x32x128xf32, #tpu.memory_space<vmem>>, vector<1x1x32x128xf32>,
    %c0_39 = arith.constant 0 : index
    %c4 = arith.constant 4 : index
    %c0_40 = arith.constant 0 : index
    %c0_41 = arith.constant 0 : index
    %30 = vector.load %arg1[%c0_39, %c4, %c0_40, %c0_41] : memref<1x16x16x128xf32, #tpu.memory_space<vmem>>, vector<1x1x16x128xf32>
    %31 = vector.shape_cast %30 : vector<1x1x16x128xf32> to vector<16x128xf32>
    %cst_42 = arith.constant dense<0.000000e+00> : vector<16x128xf32>
    %32 = tpu.matmul %31, %0, %cst_42 {dimension_numbers = #tpu.dot_dimension_numbers<[1], [0], [0], [1], [0, 0, 1, 1], [], []>} : vector<16x128xf32>, vector<128x128xf32>, vector<16x128xf32> -> vector<16x128xf32>
    %cst_43 = arith.constant dense<0.000000e+00> : vector<32x128xf32>
    %33 = tpu.matmul %1, %32, %cst_43 {dimension_numbers = #tpu.dot_dimension_numbers<[1], [0], [0], [1], [0, 0, 1, 1], [], []>} : vector<32x16xf32>, vector<16x128xf32>, vector<32x128xf32> -> vector<32x128xf32>
    %c0_44 = arith.constant 0 : index
    %c4_45 = arith.constant 4 : index
    %c0_46 = arith.constant 0 : index
    %c0_47 = arith.constant 0 : index
    %34 = vector.load %arg4[%c0_44, %c4_45, %c0_46, %c0_47] : memref<1x16x32x128xf32, #tpu.memory_space<vmem>>, vector<1x1x32x128xf32>
    %35 = vector.shape_cast %34 : vector<1x1x32x128xf32> to vector<32x128xf32>
    %36 = vector.shape_cast %33 : vector<32x128xf32> to vector<1x1x32x128xf32>
    tpu.vector_store %arg4[%c0_44, %c4_45, %c0_46, %c0_47], %36 {strides = array<i32>} : memref<1x16x32x128xf32, #tpu.memory_space<vmem>>, vector<1x1x32x128xf32>,
    %c0_48 = arith.constant 0 : index
    %c5 = arith.constant 5 : index
    %c0_49 = arith.constant 0 : index
    %c0_50 = arith.constant 0 : index
    %37 = vector.load %arg1[%c0_48, %c5, %c0_49, %c0_50] : memref<1x16x16x128xf32, #tpu.memory_space<vmem>>, vector<1x1x16x128xf32>
    %38 = vector.shape_cast %37 : vector<1x1x16x128xf32> to vector<16x128xf32>
    %cst_51 = arith.constant dense<0.000000e+00> : vector<16x128xf32>
    %39 = tpu.matmul %38, %0, %cst_51 {dimension_numbers = #tpu.dot_dimension_numbers<[1], [0], [0], [1], [0, 0, 1, 1], [], []>} : vector<16x128xf32>, vector<128x128xf32>, vector<16x128xf32> -> vector<16x128xf32>
    %cst_52 = arith.constant dense<0.000000e+00> : vector<32x128xf32>
    %40 = tpu.matmul %1, %39, %cst_52 {dimension_numbers = #tpu.dot_dimension_numbers<[1], [0], [0], [1], [0, 0, 1, 1], [], []>} : vector<32x16xf32>, vector<16x128xf32>, vector<32x128xf32> -> vector<32x128xf32>
    %c0_53 = arith.constant 0 : index
    %c5_54 = arith.constant 5 : index
    %c0_55 = arith.constant 0 : index
    %c0_56 = arith.constant 0 : index
    %41 = vector.load %arg4[%c0_53, %c5_54, %c0_55, %c0_56] : memref<1x16x32x128xf32, #tpu.memory_space<vmem>>, vector<1x1x32x128xf32>
    %42 = vector.shape_cast %41 : vector<1x1x32x128xf32> to vector<32x128xf32>
    %43 = vector.shape_cast %40 : vector<32x128xf32> to vector<1x1x32x128xf32>
    tpu.vector_store %arg4[%c0_53, %c5_54, %c0_55, %c0_56], %43 {strides = array<i32>} : memref<1x16x32x128xf32, #tpu.memory_space<vmem>>, vector<1x1x32x128xf32>,
    %c0_57 = arith.constant 0 : index
    %c6 = arith.constant 6 : index
    %c0_58 = arith.constant 0 : index
    %c0_59 = arith.constant 0 : index
    %44 = vector.load %arg1[%c0_57, %c6, %c0_58, %c0_59] : memref<1x16x16x128xf32, #tpu.memory_space<vmem>>, vector<1x1x16x128xf32>
    %45 = vector.shape_cast %44 : vector<1x1x16x128xf32> to vector<16x128xf32>
    %cst_60 = arith.constant dense<0.000000e+00> : vector<16x128xf32>
    %46 = tpu.matmul %45, %0, %cst_60 {dimension_numbers = #tpu.dot_dimension_numbers<[1], [0], [0], [1], [0, 0, 1, 1], [], []>} : vector<16x128xf32>, vector<128x128xf32>, vector<16x128xf32> -> vector<16x128xf32>
    %cst_61 = arith.constant dense<0.000000e+00> : vector<32x128xf32>
    %47 = tpu.matmul %1, %46, %cst_61 {dimension_numbers = #tpu.dot_dimension_numbers<[1], [0], [0], [1], [0, 0, 1, 1], [], []>} : vector<32x16xf32>, vector<16x128xf32>, vector<32x128xf32> -> vector<32x128xf32>
    %c0_62 = arith.constant 0 : index
    %c6_63 = arith.constant 6 : index
    %c0_64 = arith.constant 0 : index
    %c0_65 = arith.constant 0 : index
    %48 = vector.load %arg4[%c0_62, %c6_63, %c0_64, %c0_65] : memref<1x16x32x128xf32, #tpu.memory_space<vmem>>, vector<1x1x32x128xf32>
    %49 = vector.shape_cast %48 : vector<1x1x32x128xf32> to vector<32x128xf32>
    %50 = vector.shape_cast %47 : vector<32x128xf32> to vector<1x1x32x128xf32>
    tpu.vector_store %arg4[%c0_62, %c6_63, %c0_64, %c0_65], %50 {strides = array<i32>} : memref<1x16x32x128xf32, #tpu.memory_space<vmem>>, vector<1x1x32x128xf32>,
    %c0_66 = arith.constant 0 : index
    %c7 = arith.constant 7 : index
    %c0_67 = arith.constant 0 : index
    %c0_68 = arith.constant 0 : index
    %51 = vector.load %arg1[%c0_66, %c7, %c0_67, %c0_68] : memref<1x16x16x128xf32, #tpu.memory_space<vmem>>, vector<1x1x16x128xf32>
    %52 = vector.shape_cast %51 : vector<1x1x16x128xf32> to vector<16x128xf32>
    %cst_69 = arith.constant dense<0.000000e+00> : vector<16x128xf32>
    %53 = tpu.matmul %52, %0, %cst_69 {dimension_numbers = #tpu.dot_dimension_numbers<[1], [0], [0], [1], [0, 0, 1, 1], [], []>} : vector<16x128xf32>, vector<128x128xf32>, vector<16x128xf32> -> vector<16x128xf32>
    %cst_70 = arith.constant dense<0.000000e+00> : vector<32x128xf32>
    %54 = tpu.matmul %1, %53, %cst_70 {dimension_numbers = #tpu.dot_dimension_numbers<[1], [0], [0], [1], [0, 0, 1, 1], [], []>} : vector<32x16xf32>, vector<16x128xf32>, vector<32x128xf32> -> vector<32x128xf32>
    %c0_71 = arith.constant 0 : index
    %c7_72 = arith.constant 7 : index
    %c0_73 = arith.constant 0 : index
    %c0_74 = arith.constant 0 : index
    %55 = vector.load %arg4[%c0_71, %c7_72, %c0_73, %c0_74] : memref<1x16x32x128xf32, #tpu.memory_space<vmem>>, vector<1x1x32x128xf32>
    %56 = vector.shape_cast %55 : vector<1x1x32x128xf32> to vector<32x128xf32>
    %57 = vector.shape_cast %54 : vector<32x128xf32> to vector<1x1x32x128xf32>
    tpu.vector_store %arg4[%c0_71, %c7_72, %c0_73, %c0_74], %57 {strides = array<i32>} : memref<1x16x32x128xf32, #tpu.memory_space<vmem>>, vector<1x1x32x128xf32>,
    %c0_75 = arith.constant 0 : index
    %c8 = arith.constant 8 : index
    %c0_76 = arith.constant 0 : index
    %c0_77 = arith.constant 0 : index
    %58 = vector.load %arg1[%c0_75, %c8, %c0_76, %c0_77] : memref<1x16x16x128xf32, #tpu.memory_space<vmem>>, vector<1x1x16x128xf32>
    %59 = vector.shape_cast %58 : vector<1x1x16x128xf32> to vector<16x128xf32>
    %cst_78 = arith.constant dense<0.000000e+00> : vector<16x128xf32>
    %60 = tpu.matmul %59, %0, %cst_78 {dimension_numbers = #tpu.dot_dimension_numbers<[1], [0], [0], [1], [0, 0, 1, 1], [], []>} : vector<16x128xf32>, vector<128x128xf32>, vector<16x128xf32> -> vector<16x128xf32>
    %cst_79 = arith.constant dense<0.000000e+00> : vector<32x128xf32>
    %61 = tpu.matmul %1, %60, %cst_79 {dimension_numbers = #tpu.dot_dimension_numbers<[1], [0], [0], [1], [0, 0, 1, 1], [], []>} : vector<32x16xf32>, vector<16x128xf32>, vector<32x128xf32> -> vector<32x128xf32>
    %c0_80 = arith.constant 0 : index
    %c8_81 = arith.constant 8 : index
    %c0_82 = arith.constant 0 : index
    %c0_83 = arith.constant 0 : index
    %62 = vector.load %arg4[%c0_80, %c8_81, %c0_82, %c0_83] : memref<1x16x32x128xf32, #tpu.memory_space<vmem>>, vector<1x1x32x128xf32>
    %63 = vector.shape_cast %62 : vector<1x1x32x128xf32> to vector<32x128xf32>
    %64 = vector.shape_cast %61 : vector<32x128xf32> to vector<1x1x32x128xf32>
    tpu.vector_store %arg4[%c0_80, %c8_81, %c0_82, %c0_83], %64 {strides = array<i32>} : memref<1x16x32x128xf32, #tpu.memory_space<vmem>>, vector<1x1x32x128xf32>,
    %c0_84 = arith.constant 0 : index
    %c9 = arith.constant 9 : index
    %c0_85 = arith.constant 0 : index
    %c0_86 = arith.constant 0 : index
    %65 = vector.load %arg1[%c0_84, %c9, %c0_85, %c0_86] : memref<1x16x16x128xf32, #tpu.memory_space<vmem>>, vector<1x1x16x128xf32>
    %66 = vector.shape_cast %65 : vector<1x1x16x128xf32> to vector<16x128xf32>
    %cst_87 = arith.constant dense<0.000000e+00> : vector<16x128xf32>
    %67 = tpu.matmul %66, %0, %cst_87 {dimension_numbers = #tpu.dot_dimension_numbers<[1], [0], [0], [1], [0, 0, 1, 1], [], []>} : vector<16x128xf32>, vector<128x128xf32>, vector<16x128xf32> -> vector<16x128xf32>
    %cst_88 = arith.constant dense<0.000000e+00> : vector<32x128xf32>
    %68 = tpu.matmul %1, %67, %cst_88 {dimension_numbers = #tpu.dot_dimension_numbers<[1], [0], [0], [1], [0, 0, 1, 1], [], []>} : vector<32x16xf32>, vector<16x128xf32>, vector<32x128xf32> -> vector<32x128xf32>
    %c0_89 = arith.constant 0 : index
    %c9_90 = arith.constant 9 : index
    %c0_91 = arith.constant 0 : index
    %c0_92 = arith.constant 0 : index
    %69 = vector.load %arg4[%c0_89, %c9_90, %c0_91, %c0_92] : memref<1x16x32x128xf32, #tpu.memory_space<vmem>>, vector<1x1x32x128xf32>
    %70 = vector.shape_cast %69 : vector<1x1x32x128xf32> to vector<32x128xf32>
    %71 = vector.shape_cast %68 : vector<32x128xf32> to vector<1x1x32x128xf32>
    tpu.vector_store %arg4[%c0_89, %c9_90, %c0_91, %c0_92], %71 {strides = array<i32>} : memref<1x16x32x128xf32, #tpu.memory_space<vmem>>, vector<1x1x32x128xf32>,
    %c0_93 = arith.constant 0 : index
    %c10 = arith.constant 10 : index
    %c0_94 = arith.constant 0 : index
    %c0_95 = arith.constant 0 : index
    %72 = vector.load %arg1[%c0_93, %c10, %c0_94, %c0_95] : memref<1x16x16x128xf32, #tpu.memory_space<vmem>>, vector<1x1x16x128xf32>
    %73 = vector.shape_cast %72 : vector<1x1x16x128xf32> to vector<16x128xf32>
    %cst_96 = arith.constant dense<0.000000e+00> : vector<16x128xf32>
    %74 = tpu.matmul %73, %0, %cst_96 {dimension_numbers = #tpu.dot_dimension_numbers<[1], [0], [0], [1], [0, 0, 1, 1], [], []>} : vector<16x128xf32>, vector<128x128xf32>, vector<16x128xf32> -> vector<16x128xf32>
    %cst_97 = arith.constant dense<0.000000e+00> : vector<32x128xf32>
    %75 = tpu.matmul %1, %74, %cst_97 {dimension_numbers = #tpu.dot_dimension_numbers<[1], [0], [0], [1], [0, 0, 1, 1], [], []>} : vector<32x16xf32>, vector<16x128xf32>, vector<32x128xf32> -> vector<32x128xf32>
    %c0_98 = arith.constant 0 : index
    %c10_99 = arith.constant 10 : index
    %c0_100 = arith.constant 0 : index
    %c0_101 = arith.constant 0 : index
    %76 = vector.load %arg4[%c0_98, %c10_99, %c0_100, %c0_101] : memref<1x16x32x128xf32, #tpu.memory_space<vmem>>, vector<1x1x32x128xf32>
    %77 = vector.shape_cast %76 : vector<1x1x32x128xf32> to vector<32x128xf32>
    %78 = vector.shape_cast %75 : vector<32x128xf32> to vector<1x1x32x128xf32>
    tpu.vector_store %arg4[%c0_98, %c10_99, %c0_100, %c0_101], %78 {strides = array<i32>} : memref<1x16x32x128xf32, #tpu.memory_space<vmem>>, vector<1x1x32x128xf32>,
    %c0_102 = arith.constant 0 : index
    %c11 = arith.constant 11 : index
    %c0_103 = arith.constant 0 : index
    %c0_104 = arith.constant 0 : index
    %79 = vector.load %arg1[%c0_102, %c11, %c0_103, %c0_104] : memref<1x16x16x128xf32, #tpu.memory_space<vmem>>, vector<1x1x16x128xf32>
    %80 = vector.shape_cast %79 : vector<1x1x16x128xf32> to vector<16x128xf32>
    %cst_105 = arith.constant dense<0.000000e+00> : vector<16x128xf32>
    %81 = tpu.matmul %80, %0, %cst_105 {dimension_numbers = #tpu.dot_dimension_numbers<[1], [0], [0], [1], [0, 0, 1, 1], [], []>} : vector<16x128xf32>, vector<128x128xf32>, vector<16x128xf32> -> vector<16x128xf32>
    %cst_106 = arith.constant dense<0.000000e+00> : vector<32x128xf32>
    %82 = tpu.matmul %1, %81, %cst_106 {dimension_numbers = #tpu.dot_dimension_numbers<[1], [0], [0], [1], [0, 0, 1, 1], [], []>} : vector<32x16xf32>, vector<16x128xf32>, vector<32x128xf32> -> vector<32x128xf32>
    %c0_107 = arith.constant 0 : index
    %c11_108 = arith.constant 11 : index
    %c0_109 = arith.constant 0 : index
    %c0_110 = arith.constant 0 : index
    %83 = vector.load %arg4[%c0_107, %c11_108, %c0_109, %c0_110] : memref<1x16x32x128xf32, #tpu.memory_space<vmem>>, vector<1x1x32x128xf32>
    %84 = vector.shape_cast %83 : vector<1x1x32x128xf32> to vector<32x128xf32>
    %85 = vector.shape_cast %82 : vector<32x128xf32> to vector<1x1x32x128xf32>
    tpu.vector_store %arg4[%c0_107, %c11_108, %c0_109, %c0_110], %85 {strides = array<i32>} : memref<1x16x32x128xf32, #tpu.memory_space<vmem>>, vector<1x1x32x128xf32>,
    %c0_111 = arith.constant 0 : index
    %c12 = arith.constant 12 : index
    %c0_112 = arith.constant 0 : index
    %c0_113 = arith.constant 0 : index
    %86 = vector.load %arg1[%c0_111, %c12, %c0_112, %c0_113] : memref<1x16x16x128xf32, #tpu.memory_space<vmem>>, vector<1x1x16x128xf32>
    %87 = vector.shape_cast %86 : vector<1x1x16x128xf32> to vector<16x128xf32>
    %cst_114 = arith.constant dense<0.000000e+00> : vector<16x128xf32>
    %88 = tpu.matmul %87, %0, %cst_114 {dimension_numbers = #tpu.dot_dimension_numbers<[1], [0], [0], [1], [0, 0, 1, 1], [], []>} : vector<16x128xf32>, vector<128x128xf32>, vector<16x128xf32> -> vector<16x128xf32>
    %cst_115 = arith.constant dense<0.000000e+00> : vector<32x128xf32>
    %89 = tpu.matmul %1, %88, %cst_115 {dimension_numbers = #tpu.dot_dimension_numbers<[1], [0], [0], [1], [0, 0, 1, 1], [], []>} : vector<32x16xf32>, vector<16x128xf32>, vector<32x128xf32> -> vector<32x128xf32>
    %c0_116 = arith.constant 0 : index
    %c12_117 = arith.constant 12 : index
    %c0_118 = arith.constant 0 : index
    %c0_119 = arith.constant 0 : index
    %90 = vector.load %arg4[%c0_116, %c12_117, %c0_118, %c0_119] : memref<1x16x32x128xf32, #tpu.memory_space<vmem>>, vector<1x1x32x128xf32>
    %91 = vector.shape_cast %90 : vector<1x1x32x128xf32> to vector<32x128xf32>
    %92 = vector.shape_cast %89 : vector<32x128xf32> to vector<1x1x32x128xf32>
    tpu.vector_store %arg4[%c0_116, %c12_117, %c0_118, %c0_119], %92 {strides = array<i32>} : memref<1x16x32x128xf32, #tpu.memory_space<vmem>>, vector<1x1x32x128xf32>,
    %c0_120 = arith.constant 0 : index
    %c13 = arith.constant 13 : index
    %c0_121 = arith.constant 0 : index
    %c0_122 = arith.constant 0 : index
    %93 = vector.load %arg1[%c0_120, %c13, %c0_121, %c0_122] : memref<1x16x16x128xf32, #tpu.memory_space<vmem>>, vector<1x1x16x128xf32>
    %94 = vector.shape_cast %93 : vector<1x1x16x128xf32> to vector<16x128xf32>
    %cst_123 = arith.constant dense<0.000000e+00> : vector<16x128xf32>
    %95 = tpu.matmul %94, %0, %cst_123 {dimension_numbers = #tpu.dot_dimension_numbers<[1], [0], [0], [1], [0, 0, 1, 1], [], []>} : vector<16x128xf32>, vector<128x128xf32>, vector<16x128xf32> -> vector<16x128xf32>
    %cst_124 = arith.constant dense<0.000000e+00> : vector<32x128xf32>
    %96 = tpu.matmul %1, %95, %cst_124 {dimension_numbers = #tpu.dot_dimension_numbers<[1], [0], [0], [1], [0, 0, 1, 1], [], []>} : vector<32x16xf32>, vector<16x128xf32>, vector<32x128xf32> -> vector<32x128xf32>
    %c0_125 = arith.constant 0 : index
    %c13_126 = arith.constant 13 : index
    %c0_127 = arith.constant 0 : index
    %c0_128 = arith.constant 0 : index
    %97 = vector.load %arg4[%c0_125, %c13_126, %c0_127, %c0_128] : memref<1x16x32x128xf32, #tpu.memory_space<vmem>>, vector<1x1x32x128xf32>
    %98 = vector.shape_cast %97 : vector<1x1x32x128xf32> to vector<32x128xf32>
    %99 = vector.shape_cast %96 : vector<32x128xf32> to vector<1x1x32x128xf32>
    tpu.vector_store %arg4[%c0_125, %c13_126, %c0_127, %c0_128], %99 {strides = array<i32>} : memref<1x16x32x128xf32, #tpu.memory_space<vmem>>, vector<1x1x32x128xf32>,
    %c0_129 = arith.constant 0 : index
    %c14 = arith.constant 14 : index
    %c0_130 = arith.constant 0 : index
    %c0_131 = arith.constant 0 : index
    %100 = vector.load %arg1[%c0_129, %c14, %c0_130, %c0_131] : memref<1x16x16x128xf32, #tpu.memory_space<vmem>>, vector<1x1x16x128xf32>
    %101 = vector.shape_cast %100 : vector<1x1x16x128xf32> to vector<16x128xf32>
    %cst_132 = arith.constant dense<0.000000e+00> : vector<16x128xf32>
    %102 = tpu.matmul %101, %0, %cst_132 {dimension_numbers = #tpu.dot_dimension_numbers<[1], [0], [0], [1], [0, 0, 1, 1], [], []>} : vector<16x128xf32>, vector<128x128xf32>, vector<16x128xf32> -> vector<16x128xf32>
    %cst_133 = arith.constant dense<0.000000e+00> : vector<32x128xf32>
    %103 = tpu.matmul %1, %102, %cst_133 {dimension_numbers = #tpu.dot_dimension_numbers<[1], [0], [0], [1], [0, 0, 1, 1], [], []>} : vector<32x16xf32>, vector<16x128xf32>, vector<32x128xf32> -> vector<32x128xf32>
    %c0_134 = arith.constant 0 : index
    %c14_135 = arith.constant 14 : index
    %c0_136 = arith.constant 0 : index
    %c0_137 = arith.constant 0 : index
    %104 = vector.load %arg4[%c0_134, %c14_135, %c0_136, %c0_137] : memref<1x16x32x128xf32, #tpu.memory_space<vmem>>, vector<1x1x32x128xf32>
    %105 = vector.shape_cast %104 : vector<1x1x32x128xf32> to vector<32x128xf32>
    %106 = vector.shape_cast %103 : vector<32x128xf32> to vector<1x1x32x128xf32>
    tpu.vector_store %arg4[%c0_134, %c14_135, %c0_136, %c0_137], %106 {strides = array<i32>} : memref<1x16x32x128xf32, #tpu.memory_space<vmem>>, vector<1x1x32x128xf32>,
    %c0_138 = arith.constant 0 : index
    %c15 = arith.constant 15 : index
    %c0_139 = arith.constant 0 : index
    %c0_140 = arith.constant 0 : index
    %107 = vector.load %arg1[%c0_138, %c15, %c0_139, %c0_140] : memref<1x16x16x128xf32, #tpu.memory_space<vmem>>, vector<1x1x16x128xf32>
    %108 = vector.shape_cast %107 : vector<1x1x16x128xf32> to vector<16x128xf32>
    %cst_141 = arith.constant dense<0.000000e+00> : vector<16x128xf32>
    %109 = tpu.matmul %108, %0, %cst_141 {dimension_numbers = #tpu.dot_dimension_numbers<[1], [0], [0], [1], [0, 0, 1, 1], [], []>} : vector<16x128xf32>, vector<128x128xf32>, vector<16x128xf32> -> vector<16x128xf32>
    %cst_142 = arith.constant dense<0.000000e+00> : vector<32x128xf32>
    %110 = tpu.matmul %1, %109, %cst_142 {dimension_numbers = #tpu.dot_dimension_numbers<[1], [0], [0], [1], [0, 0, 1, 1], [], []>} : vector<32x16xf32>, vector<16x128xf32>, vector<32x128xf32> -> vector<32x128xf32>
    %c0_143 = arith.constant 0 : index
    %c15_144 = arith.constant 15 : index
    %c0_145 = arith.constant 0 : index
    %c0_146 = arith.constant 0 : index
    %111 = vector.load %arg4[%c0_143, %c15_144, %c0_145, %c0_146] : memref<1x16x32x128xf32, #tpu.memory_space<vmem>>, vector<1x1x32x128xf32>
    %112 = vector.shape_cast %111 : vector<1x1x32x128xf32> to vector<32x128xf32>
    %113 = vector.shape_cast %110 : vector<32x128xf32> to vector<1x1x32x128xf32>
    tpu.vector_store %arg4[%c0_143, %c15_144, %c0_145, %c0_146], %113 {strides = array<i32>} : memref<1x16x32x128xf32, #tpu.memory_space<vmem>>, vector<1x1x32x128xf32>,
    return
  }
  func.func @transform_0(%arg0: i32) -> (i32, i32, i32, i32) {
    %c0_i32 = arith.constant 0 : i32
    %c0_i32_0 = arith.constant 0 : i32
    %c0_i32_1 = arith.constant 0 : i32
    %c0_i32_2 = arith.constant 0 : i32
    return %arg0, %c0_i32, %c0_i32_0, %c0_i32_1 : i32, i32, i32, i32
  }
  func.func @transform_1(%arg0: i32) -> (i32, i32) {
    %c0_i32 = arith.constant 0 : i32
    %c0_i32_0 = arith.constant 0 : i32
    %c0_i32_1 = arith.constant 0 : i32
    return %c0_i32, %c0_i32_0 : i32, i32
  }
  func.func @transform_2(%arg0: i32) -> (i32, i32) {
    %c0_i32 = arith.constant 0 : i32
    %c0_i32_0 = arith.constant 0 : i32
    %c0_i32_1 = arith.constant 0 : i32
    return %c0_i32, %c0_i32_0 : i32, i32
  }
  func.func @transform_3(%arg0: i32) -> (i32, i32, i32, i32) {
    %c0_i32 = arith.constant 0 : i32
    %c0_i32_0 = arith.constant 0 : i32
    %c0_i32_1 = arith.constant 0 : i32
    %c0_i32_2 = arith.constant 0 : i32
    return %arg0, %c0_i32, %c0_i32_0, %c0_i32_1 : i32, i32, i32, i32
  }
}

module attributes {stable_mosaic.version = 11 : i64} {
  func.func @_fused_dr_pool_kernel(%arg0: i32, %arg1: i32, %arg2: memref<192xi32, #tpu.memory_space<smem>>, %arg3: memref<192xf32, #tpu.memory_space<smem>>, %arg4: memref<1x8x32x128xf32, #tpu.memory_space<vmem>>, %arg5: memref<1x16x32x128xf32, #tpu.memory_space<vmem>>, %arg6: memref<1x8x32x128xf32, #tpu.memory_space<vmem>>, %arg7: memref<1x4x32x128xf32, #tpu.memory_space<vmem>>, %arg8: memref<128x128xf32, #tpu.memory_space<vmem>>, %arg9: memref<1x128xf32, #tpu.memory_space<vmem>>, %arg10: memref<1x4x32x128xf32, #tpu.memory_space<vmem>>) attributes {dimension_semantics = [#tpu.dimension_semantics<parallel>, #tpu.dimension_semantics<parallel>], iteration_bounds = array<i64: 2, 4>, scalar_prefetch = 0 : i64, scratch_operands = 0 : i64, tpu.core_type = #tpu.core_type<tc>, window_params = [{transform_indices = @transform_0, window_bounds = array<i64: 192>}, {transform_indices = @transform_1, window_bounds = array<i64: 192>}, {transform_indices = @transform_2, window_bounds = array<i64: 1, 8, 32, 128>}, {transform_indices = @transform_3, window_bounds = array<i64: 1, 16, 32, 128>}, {transform_indices = @transform_4, window_bounds = array<i64: 1, 8, 32, 128>}, {transform_indices = @transform_5, window_bounds = array<i64: 1, 4, 32, 128>}, {pipeline_mode = #tpu.pipeline_mode<synchronous>, transform_indices = @transform_6, window_bounds = array<i64: 128, 128>}, {pipeline_mode = #tpu.pipeline_mode<synchronous>, transform_indices = @transform_7, window_bounds = array<i64: 1, 128>}, {transform_indices = @transform_8, window_bounds = array<i64: 1, 4, 32, 128>}]} {
    %c0 = arith.constant 0 : index
    %c0_0 = arith.constant 0 : index
    %0 = vector.load %arg8[%c0, %c0_0] : memref<128x128xf32, #tpu.memory_space<vmem>>, vector<128x128xf32>
    %c0_1 = arith.constant 0 : index
    %c0_2 = arith.constant 0 : index
    %1 = vector.load %arg9[%c0_1, %c0_2] : memref<1x128xf32, #tpu.memory_space<vmem>>, vector<1x128xf32>
    %2 = vector.shape_cast %1 : vector<1x128xf32> to vector<1x128xf32>
    %3 = vector.broadcast %2 : vector<1x128xf32> to vector<32x128xf32>
    %c0_3 = arith.constant 0 : index
    %c0_4 = arith.constant 0 : index
    %c0_5 = arith.constant 0 : index
    %c0_6 = arith.constant 0 : index
    %4 = vector.load %arg4[%c0_3, %c0_4, %c0_5, %c0_6] : memref<1x8x32x128xf32, #tpu.memory_space<vmem>>, vector<1x1x32x128xf32>
    %5 = vector.shape_cast %4 : vector<1x1x32x128xf32> to vector<32x128xf32>
    %cst = arith.constant dense<0.000000e+00> : vector<32x128xf32>
    %6 = tpu.matmul %5, %0, %cst {dimension_numbers = #tpu.dot_dimension_numbers<[1], [0], [0], [1], [0, 0, 1, 1], [], []>} : vector<32x128xf32>, vector<128x128xf32>, vector<32x128xf32> -> vector<32x128xf32>
    %7 = arith.addf %6, %3 : vector<32x128xf32>
    %c8_i32 = arith.constant 8 : i32
    %8 = arith.muli %arg1, %c8_i32 : i32
    %c0_i32 = arith.constant 0 : i32
    %9 = arith.addi %8, %c0_i32 : i32
    %c0_i32_7 = arith.constant 0 : i32
    %10 = arith.addi %c0_i32_7, %9 : i32
    %11 = arith.index_cast %10 : i32 to index
    %12 = memref.load %arg2[%11] : memref<192xi32, #tpu.memory_space<smem>>
    %13 = arith.index_cast %10 : i32 to index
    %14 = memref.load %arg3[%13] : memref<192xf32, #tpu.memory_space<smem>>
    %c0_8 = arith.constant 0 : index
    %15 = arith.index_cast %12 : i32 to index
    %c0_9 = arith.constant 0 : index
    %c0_10 = arith.constant 0 : index
    %16 = vector.load %arg5[%c0_8, %15, %c0_9, %c0_10] : memref<1x16x32x128xf32, #tpu.memory_space<vmem>>, vector<1x1x32x128xf32>
    %17 = vector.shape_cast %16 : vector<1x1x32x128xf32> to vector<32x128xf32>
    %18 = vector.broadcast %14 : f32 to vector<32x128xf32>
    %19 = arith.mulf %18, %17 : vector<32x128xf32>
    %20 = arith.addf %7, %19 : vector<32x128xf32>
    %c32_i32 = arith.constant 32 : i32
    %21 = arith.addi %c32_i32, %9 : i32
    %22 = arith.index_cast %21 : i32 to index
    %23 = memref.load %arg2[%22] : memref<192xi32, #tpu.memory_space<smem>>
    %24 = arith.index_cast %21 : i32 to index
    %25 = memref.load %arg3[%24] : memref<192xf32, #tpu.memory_space<smem>>
    %c0_11 = arith.constant 0 : index
    %26 = arith.index_cast %23 : i32 to index
    %c0_12 = arith.constant 0 : index
    %c0_13 = arith.constant 0 : index
    %27 = vector.load %arg5[%c0_11, %26, %c0_12, %c0_13] : memref<1x16x32x128xf32, #tpu.memory_space<vmem>>, vector<1x1x32x128xf32>
    %28 = vector.shape_cast %27 : vector<1x1x32x128xf32> to vector<32x128xf32>
    %29 = vector.broadcast %25 : f32 to vector<32x128xf32>
    %30 = arith.mulf %29, %28 : vector<32x128xf32>
    %31 = arith.addf %20, %30 : vector<32x128xf32>
    %c64_i32 = arith.constant 64 : i32
    %32 = arith.addi %c64_i32, %9 : i32
    %33 = arith.index_cast %32 : i32 to index
    %34 = memref.load %arg2[%33] : memref<192xi32, #tpu.memory_space<smem>>
    %35 = arith.index_cast %32 : i32 to index
    %36 = memref.load %arg3[%35] : memref<192xf32, #tpu.memory_space<smem>>
    %c0_14 = arith.constant 0 : index
    %37 = arith.index_cast %34 : i32 to index
    %c0_15 = arith.constant 0 : index
    %c0_16 = arith.constant 0 : index
    %38 = vector.load %arg6[%c0_14, %37, %c0_15, %c0_16] : memref<1x8x32x128xf32, #tpu.memory_space<vmem>>, vector<1x1x32x128xf32>
    %39 = vector.shape_cast %38 : vector<1x1x32x128xf32> to vector<32x128xf32>
    %40 = vector.broadcast %36 : f32 to vector<32x128xf32>
    %41 = arith.mulf %40, %39 : vector<32x128xf32>
    %42 = arith.addf %31, %41 : vector<32x128xf32>
    %c96_i32 = arith.constant 96 : i32
    %43 = arith.addi %c96_i32, %9 : i32
    %44 = arith.index_cast %43 : i32 to index
    %45 = memref.load %arg2[%44] : memref<192xi32, #tpu.memory_space<smem>>
    %46 = arith.index_cast %43 : i32 to index
    %47 = memref.load %arg3[%46] : memref<192xf32, #tpu.memory_space<smem>>
    %c0_17 = arith.constant 0 : index
    %48 = arith.index_cast %45 : i32 to index
    %c0_18 = arith.constant 0 : index
    %c0_19 = arith.constant 0 : index
    %49 = vector.load %arg6[%c0_17, %48, %c0_18, %c0_19] : memref<1x8x32x128xf32, #tpu.memory_space<vmem>>, vector<1x1x32x128xf32>
    %50 = vector.shape_cast %49 : vector<1x1x32x128xf32> to vector<32x128xf32>
    %51 = vector.broadcast %47 : f32 to vector<32x128xf32>
    %52 = arith.mulf %51, %50 : vector<32x128xf32>
    %53 = arith.addf %42, %52 : vector<32x128xf32>
    %c128_i32 = arith.constant 128 : i32
    %54 = arith.addi %c128_i32, %9 : i32
    %55 = arith.index_cast %54 : i32 to index
    %56 = memref.load %arg2[%55] : memref<192xi32, #tpu.memory_space<smem>>
    %57 = arith.index_cast %54 : i32 to index
    %58 = memref.load %arg3[%57] : memref<192xf32, #tpu.memory_space<smem>>
    %c0_20 = arith.constant 0 : index
    %59 = arith.index_cast %56 : i32 to index
    %c0_21 = arith.constant 0 : index
    %c0_22 = arith.constant 0 : index
    %60 = vector.load %arg7[%c0_20, %59, %c0_21, %c0_22] : memref<1x4x32x128xf32, #tpu.memory_space<vmem>>, vector<1x1x32x128xf32>
    %61 = vector.shape_cast %60 : vector<1x1x32x128xf32> to vector<32x128xf32>
    %62 = vector.broadcast %58 : f32 to vector<32x128xf32>
    %63 = arith.mulf %62, %61 : vector<32x128xf32>
    %64 = arith.addf %53, %63 : vector<32x128xf32>
    %c160_i32 = arith.constant 160 : i32
    %65 = arith.addi %c160_i32, %9 : i32
    %66 = arith.index_cast %65 : i32 to index
    %67 = memref.load %arg2[%66] : memref<192xi32, #tpu.memory_space<smem>>
    %68 = arith.index_cast %65 : i32 to index
    %69 = memref.load %arg3[%68] : memref<192xf32, #tpu.memory_space<smem>>
    %c0_23 = arith.constant 0 : index
    %70 = arith.index_cast %67 : i32 to index
    %c0_24 = arith.constant 0 : index
    %c0_25 = arith.constant 0 : index
    %71 = vector.load %arg7[%c0_23, %70, %c0_24, %c0_25] : memref<1x4x32x128xf32, #tpu.memory_space<vmem>>, vector<1x1x32x128xf32>
    %72 = vector.shape_cast %71 : vector<1x1x32x128xf32> to vector<32x128xf32>
    %73 = vector.broadcast %69 : f32 to vector<32x128xf32>
    %74 = arith.mulf %73, %72 : vector<32x128xf32>
    %75 = arith.addf %64, %74 : vector<32x128xf32>
    %c0_26 = arith.constant 0 : index
    %c1 = arith.constant 1 : index
    %c0_27 = arith.constant 0 : index
    %c0_28 = arith.constant 0 : index
    %76 = vector.load %arg4[%c0_26, %c1, %c0_27, %c0_28] : memref<1x8x32x128xf32, #tpu.memory_space<vmem>>, vector<1x1x32x128xf32>
    %77 = vector.shape_cast %76 : vector<1x1x32x128xf32> to vector<32x128xf32>
    %cst_29 = arith.constant dense<0.000000e+00> : vector<32x128xf32>
    %78 = tpu.matmul %77, %0, %cst_29 {dimension_numbers = #tpu.dot_dimension_numbers<[1], [0], [0], [1], [0, 0, 1, 1], [], []>} : vector<32x128xf32>, vector<128x128xf32>, vector<32x128xf32> -> vector<32x128xf32>
    %79 = arith.addf %78, %3 : vector<32x128xf32>
    %c8_i32_30 = arith.constant 8 : i32
    %80 = arith.muli %arg1, %c8_i32_30 : i32
    %c1_i32 = arith.constant 1 : i32
    %81 = arith.addi %80, %c1_i32 : i32
    %c0_i32_31 = arith.constant 0 : i32
    %82 = arith.addi %c0_i32_31, %81 : i32
    %83 = arith.index_cast %82 : i32 to index
    %84 = memref.load %arg2[%83] : memref<192xi32, #tpu.memory_space<smem>>
    %85 = arith.index_cast %82 : i32 to index
    %86 = memref.load %arg3[%85] : memref<192xf32, #tpu.memory_space<smem>>
    %c0_32 = arith.constant 0 : index
    %87 = arith.index_cast %84 : i32 to index
    %c0_33 = arith.constant 0 : index
    %c0_34 = arith.constant 0 : index
    %88 = vector.load %arg5[%c0_32, %87, %c0_33, %c0_34] : memref<1x16x32x128xf32, #tpu.memory_space<vmem>>, vector<1x1x32x128xf32>
    %89 = vector.shape_cast %88 : vector<1x1x32x128xf32> to vector<32x128xf32>
    %90 = vector.broadcast %86 : f32 to vector<32x128xf32>
    %91 = arith.mulf %90, %89 : vector<32x128xf32>
    %92 = arith.addf %79, %91 : vector<32x128xf32>
    %c32_i32_35 = arith.constant 32 : i32
    %93 = arith.addi %c32_i32_35, %81 : i32
    %94 = arith.index_cast %93 : i32 to index
    %95 = memref.load %arg2[%94] : memref<192xi32, #tpu.memory_space<smem>>
    %96 = arith.index_cast %93 : i32 to index
    %97 = memref.load %arg3[%96] : memref<192xf32, #tpu.memory_space<smem>>
    %c0_36 = arith.constant 0 : index
    %98 = arith.index_cast %95 : i32 to index
    %c0_37 = arith.constant 0 : index
    %c0_38 = arith.constant 0 : index
    %99 = vector.load %arg5[%c0_36, %98, %c0_37, %c0_38] : memref<1x16x32x128xf32, #tpu.memory_space<vmem>>, vector<1x1x32x128xf32>
    %100 = vector.shape_cast %99 : vector<1x1x32x128xf32> to vector<32x128xf32>
    %101 = vector.broadcast %97 : f32 to vector<32x128xf32>
    %102 = arith.mulf %101, %100 : vector<32x128xf32>
    %103 = arith.addf %92, %102 : vector<32x128xf32>
    %c64_i32_39 = arith.constant 64 : i32
    %104 = arith.addi %c64_i32_39, %81 : i32
    %105 = arith.index_cast %104 : i32 to index
    %106 = memref.load %arg2[%105] : memref<192xi32, #tpu.memory_space<smem>>
    %107 = arith.index_cast %104 : i32 to index
    %108 = memref.load %arg3[%107] : memref<192xf32, #tpu.memory_space<smem>>
    %c0_40 = arith.constant 0 : index
    %109 = arith.index_cast %106 : i32 to index
    %c0_41 = arith.constant 0 : index
    %c0_42 = arith.constant 0 : index
    %110 = vector.load %arg6[%c0_40, %109, %c0_41, %c0_42] : memref<1x8x32x128xf32, #tpu.memory_space<vmem>>, vector<1x1x32x128xf32>
    %111 = vector.shape_cast %110 : vector<1x1x32x128xf32> to vector<32x128xf32>
    %112 = vector.broadcast %108 : f32 to vector<32x128xf32>
    %113 = arith.mulf %112, %111 : vector<32x128xf32>
    %114 = arith.addf %103, %113 : vector<32x128xf32>
    %c96_i32_43 = arith.constant 96 : i32
    %115 = arith.addi %c96_i32_43, %81 : i32
    %116 = arith.index_cast %115 : i32 to index
    %117 = memref.load %arg2[%116] : memref<192xi32, #tpu.memory_space<smem>>
    %118 = arith.index_cast %115 : i32 to index
    %119 = memref.load %arg3[%118] : memref<192xf32, #tpu.memory_space<smem>>
    %c0_44 = arith.constant 0 : index
    %120 = arith.index_cast %117 : i32 to index
    %c0_45 = arith.constant 0 : index
    %c0_46 = arith.constant 0 : index
    %121 = vector.load %arg6[%c0_44, %120, %c0_45, %c0_46] : memref<1x8x32x128xf32, #tpu.memory_space<vmem>>, vector<1x1x32x128xf32>
    %122 = vector.shape_cast %121 : vector<1x1x32x128xf32> to vector<32x128xf32>
    %123 = vector.broadcast %119 : f32 to vector<32x128xf32>
    %124 = arith.mulf %123, %122 : vector<32x128xf32>
    %125 = arith.addf %114, %124 : vector<32x128xf32>
    %c128_i32_47 = arith.constant 128 : i32
    %126 = arith.addi %c128_i32_47, %81 : i32
    %127 = arith.index_cast %126 : i32 to index
    %128 = memref.load %arg2[%127] : memref<192xi32, #tpu.memory_space<smem>>
    %129 = arith.index_cast %126 : i32 to index
    %130 = memref.load %arg3[%129] : memref<192xf32, #tpu.memory_space<smem>>
    %c0_48 = arith.constant 0 : index
    %131 = arith.index_cast %128 : i32 to index
    %c0_49 = arith.constant 0 : index
    %c0_50 = arith.constant 0 : index
    %132 = vector.load %arg7[%c0_48, %131, %c0_49, %c0_50] : memref<1x4x32x128xf32, #tpu.memory_space<vmem>>, vector<1x1x32x128xf32>
    %133 = vector.shape_cast %132 : vector<1x1x32x128xf32> to vector<32x128xf32>
    %134 = vector.broadcast %130 : f32 to vector<32x128xf32>
    %135 = arith.mulf %134, %133 : vector<32x128xf32>
    %136 = arith.addf %125, %135 : vector<32x128xf32>
    %c160_i32_51 = arith.constant 160 : i32
    %137 = arith.addi %c160_i32_51, %81 : i32
    %138 = arith.index_cast %137 : i32 to index
    %139 = memref.load %arg2[%138] : memref<192xi32, #tpu.memory_space<smem>>
    %140 = arith.index_cast %137 : i32 to index
    %141 = memref.load %arg3[%140] : memref<192xf32, #tpu.memory_space<smem>>
    %c0_52 = arith.constant 0 : index
    %142 = arith.index_cast %139 : i32 to index
    %c0_53 = arith.constant 0 : index
    %c0_54 = arith.constant 0 : index
    %143 = vector.load %arg7[%c0_52, %142, %c0_53, %c0_54] : memref<1x4x32x128xf32, #tpu.memory_space<vmem>>, vector<1x1x32x128xf32>
    %144 = vector.shape_cast %143 : vector<1x1x32x128xf32> to vector<32x128xf32>
    %145 = vector.broadcast %141 : f32 to vector<32x128xf32>
    %146 = arith.mulf %145, %144 : vector<32x128xf32>
    %147 = arith.addf %136, %146 : vector<32x128xf32>
    %148 = arith.maximumf %75, %147 : vector<32x128xf32>
    %c0_55 = arith.constant 0 : index
    %c0_56 = arith.constant 0 : index
    %c0_57 = arith.constant 0 : index
    %c0_58 = arith.constant 0 : index
    %149 = vector.load %arg10[%c0_55, %c0_56, %c0_57, %c0_58] : memref<1x4x32x128xf32, #tpu.memory_space<vmem>>, vector<1x1x32x128xf32>
    %150 = vector.shape_cast %149 : vector<1x1x32x128xf32> to vector<32x128xf32>
    %151 = vector.shape_cast %148 : vector<32x128xf32> to vector<1x1x32x128xf32>
    tpu.vector_store %arg10[%c0_55, %c0_56, %c0_57, %c0_58], %151 {strides = array<i32>} : memref<1x4x32x128xf32, #tpu.memory_space<vmem>>, vector<1x1x32x128xf32>,
    %c0_59 = arith.constant 0 : index
    %c2 = arith.constant 2 : index
    %c0_60 = arith.constant 0 : index
    %c0_61 = arith.constant 0 : index
    %152 = vector.load %arg4[%c0_59, %c2, %c0_60, %c0_61] : memref<1x8x32x128xf32, #tpu.memory_space<vmem>>, vector<1x1x32x128xf32>
    %153 = vector.shape_cast %152 : vector<1x1x32x128xf32> to vector<32x128xf32>
    %cst_62 = arith.constant dense<0.000000e+00> : vector<32x128xf32>
    %154 = tpu.matmul %153, %0, %cst_62 {dimension_numbers = #tpu.dot_dimension_numbers<[1], [0], [0], [1], [0, 0, 1, 1], [], []>} : vector<32x128xf32>, vector<128x128xf32>, vector<32x128xf32> -> vector<32x128xf32>
    %155 = arith.addf %154, %3 : vector<32x128xf32>
    %c8_i32_63 = arith.constant 8 : i32
    %156 = arith.muli %arg1, %c8_i32_63 : i32
    %c2_i32 = arith.constant 2 : i32
    %157 = arith.addi %156, %c2_i32 : i32
    %c0_i32_64 = arith.constant 0 : i32
    %158 = arith.addi %c0_i32_64, %157 : i32
    %159 = arith.index_cast %158 : i32 to index
    %160 = memref.load %arg2[%159] : memref<192xi32, #tpu.memory_space<smem>>
    %161 = arith.index_cast %158 : i32 to index
    %162 = memref.load %arg3[%161] : memref<192xf32, #tpu.memory_space<smem>>
    %c0_65 = arith.constant 0 : index
    %163 = arith.index_cast %160 : i32 to index
    %c0_66 = arith.constant 0 : index
    %c0_67 = arith.constant 0 : index
    %164 = vector.load %arg5[%c0_65, %163, %c0_66, %c0_67] : memref<1x16x32x128xf32, #tpu.memory_space<vmem>>, vector<1x1x32x128xf32>
    %165 = vector.shape_cast %164 : vector<1x1x32x128xf32> to vector<32x128xf32>
    %166 = vector.broadcast %162 : f32 to vector<32x128xf32>
    %167 = arith.mulf %166, %165 : vector<32x128xf32>
    %168 = arith.addf %155, %167 : vector<32x128xf32>
    %c32_i32_68 = arith.constant 32 : i32
    %169 = arith.addi %c32_i32_68, %157 : i32
    %170 = arith.index_cast %169 : i32 to index
    %171 = memref.load %arg2[%170] : memref<192xi32, #tpu.memory_space<smem>>
    %172 = arith.index_cast %169 : i32 to index
    %173 = memref.load %arg3[%172] : memref<192xf32, #tpu.memory_space<smem>>
    %c0_69 = arith.constant 0 : index
    %174 = arith.index_cast %171 : i32 to index
    %c0_70 = arith.constant 0 : index
    %c0_71 = arith.constant 0 : index
    %175 = vector.load %arg5[%c0_69, %174, %c0_70, %c0_71] : memref<1x16x32x128xf32, #tpu.memory_space<vmem>>, vector<1x1x32x128xf32>
    %176 = vector.shape_cast %175 : vector<1x1x32x128xf32> to vector<32x128xf32>
    %177 = vector.broadcast %173 : f32 to vector<32x128xf32>
    %178 = arith.mulf %177, %176 : vector<32x128xf32>
    %179 = arith.addf %168, %178 : vector<32x128xf32>
    %c64_i32_72 = arith.constant 64 : i32
    %180 = arith.addi %c64_i32_72, %157 : i32
    %181 = arith.index_cast %180 : i32 to index
    %182 = memref.load %arg2[%181] : memref<192xi32, #tpu.memory_space<smem>>
    %183 = arith.index_cast %180 : i32 to index
    %184 = memref.load %arg3[%183] : memref<192xf32, #tpu.memory_space<smem>>
    %c0_73 = arith.constant 0 : index
    %185 = arith.index_cast %182 : i32 to index
    %c0_74 = arith.constant 0 : index
    %c0_75 = arith.constant 0 : index
    %186 = vector.load %arg6[%c0_73, %185, %c0_74, %c0_75] : memref<1x8x32x128xf32, #tpu.memory_space<vmem>>, vector<1x1x32x128xf32>
    %187 = vector.shape_cast %186 : vector<1x1x32x128xf32> to vector<32x128xf32>
    %188 = vector.broadcast %184 : f32 to vector<32x128xf32>
    %189 = arith.mulf %188, %187 : vector<32x128xf32>
    %190 = arith.addf %179, %189 : vector<32x128xf32>
    %c96_i32_76 = arith.constant 96 : i32
    %191 = arith.addi %c96_i32_76, %157 : i32
    %192 = arith.index_cast %191 : i32 to index
    %193 = memref.load %arg2[%192] : memref<192xi32, #tpu.memory_space<smem>>
    %194 = arith.index_cast %191 : i32 to index
    %195 = memref.load %arg3[%194] : memref<192xf32, #tpu.memory_space<smem>>
    %c0_77 = arith.constant 0 : index
    %196 = arith.index_cast %193 : i32 to index
    %c0_78 = arith.constant 0 : index
    %c0_79 = arith.constant 0 : index
    %197 = vector.load %arg6[%c0_77, %196, %c0_78, %c0_79] : memref<1x8x32x128xf32, #tpu.memory_space<vmem>>, vector<1x1x32x128xf32>
    %198 = vector.shape_cast %197 : vector<1x1x32x128xf32> to vector<32x128xf32>
    %199 = vector.broadcast %195 : f32 to vector<32x128xf32>
    %200 = arith.mulf %199, %198 : vector<32x128xf32>
    %201 = arith.addf %190, %200 : vector<32x128xf32>
    %c128_i32_80 = arith.constant 128 : i32
    %202 = arith.addi %c128_i32_80, %157 : i32
    %203 = arith.index_cast %202 : i32 to index
    %204 = memref.load %arg2[%203] : memref<192xi32, #tpu.memory_space<smem>>
    %205 = arith.index_cast %202 : i32 to index
    %206 = memref.load %arg3[%205] : memref<192xf32, #tpu.memory_space<smem>>
    %c0_81 = arith.constant 0 : index
    %207 = arith.index_cast %204 : i32 to index
    %c0_82 = arith.constant 0 : index
    %c0_83 = arith.constant 0 : index
    %208 = vector.load %arg7[%c0_81, %207, %c0_82, %c0_83] : memref<1x4x32x128xf32, #tpu.memory_space<vmem>>, vector<1x1x32x128xf32>
    %209 = vector.shape_cast %208 : vector<1x1x32x128xf32> to vector<32x128xf32>
    %210 = vector.broadcast %206 : f32 to vector<32x128xf32>
    %211 = arith.mulf %210, %209 : vector<32x128xf32>
    %212 = arith.addf %201, %211 : vector<32x128xf32>
    %c160_i32_84 = arith.constant 160 : i32
    %213 = arith.addi %c160_i32_84, %157 : i32
    %214 = arith.index_cast %213 : i32 to index
    %215 = memref.load %arg2[%214] : memref<192xi32, #tpu.memory_space<smem>>
    %216 = arith.index_cast %213 : i32 to index
    %217 = memref.load %arg3[%216] : memref<192xf32, #tpu.memory_space<smem>>
    %c0_85 = arith.constant 0 : index
    %218 = arith.index_cast %215 : i32 to index
    %c0_86 = arith.constant 0 : index
    %c0_87 = arith.constant 0 : index
    %219 = vector.load %arg7[%c0_85, %218, %c0_86, %c0_87] : memref<1x4x32x128xf32, #tpu.memory_space<vmem>>, vector<1x1x32x128xf32>
    %220 = vector.shape_cast %219 : vector<1x1x32x128xf32> to vector<32x128xf32>
    %221 = vector.broadcast %217 : f32 to vector<32x128xf32>
    %222 = arith.mulf %221, %220 : vector<32x128xf32>
    %223 = arith.addf %212, %222 : vector<32x128xf32>
    %c0_88 = arith.constant 0 : index
    %c3 = arith.constant 3 : index
    %c0_89 = arith.constant 0 : index
    %c0_90 = arith.constant 0 : index
    %224 = vector.load %arg4[%c0_88, %c3, %c0_89, %c0_90] : memref<1x8x32x128xf32, #tpu.memory_space<vmem>>, vector<1x1x32x128xf32>
    %225 = vector.shape_cast %224 : vector<1x1x32x128xf32> to vector<32x128xf32>
    %cst_91 = arith.constant dense<0.000000e+00> : vector<32x128xf32>
    %226 = tpu.matmul %225, %0, %cst_91 {dimension_numbers = #tpu.dot_dimension_numbers<[1], [0], [0], [1], [0, 0, 1, 1], [], []>} : vector<32x128xf32>, vector<128x128xf32>, vector<32x128xf32> -> vector<32x128xf32>
    %227 = arith.addf %226, %3 : vector<32x128xf32>
    %c8_i32_92 = arith.constant 8 : i32
    %228 = arith.muli %arg1, %c8_i32_92 : i32
    %c3_i32 = arith.constant 3 : i32
    %229 = arith.addi %228, %c3_i32 : i32
    %c0_i32_93 = arith.constant 0 : i32
    %230 = arith.addi %c0_i32_93, %229 : i32
    %231 = arith.index_cast %230 : i32 to index
    %232 = memref.load %arg2[%231] : memref<192xi32, #tpu.memory_space<smem>>
    %233 = arith.index_cast %230 : i32 to index
    %234 = memref.load %arg3[%233] : memref<192xf32, #tpu.memory_space<smem>>
    %c0_94 = arith.constant 0 : index
    %235 = arith.index_cast %232 : i32 to index
    %c0_95 = arith.constant 0 : index
    %c0_96 = arith.constant 0 : index
    %236 = vector.load %arg5[%c0_94, %235, %c0_95, %c0_96] : memref<1x16x32x128xf32, #tpu.memory_space<vmem>>, vector<1x1x32x128xf32>
    %237 = vector.shape_cast %236 : vector<1x1x32x128xf32> to vector<32x128xf32>
    %238 = vector.broadcast %234 : f32 to vector<32x128xf32>
    %239 = arith.mulf %238, %237 : vector<32x128xf32>
    %240 = arith.addf %227, %239 : vector<32x128xf32>
    %c32_i32_97 = arith.constant 32 : i32
    %241 = arith.addi %c32_i32_97, %229 : i32
    %242 = arith.index_cast %241 : i32 to index
    %243 = memref.load %arg2[%242] : memref<192xi32, #tpu.memory_space<smem>>
    %244 = arith.index_cast %241 : i32 to index
    %245 = memref.load %arg3[%244] : memref<192xf32, #tpu.memory_space<smem>>
    %c0_98 = arith.constant 0 : index
    %246 = arith.index_cast %243 : i32 to index
    %c0_99 = arith.constant 0 : index
    %c0_100 = arith.constant 0 : index
    %247 = vector.load %arg5[%c0_98, %246, %c0_99, %c0_100] : memref<1x16x32x128xf32, #tpu.memory_space<vmem>>, vector<1x1x32x128xf32>
    %248 = vector.shape_cast %247 : vector<1x1x32x128xf32> to vector<32x128xf32>
    %249 = vector.broadcast %245 : f32 to vector<32x128xf32>
    %250 = arith.mulf %249, %248 : vector<32x128xf32>
    %251 = arith.addf %240, %250 : vector<32x128xf32>
    %c64_i32_101 = arith.constant 64 : i32
    %252 = arith.addi %c64_i32_101, %229 : i32
    %253 = arith.index_cast %252 : i32 to index
    %254 = memref.load %arg2[%253] : memref<192xi32, #tpu.memory_space<smem>>
    %255 = arith.index_cast %252 : i32 to index
    %256 = memref.load %arg3[%255] : memref<192xf32, #tpu.memory_space<smem>>
    %c0_102 = arith.constant 0 : index
    %257 = arith.index_cast %254 : i32 to index
    %c0_103 = arith.constant 0 : index
    %c0_104 = arith.constant 0 : index
    %258 = vector.load %arg6[%c0_102, %257, %c0_103, %c0_104] : memref<1x8x32x128xf32, #tpu.memory_space<vmem>>, vector<1x1x32x128xf32>
    %259 = vector.shape_cast %258 : vector<1x1x32x128xf32> to vector<32x128xf32>
    %260 = vector.broadcast %256 : f32 to vector<32x128xf32>
    %261 = arith.mulf %260, %259 : vector<32x128xf32>
    %262 = arith.addf %251, %261 : vector<32x128xf32>
    %c96_i32_105 = arith.constant 96 : i32
    %263 = arith.addi %c96_i32_105, %229 : i32
    %264 = arith.index_cast %263 : i32 to index
    %265 = memref.load %arg2[%264] : memref<192xi32, #tpu.memory_space<smem>>
    %266 = arith.index_cast %263 : i32 to index
    %267 = memref.load %arg3[%266] : memref<192xf32, #tpu.memory_space<smem>>
    %c0_106 = arith.constant 0 : index
    %268 = arith.index_cast %265 : i32 to index
    %c0_107 = arith.constant 0 : index
    %c0_108 = arith.constant 0 : index
    %269 = vector.load %arg6[%c0_106, %268, %c0_107, %c0_108] : memref<1x8x32x128xf32, #tpu.memory_space<vmem>>, vector<1x1x32x128xf32>
    %270 = vector.shape_cast %269 : vector<1x1x32x128xf32> to vector<32x128xf32>
    %271 = vector.broadcast %267 : f32 to vector<32x128xf32>
    %272 = arith.mulf %271, %270 : vector<32x128xf32>
    %273 = arith.addf %262, %272 : vector<32x128xf32>
    %c128_i32_109 = arith.constant 128 : i32
    %274 = arith.addi %c128_i32_109, %229 : i32
    %275 = arith.index_cast %274 : i32 to index
    %276 = memref.load %arg2[%275] : memref<192xi32, #tpu.memory_space<smem>>
    %277 = arith.index_cast %274 : i32 to index
    %278 = memref.load %arg3[%277] : memref<192xf32, #tpu.memory_space<smem>>
    %c0_110 = arith.constant 0 : index
    %279 = arith.index_cast %276 : i32 to index
    %c0_111 = arith.constant 0 : index
    %c0_112 = arith.constant 0 : index
    %280 = vector.load %arg7[%c0_110, %279, %c0_111, %c0_112] : memref<1x4x32x128xf32, #tpu.memory_space<vmem>>, vector<1x1x32x128xf32>
    %281 = vector.shape_cast %280 : vector<1x1x32x128xf32> to vector<32x128xf32>
    %282 = vector.broadcast %278 : f32 to vector<32x128xf32>
    %283 = arith.mulf %282, %281 : vector<32x128xf32>
    %284 = arith.addf %273, %283 : vector<32x128xf32>
    %c160_i32_113 = arith.constant 160 : i32
    %285 = arith.addi %c160_i32_113, %229 : i32
    %286 = arith.index_cast %285 : i32 to index
    %287 = memref.load %arg2[%286] : memref<192xi32, #tpu.memory_space<smem>>
    %288 = arith.index_cast %285 : i32 to index
    %289 = memref.load %arg3[%288] : memref<192xf32, #tpu.memory_space<smem>>
    %c0_114 = arith.constant 0 : index
    %290 = arith.index_cast %287 : i32 to index
    %c0_115 = arith.constant 0 : index
    %c0_116 = arith.constant 0 : index
    %291 = vector.load %arg7[%c0_114, %290, %c0_115, %c0_116] : memref<1x4x32x128xf32, #tpu.memory_space<vmem>>, vector<1x1x32x128xf32>
    %292 = vector.shape_cast %291 : vector<1x1x32x128xf32> to vector<32x128xf32>
    %293 = vector.broadcast %289 : f32 to vector<32x128xf32>
    %294 = arith.mulf %293, %292 : vector<32x128xf32>
    %295 = arith.addf %284, %294 : vector<32x128xf32>
    %296 = arith.maximumf %223, %295 : vector<32x128xf32>
    %c0_117 = arith.constant 0 : index
    %c1_118 = arith.constant 1 : index
    %c0_119 = arith.constant 0 : index
    %c0_120 = arith.constant 0 : index
    %297 = vector.load %arg10[%c0_117, %c1_118, %c0_119, %c0_120] : memref<1x4x32x128xf32, #tpu.memory_space<vmem>>, vector<1x1x32x128xf32>
    %298 = vector.shape_cast %297 : vector<1x1x32x128xf32> to vector<32x128xf32>
    %299 = vector.shape_cast %296 : vector<32x128xf32> to vector<1x1x32x128xf32>
    tpu.vector_store %arg10[%c0_117, %c1_118, %c0_119, %c0_120], %299 {strides = array<i32>} : memref<1x4x32x128xf32, #tpu.memory_space<vmem>>, vector<1x1x32x128xf32>,
    %c0_121 = arith.constant 0 : index
    %c4 = arith.constant 4 : index
    %c0_122 = arith.constant 0 : index
    %c0_123 = arith.constant 0 : index
    %300 = vector.load %arg4[%c0_121, %c4, %c0_122, %c0_123] : memref<1x8x32x128xf32, #tpu.memory_space<vmem>>, vector<1x1x32x128xf32>
    %301 = vector.shape_cast %300 : vector<1x1x32x128xf32> to vector<32x128xf32>
    %cst_124 = arith.constant dense<0.000000e+00> : vector<32x128xf32>
    %302 = tpu.matmul %301, %0, %cst_124 {dimension_numbers = #tpu.dot_dimension_numbers<[1], [0], [0], [1], [0, 0, 1, 1], [], []>} : vector<32x128xf32>, vector<128x128xf32>, vector<32x128xf32> -> vector<32x128xf32>
    %303 = arith.addf %302, %3 : vector<32x128xf32>
    %c8_i32_125 = arith.constant 8 : i32
    %304 = arith.muli %arg1, %c8_i32_125 : i32
    %c4_i32 = arith.constant 4 : i32
    %305 = arith.addi %304, %c4_i32 : i32
    %c0_i32_126 = arith.constant 0 : i32
    %306 = arith.addi %c0_i32_126, %305 : i32
    %307 = arith.index_cast %306 : i32 to index
    %308 = memref.load %arg2[%307] : memref<192xi32, #tpu.memory_space<smem>>
    %309 = arith.index_cast %306 : i32 to index
    %310 = memref.load %arg3[%309] : memref<192xf32, #tpu.memory_space<smem>>
    %c0_127 = arith.constant 0 : index
    %311 = arith.index_cast %308 : i32 to index
    %c0_128 = arith.constant 0 : index
    %c0_129 = arith.constant 0 : index
    %312 = vector.load %arg5[%c0_127, %311, %c0_128, %c0_129] : memref<1x16x32x128xf32, #tpu.memory_space<vmem>>, vector<1x1x32x128xf32>
    %313 = vector.shape_cast %312 : vector<1x1x32x128xf32> to vector<32x128xf32>
    %314 = vector.broadcast %310 : f32 to vector<32x128xf32>
    %315 = arith.mulf %314, %313 : vector<32x128xf32>
    %316 = arith.addf %303, %315 : vector<32x128xf32>
    %c32_i32_130 = arith.constant 32 : i32
    %317 = arith.addi %c32_i32_130, %305 : i32
    %318 = arith.index_cast %317 : i32 to index
    %319 = memref.load %arg2[%318] : memref<192xi32, #tpu.memory_space<smem>>
    %320 = arith.index_cast %317 : i32 to index
    %321 = memref.load %arg3[%320] : memref<192xf32, #tpu.memory_space<smem>>
    %c0_131 = arith.constant 0 : index
    %322 = arith.index_cast %319 : i32 to index
    %c0_132 = arith.constant 0 : index
    %c0_133 = arith.constant 0 : index
    %323 = vector.load %arg5[%c0_131, %322, %c0_132, %c0_133] : memref<1x16x32x128xf32, #tpu.memory_space<vmem>>, vector<1x1x32x128xf32>
    %324 = vector.shape_cast %323 : vector<1x1x32x128xf32> to vector<32x128xf32>
    %325 = vector.broadcast %321 : f32 to vector<32x128xf32>
    %326 = arith.mulf %325, %324 : vector<32x128xf32>
    %327 = arith.addf %316, %326 : vector<32x128xf32>
    %c64_i32_134 = arith.constant 64 : i32
    %328 = arith.addi %c64_i32_134, %305 : i32
    %329 = arith.index_cast %328 : i32 to index
    %330 = memref.load %arg2[%329] : memref<192xi32, #tpu.memory_space<smem>>
    %331 = arith.index_cast %328 : i32 to index
    %332 = memref.load %arg3[%331] : memref<192xf32, #tpu.memory_space<smem>>
    %c0_135 = arith.constant 0 : index
    %333 = arith.index_cast %330 : i32 to index
    %c0_136 = arith.constant 0 : index
    %c0_137 = arith.constant 0 : index
    %334 = vector.load %arg6[%c0_135, %333, %c0_136, %c0_137] : memref<1x8x32x128xf32, #tpu.memory_space<vmem>>, vector<1x1x32x128xf32>
    %335 = vector.shape_cast %334 : vector<1x1x32x128xf32> to vector<32x128xf32>
    %336 = vector.broadcast %332 : f32 to vector<32x128xf32>
    %337 = arith.mulf %336, %335 : vector<32x128xf32>
    %338 = arith.addf %327, %337 : vector<32x128xf32>
    %c96_i32_138 = arith.constant 96 : i32
    %339 = arith.addi %c96_i32_138, %305 : i32
    %340 = arith.index_cast %339 : i32 to index
    %341 = memref.load %arg2[%340] : memref<192xi32, #tpu.memory_space<smem>>
    %342 = arith.index_cast %339 : i32 to index
    %343 = memref.load %arg3[%342] : memref<192xf32, #tpu.memory_space<smem>>
    %c0_139 = arith.constant 0 : index
    %344 = arith.index_cast %341 : i32 to index
    %c0_140 = arith.constant 0 : index
    %c0_141 = arith.constant 0 : index
    %345 = vector.load %arg6[%c0_139, %344, %c0_140, %c0_141] : memref<1x8x32x128xf32, #tpu.memory_space<vmem>>, vector<1x1x32x128xf32>
    %346 = vector.shape_cast %345 : vector<1x1x32x128xf32> to vector<32x128xf32>
    %347 = vector.broadcast %343 : f32 to vector<32x128xf32>
    %348 = arith.mulf %347, %346 : vector<32x128xf32>
    %349 = arith.addf %338, %348 : vector<32x128xf32>
    %c128_i32_142 = arith.constant 128 : i32
    %350 = arith.addi %c128_i32_142, %305 : i32
    %351 = arith.index_cast %350 : i32 to index
    %352 = memref.load %arg2[%351] : memref<192xi32, #tpu.memory_space<smem>>
    %353 = arith.index_cast %350 : i32 to index
    %354 = memref.load %arg3[%353] : memref<192xf32, #tpu.memory_space<smem>>
    %c0_143 = arith.constant 0 : index
    %355 = arith.index_cast %352 : i32 to index
    %c0_144 = arith.constant 0 : index
    %c0_145 = arith.constant 0 : index
    %356 = vector.load %arg7[%c0_143, %355, %c0_144, %c0_145] : memref<1x4x32x128xf32, #tpu.memory_space<vmem>>, vector<1x1x32x128xf32>
    %357 = vector.shape_cast %356 : vector<1x1x32x128xf32> to vector<32x128xf32>
    %358 = vector.broadcast %354 : f32 to vector<32x128xf32>
    %359 = arith.mulf %358, %357 : vector<32x128xf32>
    %360 = arith.addf %349, %359 : vector<32x128xf32>
    %c160_i32_146 = arith.constant 160 : i32
    %361 = arith.addi %c160_i32_146, %305 : i32
    %362 = arith.index_cast %361 : i32 to index
    %363 = memref.load %arg2[%362] : memref<192xi32, #tpu.memory_space<smem>>
    %364 = arith.index_cast %361 : i32 to index
    %365 = memref.load %arg3[%364] : memref<192xf32, #tpu.memory_space<smem>>
    %c0_147 = arith.constant 0 : index
    %366 = arith.index_cast %363 : i32 to index
    %c0_148 = arith.constant 0 : index
    %c0_149 = arith.constant 0 : index
    %367 = vector.load %arg7[%c0_147, %366, %c0_148, %c0_149] : memref<1x4x32x128xf32, #tpu.memory_space<vmem>>, vector<1x1x32x128xf32>
    %368 = vector.shape_cast %367 : vector<1x1x32x128xf32> to vector<32x128xf32>
    %369 = vector.broadcast %365 : f32 to vector<32x128xf32>
    %370 = arith.mulf %369, %368 : vector<32x128xf32>
    %371 = arith.addf %360, %370 : vector<32x128xf32>
    %c0_150 = arith.constant 0 : index
    %c5 = arith.constant 5 : index
    %c0_151 = arith.constant 0 : index
    %c0_152 = arith.constant 0 : index
    %372 = vector.load %arg4[%c0_150, %c5, %c0_151, %c0_152] : memref<1x8x32x128xf32, #tpu.memory_space<vmem>>, vector<1x1x32x128xf32>
    %373 = vector.shape_cast %372 : vector<1x1x32x128xf32> to vector<32x128xf32>
    %cst_153 = arith.constant dense<0.000000e+00> : vector<32x128xf32>
    %374 = tpu.matmul %373, %0, %cst_153 {dimension_numbers = #tpu.dot_dimension_numbers<[1], [0], [0], [1], [0, 0, 1, 1], [], []>} : vector<32x128xf32>, vector<128x128xf32>, vector<32x128xf32> -> vector<32x128xf32>
    %375 = arith.addf %374, %3 : vector<32x128xf32>
    %c8_i32_154 = arith.constant 8 : i32
    %376 = arith.muli %arg1, %c8_i32_154 : i32
    %c5_i32 = arith.constant 5 : i32
    %377 = arith.addi %376, %c5_i32 : i32
    %c0_i32_155 = arith.constant 0 : i32
    %378 = arith.addi %c0_i32_155, %377 : i32
    %379 = arith.index_cast %378 : i32 to index
    %380 = memref.load %arg2[%379] : memref<192xi32, #tpu.memory_space<smem>>
    %381 = arith.index_cast %378 : i32 to index
    %382 = memref.load %arg3[%381] : memref<192xf32, #tpu.memory_space<smem>>
    %c0_156 = arith.constant 0 : index
    %383 = arith.index_cast %380 : i32 to index
    %c0_157 = arith.constant 0 : index
    %c0_158 = arith.constant 0 : index
    %384 = vector.load %arg5[%c0_156, %383, %c0_157, %c0_158] : memref<1x16x32x128xf32, #tpu.memory_space<vmem>>, vector<1x1x32x128xf32>
    %385 = vector.shape_cast %384 : vector<1x1x32x128xf32> to vector<32x128xf32>
    %386 = vector.broadcast %382 : f32 to vector<32x128xf32>
    %387 = arith.mulf %386, %385 : vector<32x128xf32>
    %388 = arith.addf %375, %387 : vector<32x128xf32>
    %c32_i32_159 = arith.constant 32 : i32
    %389 = arith.addi %c32_i32_159, %377 : i32
    %390 = arith.index_cast %389 : i32 to index
    %391 = memref.load %arg2[%390] : memref<192xi32, #tpu.memory_space<smem>>
    %392 = arith.index_cast %389 : i32 to index
    %393 = memref.load %arg3[%392] : memref<192xf32, #tpu.memory_space<smem>>
    %c0_160 = arith.constant 0 : index
    %394 = arith.index_cast %391 : i32 to index
    %c0_161 = arith.constant 0 : index
    %c0_162 = arith.constant 0 : index
    %395 = vector.load %arg5[%c0_160, %394, %c0_161, %c0_162] : memref<1x16x32x128xf32, #tpu.memory_space<vmem>>, vector<1x1x32x128xf32>
    %396 = vector.shape_cast %395 : vector<1x1x32x128xf32> to vector<32x128xf32>
    %397 = vector.broadcast %393 : f32 to vector<32x128xf32>
    %398 = arith.mulf %397, %396 : vector<32x128xf32>
    %399 = arith.addf %388, %398 : vector<32x128xf32>
    %c64_i32_163 = arith.constant 64 : i32
    %400 = arith.addi %c64_i32_163, %377 : i32
    %401 = arith.index_cast %400 : i32 to index
    %402 = memref.load %arg2[%401] : memref<192xi32, #tpu.memory_space<smem>>
    %403 = arith.index_cast %400 : i32 to index
    %404 = memref.load %arg3[%403] : memref<192xf32, #tpu.memory_space<smem>>
    %c0_164 = arith.constant 0 : index
    %405 = arith.index_cast %402 : i32 to index
    %c0_165 = arith.constant 0 : index
    %c0_166 = arith.constant 0 : index
    %406 = vector.load %arg6[%c0_164, %405, %c0_165, %c0_166] : memref<1x8x32x128xf32, #tpu.memory_space<vmem>>, vector<1x1x32x128xf32>
    %407 = vector.shape_cast %406 : vector<1x1x32x128xf32> to vector<32x128xf32>
    %408 = vector.broadcast %404 : f32 to vector<32x128xf32>
    %409 = arith.mulf %408, %407 : vector<32x128xf32>
    %410 = arith.addf %399, %409 : vector<32x128xf32>
    %c96_i32_167 = arith.constant 96 : i32
    %411 = arith.addi %c96_i32_167, %377 : i32
    %412 = arith.index_cast %411 : i32 to index
    %413 = memref.load %arg2[%412] : memref<192xi32, #tpu.memory_space<smem>>
    %414 = arith.index_cast %411 : i32 to index
    %415 = memref.load %arg3[%414] : memref<192xf32, #tpu.memory_space<smem>>
    %c0_168 = arith.constant 0 : index
    %416 = arith.index_cast %413 : i32 to index
    %c0_169 = arith.constant 0 : index
    %c0_170 = arith.constant 0 : index
    %417 = vector.load %arg6[%c0_168, %416, %c0_169, %c0_170] : memref<1x8x32x128xf32, #tpu.memory_space<vmem>>, vector<1x1x32x128xf32>
    %418 = vector.shape_cast %417 : vector<1x1x32x128xf32> to vector<32x128xf32>
    %419 = vector.broadcast %415 : f32 to vector<32x128xf32>
    %420 = arith.mulf %419, %418 : vector<32x128xf32>
    %421 = arith.addf %410, %420 : vector<32x128xf32>
    %c128_i32_171 = arith.constant 128 : i32
    %422 = arith.addi %c128_i32_171, %377 : i32
    %423 = arith.index_cast %422 : i32 to index
    %424 = memref.load %arg2[%423] : memref<192xi32, #tpu.memory_space<smem>>
    %425 = arith.index_cast %422 : i32 to index
    %426 = memref.load %arg3[%425] : memref<192xf32, #tpu.memory_space<smem>>
    %c0_172 = arith.constant 0 : index
    %427 = arith.index_cast %424 : i32 to index
    %c0_173 = arith.constant 0 : index
    %c0_174 = arith.constant 0 : index
    %428 = vector.load %arg7[%c0_172, %427, %c0_173, %c0_174] : memref<1x4x32x128xf32, #tpu.memory_space<vmem>>, vector<1x1x32x128xf32>
    %429 = vector.shape_cast %428 : vector<1x1x32x128xf32> to vector<32x128xf32>
    %430 = vector.broadcast %426 : f32 to vector<32x128xf32>
    %431 = arith.mulf %430, %429 : vector<32x128xf32>
    %432 = arith.addf %421, %431 : vector<32x128xf32>
    %c160_i32_175 = arith.constant 160 : i32
    %433 = arith.addi %c160_i32_175, %377 : i32
    %434 = arith.index_cast %433 : i32 to index
    %435 = memref.load %arg2[%434] : memref<192xi32, #tpu.memory_space<smem>>
    %436 = arith.index_cast %433 : i32 to index
    %437 = memref.load %arg3[%436] : memref<192xf32, #tpu.memory_space<smem>>
    %c0_176 = arith.constant 0 : index
    %438 = arith.index_cast %435 : i32 to index
    %c0_177 = arith.constant 0 : index
    %c0_178 = arith.constant 0 : index
    %439 = vector.load %arg7[%c0_176, %438, %c0_177, %c0_178] : memref<1x4x32x128xf32, #tpu.memory_space<vmem>>, vector<1x1x32x128xf32>
    %440 = vector.shape_cast %439 : vector<1x1x32x128xf32> to vector<32x128xf32>
    %441 = vector.broadcast %437 : f32 to vector<32x128xf32>
    %442 = arith.mulf %441, %440 : vector<32x128xf32>
    %443 = arith.addf %432, %442 : vector<32x128xf32>
    %444 = arith.maximumf %371, %443 : vector<32x128xf32>
    %c0_179 = arith.constant 0 : index
    %c2_180 = arith.constant 2 : index
    %c0_181 = arith.constant 0 : index
    %c0_182 = arith.constant 0 : index
    %445 = vector.load %arg10[%c0_179, %c2_180, %c0_181, %c0_182] : memref<1x4x32x128xf32, #tpu.memory_space<vmem>>, vector<1x1x32x128xf32>
    %446 = vector.shape_cast %445 : vector<1x1x32x128xf32> to vector<32x128xf32>
    %447 = vector.shape_cast %444 : vector<32x128xf32> to vector<1x1x32x128xf32>
    tpu.vector_store %arg10[%c0_179, %c2_180, %c0_181, %c0_182], %447 {strides = array<i32>} : memref<1x4x32x128xf32, #tpu.memory_space<vmem>>, vector<1x1x32x128xf32>,
    %c0_183 = arith.constant 0 : index
    %c6 = arith.constant 6 : index
    %c0_184 = arith.constant 0 : index
    %c0_185 = arith.constant 0 : index
    %448 = vector.load %arg4[%c0_183, %c6, %c0_184, %c0_185] : memref<1x8x32x128xf32, #tpu.memory_space<vmem>>, vector<1x1x32x128xf32>
    %449 = vector.shape_cast %448 : vector<1x1x32x128xf32> to vector<32x128xf32>
    %cst_186 = arith.constant dense<0.000000e+00> : vector<32x128xf32>
    %450 = tpu.matmul %449, %0, %cst_186 {dimension_numbers = #tpu.dot_dimension_numbers<[1], [0], [0], [1], [0, 0, 1, 1], [], []>} : vector<32x128xf32>, vector<128x128xf32>, vector<32x128xf32> -> vector<32x128xf32>
    %451 = arith.addf %450, %3 : vector<32x128xf32>
    %c8_i32_187 = arith.constant 8 : i32
    %452 = arith.muli %arg1, %c8_i32_187 : i32
    %c6_i32 = arith.constant 6 : i32
    %453 = arith.addi %452, %c6_i32 : i32
    %c0_i32_188 = arith.constant 0 : i32
    %454 = arith.addi %c0_i32_188, %453 : i32
    %455 = arith.index_cast %454 : i32 to index
    %456 = memref.load %arg2[%455] : memref<192xi32, #tpu.memory_space<smem>>
    %457 = arith.index_cast %454 : i32 to index
    %458 = memref.load %arg3[%457] : memref<192xf32, #tpu.memory_space<smem>>
    %c0_189 = arith.constant 0 : index
    %459 = arith.index_cast %456 : i32 to index
    %c0_190 = arith.constant 0 : index
    %c0_191 = arith.constant 0 : index
    %460 = vector.load %arg5[%c0_189, %459, %c0_190, %c0_191] : memref<1x16x32x128xf32, #tpu.memory_space<vmem>>, vector<1x1x32x128xf32>
    %461 = vector.shape_cast %460 : vector<1x1x32x128xf32> to vector<32x128xf32>
    %462 = vector.broadcast %458 : f32 to vector<32x128xf32>
    %463 = arith.mulf %462, %461 : vector<32x128xf32>
    %464 = arith.addf %451, %463 : vector<32x128xf32>
    %c32_i32_192 = arith.constant 32 : i32
    %465 = arith.addi %c32_i32_192, %453 : i32
    %466 = arith.index_cast %465 : i32 to index
    %467 = memref.load %arg2[%466] : memref<192xi32, #tpu.memory_space<smem>>
    %468 = arith.index_cast %465 : i32 to index
    %469 = memref.load %arg3[%468] : memref<192xf32, #tpu.memory_space<smem>>
    %c0_193 = arith.constant 0 : index
    %470 = arith.index_cast %467 : i32 to index
    %c0_194 = arith.constant 0 : index
    %c0_195 = arith.constant 0 : index
    %471 = vector.load %arg5[%c0_193, %470, %c0_194, %c0_195] : memref<1x16x32x128xf32, #tpu.memory_space<vmem>>, vector<1x1x32x128xf32>
    %472 = vector.shape_cast %471 : vector<1x1x32x128xf32> to vector<32x128xf32>
    %473 = vector.broadcast %469 : f32 to vector<32x128xf32>
    %474 = arith.mulf %473, %472 : vector<32x128xf32>
    %475 = arith.addf %464, %474 : vector<32x128xf32>
    %c64_i32_196 = arith.constant 64 : i32
    %476 = arith.addi %c64_i32_196, %453 : i32
    %477 = arith.index_cast %476 : i32 to index
    %478 = memref.load %arg2[%477] : memref<192xi32, #tpu.memory_space<smem>>
    %479 = arith.index_cast %476 : i32 to index
    %480 = memref.load %arg3[%479] : memref<192xf32, #tpu.memory_space<smem>>
    %c0_197 = arith.constant 0 : index
    %481 = arith.index_cast %478 : i32 to index
    %c0_198 = arith.constant 0 : index
    %c0_199 = arith.constant 0 : index
    %482 = vector.load %arg6[%c0_197, %481, %c0_198, %c0_199] : memref<1x8x32x128xf32, #tpu.memory_space<vmem>>, vector<1x1x32x128xf32>
    %483 = vector.shape_cast %482 : vector<1x1x32x128xf32> to vector<32x128xf32>
    %484 = vector.broadcast %480 : f32 to vector<32x128xf32>
    %485 = arith.mulf %484, %483 : vector<32x128xf32>
    %486 = arith.addf %475, %485 : vector<32x128xf32>
    %c96_i32_200 = arith.constant 96 : i32
    %487 = arith.addi %c96_i32_200, %453 : i32
    %488 = arith.index_cast %487 : i32 to index
    %489 = memref.load %arg2[%488] : memref<192xi32, #tpu.memory_space<smem>>
    %490 = arith.index_cast %487 : i32 to index
    %491 = memref.load %arg3[%490] : memref<192xf32, #tpu.memory_space<smem>>
    %c0_201 = arith.constant 0 : index
    %492 = arith.index_cast %489 : i32 to index
    %c0_202 = arith.constant 0 : index
    %c0_203 = arith.constant 0 : index
    %493 = vector.load %arg6[%c0_201, %492, %c0_202, %c0_203] : memref<1x8x32x128xf32, #tpu.memory_space<vmem>>, vector<1x1x32x128xf32>
    %494 = vector.shape_cast %493 : vector<1x1x32x128xf32> to vector<32x128xf32>
    %495 = vector.broadcast %491 : f32 to vector<32x128xf32>
    %496 = arith.mulf %495, %494 : vector<32x128xf32>
    %497 = arith.addf %486, %496 : vector<32x128xf32>
    %c128_i32_204 = arith.constant 128 : i32
    %498 = arith.addi %c128_i32_204, %453 : i32
    %499 = arith.index_cast %498 : i32 to index
    %500 = memref.load %arg2[%499] : memref<192xi32, #tpu.memory_space<smem>>
    %501 = arith.index_cast %498 : i32 to index
    %502 = memref.load %arg3[%501] : memref<192xf32, #tpu.memory_space<smem>>
    %c0_205 = arith.constant 0 : index
    %503 = arith.index_cast %500 : i32 to index
    %c0_206 = arith.constant 0 : index
    %c0_207 = arith.constant 0 : index
    %504 = vector.load %arg7[%c0_205, %503, %c0_206, %c0_207] : memref<1x4x32x128xf32, #tpu.memory_space<vmem>>, vector<1x1x32x128xf32>
    %505 = vector.shape_cast %504 : vector<1x1x32x128xf32> to vector<32x128xf32>
    %506 = vector.broadcast %502 : f32 to vector<32x128xf32>
    %507 = arith.mulf %506, %505 : vector<32x128xf32>
    %508 = arith.addf %497, %507 : vector<32x128xf32>
    %c160_i32_208 = arith.constant 160 : i32
    %509 = arith.addi %c160_i32_208, %453 : i32
    %510 = arith.index_cast %509 : i32 to index
    %511 = memref.load %arg2[%510] : memref<192xi32, #tpu.memory_space<smem>>
    %512 = arith.index_cast %509 : i32 to index
    %513 = memref.load %arg3[%512] : memref<192xf32, #tpu.memory_space<smem>>
    %c0_209 = arith.constant 0 : index
    %514 = arith.index_cast %511 : i32 to index
    %c0_210 = arith.constant 0 : index
    %c0_211 = arith.constant 0 : index
    %515 = vector.load %arg7[%c0_209, %514, %c0_210, %c0_211] : memref<1x4x32x128xf32, #tpu.memory_space<vmem>>, vector<1x1x32x128xf32>
    %516 = vector.shape_cast %515 : vector<1x1x32x128xf32> to vector<32x128xf32>
    %517 = vector.broadcast %513 : f32 to vector<32x128xf32>
    %518 = arith.mulf %517, %516 : vector<32x128xf32>
    %519 = arith.addf %508, %518 : vector<32x128xf32>
    %c0_212 = arith.constant 0 : index
    %c7 = arith.constant 7 : index
    %c0_213 = arith.constant 0 : index
    %c0_214 = arith.constant 0 : index
    %520 = vector.load %arg4[%c0_212, %c7, %c0_213, %c0_214] : memref<1x8x32x128xf32, #tpu.memory_space<vmem>>, vector<1x1x32x128xf32>
    %521 = vector.shape_cast %520 : vector<1x1x32x128xf32> to vector<32x128xf32>
    %cst_215 = arith.constant dense<0.000000e+00> : vector<32x128xf32>
    %522 = tpu.matmul %521, %0, %cst_215 {dimension_numbers = #tpu.dot_dimension_numbers<[1], [0], [0], [1], [0, 0, 1, 1], [], []>} : vector<32x128xf32>, vector<128x128xf32>, vector<32x128xf32> -> vector<32x128xf32>
    %523 = arith.addf %522, %3 : vector<32x128xf32>
    %c8_i32_216 = arith.constant 8 : i32
    %524 = arith.muli %arg1, %c8_i32_216 : i32
    %c7_i32 = arith.constant 7 : i32
    %525 = arith.addi %524, %c7_i32 : i32
    %c0_i32_217 = arith.constant 0 : i32
    %526 = arith.addi %c0_i32_217, %525 : i32
    %527 = arith.index_cast %526 : i32 to index
    %528 = memref.load %arg2[%527] : memref<192xi32, #tpu.memory_space<smem>>
    %529 = arith.index_cast %526 : i32 to index
    %530 = memref.load %arg3[%529] : memref<192xf32, #tpu.memory_space<smem>>
    %c0_218 = arith.constant 0 : index
    %531 = arith.index_cast %528 : i32 to index
    %c0_219 = arith.constant 0 : index
    %c0_220 = arith.constant 0 : index
    %532 = vector.load %arg5[%c0_218, %531, %c0_219, %c0_220] : memref<1x16x32x128xf32, #tpu.memory_space<vmem>>, vector<1x1x32x128xf32>
    %533 = vector.shape_cast %532 : vector<1x1x32x128xf32> to vector<32x128xf32>
    %534 = vector.broadcast %530 : f32 to vector<32x128xf32>
    %535 = arith.mulf %534, %533 : vector<32x128xf32>
    %536 = arith.addf %523, %535 : vector<32x128xf32>
    %c32_i32_221 = arith.constant 32 : i32
    %537 = arith.addi %c32_i32_221, %525 : i32
    %538 = arith.index_cast %537 : i32 to index
    %539 = memref.load %arg2[%538] : memref<192xi32, #tpu.memory_space<smem>>
    %540 = arith.index_cast %537 : i32 to index
    %541 = memref.load %arg3[%540] : memref<192xf32, #tpu.memory_space<smem>>
    %c0_222 = arith.constant 0 : index
    %542 = arith.index_cast %539 : i32 to index
    %c0_223 = arith.constant 0 : index
    %c0_224 = arith.constant 0 : index
    %543 = vector.load %arg5[%c0_222, %542, %c0_223, %c0_224] : memref<1x16x32x128xf32, #tpu.memory_space<vmem>>, vector<1x1x32x128xf32>
    %544 = vector.shape_cast %543 : vector<1x1x32x128xf32> to vector<32x128xf32>
    %545 = vector.broadcast %541 : f32 to vector<32x128xf32>
    %546 = arith.mulf %545, %544 : vector<32x128xf32>
    %547 = arith.addf %536, %546 : vector<32x128xf32>
    %c64_i32_225 = arith.constant 64 : i32
    %548 = arith.addi %c64_i32_225, %525 : i32
    %549 = arith.index_cast %548 : i32 to index
    %550 = memref.load %arg2[%549] : memref<192xi32, #tpu.memory_space<smem>>
    %551 = arith.index_cast %548 : i32 to index
    %552 = memref.load %arg3[%551] : memref<192xf32, #tpu.memory_space<smem>>
    %c0_226 = arith.constant 0 : index
    %553 = arith.index_cast %550 : i32 to index
    %c0_227 = arith.constant 0 : index
    %c0_228 = arith.constant 0 : index
    %554 = vector.load %arg6[%c0_226, %553, %c0_227, %c0_228] : memref<1x8x32x128xf32, #tpu.memory_space<vmem>>, vector<1x1x32x128xf32>
    %555 = vector.shape_cast %554 : vector<1x1x32x128xf32> to vector<32x128xf32>
    %556 = vector.broadcast %552 : f32 to vector<32x128xf32>
    %557 = arith.mulf %556, %555 : vector<32x128xf32>
    %558 = arith.addf %547, %557 : vector<32x128xf32>
    %c96_i32_229 = arith.constant 96 : i32
    %559 = arith.addi %c96_i32_229, %525 : i32
    %560 = arith.index_cast %559 : i32 to index
    %561 = memref.load %arg2[%560] : memref<192xi32, #tpu.memory_space<smem>>
    %562 = arith.index_cast %559 : i32 to index
    %563 = memref.load %arg3[%562] : memref<192xf32, #tpu.memory_space<smem>>
    %c0_230 = arith.constant 0 : index
    %564 = arith.index_cast %561 : i32 to index
    %c0_231 = arith.constant 0 : index
    %c0_232 = arith.constant 0 : index
    %565 = vector.load %arg6[%c0_230, %564, %c0_231, %c0_232] : memref<1x8x32x128xf32, #tpu.memory_space<vmem>>, vector<1x1x32x128xf32>
    %566 = vector.shape_cast %565 : vector<1x1x32x128xf32> to vector<32x128xf32>
    %567 = vector.broadcast %563 : f32 to vector<32x128xf32>
    %568 = arith.mulf %567, %566 : vector<32x128xf32>
    %569 = arith.addf %558, %568 : vector<32x128xf32>
    %c128_i32_233 = arith.constant 128 : i32
    %570 = arith.addi %c128_i32_233, %525 : i32
    %571 = arith.index_cast %570 : i32 to index
    %572 = memref.load %arg2[%571] : memref<192xi32, #tpu.memory_space<smem>>
    %573 = arith.index_cast %570 : i32 to index
    %574 = memref.load %arg3[%573] : memref<192xf32, #tpu.memory_space<smem>>
    %c0_234 = arith.constant 0 : index
    %575 = arith.index_cast %572 : i32 to index
    %c0_235 = arith.constant 0 : index
    %c0_236 = arith.constant 0 : index
    %576 = vector.load %arg7[%c0_234, %575, %c0_235, %c0_236] : memref<1x4x32x128xf32, #tpu.memory_space<vmem>>, vector<1x1x32x128xf32>
    %577 = vector.shape_cast %576 : vector<1x1x32x128xf32> to vector<32x128xf32>
    %578 = vector.broadcast %574 : f32 to vector<32x128xf32>
    %579 = arith.mulf %578, %577 : vector<32x128xf32>
    %580 = arith.addf %569, %579 : vector<32x128xf32>
    %c160_i32_237 = arith.constant 160 : i32
    %581 = arith.addi %c160_i32_237, %525 : i32
    %582 = arith.index_cast %581 : i32 to index
    %583 = memref.load %arg2[%582] : memref<192xi32, #tpu.memory_space<smem>>
    %584 = arith.index_cast %581 : i32 to index
    %585 = memref.load %arg3[%584] : memref<192xf32, #tpu.memory_space<smem>>
    %c0_238 = arith.constant 0 : index
    %586 = arith.index_cast %583 : i32 to index
    %c0_239 = arith.constant 0 : index
    %c0_240 = arith.constant 0 : index
    %587 = vector.load %arg7[%c0_238, %586, %c0_239, %c0_240] : memref<1x4x32x128xf32, #tpu.memory_space<vmem>>, vector<1x1x32x128xf32>
    %588 = vector.shape_cast %587 : vector<1x1x32x128xf32> to vector<32x128xf32>
    %589 = vector.broadcast %585 : f32 to vector<32x128xf32>
    %590 = arith.mulf %589, %588 : vector<32x128xf32>
    %591 = arith.addf %580, %590 : vector<32x128xf32>
    %592 = arith.maximumf %519, %591 : vector<32x128xf32>
    %c0_241 = arith.constant 0 : index
    %c3_242 = arith.constant 3 : index
    %c0_243 = arith.constant 0 : index
    %c0_244 = arith.constant 0 : index
    %593 = vector.load %arg10[%c0_241, %c3_242, %c0_243, %c0_244] : memref<1x4x32x128xf32, #tpu.memory_space<vmem>>, vector<1x1x32x128xf32>
    %594 = vector.shape_cast %593 : vector<1x1x32x128xf32> to vector<32x128xf32>
    %595 = vector.shape_cast %592 : vector<32x128xf32> to vector<1x1x32x128xf32>
    tpu.vector_store %arg10[%c0_241, %c3_242, %c0_243, %c0_244], %595 {strides = array<i32>} : memref<1x4x32x128xf32, #tpu.memory_space<vmem>>, vector<1x1x32x128xf32>,
    return
  }
  func.func @transform_0(%arg0: i32, %arg1: i32) -> i32 {
    %c0_i32 = arith.constant 0 : i32
    %c0_i32_0 = arith.constant 0 : i32
    return %c0_i32 : i32
  }
  func.func @transform_1(%arg0: i32, %arg1: i32) -> i32 {
    %c0_i32 = arith.constant 0 : i32
    %c0_i32_0 = arith.constant 0 : i32
    return %c0_i32 : i32
  }
  func.func @transform_2(%arg0: i32, %arg1: i32) -> (i32, i32, i32, i32) {
    %c0_i32 = arith.constant 0 : i32
    %c0_i32_0 = arith.constant 0 : i32
    %c0_i32_1 = arith.constant 0 : i32
    return %arg0, %arg1, %c0_i32, %c0_i32_0 : i32, i32, i32, i32
  }
  func.func @transform_3(%arg0: i32, %arg1: i32) -> (i32, i32, i32, i32) {
    %c0_i32 = arith.constant 0 : i32
    %c0_i32_0 = arith.constant 0 : i32
    %c0_i32_1 = arith.constant 0 : i32
    %c0_i32_2 = arith.constant 0 : i32
    return %arg0, %c0_i32, %c0_i32_0, %c0_i32_1 : i32, i32, i32, i32
  }
  func.func @transform_4(%arg0: i32, %arg1: i32) -> (i32, i32, i32, i32) {
    %c0_i32 = arith.constant 0 : i32
    %c0_i32_0 = arith.constant 0 : i32
    %c0_i32_1 = arith.constant 0 : i32
    %c0_i32_2 = arith.constant 0 : i32
    return %arg0, %c0_i32, %c0_i32_0, %c0_i32_1 : i32, i32, i32, i32
  }
  func.func @transform_5(%arg0: i32, %arg1: i32) -> (i32, i32, i32, i32) {
    %c0_i32 = arith.constant 0 : i32
    %c0_i32_0 = arith.constant 0 : i32
    %c0_i32_1 = arith.constant 0 : i32
    %c0_i32_2 = arith.constant 0 : i32
    return %arg0, %c0_i32, %c0_i32_0, %c0_i32_1 : i32, i32, i32, i32
  }
  func.func @transform_6(%arg0: i32, %arg1: i32) -> (i32, i32) {
    %c0_i32 = arith.constant 0 : i32
    %c0_i32_0 = arith.constant 0 : i32
    %c0_i32_1 = arith.constant 0 : i32
    return %c0_i32, %c0_i32_0 : i32, i32
  }
  func.func @transform_7(%arg0: i32, %arg1: i32) -> (i32, i32) {
    %c0_i32 = arith.constant 0 : i32
    %c0_i32_0 = arith.constant 0 : i32
    %c0_i32_1 = arith.constant 0 : i32
    return %c0_i32, %c0_i32_0 : i32, i32
  }
  func.func @transform_8(%arg0: i32, %arg1: i32) -> (i32, i32, i32, i32) {
    %c0_i32 = arith.constant 0 : i32
    %c0_i32_0 = arith.constant 0 : i32
    %c0_i32_1 = arith.constant 0 : i32
    return %arg0, %arg1, %c0_i32, %c0_i32_0 : i32, i32, i32, i32
  }
}

module attributes {stable_mosaic.version = 11 : i64} {
  func.func @_pool_w2_kernel(%arg0: i32, %arg1: i32, %arg2: memref<1x4x16x256xf32, #tpu.memory_space<vmem>>, %arg3: memref<1x4x16x128xf32, #tpu.memory_space<vmem>>) attributes {dimension_semantics = [#tpu.dimension_semantics<parallel>, #tpu.dimension_semantics<parallel>], iteration_bounds = array<i64: 2, 4>, scalar_prefetch = 0 : i64, scratch_operands = 0 : i64, tpu.core_type = #tpu.core_type<tc>, window_params = [{transform_indices = @transform_0, window_bounds = array<i64: 1, 4, 16, 256>}, {transform_indices = @transform_1, window_bounds = array<i64: 1, 4, 16, 128>}]} {
    %c0 = arith.constant 0 : index
    %c0_0 = arith.constant 0 : index
    %c0_1 = arith.constant 0 : index
    %c0_2 = arith.constant 0 : index
    %0 = vector.load %arg2[%c0, %c0_0, %c0_1, %c0_2] : memref<1x4x16x256xf32, #tpu.memory_space<vmem>>, vector<1x4x16x256xf32>
    %1 = vector.shape_cast %0 : vector<1x4x16x256xf32> to vector<4x16x256xf32>
    %2 = vector.extract_strided_slice %1 {offsets = [0, 0, 0], sizes = [4, 16, 128], strides = [1, 1, 1]} : vector<4x16x256xf32> to vector<4x16x128xf32>
    %3 = vector.extract_strided_slice %1 {offsets = [0, 0, 128], sizes = [4, 16, 128], strides = [1, 1, 1]} : vector<4x16x256xf32> to vector<4x16x128xf32>
    %4 = arith.maximumf %2, %3 : vector<4x16x128xf32>
    %c0_3 = arith.constant 0 : index
    %c0_4 = arith.constant 0 : index
    %c0_5 = arith.constant 0 : index
    %c0_6 = arith.constant 0 : index
    %5 = vector.load %arg3[%c0_3, %c0_4, %c0_5, %c0_6] : memref<1x4x16x128xf32, #tpu.memory_space<vmem>>, vector<1x4x16x128xf32>
    %6 = vector.shape_cast %5 : vector<1x4x16x128xf32> to vector<4x16x128xf32>
    %7 = vector.shape_cast %4 : vector<4x16x128xf32> to vector<1x4x16x128xf32>
    tpu.vector_store %arg3[%c0_3, %c0_4, %c0_5, %c0_6], %7 {strides = array<i32>} : memref<1x4x16x128xf32, #tpu.memory_space<vmem>>, vector<1x4x16x128xf32>,
    return
  }
  func.func @transform_0(%arg0: i32, %arg1: i32) -> (i32, i32, i32, i32) {
    %c0_i32 = arith.constant 0 : i32
    %c0_i32_0 = arith.constant 0 : i32
    %c0_i32_1 = arith.constant 0 : i32
    return %arg0, %arg1, %c0_i32, %c0_i32_0 : i32, i32, i32, i32
  }
  func.func @transform_1(%arg0: i32, %arg1: i32) -> (i32, i32, i32, i32) {
    %c0_i32 = arith.constant 0 : i32
    %c0_i32_0 = arith.constant 0 : i32
    %c0_i32_1 = arith.constant 0 : i32
    return %arg0, %arg1, %c0_i32, %c0_i32_0 : i32, i32, i32, i32
  }
}

</mosaic_0001>

<llo_original>
// kernel: pspool_forward.9
$region0: #{pspool_forward.9}
  #allocation0 [shape = 'u32[]', space=smem, size = 0x4, offset = 0x4, fixed_abs, tag = 'smem constant byte address 0x4 - core index']
  #allocation1 [shape = 'u32[144,128]{1,0:T(1,128)}', space=vmem, size = 0x12000, scoped, tag = 'internal scratch']
  %s0 = inlined_call_operand.vmem [shape: f32[2,16,8,256], index: 0, kind: input, shape index: {}]
  %s1 = inlined_call_operand.vmem [shape: f32[2,8,8,128], index: 1, kind: output, shape index: {}]
  %s2 = sld [smem:[#allocation0]]
  $region37: #{pspool_forward.9} parent=0
    _
  %s4 = ssub.s32 1, %s2
  %s5 = scalar_select 0, %s4, %s2
  loop: start=0, step=1, limit=10
  $region2: #{pspool_forward.9} parent=0 // loop_pre_header
    _
  $region3: #{pspool_forward.9} parent=0 // loop_header
    %s7 = sphi 0, %s11
    %p8 = scmp.ge.s32.totalorder %s7, 10
    %s14 = sphi 0, %s26
    %s15 = sphi 0, %s22
    %s16 = sphi 0, %s14
    %s17 = sphi 0, %s15
    %s18 = sphi 0, %s16
    %s19 = sphi 0, %s17
    %s31 = sphi 0, %s33
    %s34 = sphi 0, %s31
    %s35 = sphi 0, %s34
    %s51 = sphi 0, %s35
    %s59 = sphi 0, %s61
    %s62 = sphi 0, %s59
    %s63 = sphi 0, %s62
    %s79 = sphi 0, %s63
  $region4: #{pspool_forward.9} parent=0 // loop_header_branch
    %10 = sbr.rel (%p8) target = $region8
  $region5: #{pspool_forward.9} parent=0 // loop_body
    %s12 = ssub.s32 %s7, 1
    %s13 = ssub.s32 %s7, 2
    %s20 = sadd.s32 1, %s15
    %p21 = scmp.ge.s32.totalorder %s20, 4
    %s22 = scalar_select %p21, 0, %s20
    %s23 = sadd.s32 1, %s14
    %s24 = scalar_select %p21, %s23, %s14
    %p25 = scmp.ge.s32.totalorder %s24, 2
    %s26 = scalar_select %p25, 0, %s24
    %s27 = ssub.s32 %s14, %s26
    %s28 = ssub.s32 %s15, %s22
    %s29 = sor.u32 %s27, %s28
    %p30 = scmp.eq.s32.totalorder %s29, 0
    %s32 = sadd.s32 %s31, 1
    %s33 = scalar_select %p30, %s31, %s32
    %p36 = pneg %p30
    %p37 = scmp.eq.s32.totalorder %s7, 7
    %p38 = por %p36, %p37
    %p39 = scmp.ne.s32.totalorder %s31, %s34
    %p40 = scmp.eq.s32.totalorder %s7, 0
    %p41 = por %p39, %p40
    %p42 = scmp.ne.s32.totalorder %s31, %s34
    %p43 = scmp.eq.s32.totalorder %s12, 7
    %p44 = por %p42, %p43
    %p45 = scmp.ne.s32.totalorder %s34, %s35
    %p46 = scmp.eq.s32.totalorder %s12, 0
    %p47 = por %p45, %p46
    %p48 = scmp.ne.s32.totalorder %s34, %s35
    %p49 = scmp.eq.s32.totalorder %s13, 7
    %p50 = por %p48, %p49
    %p52 = scmp.ne.s32.totalorder %s35, %s51
    %p53 = scmp.eq.s32.totalorder %s13, 0
    %p54 = por %p52, %p53
    %s55 = ssub.s32 %s14, %s26
    %s56 = ssub.s32 %s15, %s22
    %s57 = sor.u32 %s55, %s56
    %p58 = scmp.eq.s32.totalorder %s57, 0
    %s60 = sadd.s32 %s59, 1
    %s61 = scalar_select %p58, %s59, %s60
    %p64 = pneg %p58
    %p65 = scmp.eq.s32.totalorder %s7, 7
    %p66 = por %p64, %p65
    %p67 = scmp.ne.s32.totalorder %s59, %s62
    %p68 = scmp.eq.s32.totalorder %s7, 0
    %p69 = por %p67, %p68
    %p70 = scmp.ne.s32.totalorder %s59, %s62
    %p71 = scmp.eq.s32.totalorder %s12, 7
    %p72 = por %p70, %p71
    %p73 = scmp.ne.s32.totalorder %s62, %s63
    %p74 = scmp.eq.s32.totalorder %s12, 0
    %p75 = por %p73, %p74
    %p76 = scmp.ne.s32.totalorder %s62, %s63
    %p77 = scmp.eq.s32.totalorder %s13, 7
    %p78 = por %p76, %p77
    %p80 = scmp.ne.s32.totalorder %s63, %s79
    %p81 = scmp.eq.s32.totalorder %s13, 0
    %p82 = por %p80, %p81
    %p83 = scmp.le.s32.totalorder 1, %s7
    %p84 = scmp.lt.s32.totalorder %s7, 9
    %p85 = pnand %p83, %p84
    %p86 = pneg %p85
    // Predicated region
    $region9: #{pspool_forward.9} parent=5 // pred_check
      _
    $region10: #{pspool_forward.9} parent=5 // pred_check_branch
      %88 = sbr.rel (%p85) target = $region12
    $region11: #{pspool_forward.9} parent=5 // pred_region
      %s89 = ssub.s32 %s7, 1
    $region12: #{pspool_forward.9} parent=5 // pred_fallthru
      _
    %p90 = scmp.lt.s32.totalorder %s7, 8
    // Predicated region
    $region13: #{pspool_forward.9} parent=5 // pred_check
      %p91 = pneg %p90
    $region14: #{pspool_forward.9} parent=5 // pred_check_branch
      %93 = sbr.rel (%p91) target = $region16
    $region15: #{pspool_forward.9} parent=5 // pred_region
      // Predicated region
      $region17: #{pspool_forward.9} parent=15 // pred_check
        %p94 = pneg %p41
      $region18: #{pspool_forward.9} parent=15 // pred_check_branch
        %96 = sbr.rel (%p94) target = $region20
      $region19: #{pspool_forward.9} parent=15 // pred_region
        %s97 = smul.u32 4, %s15
        %p98 = scmp.lt.s32.totalorder %s14, 1
        %s99 = scalar_select %p98, %s14, 1
        %p100 = scmp.lt.s32.totalorder %s97, 15
        %s101 = scalar_select %p100, %s97, 15
        %s102 = smul.addr %s101, 2
        %s103 = smul.addr %s99, 32
        %s104 = sadd.s32 %s102, %s103
        %s105 = smul.addr %s104, 8
        %s106 = scalar_lea.vmem %s0, %s105
        %s107 = smul.u32 4, %s15
      $region20: #{pspool_forward.9} parent=15 // pred_fallthru
        _
    $region16: #{pspool_forward.9} parent=5 // pred_fallthru
      _
    %p108 = scmp.le.s32.totalorder 1, %s7
    %p109 = scmp.lt.s32.totalorder %s7, 9
    %p110 = pnand %p108, %p109
    %p111 = pneg %p110
    // Predicated region
    $region21: #{pspool_forward.9} parent=5 // pred_check
      _
    $region22: #{pspool_forward.9} parent=5 // pred_check_branch
      %113 = sbr.rel (%p110) target = $region24
    $region23: #{pspool_forward.9} parent=5 // pred_region
      %s114 = ssub.s32 %s7, 1
      %s115 = smul.u32 4, %s17
      %p116 = scmp.lt.s32.totalorder %s16, 1
      %s117 = scalar_select %p116, %s16, 1
      %p118 = scmp.lt.s32.totalorder %s115, 15
      %s119 = scalar_select %p118, %s115, 15
      %s120 = smul.addr %s119, 2
      %s121 = smul.addr %s117, 32
      %s122 = sadd.s32 %s120, %s121
      %s123 = smul.addr %s122, 8
      %s124 = scalar_lea.vmem %s0, %s123
      %p125 = pneg %p47
      %p126 = pneg %p44
      %p127 = pneg %p75
      %p128 = pneg %p72
      %s129 = smul.u32 2, %s17
      %p130 = scmp.lt.s32.totalorder %s16, 1
      %s131 = scalar_select %p130, %s16, 1
      %p132 = scmp.lt.s32.totalorder %s129, 7
      %s133 = scalar_select %p132, %s129, 7
      %s134 = smul.addr %s131, 8
      %s135 = sadd.s32 %s133, %s134
      %s136 = smul.addr %s135, 8
      %s137 = scalar_lea.vmem %s1, %s136
      %s138 = smul.u32 4, %s17
      %p139 = scmp.lt.s32.totalorder %s16, 1
      %s140 = scalar_select %p139, %s16, 1
      %p141 = scmp.lt.s32.totalorder %s138, 15
      %s142 = scalar_select %p141, %s138, 15
      %s143 = smul.addr %s142, 2
      %s144 = smul.addr %s140, 32
      %s145 = sadd.s32 %s143, %s144
      %s146 = smul.addr %s145, 8
      %s147 = scalar_lea.vmem %s0, %s146
      %s148 = smul.u32 4, %s17
      %s149 = smul.u32 2, %s17
      %p150 = scmp.lt.s32.totalorder %s16, 1
      %s151 = scalar_select %p150, %s16, 1
      %p152 = scmp.lt.s32.totalorder %s149, 7
      %s153 = scalar_select %p152, %s149, 7
      %s154 = smul.addr %s151, 8
      %s155 = sadd.s32 %s153, %s154
      %s156 = smul.addr %s155, 8
      %s157 = scalar_lea.vmem %s1, %s156
      %s158 = smul.u32 2, %s17
      %v159 = vld [vmem:[%s147] sm:$0xff]
      %v160 = vld [vmem:[%s147 + $0x8] sm:$0xff]
      %v161 = vld [vmem:[%s147 + $0x10] sm:$0xff]
      %v162 = vld [vmem:[%s147 + $0x18] sm:$0xff]
      %v163 = vld [vmem:[%s147 + $0x20] sm:$0xff]
      %v164 = vld [vmem:[%s147 + $0x28] sm:$0xff]
      %v165 = vld [vmem:[%s147 + $0x30] sm:$0xff]
      %v166 = vld [vmem:[%s147 + $0x38] sm:$0xff]
      %v167 = vmax.f32 %v159, %v160
      %v168 = vmax.f32 %v161, %v162
      %v169 = vmax.f32 %v163, %v164
      %v170 = vmax.f32 %v165, %v166
      %v171 = vmax.f32 %v167, %v168
      %v172 = vmax.f32 %v169, %v170
      %173 = vst [vmem:[%s157] sm:$0xff] %v171
      %174 = vst [vmem:[%s157 + $0x8] sm:$0xff] %v172
      %s175 = smul.u32 2, %s17
      %p176 = scmp.lt.s32.totalorder %s16, 1
      %s177 = scalar_select %p176, %s16, 1
      %p178 = scmp.lt.s32.totalorder %s175, 7
      %s179 = scalar_select %p178, %s175, 7
      %s180 = smul.addr %s177, 8
      %s181 = sadd.s32 %s179, %s180
      %s182 = smul.addr %s181, 8
      %s183 = scalar_lea.vmem %s1, %s182
      // Predicated region
      $region25: #{pspool_forward.9} parent=23 // pred_check
        %p184 = pneg %p72
      $region26: #{pspool_forward.9} parent=23 // pred_check_branch
        %186 = sbr.rel (%p184) target = $region28
      $region27: #{pspool_forward.9} parent=23 // pred_region
        %s187 = smul.u32 2, %s17
      $region28: #{pspool_forward.9} parent=23 // pred_fallthru
        _
    $region24: #{pspool_forward.9} parent=5 // pred_fallthru
      _
    %p188 = scmp.le.s32.totalorder 2, %s7
    // Predicated region
    $region29: #{pspool_forward.9} parent=5 // pred_check
      %p189 = pneg %p188
    $region30: #{pspool_forward.9} parent=5 // pred_check_branch
      %191 = sbr.rel (%p189) target = $region32
    $region31: #{pspool_forward.9} parent=5 // pred_region
      %s192 = ssub.s32 %s7, 2
      // Predicated region
      $region33: #{pspool_forward.9} parent=31 // pred_check
        %p193 = pneg %p78
      $region34: #{pspool_forward.9} parent=31 // pred_check_branch
        %195 = sbr.rel (%p193) target = $region36
      $region35: #{pspool_forward.9} parent=31 // pred_region
        %s196 = smul.u32 2, %s19
        %p197 = scmp.lt.s32.totalorder %s18, 1
        %s198 = scalar_select %p197, %s18, 1
        %p199 = scmp.lt.s32.totalorder %s196, 7
        %s200 = scalar_select %p199, %s196, 7
        %s201 = smul.addr %s198, 8
        %s202 = sadd.s32 %s200, %s201
        %s203 = smul.addr %s202, 8
        %s204 = scalar_lea.vmem %s1, %s203
      $region36: #{pspool_forward.9} parent=31 // pred_fallthru
        _
    $region32: #{pspool_forward.9} parent=5 // pred_fallthru
      _
  $region6: #{pspool_forward.9} parent=0 // loop_footer
    %s11 = sadd.s32 1, %s7
  $region7: #{pspool_forward.9} parent=0 // loop_footer_branch
    %6 = sbr.rel target = $region3
  $region8: #{pspool_forward.9} parent=0 // loop_exit
    _

// kernel: pspool_forward.8
$region0: #{pspool_forward.8}
  #allocation0 [shape = 'u32[]', space=smem, size = 0x4, offset = 0x4, fixed_abs, tag = 'smem constant byte address 0x4 - core index']
  #allocation1 [shape = 'u32[144,128]{1,0:T(1,128)}', space=vmem, size = 0x12000, scoped, tag = 'internal scratch']
  %s0 = inlined_call_operand.vmem [shape: f32[2,32,16,256], index: 0, kind: input, shape index: {}]
  %s1 = inlined_call_operand.vmem [shape: f32[2,16,16,128], index: 1, kind: output, shape index: {}]
  %s2 = sld [smem:[#allocation0]]
  $region37: #{pspool_forward.8} parent=0
    _
  %s4 = ssub.s32 1, %s2
  %s5 = scalar_select 0, %s4, %s2
  loop: start=0, step=1, limit=10
  $region2: #{pspool_forward.8} parent=0 // loop_pre_header
    _
  $region3: #{pspool_forward.8} parent=0 // loop_header
    %s7 = sphi 0, %s11
    %p8 = scmp.ge.s32.totalorder %s7, 10
    %s14 = sphi 0, %s26
    %s15 = sphi 0, %s22
    %s16 = sphi 0, %s14
    %s17 = sphi 0, %s15
    %s18 = sphi 0, %s16
    %s19 = sphi 0, %s17
    %s31 = sphi 0, %s33
    %s34 = sphi 0, %s31
    %s35 = sphi 0, %s34
    %s51 = sphi 0, %s35
    %s59 = sphi 0, %s61
    %s62 = sphi 0, %s59
    %s63 = sphi 0, %s62
    %s79 = sphi 0, %s63
  $region4: #{pspool_forward.8} parent=0 // loop_header_branch
    %10 = sbr.rel (%p8) target = $region8
  $region5: #{pspool_forward.8} parent=0 // loop_body
    %s12 = ssub.s32 %s7, 1
    %s13 = ssub.s32 %s7, 2
    %s20 = sadd.s32 1, %s15
    %p21 = scmp.ge.s32.totalorder %s20, 4
    %s22 = scalar_select %p21, 0, %s20
    %s23 = sadd.s32 1, %s14
    %s24 = scalar_select %p21, %s23, %s14
    %p25 = scmp.ge.s32.totalorder %s24, 2
    %s26 = scalar_select %p25, 0, %s24
    %s27 = ssub.s32 %s14, %s26
    %s28 = ssub.s32 %s15, %s22
    %s29 = sor.u32 %s27, %s28
    %p30 = scmp.eq.s32.totalorder %s29, 0
    %s32 = sadd.s32 %s31, 1
    %s33 = scalar_select %p30, %s31, %s32
    %p36 = pneg %p30
    %p37 = scmp.eq.s32.totalorder %s7, 7
    %p38 = por %p36, %p37
    %p39 = scmp.ne.s32.totalorder %s31, %s34
    %p40 = scmp.eq.s32.totalorder %s7, 0
    %p41 = por %p39, %p40
    %p42 = scmp.ne.s32.totalorder %s31, %s34
    %p43 = scmp.eq.s32.totalorder %s12, 7
    %p44 = por %p42, %p43
    %p45 = scmp.ne.s32.totalorder %s34, %s35
    %p46 = scmp.eq.s32.totalorder %s12, 0
    %p47 = por %p45, %p46
    %p48 = scmp.ne.s32.totalorder %s34, %s35
    %p49 = scmp.eq.s32.totalorder %s13, 7
    %p50 = por %p48, %p49
    %p52 = scmp.ne.s32.totalorder %s35, %s51
    %p53 = scmp.eq.s32.totalorder %s13, 0
    %p54 = por %p52, %p53
    %s55 = ssub.s32 %s14, %s26
    %s56 = ssub.s32 %s15, %s22
    %s57 = sor.u32 %s55, %s56
    %p58 = scmp.eq.s32.totalorder %s57, 0
    %s60 = sadd.s32 %s59, 1
    %s61 = scalar_select %p58, %s59, %s60
    %p64 = pneg %p58
    %p65 = scmp.eq.s32.totalorder %s7, 7
    %p66 = por %p64, %p65
    %p67 = scmp.ne.s32.totalorder %s59, %s62
    %p68 = scmp.eq.s32.totalorder %s7, 0
    %p69 = por %p67, %p68
    %p70 = scmp.ne.s32.totalorder %s59, %s62
    %p71 = scmp.eq.s32.totalorder %s12, 7
    %p72 = por %p70, %p71
    %p73 = scmp.ne.s32.totalorder %s62, %s63
    %p74 = scmp.eq.s32.totalorder %s12, 0
    %p75 = por %p73, %p74
    %p76 = scmp.ne.s32.totalorder %s62, %s63
    %p77 = scmp.eq.s32.totalorder %s13, 7
    %p78 = por %p76, %p77
    %p80 = scmp.ne.s32.totalorder %s63, %s79
    %p81 = scmp.eq.s32.totalorder %s13, 0
    %p82 = por %p80, %p81
    %p83 = scmp.le.s32.totalorder 1, %s7
    %p84 = scmp.lt.s32.totalorder %s7, 9
    %p85 = pnand %p83, %p84
    %p86 = pneg %p85
    // Predicated region
    $region9: #{pspool_forward.8} parent=5 // pred_check
      _
    $region10: #{pspool_forward.8} parent=5 // pred_check_branch
      %88 = sbr.rel (%p85) target = $region12
    $region11: #{pspool_forward.8} parent=5 // pred_region
      %s89 = ssub.s32 %s7, 1
    $region12: #{pspool_forward.8} parent=5 // pred_fallthru
      _
    %p90 = scmp.lt.s32.totalorder %s7, 8
    // Predicated region
    $region13: #{pspool_forward.8} parent=5 // pred_check
      %p91 = pneg %p90
    $region14: #{pspool_forward.8} parent=5 // pred_check_branch
      %93 = sbr.rel (%p91) target = $region16
    $region15: #{pspool_forward.8} parent=5 // pred_region
      // Predicated region
      $region17: #{pspool_forward.8} parent=15 // pred_check
        %p94 = pneg %p41
      $region18: #{pspool_forward.8} parent=15 // pred_check_branch
        %96 = sbr.rel (%p94) target = $region20
      $region19: #{pspool_forward.8} parent=15 // pred_region
        %s97 = smul.u32 8, %s15
        %p98 = scmp.lt.s32.totalorder %s14, 1
        %s99 = scalar_select %p98, %s14, 1
        %p100 = scmp.lt.s32.totalorder %s97, 31
        %s101 = scalar_select %p100, %s97, 31
        %s102 = smul.addr %s101, 4
        %s103 = smul.addr %s99, 128
        %s104 = sadd.s32 %s102, %s103
        %s105 = smul.addr %s104, 8
        %s106 = scalar_lea.vmem %s0, %s105
        %s107 = smul.u32 8, %s15
      $region20: #{pspool_forward.8} parent=15 // pred_fallthru
        _
    $region16: #{pspool_forward.8} parent=5 // pred_fallthru
      _
    %p108 = scmp.le.s32.totalorder 1, %s7
    %p109 = scmp.lt.s32.totalorder %s7, 9
    %p110 = pnand %p108, %p109
    %p111 = pneg %p110
    // Predicated region
    $region21: #{pspool_forward.8} parent=5 // pred_check
      _
    $region22: #{pspool_forward.8} parent=5 // pred_check_branch
      %113 = sbr.rel (%p110) target = $region24
    $region23: #{pspool_forward.8} parent=5 // pred_region
      %s114 = ssub.s32 %s7, 1
      %s115 = smul.u32 8, %s17
      %p116 = scmp.lt.s32.totalorder %s16, 1
      %s117 = scalar_select %p116, %s16, 1
      %p118 = scmp.lt.s32.totalorder %s115, 31
      %s119 = scalar_select %p118, %s115, 31
      %s120 = smul.addr %s119, 4
      %s121 = smul.addr %s117, 128
      %s122 = sadd.s32 %s120, %s121
      %s123 = smul.addr %s122, 8
      %s124 = scalar_lea.vmem %s0, %s123
      %p125 = pneg %p47
      %p126 = pneg %p44
      %p127 = pneg %p75
      %p128 = pneg %p72
      %s129 = smul.u32 4, %s17
      %p130 = scmp.lt.s32.totalorder %s16, 1
      %s131 = scalar_select %p130, %s16, 1
      %p132 = scmp.lt.s32.totalorder %s129, 15
      %s133 = scalar_select %p132, %s129, 15
      %s134 = smul.addr %s133, 2
      %s135 = smul.addr %s131, 32
      %s136 = sadd.s32 %s134, %s135
      %s137 = smul.addr %s136, 8
      %s138 = scalar_lea.vmem %s1, %s137
      %s139 = smul.u32 8, %s17
      %p140 = scmp.lt.s32.totalorder %s16, 1
      %s141 = scalar_select %p140, %s16, 1
      %p142 = scmp.lt.s32.totalorder %s139, 31
      %s143 = scalar_select %p142, %s139, 31
      %s144 = smul.addr %s143, 4
      %s145 = smul.addr %s141, 128
      %s146 = sadd.s32 %s144, %s145
      %s147 = smul.addr %s146, 8
      %s148 = scalar_lea.vmem %s0, %s147
      %s149 = smul.u32 8, %s17
      %s150 = smul.u32 4, %s17
      %p151 = scmp.lt.s32.totalorder %s16, 1
      %s152 = scalar_select %p151, %s16, 1
      %p153 = scmp.lt.s32.totalorder %s150, 15
      %s154 = scalar_select %p153, %s150, 15
      %s155 = smul.addr %s154, 2
      %s156 = smul.addr %s152, 32
      %s157 = sadd.s32 %s155, %s156
      %s158 = smul.addr %s157, 8
      %s159 = scalar_lea.vmem %s1, %s158
      %s160 = smul.u32 4, %s17
      %v161 = vld [vmem:[%s148] sm:$0xff]
      %v162 = vld [vmem:[%s148 + $0x8] sm:$0xff]
      %v163 = vld [vmem:[%s148 + $0x10] sm:$0xff]
      %v164 = vld [vmem:[%s148 + $0x18] sm:$0xff]
      %v165 = vld [vmem:[%s148 + $0x20] sm:$0xff]
      %v166 = vld [vmem:[%s148 + $0x28] sm:$0xff]
      %v167 = vld [vmem:[%s148 + $0x30] sm:$0xff]
      %v168 = vld [vmem:[%s148 + $0x38] sm:$0xff]
      %v169 = vld [vmem:[%s148 + $0x40] sm:$0xff]
      %v170 = vld [vmem:[%s148 + $0x48] sm:$0xff]
      %v171 = vld [vmem:[%s148 + $0x50] sm:$0xff]
      %v172 = vld [vmem:[%s148 + $0x58] sm:$0xff]
      %v173 = vld [vmem:[%s148 + $0x60] sm:$0xff]
      %v174 = vld [vmem:[%s148 + $0x68] sm:$0xff]
      %v175 = vld [vmem:[%s148 + $0x70] sm:$0xff]
      %v176 = vld [vmem:[%s148 + $0x78] sm:$0xff]
      %v177 = vld [vmem:[%s148 + $0x80] sm:$0xff]
      %v178 = vld [vmem:[%s148 + $0x88] sm:$0xff]
      %v179 = vld [vmem:[%s148 + $0x90] sm:$0xff]
      %v180 = vld [vmem:[%s148 + $0x98] sm:$0xff]
      %v181 = vld [vmem:[%s148 + $0xa0] sm:$0xff]
      %v182 = vld [vmem:[%s148 + $0xa8] sm:$0xff]
      %v183 = vld [vmem:[%s148 + $0xb0] sm:$0xff]
      %v184 = vld [vmem:[%s148 + $0xb8] sm:$0xff]
      %v185 = vld [vmem:[%s148 + $0xc0] sm:$0xff]
      %v186 = vld [vmem:[%s148 + $0xc8] sm:$0xff]
      %v187 = vld [vmem:[%s148 + $0xd0] sm:$0xff]
      %v188 = vld [vmem:[%s148 + $0xd8] sm:$0xff]
      %v189 = vld [vmem:[%s148 + $0xe0] sm:$0xff]
      %v190 = vld [vmem:[%s148 + $0xe8] sm:$0xff]
      %v191 = vld [vmem:[%s148 + $0xf0] sm:$0xff]
      %v192 = vld [vmem:[%s148 + $0xf8] sm:$0xff]
      %v193 = vmax.f32 %v161, %v162
      %v194 = vmax.f32 %v163, %v164
      %v195 = vmax.f32 %v165, %v166
      %v196 = vmax.f32 %v167, %v168
      %v197 = vmax.f32 %v169, %v170
      %v198 = vmax.f32 %v171, %v172
      %v199 = vmax.f32 %v173, %v174
      %v200 = vmax.f32 %v175, %v176
      %v201 = vmax.f32 %v177, %v178
      %v202 = vmax.f32 %v179, %v180
      %v203 = vmax.f32 %v181, %v182
      %v204 = vmax.f32 %v183, %v184
      %v205 = vmax.f32 %v185, %v186
      %v206 = vmax.f32 %v187, %v188
      %v207 = vmax.f32 %v189, %v190
      %v208 = vmax.f32 %v191, %v192
      %v209 = vmax.f32 %v193, %v195
      %v210 = vmax.f32 %v194, %v196
      %v211 = vmax.f32 %v197, %v199
      %v212 = vmax.f32 %v198, %v200
      %v213 = vmax.f32 %v201, %v203
      %v214 = vmax.f32 %v202, %v204
      %v215 = vmax.f32 %v205, %v207
      %v216 = vmax.f32 %v206, %v208
      %217 = vst [vmem:[%s159] sm:$0xff] %v209
      %218 = vst [vmem:[%s159 + $0x8] sm:$0xff] %v210
      %219 = vst [vmem:[%s159 + $0x10] sm:$0xff] %v211
      %220 = vst [vmem:[%s159 + $0x18] sm:$0xff] %v212
      %221 = vst [vmem:[%s159 + $0x20] sm:$0xff] %v213
      %222 = vst [vmem:[%s159 + $0x28] sm:$0xff] %v214
      %223 = vst [vmem:[%s159 + $0x30] sm:$0xff] %v215
      %224 = vst [vmem:[%s159 + $0x38] sm:$0xff] %v216
      %s225 = smul.u32 4, %s17
      %p226 = scmp.lt.s32.totalorder %s16, 1
      %s227 = scalar_select %p226, %s16, 1
      %p228 = scmp.lt.s32.totalorder %s225, 15
      %s229 = scalar_select %p228, %s225, 15
      %s230 = smul.addr %s229, 2
      %s231 = smul.addr %s227, 32
      %s232 = sadd.s32 %s230, %s231
      %s233 = smul.addr %s232, 8
      %s234 = scalar_lea.vmem %s1, %s233
      // Predicated region
      $region25: #{pspool_forward.8} parent=23 // pred_check
        %p235 = pneg %p72
      $region26: #{pspool_forward.8} parent=23 // pred_check_branch
        %237 = sbr.rel (%p235) target = $region28
      $region27: #{pspool_forward.8} parent=23 // pred_region
        %s238 = smul.u32 4, %s17
      $region28: #{pspool_forward.8} parent=23 // pred_fallthru
        _
    $region24: #{pspool_forward.8} parent=5 // pred_fallthru
      _
    %p239 = scmp.le.s32.totalorder 2, %s7
    // Predicated region
    $region29: #{pspool_forward.8} parent=5 // pred_check
      %p240 = pneg %p239
    $region30: #{pspool_forward.8} parent=5 // pred_check_branch
      %242 = sbr.rel (%p240) target = $region32
    $region31: #{pspool_forward.8} parent=5 // pred_region
      %s243 = ssub.s32 %s7, 2
      // Predicated region
      $region33: #{pspool_forward.8} parent=31 // pred_check
        %p244 = pneg %p78
      $region34: #{pspool_forward.8} parent=31 // pred_check_branch
        %246 = sbr.rel (%p244) target = $region36
      $region35: #{pspool_forward.8} parent=31 // pred_region
        %s247 = smul.u32 4, %s19
        %p248 = scmp.lt.s32.totalorder %s18, 1
        %s249 = scalar_select %p248, %s18, 1
        %p250 = scmp.lt.s32.totalorder %s247, 15
        %s251 = scalar_select %p250, %s247, 15
        %s252 = smul.addr %s251, 2
        %s253 = smul.addr %s249, 32
        %s254 = sadd.s32 %s252, %s253
        %s255 = smul.addr %s254, 8
        %s256 = scalar_lea.vmem %s1, %s255
      $region36: #{pspool_forward.8} parent=31 // pred_fallthru
        _
    $region32: #{pspool_forward.8} parent=5 // pred_fallthru
      _
  $region6: #{pspool_forward.8} parent=0 // loop_footer
    %s11 = sadd.s32 1, %s7
  $region7: #{pspool_forward.8} parent=0 // loop_footer_branch
    %6 = sbr.rel target = $region3
  $region8: #{pspool_forward.8} parent=0 // loop_exit
    _

// kernel: pspool_forward.10
$region0: #{pspool_forward.10}
  #allocation0 [shape = 'u32[]', space=smem, size = 0x4, offset = 0x4, fixed_abs, tag = 'smem constant byte address 0x4 - core index']
  #allocation1 [shape = 'u32[144,128]{1,0:T(1,128)}', space=vmem, size = 0x12000, scoped, tag = 'internal scratch']
  %s0 = inlined_call_operand.vmem [shape: f32[2,8,4,256], index: 0, kind: input, shape index: {}]
  %s1 = inlined_call_operand.vmem [shape: f32[2,4,4,128], index: 1, kind: output, shape index: {}]
  %s2 = sld [smem:[#allocation0]]
  $region37: #{pspool_forward.10} parent=0
    _
  %s4 = ssub.s32 1, %s2
  %s5 = scalar_select 0, %s4, %s2
  loop: start=0, step=1, limit=10
  $region2: #{pspool_forward.10} parent=0 // loop_pre_header
    _
  $region3: #{pspool_forward.10} parent=0 // loop_header
    %s7 = sphi 0, %s11
    %p8 = scmp.ge.s32.totalorder %s7, 10
    %s14 = sphi 0, %s26
    %s15 = sphi 0, %s22
    %s16 = sphi 0, %s14
    %s17 = sphi 0, %s15
    %s18 = sphi 0, %s16
    %s19 = sphi 0, %s17
    %s31 = sphi 0, %s33
    %s34 = sphi 0, %s31
    %s35 = sphi 0, %s34
    %s51 = sphi 0, %s35
    %s59 = sphi 0, %s61
    %s62 = sphi 0, %s59
    %s63 = sphi 0, %s62
    %s79 = sphi 0, %s63
  $region4: #{pspool_forward.10} parent=0 // loop_header_branch
    %10 = sbr.rel (%p8) target = $region8
  $region5: #{pspool_forward.10} parent=0 // loop_body
    %s12 = ssub.s32 %s7, 1
    %s13 = ssub.s32 %s7, 2
    %s20 = sadd.s32 1, %s15
    %p21 = scmp.ge.s32.totalorder %s20, 4
    %s22 = scalar_select %p21, 0, %s20
    %s23 = sadd.s32 1, %s14
    %s24 = scalar_select %p21, %s23, %s14
    %p25 = scmp.ge.s32.totalorder %s24, 2
    %s26 = scalar_select %p25, 0, %s24
    %s27 = ssub.s32 %s14, %s26
    %s28 = ssub.s32 %s15, %s22
    %s29 = sor.u32 %s27, %s28
    %p30 = scmp.eq.s32.totalorder %s29, 0
    %s32 = sadd.s32 %s31, 1
    %s33 = scalar_select %p30, %s31, %s32
    %p36 = pneg %p30
    %p37 = scmp.eq.s32.totalorder %s7, 7
    %p38 = por %p36, %p37
    %p39 = scmp.ne.s32.totalorder %s31, %s34
    %p40 = scmp.eq.s32.totalorder %s7, 0
    %p41 = por %p39, %p40
    %p42 = scmp.ne.s32.totalorder %s31, %s34
    %p43 = scmp.eq.s32.totalorder %s12, 7
    %p44 = por %p42, %p43
    %p45 = scmp.ne.s32.totalorder %s34, %s35
    %p46 = scmp.eq.s32.totalorder %s12, 0
    %p47 = por %p45, %p46
    %p48 = scmp.ne.s32.totalorder %s34, %s35
    %p49 = scmp.eq.s32.totalorder %s13, 7
    %p50 = por %p48, %p49
    %p52 = scmp.ne.s32.totalorder %s35, %s51
    %p53 = scmp.eq.s32.totalorder %s13, 0
    %p54 = por %p52, %p53
    %s55 = ssub.s32 %s14, %s26
    %s56 = ssub.s32 %s15, %s22
    %s57 = sor.u32 %s55, %s56
    %p58 = scmp.eq.s32.totalorder %s57, 0
    %s60 = sadd.s32 %s59, 1
    %s61 = scalar_select %p58, %s59, %s60
    %p64 = pneg %p58
    %p65 = scmp.eq.s32.totalorder %s7, 7
    %p66 = por %p64, %p65
    %p67 = scmp.ne.s32.totalorder %s59, %s62
    %p68 = scmp.eq.s32.totalorder %s7, 0
    %p69 = por %p67, %p68
    %p70 = scmp.ne.s32.totalorder %s59, %s62
    %p71 = scmp.eq.s32.totalorder %s12, 7
    %p72 = por %p70, %p71
    %p73 = scmp.ne.s32.totalorder %s62, %s63
    %p74 = scmp.eq.s32.totalorder %s12, 0
    %p75 = por %p73, %p74
    %p76 = scmp.ne.s32.totalorder %s62, %s63
    %p77 = scmp.eq.s32.totalorder %s13, 7
    %p78 = por %p76, %p77
    %p80 = scmp.ne.s32.totalorder %s63, %s79
    %p81 = scmp.eq.s32.totalorder %s13, 0
    %p82 = por %p80, %p81
    %p83 = scmp.le.s32.totalorder 1, %s7
    %p84 = scmp.lt.s32.totalorder %s7, 9
    %p85 = pnand %p83, %p84
    %p86 = pneg %p85
    // Predicated region
    $region9: #{pspool_forward.10} parent=5 // pred_check
      _
    $region10: #{pspool_forward.10} parent=5 // pred_check_branch
      %88 = sbr.rel (%p85) target = $region12
    $region11: #{pspool_forward.10} parent=5 // pred_region
      %s89 = ssub.s32 %s7, 1
    $region12: #{pspool_forward.10} parent=5 // pred_fallthru
      _
    %p90 = scmp.lt.s32.totalorder %s7, 8
    // Predicated region
    $region13: #{pspool_forward.10} parent=5 // pred_check
      %p91 = pneg %p90
    $region14: #{pspool_forward.10} parent=5 // pred_check_branch
      %93 = sbr.rel (%p91) target = $region16
    $region15: #{pspool_forward.10} parent=5 // pred_region
      // Predicated region
      $region17: #{pspool_forward.10} parent=15 // pred_check
        %p94 = pneg %p41
      $region18: #{pspool_forward.10} parent=15 // pred_check_branch
        %96 = sbr.rel (%p94) target = $region20
      $region19: #{pspool_forward.10} parent=15 // pred_region
        %s97 = smul.u32 2, %s15
        %p98 = scmp.lt.s32.totalorder %s14, 1
        %s99 = scalar_select %p98, %s14, 1
        %p100 = scmp.lt.s32.totalorder %s97, 7
        %s101 = scalar_select %p100, %s97, 7
        %s102 = smul.addr %s101, 2
        %s103 = smul.addr %s99, 16
        %s104 = sadd.s32 %s102, %s103
        %s105 = smul.addr %s104, 4
        %s106 = scalar_lea.vmem %s0, %s105
        %s107 = smul.u32 2, %s15
      $region20: #{pspool_forward.10} parent=15 // pred_fallthru
        _
    $region16: #{pspool_forward.10} parent=5 // pred_fallthru
      _
    %p108 = scmp.le.s32.totalorder 1, %s7
    %p109 = scmp.lt.s32.totalorder %s7, 9
    %p110 = pnand %p108, %p109
    %p111 = pneg %p110
    // Predicated region
    $region21: #{pspool_forward.10} parent=5 // pred_check
      _
    $region22: #{pspool_forward.10} parent=5 // pred_check_branch
      %113 = sbr.rel (%p110) target = $region24
    $region23: #{pspool_forward.10} parent=5 // pred_region
      %s114 = ssub.s32 %s7, 1
      %s115 = smul.u32 2, %s17
      %p116 = scmp.lt.s32.totalorder %s16, 1
      %s117 = scalar_select %p116, %s16, 1
      %p118 = scmp.lt.s32.totalorder %s115, 7
      %s119 = scalar_select %p118, %s115, 7
      %s120 = smul.addr %s119, 2
      %s121 = smul.addr %s117, 16
      %s122 = sadd.s32 %s120, %s121
      %s123 = smul.addr %s122, 4
      %s124 = scalar_lea.vmem %s0, %s123
      %p125 = pneg %p47
      %p126 = pneg %p44
      %p127 = pneg %p75
      %p128 = pneg %p72
      %p129 = scmp.lt.s32.totalorder %s16, 1
      %s130 = scalar_select %p129, %s16, 1
      %p131 = scmp.lt.s32.totalorder %s17, 3
      %s132 = scalar_select %p131, %s17, 3
      %s133 = smul.addr %s130, 4
      %s134 = sadd.s32 %s132, %s133
      %s135 = smul.addr %s134, 4
      %s136 = scalar_lea.vmem %s1, %s135
      %s137 = smul.u32 2, %s17
      %p138 = scmp.lt.s32.totalorder %s16, 1
      %s139 = scalar_select %p138, %s16, 1
      %p140 = scmp.lt.s32.totalorder %s137, 7
      %s141 = scalar_select %p140, %s137, 7
      %s142 = smul.addr %s141, 2
      %s143 = smul.addr %s139, 16
      %s144 = sadd.s32 %s142, %s143
      %s145 = smul.addr %s144, 4
      %s146 = scalar_lea.vmem %s0, %s145
      %s147 = smul.u32 2, %s17
      %p148 = scmp.lt.s32.totalorder %s16, 1
      %s149 = scalar_select %p148, %s16, 1
      %p150 = scmp.lt.s32.totalorder %s17, 3
      %s151 = scalar_select %p150, %s17, 3
      %s152 = smul.addr %s149, 4
      %s153 = sadd.s32 %s151, %s152
      %s154 = smul.addr %s153, 4
      %s155 = scalar_lea.vmem %s1, %s154
      %v156 = vld [vmem:[%s146] sm:$0xff]
      %v157 = vld [vmem:[%s146 + $0x8] sm:$0xff]
      %v160 = vrot.slane %v156, 4
      %v161 = vrot.slane %v157, 4
      %v164 = vmax.f32 %v156, %v160
      %v165 = vmax.f32 %v157, %v161
      %v166 = vmax.f32 %v164, %v165
      %167 = vst [vmem:[%s155] sm:$0xf] %v166
      %p168 = scmp.lt.s32.totalorder %s16, 1
      %s169 = scalar_select %p168, %s16, 1
      %p170 = scmp.lt.s32.totalorder %s17, 3
      %s171 = scalar_select %p170, %s17, 3
      %s172 = smul.addr %s169, 4
      %s173 = sadd.s32 %s171, %s172
      %s174 = smul.addr %s173, 4
      %s175 = scalar_lea.vmem %s1, %s174
      // Predicated region
      $region25: #{pspool_forward.10} parent=23 // pred_check
        %p176 = pneg %p72
      $region26: #{pspool_forward.10} parent=23 // pred_check_branch
        %178 = sbr.rel (%p176) target = $region28
      $region27: #{pspool_forward.10} parent=23 // pred_region
        _
      $region28: #{pspool_forward.10} parent=23 // pred_fallthru
        _
    $region24: #{pspool_forward.10} parent=5 // pred_fallthru
      _
    %p179 = scmp.le.s32.totalorder 2, %s7
    // Predicated region
    $region29: #{pspool_forward.10} parent=5 // pred_check
      %p180 = pneg %p179
    $region30: #{pspool_forward.10} parent=5 // pred_check_branch
      %182 = sbr.rel (%p180) target = $region32
    $region31: #{pspool_forward.10} parent=5 // pred_region
      %s183 = ssub.s32 %s7, 2
      // Predicated region
      $region33: #{pspool_forward.10} parent=31 // pred_check
        %p184 = pneg %p78
      $region34: #{pspool_forward.10} parent=31 // pred_check_branch
        %186 = sbr.rel (%p184) target = $region36
      $region35: #{pspool_forward.10} parent=31 // pred_region
        %p187 = scmp.lt.s32.totalorder %s18, 1
        %s188 = scalar_select %p187, %s18, 1
        %p189 = scmp.lt.s32.totalorder %s19, 3
        %s190 = scalar_select %p189, %s19, 3
        %s191 = smul.addr %s188, 4
        %s192 = sadd.s32 %s190, %s191
        %s193 = smul.addr %s192, 4
        %s194 = scalar_lea.vmem %s1, %s193
      $region36: #{pspool_forward.10} parent=31 // pred_fallthru
        _
    $region32: #{pspool_forward.10} parent=5 // pred_fallthru
      _
  $region6: #{pspool_forward.10} parent=0 // loop_footer
    %s11 = sadd.s32 1, %s7
  $region7: #{pspool_forward.10} parent=0 // loop_footer_branch
    %6 = sbr.rel target = $region3
  $region8: #{pspool_forward.10} parent=0 // loop_exit
    _

// kernel: pspool_forward.12
$region0: #{pspool_forward.12}
  #allocation0 [shape = 'u32[]', space=smem, size = 0x4, offset = 0x4, fixed_abs, tag = 'smem constant byte address 0x4 - core index']
  #allocation1 [shape = 'u32[144,128]{1,0:T(1,128)}', space=vmem, size = 0x12000, scoped, tag = 'internal scratch']
  %s0 = inlined_call_operand.vmem [shape: f32[2,8,8,128], index: 0, kind: input, shape index: {}]
  %s1 = inlined_call_operand.vmem [shape: f32[128,128], index: 1, kind: input, shape index: {}]
  %s2 = inlined_call_operand.vmem [shape: f32[32,8], index: 2, kind: input, shape index: {}]
  %s3 = inlined_call_operand.vmem [shape: f32[2,8,32,128], index: 3, kind: output, shape index: {}]
  %s4 = sld [smem:[#allocation0]]
  $region45: #{pspool_forward.12} parent=0
    _
  %s6 = ssub.s32 1, %s4
  %s7 = scalar_select 0, %s6, %s4
  loop: start=0, step=1, limit=4
  $region2: #{pspool_forward.12} parent=0 // loop_pre_header
    _
  $region3: #{pspool_forward.12} parent=0 // loop_header
    %s9 = sphi 0, %s13
    %p10 = scmp.ge.s32.totalorder %s9, 4
    %s19 = sphi 0, %s21
    %s22 = sphi 0, %s19
    %s23 = sphi 0, %s22
    %s39 = sphi 0, %s23
    %s43 = sphi 0, %s43
    %s45 = sphi 0, %s43
    %s46 = sphi 0, %s45
    %s60 = sphi 0, %s46
    %s64 = sphi 0, %s64
    %s66 = sphi 0, %s64
    %s67 = sphi 0, %s66
    %s81 = sphi 0, %s67
    %s87 = sphi 0, %s89
    %s90 = sphi 0, %s87
    %s91 = sphi 0, %s90
    %s107 = sphi 0, %s91
  $region4: #{pspool_forward.12} parent=0 // loop_header_branch
    %12 = sbr.rel (%p10) target = $region8
  $region5: #{pspool_forward.12} parent=0 // loop_body
    %s14 = ssub.s32 %s9, 1
    %s15 = ssub.s32 %s9, 2
    %s16 = sadd.s32 %s9, 1
    %s17 = ssub.s32 %s9, %s16
    %p18 = scmp.eq.s32.totalorder %s17, 0
    %s20 = sadd.s32 %s19, 1
    %s21 = scalar_select %p18, %s19, %s20
    %p24 = pneg %p18
    %p25 = scmp.eq.s32.totalorder %s9, 1
    %p26 = por %p24, %p25
    %p27 = scmp.ne.s32.totalorder %s19, %s22
    %p28 = scmp.eq.s32.totalorder %s9, 0
    %p29 = por %p27, %p28
    %p30 = scmp.ne.s32.totalorder %s19, %s22
    %p31 = scmp.eq.s32.totalorder %s14, 1
    %p32 = por %p30, %p31
    %p33 = scmp.ne.s32.totalorder %s22, %s23
    %p34 = scmp.eq.s32.totalorder %s14, 0
    %p35 = por %p33, %p34
    %p36 = scmp.ne.s32.totalorder %s22, %s23
    %p37 = scmp.eq.s32.totalorder %s15, 1
    %p38 = por %p36, %p37
    %p40 = scmp.ne.s32.totalorder %s23, %s39
    %p41 = scmp.eq.s32.totalorder %s15, 0
    %p42 = por %p40, %p41
    %s44 = sadd.s32 %s43, 1
    %p47 = scmp.eq.s32.totalorder %s9, 1
    %p48 = scmp.ne.s32.totalorder %s43, %s45
    %p49 = scmp.eq.s32.totalorder %s9, 0
    %p50 = por %p48, %p49
    %p51 = scmp.ne.s32.totalorder %s43, %s45
    %p52 = scmp.eq.s32.totalorder %s14, 1
    %p53 = por %p51, %p52
    %p54 = scmp.ne.s32.totalorder %s45, %s46
    %p55 = scmp.eq.s32.totalorder %s14, 0
    %p56 = por %p54, %p55
    %p57 = scmp.ne.s32.totalorder %s45, %s46
    %p58 = scmp.eq.s32.totalorder %s15, 1
    %p59 = por %p57, %p58
    %p61 = scmp.ne.s32.totalorder %s46, %s60
    %p62 = scmp.eq.s32.totalorder %s15, 0
    %p63 = por %p61, %p62
    %s65 = sadd.s32 %s64, 1
    %p68 = scmp.eq.s32.totalorder %s9, 1
    %p69 = scmp.ne.s32.totalorder %s64, %s66
    %p70 = scmp.eq.s32.totalorder %s9, 0
    %p71 = por %p69, %p70
    %p72 = scmp.ne.s32.totalorder %s64, %s66
    %p73 = scmp.eq.s32.totalorder %s14, 1
    %p74 = por %p72, %p73
    %p75 = scmp.ne.s32.totalorder %s66, %s67
    %p76 = scmp.eq.s32.totalorder %s14, 0
    %p77 = por %p75, %p76
    %p78 = scmp.ne.s32.totalorder %s66, %s67
    %p79 = scmp.eq.s32.totalorder %s15, 1
    %p80 = por %p78, %p79
    %p82 = scmp.ne.s32.totalorder %s67, %s81
    %p83 = scmp.eq.s32.totalorder %s15, 0
    %p84 = por %p82, %p83
    %s85 = ssub.s32 %s9, %s16
    %p86 = scmp.eq.s32.totalorder %s85, 0
    %s88 = sadd.s32 %s87, 1
    %s89 = scalar_select %p86, %s87, %s88
    %p92 = pneg %p86
    %p93 = scmp.eq.s32.totalorder %s9, 1
    %p94 = por %p92, %p93
    %p95 = scmp.ne.s32.totalorder %s87, %s90
    %p96 = scmp.eq.s32.totalorder %s9, 0
    %p97 = por %p95, %p96
    %p98 = scmp.ne.s32.totalorder %s87, %s90
    %p99 = scmp.eq.s32.totalorder %s14, 1
    %p100 = por %p98, %p99
    %p101 = scmp.ne.s32.totalorder %s90, %s91
    %p102 = scmp.eq.s32.totalorder %s14, 0
    %p103 = por %p101, %p102
    %p104 = scmp.ne.s32.totalorder %s90, %s91
    %p105 = scmp.eq.s32.totalorder %s15, 1
    %p106 = por %p104, %p105
    %p108 = scmp.ne.s32.totalorder %s91, %s107
    %p109 = scmp.eq.s32.totalorder %s15, 0
    %p110 = por %p108, %p109
    %p111 = scmp.le.s32.totalorder 1, %s9
    %p112 = scmp.lt.s32.totalorder %s9, 3
    %p113 = pnand %p111, %p112
    %p114 = pneg %p113
    // Predicated region
    $region9: #{pspool_forward.12} parent=5 // pred_check
      _
    $region10: #{pspool_forward.12} parent=5 // pred_check_branch
      %116 = sbr.rel (%p113) target = $region12
    $region11: #{pspool_forward.12} parent=5 // pred_region
      %s117 = ssub.s32 %s9, 1
      // Predicated region
      $region13: #{pspool_forward.12} parent=11 // pred_check
        %p118 = pneg %p56
      $region14: #{pspool_forward.12} parent=11 // pred_check_branch
        %120 = sbr.rel (%p118) target = $region16
      $region15: #{pspool_forward.12} parent=11 // pred_region
        _
      $region16: #{pspool_forward.12} parent=11 // pred_fallthru
        _
      // Predicated region
      $region17: #{pspool_forward.12} parent=11 // pred_check
        %p121 = pneg %p77
      $region18: #{pspool_forward.12} parent=11 // pred_check_branch
        %123 = sbr.rel (%p121) target = $region20
      $region19: #{pspool_forward.12} parent=11 // pred_region
        _
      $region20: #{pspool_forward.12} parent=11 // pred_fallthru
        _
    $region12: #{pspool_forward.12} parent=5 // pred_fallthru
      _
    %p124 = scmp.lt.s32.totalorder %s9, 2
    // Predicated region
    $region21: #{pspool_forward.12} parent=5 // pred_check
      %p125 = pneg %p124
    $region22: #{pspool_forward.12} parent=5 // pred_check_branch
      %127 = sbr.rel (%p125) target = $region24
    $region23: #{pspool_forward.12} parent=5 // pred_region
      // Predicated region
      $region25: #{pspool_forward.12} parent=23 // pred_check
        %p128 = pneg %p29
      $region26: #{pspool_forward.12} parent=23 // pred_check_branch
        %130 = sbr.rel (%p128) target = $region28
      $region27: #{pspool_forward.12} parent=23 // pred_region
        %p131 = scmp.lt.s32.totalorder %s9, 1
        %s132 = scalar_select %p131, %s9, 1
        %s133 = smul.addr %s132, 8
        %s134 = smul.addr %s133, 8
        %s135 = scalar_lea.vmem %s0, %s134
      $region28: #{pspool_forward.12} parent=23 // pred_fallthru
        _
    $region24: #{pspool_forward.12} parent=5 // pred_fallthru
      _
    %p136 = scmp.le.s32.totalorder 1, %s9
    %p137 = scmp.lt.s32.totalorder %s9, 3
    %p138 = pnand %p136, %p137
    %p139 = pneg %p138
    // Predicated region
    $region29: #{pspool_forward.12} parent=5 // pred_check
      _
    $region30: #{pspool_forward.12} parent=5 // pred_check_branch
      %141 = sbr.rel (%p138) target = $region32
    $region31: #{pspool_forward.12} parent=5 // pred_region
      %s142 = ssub.s32 %s9, 1
      %p143 = scmp.lt.s32.totalorder %s14, 1
      %s144 = scalar_select %p143, %s14, 1
      %s145 = smul.addr %s144, 8
      %s146 = smul.addr %s145, 8
      %s147 = scalar_lea.vmem %s0, %s146
      %p148 = pneg %p35
      %p149 = pneg %p32
      %p150 = pneg %p56
      %p151 = pneg %p53
      %p152 = pneg %p77
      %p153 = pneg %p74
      %p154 = pneg %p103
      %p155 = pneg %p100
      %p156 = scmp.lt.s32.totalorder %s14, 1
      %s157 = scalar_select %p156, %s14, 1
      %s158 = smul.addr %s157, 32
      %s159 = smul.addr %s158, 8
      %s160 = scalar_lea.vmem %s3, %s159
      %p161 = scmp.lt.s32.totalorder %s14, 1
      %s162 = scalar_select %p161, %s14, 1
      %s163 = smul.addr %s162, 8
      %s164 = smul.addr %s163, 8
      %s165 = scalar_lea.vmem %s0, %s164
      %p166 = scmp.lt.s32.totalorder %s14, 1
      %s167 = scalar_select %p166, %s14, 1
      %s168 = smul.addr %s167, 32
      %s169 = smul.addr %s168, 8
      %s170 = scalar_lea.vmem %s3, %s169
      %v171 = vld [vmem:[%s1] sm:$0xff]
      %v172 = vld [vmem:[%s1 + $0x8] sm:$0xff]
      %v173 = vld [vmem:[%s1 + $0x10] sm:$0xff]
      %v174 = vld [vmem:[%s1 + $0x18] sm:$0xff]
      %v175 = vld [vmem:[%s1 + $0x20] sm:$0xff]
      %v176 = vld [vmem:[%s1 + $0x28] sm:$0xff]
      %v177 = vld [vmem:[%s1 + $0x30] sm:$0xff]
      %v178 = vld [vmem:[%s1 + $0x38] sm:$0xff]
      %v179 = vld [vmem:[%s1 + $0x40] sm:$0xff]
      %v180 = vld [vmem:[%s1 + $0x48] sm:$0xff]
      %v181 = vld [vmem:[%s1 + $0x50] sm:$0xff]
      %v182 = vld [vmem:[%s1 + $0x58] sm:$0xff]
      %v183 = vld [vmem:[%s1 + $0x60] sm:$0xff]
      %v184 = vld [vmem:[%s1 + $0x68] sm:$0xff]
      %v185 = vld [vmem:[%s1 + $0x70] sm:$0xff]
      %v186 = vld [vmem:[%s1 + $0x78] sm:$0xff]
      %v187 = vld [vmem:[%s2] sm:$0xff]
      %v188 = vld [vmem:[%s2 + $0x8] sm:$0xff]
      %v189 = vld [vmem:[%s2 + $0x10] sm:$0xff]
      %v190 = vld [vmem:[%s2 + $0x18] sm:$0xff]
      %v191 = vld [vmem:[%s165] sm:$0xff]
      %192 = vmatprep.subr.mxu0 0.0
      %193 = vmatpush1.msra.mxu0 %v171
      %194 = vmatprep.subr.mxu0 0.0
      %195 = vmatpush1.msra.mxu0 %v172
      %196 = vmatprep.subr.mxu0 0.0
      %197 = vmatpush1.msra.mxu0 %v173
      %198 = vmatprep.subr.mxu0 0.0
      %199 = vmatpush1.msra.mxu0 %v174
      %200 = vmatprep.subr.mxu0 0.0
      %201 = vmatpush1.msra.mxu0 %v175
      %202 = vmatprep.subr.mxu0 0.0
      %203 = vmatpush1.msra.mxu0 %v176
      %204 = vmatprep.subr.mxu0 0.0
      %205 = vmatpush1.msra.mxu0 %v177
      %206 = vmatprep.subr.mxu0 0.0
      %207 = vmatpush1.msra.mxu0 %v178
      %208 = vmatprep.subr.mxu0 0.0
      %209 = vmatpush1.msra.mxu0 %v179
      %210 = vmatprep.subr.mxu0 0.0
      %211 = vmatpush1.msra.mxu0 %v180
      %212 = vmatprep.subr.mxu0 0.0
      %213 = vmatpush1.msra.mxu0 %v181
      %214 = vmatprep.subr.mxu0 0.0
      %215 = vmatpush1.msra.mxu0 %v182
      %216 = vmatprep.subr.mxu0 0.0
      %217 = vmatpush1.msra.mxu0 %v183
      %218 = vmatprep.subr.mxu0 0.0
      %219 = vmatpush1.msra.mxu0 %v184
      %220 = vmatprep.subr.mxu0 0.0
      %221 = vmatpush1.msra.mxu0 %v185
      %222 = vmatprep.subr.mxu0 0.0
      %223 = vmatpush1.msra.mxu0 %v186
      %224 = vmatprep.subr.mxu0 0.0
      %225 = vmatpush1.msra.mxu0 0.0
      %226 = vmatprep.subr.mxu0 0.0
      %227 = vmatpush1.msra.mxu0 0.0
      %228 = vmatprep.subr.mxu0 0.0
      %229 = vmatpush1.msra.mxu0 0.0
      %230 = vmatprep.subr.mxu0 0.0
      %231 = vmatpush1.msra.mxu0 0.0
      %232 = vmatprep.subr.mxu0 0.0
      %233 = vmatpush1.msra.mxu0 0.0
      %234 = vmatprep.subr.mxu0 0.0
      %235 = vmatpush1.msra.mxu0 0.0
      %236 = vmatprep.subr.mxu0 0.0
      %237 = vmatpush1.msra.mxu0 0.0
      %238 = vmatprep.subr.mxu0 0.0
      %239 = vmatpush1.msra.mxu0 0.0
      %240 = vmatprep.subr.mxu0 0.0
      %241 = vmatpush1.msra.mxu0 0.0
      %242 = vmatprep.subr.mxu0 0.0
      %243 = vmatpush1.msra.mxu0 0.0
      %244 = vmatprep.subr.mxu0 0.0
      %245 = vmatpush1.msra.mxu0 0.0
      %246 = vmatprep.subr.mxu0 0.0
      %247 = vmatpush1.msra.mxu0 0.0
      %248 = vmatprep.subr.mxu0 0.0
      %249 = vmatpush1.msra.mxu0 0.0
      %250 = vmatprep.subr.mxu0 0.0
      %251 = vmatpush1.msra.mxu0 0.0
      %252 = vmatprep.subr.mxu0 0.0
      %253 = vmatpush1.msra.mxu0 0.0
      %254 = vmatprep.subr.mxu0 0.0
      %255 = vmatpush1.msra.mxu0 0.0
      %256 = vmatprep.mubr.f32.mxu0 0.0
      %257 = vmatmul.mubr.f32.gmra.mrb[0].mxu0 %v191
      %v258 = vpop.f32.mrb[0].mxu0
      %v259 = vadd.f32 0.0, %v258
      %v260 = vpop.f32.mrb[0].mxu0
      %261 = vdwg.mxu0
      %vm262 = vcmask 64512
      %v264 = vsel %vm262, %v187, 0
      %v267 = vsel %vm262, %v188, 0
      %v270 = vsel %vm262, %v189, 0
      %v273 = vsel %vm262, %v190, 0
      %275 = vmatprep.subr.mxu0 0.0
      %276 = vmatpush1.msra.mxu0 %v259
      %277 = vmatprep.subr.mxu0 0.0
      %278 = vmatpush1.msra.mxu0 0.0
      %279 = vmatprep.subr.mxu0 0.0
      %280 = vmatpush1.msra.mxu0 0.0
      %281 = vmatprep.subr.mxu0 0.0
      %282 = vmatpush1.msra.mxu0 0.0
      %283 = vmatprep.subr.mxu0 0.0
      %284 = vmatpush1.msra.mxu0 0.0
      %285 = vmatprep.subr.mxu0 0.0
      %286 = vmatpush1.msra.mxu0 0.0
      %287 = vmatprep.subr.mxu0 0.0
      %288 = vmatpush1.msra.mxu0 0.0
      %289 = vmatprep.subr.mxu0 0.0
      %290 = vmatpush1.msra.mxu0 0.0
      %291 = vmatprep.subr.mxu0 0.0
      %292 = vmatpush1.msra.mxu0 0.0
      %293 = vmatprep.subr.mxu0 0.0
      %294 = vmatpush1.msra.mxu0 0.0
      %295 = vmatprep.subr.mxu0 0.0
      %296 = vmatpush1.msra.mxu0 0.0
      %297 = vmatprep.subr.mxu0 0.0
      %298 = vmatpush1.msra.mxu0 0.0
      %299 = vmatprep.subr.mxu0 0.0
      %300 = vmatpush1.msra.mxu0 0.0
      %301 = vmatprep.subr.mxu0 0.0
      %302 = vmatpush1.msra.mxu0 0.0
      %303 = vmatprep.subr.mxu0 0.0
      %304 = vmatpush1.msra.mxu0 0.0
      %305 = vmatprep.subr.mxu0 0.0
      %306 = vmatpush1.msra.mxu0 0.0
      %307 = vmatprep.subr.mxu0 0.0
      %308 = vmatpush1.msra.mxu0 0.0
      %309 = vmatprep.subr.mxu0 0.0
      %310 = vmatpush1.msra.mxu0 0.0
      %311 = vmatprep.subr.mxu0 0.0
      %312 = vmatpush1.msra.mxu0 0.0
      %313 = vmatprep.subr.mxu0 0.0
      %314 = vmatpush1.msra.mxu0 0.0
      %315 = vmatprep.subr.mxu0 0.0
      %316 = vmatpush1.msra.mxu0 0.0
      %317 = vmatprep.subr.mxu0 0.0
      %318 = vmatpush1.msra.mxu0 0.0
      %319 = vmatprep.subr.mxu0 0.0
      %320 = vmatpush1.msra.mxu0 0.0
      %321 = vmatprep.subr.mxu0 0.0
      %322 = vmatpush1.msra.mxu0 0.0
      %323 = vmatprep.subr.mxu0 0.0
      %324 = vmatpush1.msra.mxu0 0.0
      %325 = vmatprep.subr.mxu0 0.0
      %326 = vmatpush1.msra.mxu0 0.0
      %327 = vmatprep.subr.mxu0 0.0
      %328 = vmatpush1.msra.mxu0 0.0
      %329 = vmatprep.subr.mxu0 0.0
      %330 = vmatpush1.msra.mxu0 0.0
      %331 = vmatprep.subr.mxu0 0.0
      %332 = vmatpush1.msra.mxu0 0.0
      %333 = vmatprep.subr.mxu0 0.0
      %334 = vmatpush1.msra.mxu0 0.0
      %335 = vmatprep.subr.mxu0 0.0
      %336 = vmatpush1.msra.mxu0 0.0
      %337 = vmatprep.subr.mxu0 0.0
      %338 = vmatpush1.msra.mxu0 0.0
      %339 = vmatprep.mubr.f32.mxu0 0.0
      %340 = vmatmul.mubr.f32.gmra.mrb[0].mxu0 %v264
      %v341 = vpop.f32.mrb[0].mxu0
      %v342 = vadd.f32 0.0, %v341
      %v343 = vpop.f32.mrb[0].mxu0
      %344 = vmatprep.mubr.f32.mxu0 0.0
      %345 = vmatmul.mubr.f32.gmra.mrb[0].mxu0 %v267
      %v346 = vpop.f32.mrb[0].mxu0
      %v347 = vadd.f32 0.0, %v346
      %v348 = vpop.f32.mrb[0].mxu0
      %349 = vmatprep.mubr.f32.mxu0 0.0
      %350 = vmatmul.mubr.f32.gmra.mrb[0].mxu0 %v270
      %v351 = vpop.f32.mrb[0].mxu0
      %v352 = vadd.f32 0.0, %v351
      %v353 = vpop.f32.mrb[0].mxu0
      %354 = vmatprep.mubr.f32.mxu0 0.0
      %355 = vmatmul.mubr.f32.gmra.mrb[0].mxu0 %v273
      %v356 = vpop.f32.mrb[0].mxu0
      %v357 = vadd.f32 0.0, %v356
      %v358 = vpop.f32.mrb[0].mxu0
      %359 = vdwg.mxu0
      %360 = vst [vmem:[%s170] sm:$0xff] %v342
      %361 = vst [vmem:[%s170 + $0x8] sm:$0xff] %v347
      %362 = vst [vmem:[%s170 + $0x10] sm:$0xff] %v352
      %363 = vst [vmem:[%s170 + $0x18] sm:$0xff] %v357
      %s364 = scalar_lea.vmem %s165, 8
      %v365 = vld [vmem:[%s364] sm:$0xff]
      %366 = vmatprep.subr.mxu0 0.0
      %367 = vmatpush1.msra.mxu0 %v171
      %368 = vmatprep.subr.mxu0 0.0
      %369 = vmatpush1.msra.mxu0 %v172
      %370 = vmatprep.subr.mxu0 0.0
      %371 = vmatpush1.msra.mxu0 %v173
      %372 = vmatprep.subr.mxu0 0.0
      %373 = vmatpush1.msra.mxu0 %v174
      %374 = vmatprep.subr.mxu0 0.0
      %375 = vmatpush1.msra.mxu0 %v175
      %376 = vmatprep.subr.mxu0 0.0
      %377 = vmatpush1.msra.mxu0 %v176
      %378 = vmatprep.subr.mxu0 0.0
      %379 = vmatpush1.msra.mxu0 %v177
      %380 = vmatprep.subr.mxu0 0.0
      %381 = vmatpush1.msra.mxu0 %v178
      %382 = vmatprep.subr.mxu0 0.0
      %383 = vmatpush1.msra.mxu0 %v179
      %384 = vmatprep.subr.mxu0 0.0
      %385 = vmatpush1.msra.mxu0 %v180
      %386 = vmatprep.subr.mxu0 0.0
      %387 = vmatpush1.msra.mxu0 %v181
      %388 = vmatprep.subr.mxu0 0.0
      %389 = vmatpush1.msra.mxu0 %v182
      %390 = vmatprep.subr.mxu0 0.0
      %391 = vmatpush1.msra.mxu0 %v183
      %392 = vmatprep.subr.mxu0 0.0
      %393 = vmatpush1.msra.mxu0 %v184
      %394 = vmatprep.subr.mxu0 0.0
      %395 = vmatpush1.msra.mxu0 %v185
      %396 = vmatprep.subr.mxu0 0.0
      %397 = vmatpush1.msra.mxu0 %v186
      %398 = vmatprep.subr.mxu0 0.0
      %399 = vmatpush1.msra.mxu0 0.0
      %400 = vmatprep.subr.mxu0 0.0
      %401 = vmatpush1.msra.mxu0 0.0
      %402 = vmatprep.subr.mxu0 0.0
      %403 = vmatpush1.msra.mxu0 0.0
      %404 = vmatprep.subr.mxu0 0.0
      %405 = vmatpush1.msra.mxu0 0.0
      %406 = vmatprep.subr.mxu0 0.0
      %407 = vmatpush1.msra.mxu0 0.0
      %408 = vmatprep.subr.mxu0 0.0
      %409 = vmatpush1.msra.mxu0 0.0
      %410 = vmatprep.subr.mxu0 0.0
      %411 = vmatpush1.msra.mxu0 0.0
      %412 = vmatprep.subr.mxu0 0.0
      %413 = vmatpush1.msra.mxu0 0.0
      %414 = vmatprep.subr.mxu0 0.0
      %415 = vmatpush1.msra.mxu0 0.0
      %416 = vmatprep.subr.mxu0 0.0
      %417 = vmatpush1.msra.mxu0 0.0
      %418 = vmatprep.subr.mxu0 0.0
      %419 = vmatpush1.msra.mxu0 0.0
      %420 = vmatprep.subr.mxu0 0.0
      %421 = vmatpush1.msra.mxu0 0.0
      %422 = vmatprep.subr.mxu0 0.0
      %423 = vmatpush1.msra.mxu0 0.0
      %424 = vmatprep.subr.mxu0 0.0
      %425 = vmatpush1.msra.mxu0 0.0
      %426 = vmatprep.subr.mxu0 0.0
      %427 = vmatpush1.msra.mxu0 0.0
      %428 = vmatprep.subr.mxu0 0.0
      %429 = vmatpush1.msra.mxu0 0.0
      %430 = vmatprep.mubr.f32.mxu0 0.0
      %431 = vmatmul.mubr.f32.gmra.mrb[0].mxu0 %v365
      %v432 = vpop.f32.mrb[0].mxu0
      %v433 = vadd.f32 0.0, %v432
      %v434 = vpop.f32.mrb[0].mxu0
      %435 = vdwg.mxu0
      %436 = vmatprep.subr.mxu0 0.0
      %437 = vmatpush1.msra.mxu0 %v433
      %438 = vmatprep.subr.mxu0 0.0
      %439 = vmatpush1.msra.mxu0 0.0
      %440 = vmatprep.subr.mxu0 0.0
      %441 = vmatpush1.msra.mxu0 0.0
      %442 = vmatprep.subr.mxu0 0.0
      %443 = vmatpush1.msra.mxu0 0.0
      %444 = vmatprep.subr.mxu0 0.0
      %445 = vmatpush1.msra.mxu0 0.0
      %446 = vmatprep.subr.mxu0 0.0
      %447 = vmatpush1.msra.mxu0 0.0
      %448 = vmatprep.subr.mxu0 0.0
      %449 = vmatpush1.msra.mxu0 0.0
      %450 = vmatprep.subr.mxu0 0.0
      %451 = vmatpush1.msra.mxu0 0.0
      %452 = vmatprep.subr.mxu0 0.0
      %453 = vmatpush1.msra.mxu0 0.0
      %454 = vmatprep.subr.mxu0 0.0
      %455 = vmatpush1.msra.mxu0 0.0
      %456 = vmatprep.subr.mxu0 0.0
      %457 = vmatpush1.msra.mxu0 0.0
      %458 = vmatprep.subr.mxu0 0.0
      %459 = vmatpush1.msra.mxu0 0.0
      %460 = vmatprep.subr.mxu0 0.0
      %461 = vmatpush1.msra.mxu0 0.0
      %462 = vmatprep.subr.mxu0 0.0
      %463 = vmatpush1.msra.mxu0 0.0
      %464 = vmatprep.subr.mxu0 0.0
      %465 = vmatpush1.msra.mxu0 0.0
      %466 = vmatprep.subr.mxu0 0.0
      %467 = vmatpush1.msra.mxu0 0.0
      %468 = vmatprep.subr.mxu0 0.0
      %469 = vmatpush1.msra.mxu0 0.0
      %470 = vmatprep.subr.mxu0 0.0
      %471 = vmatpush1.msra.mxu0 0.0
      %472 = vmatprep.subr.mxu0 0.0
      %473 = vmatpush1.msra.mxu0 0.0
      %474 = vmatprep.subr.mxu0 0.0
      %475 = vmatpush1.msra.mxu0 0.0
      %476 = vmatprep.subr.mxu0 0.0
      %477 = vmatpush1.msra.mxu0 0.0
      %478 = vmatprep.subr.mxu0 0.0
      %479 = vmatpush1.msra.mxu0 0.0
      %480 = vmatprep.subr.mxu0 0.0
      %481 = vmatpush1.msra.mxu0 0.0
      %482 = vmatprep.subr.mxu0 0.0
      %483 = vmatpush1.msra.mxu0 0.0
      %484 = vmatprep.subr.mxu0 0.0
      %485 = vmatpush1.msra.mxu0 0.0
      %486 = vmatprep.subr.mxu0 0.0
      %487 = vmatpush1.msra.mxu0 0.0
      %488 = vmatprep.subr.mxu0 0.0
      %489 = vmatpush1.msra.mxu0 0.0
      %490 = vmatprep.subr.mxu0 0.0
      %491 = vmatpush1.msra.mxu0 0.0
      %492 = vmatprep.subr.mxu0 0.0
      %493 = vmatpush1.msra.mxu0 0.0
      %494 = vmatprep.subr.mxu0 0.0
      %495 = vmatpush1.msra.mxu0 0.0
      %496 = vmatprep.subr.mxu0 0.0
      %497 = vmatpush1.msra.mxu0 0.0
      %498 = vmatprep.subr.mxu0 0.0
      %499 = vmatpush1.msra.mxu0 0.0
      %500 = vmatprep.mubr.f32.mxu0 0.0
      %501 = vmatmul.mubr.f32.gmra.mrb[0].mxu0 %v264
      %v502 = vpop.f32.mrb[0].mxu0
      %v503 = vadd.f32 0.0, %v502
      %v504 = vpop.f32.mrb[0].mxu0
      %505 = vmatprep.mubr.f32.mxu0 0.0
      %506 = vmatmul.mubr.f32.gmra.mrb[0].mxu0 %v267
      %v507 = vpop.f32.mrb[0].mxu0
      %v508 = vadd.f32 0.0, %v507
      %v509 = vpop.f32.mrb[0].mxu0
      %510 = vmatprep.mubr.f32.mxu0 0.0
      %511 = vmatmul.mubr.f32.gmra.mrb[0].mxu0 %v270
      %v512 = vpop.f32.mrb[0].mxu0
      %v513 = vadd.f32 0.0, %v512
      %v514 = vpop.f32.mrb[0].mxu0
      %515 = vmatprep.mubr.f32.mxu0 0.0
      %516 = vmatmul.mubr.f32.gmra.mrb[0].mxu0 %v273
      %v517 = vpop.f32.mrb[0].mxu0
      %v518 = vadd.f32 0.0, %v517
      %v519 = vpop.f32.mrb[0].mxu0
      %520 = vdwg.mxu0
      %s521 = scalar_lea.vmem %s170, 32
      %522 = vst [vmem:[%s521] sm:$0xff] %v503
      %523 = vst [vmem:[%s521 + $0x8] sm:$0xff] %v508
      %524 = vst [vmem:[%s521 + $0x10] sm:$0xff] %v513
      %525 = vst [vmem:[%s521 + $0x18] sm:$0xff] %v518
      %s526 = scalar_lea.vmem %s165, 16
      %v527 = vld [vmem:[%s526] sm:$0xff]
      %528 = vmatprep.subr.mxu0 0.0
      %529 = vmatpush1.msra.mxu0 %v171
      %530 = vmatprep.subr.mxu0 0.0
      %531 = vmatpush1.msra.mxu0 %v172
      %532 = vmatprep.subr.mxu0 0.0
      %533 = vmatpush1.msra.mxu0 %v173
      %534 = vmatprep.subr.mxu0 0.0
      %535 = vmatpush1.msra.mxu0 %v174
      %536 = vmatprep.subr.mxu0 0.0
      %537 = vmatpush1.msra.mxu0 %v175
      %538 = vmatprep.subr.mxu0 0.0
      %539 = vmatpush1.msra.mxu0 %v176
      %540 = vmatprep.subr.mxu0 0.0
      %541 = vmatpush1.msra.mxu0 %v177
      %542 = vmatprep.subr.mxu0 0.0
      %543 = vmatpush1.msra.mxu0 %v178
      %544 = vmatprep.subr.mxu0 0.0
      %545 = vmatpush1.msra.mxu0 %v179
      %546 = vmatprep.subr.mxu0 0.0
      %547 = vmatpush1.msra.mxu0 %v180
      %548 = vmatprep.subr.mxu0 0.0
      %549 = vmatpush1.msra.mxu0 %v181
      %550 = vmatprep.subr.mxu0 0.0
      %551 = vmatpush1.msra.mxu0 %v182
      %552 = vmatprep.subr.mxu0 0.0
      %553 = vmatpush1.msra.mxu0 %v183
      %554 = vmatprep.subr.mxu0 0.0
      %555 = vmatpush1.msra.mxu0 %v184
      %556 = vmatprep.subr.mxu0 0.0
      %557 = vmatpush1.msra.mxu0 %v185
      %558 = vmatprep.subr.mxu0 0.0
      %559 = vmatpush1.msra.mxu0 %v186
      %560 = vmatprep.subr.mxu0 0.0
      %561 = vmatpush1.msra.mxu0 0.0
      %562 = vmatprep.subr.mxu0 0.0
      %563 = vmatpush1.msra.mxu0 0.0
      %564 = vmatprep.subr.mxu0 0.0
      %565 = vmatpush1.msra.mxu0 0.0
      %566 = vmatprep.subr.mxu0 0.0
      %567 = vmatpush1.msra.mxu0 0.0
      %568 = vmatprep.subr.mxu0 0.0
      %569 = vmatpush1.msra.mxu0 0.0
      %570 = vmatprep.subr.mxu0 0.0
      %571 = vmatpush1.msra.mxu0 0.0
      %572 = vmatprep.subr.mxu0 0.0
      %573 = vmatpush1.msra.mxu0 0.0
      %574 = vmatprep.subr.mxu0 0.0
      %575 = vmatpush1.msra.mxu0 0.0
      %576 = vmatprep.subr.mxu0 0.0
      %577 = vmatpush1.msra.mxu0 0.0
      %578 = vmatprep.subr.mxu0 0.0
      %579 = vmatpush1.msra.mxu0 0.0
      %580 = vmatprep.subr.mxu0 0.0
      %581 = vmatpush1.msra.mxu0 0.0
      %582 = vmatprep.subr.mxu0 0.0
      %583 = vmatpush1.msra.mxu0 0.0
      %584 = vmatprep.subr.mxu0 0.0
      %585 = vmatpush1.msra.mxu0 0.0
      %586 = vmatprep.subr.mxu0 0.0
      %587 = vmatpush1.msra.mxu0 0.0
      %588 = vmatprep.subr.mxu0 0.0
      %589 = vmatpush1.msra.mxu0 0.0
      %590 = vmatprep.subr.mxu0 0.0
      %591 = vmatpush1.msra.mxu0 0.0
      %592 = vmatprep.mubr.f32.mxu0 0.0
      %593 = vmatmul.mubr.f32.gmra.mrb[0].mxu0 %v527
      %v594 = vpop.f32.mrb[0].mxu0
      %v595 = vadd.f32 0.0, %v594
      %v596 = vpop.f32.mrb[0].mxu0
      %597 = vdwg.mxu0
      %598 = vmatprep.subr.mxu0 0.0
      %599 = vmatpush1.msra.mxu0 %v595
      %600 = vmatprep.subr.mxu0 0.0
      %601 = vmatpush1.msra.mxu0 0.0
      %602 = vmatprep.subr.mxu0 0.0
      %603 = vmatpush1.msra.mxu0 0.0
      %604 = vmatprep.subr.mxu0 0.0
      %605 = vmatpush1.msra.mxu0 0.0
      %606 = vmatprep.subr.mxu0 0.0
      %607 = vmatpush1.msra.mxu0 0.0
      %608 = vmatprep.subr.mxu0 0.0
      %609 = vmatpush1.msra.mxu0 0.0
      %610 = vmatprep.subr.mxu0 0.0
      %611 = vmatpush1.msra.mxu0 0.0
      %612 = vmatprep.subr.mxu0 0.0
      %613 = vmatpush1.msra.mxu0 0.0
      %614 = vmatprep.subr.mxu0 0.0
      %615 = vmatpush1.msra.mxu0 0.0
      %616 = vmatprep.subr.mxu0 0.0
      %617 = vmatpush1.msra.mxu0 0.0
      %618 = vmatprep.subr.mxu0 0.0
      %619 = vmatpush1.msra.mxu0 0.0
      %620 = vmatprep.subr.mxu0 0.0
      %621 = vmatpush1.msra.mxu0 0.0
      %622 = vmatprep.subr.mxu0 0.0
      %623 = vmatpush1.msra.mxu0 0.0
      %624 = vmatprep.subr.mxu0 0.0
      %625 = vmatpush1.msra.mxu0 0.0
      %626 = vmatprep.subr.mxu0 0.0
      %627 = vmatpush1.msra.mxu0 0.0
      %628 = vmatprep.subr.mxu0 0.0
      %629 = vmatpush1.msra.mxu0 0.0
      %630 = vmatprep.subr.mxu0 0.0
      %631 = vmatpush1.msra.mxu0 0.0
      %632 = vmatprep.subr.mxu0 0.0
      %633 = vmatpush1.msra.mxu0 0.0
      %634 = vmatprep.subr.mxu0 0.0
      %635 = vmatpush1.msra.mxu0 0.0
      %636 = vmatprep.subr.mxu0 0.0
      %637 = vmatpush1.msra.mxu0 0.0
      %638 = vmatprep.subr.mxu0 0.0
      %639 = vmatpush1.msra.mxu0 0.0
      %640 = vmatprep.subr.mxu0 0.0
      %641 = vmatpush1.msra.mxu0 0.0
      %642 = vmatprep.subr.mxu0 0.0
      %643 = vmatpush1.msra.mxu0 0.0
      %644 = vmatprep.subr.mxu0 0.0
      %645 = vmatpush1.msra.mxu0 0.0
      %646 = vmatprep.subr.mxu0 0.0
      %647 = vmatpush1.msra.mxu0 0.0
      %648 = vmatprep.subr.mxu0 0.0
      %649 = vmatpush1.msra.mxu0 0.0
      %650 = vmatprep.subr.mxu0 0.0
      %651 = vmatpush1.msra.mxu0 0.0
      %652 = vmatprep.subr.mxu0 0.0
      %653 = vmatpush1.msra.mxu0 0.0
      %654 = vmatprep.subr.mxu0 0.0
      %655 = vmatpush1.msra.mxu0 0.0
      %656 = vmatprep.subr.mxu0 0.0
      %657 = vmatpush1.msra.mxu0 0.0
      %658 = vmatprep.subr.mxu0 0.0
      %659 = vmatpush1.msra.mxu0 0.0
      %660 = vmatprep.subr.mxu0 0.0
      %661 = vmatpush1.msra.mxu0 0.0
      %662 = vmatprep.mubr.f32.mxu0 0.0
      %663 = vmatmul.mubr.f32.gmra.mrb[0].mxu0 %v264
      %v664 = vpop.f32.mrb[0].mxu0
      %v665 = vadd.f32 0.0, %v664
      %v666 = vpop.f32.mrb[0].mxu0
      %667 = vmatprep.mubr.f32.mxu0 0.0
      %668 = vmatmul.mubr.f32.gmra.mrb[0].mxu0 %v267
      %v669 = vpop.f32.mrb[0].mxu0
      %v670 = vadd.f32 0.0, %v669
      %v671 = vpop.f32.mrb[0].mxu0
      %672 = vmatprep.mubr.f32.mxu0 0.0
      %673 = vmatmul.mubr.f32.gmra.mrb[0].mxu0 %v270
      %v674 = vpop.f32.mrb[0].mxu0
      %v675 = vadd.f32 0.0, %v674
      %v676 = vpop.f32.mrb[0].mxu0
      %677 = vmatprep.mubr.f32.mxu0 0.0
      %678 = vmatmul.mubr.f32.gmra.mrb[0].mxu0 %v273
      %v679 = vpop.f32.mrb[0].mxu0
      %v680 = vadd.f32 0.0, %v679
      %v681 = vpop.f32.mrb[0].mxu0
      %682 = vdwg.mxu0
      %s683 = scalar_lea.vmem %s170, 64
      %684 = vst [vmem:[%s683] sm:$0xff] %v665
      %685 = vst [vmem:[%s683 + $0x8] sm:$0xff] %v670
      %686 = vst [vmem:[%s683 + $0x10] sm:$0xff] %v675
      %687 = vst [vmem:[%s683 + $0x18] sm:$0xff] %v680
      %s688 = scalar_lea.vmem %s165, 24
      %v689 = vld [vmem:[%s688] sm:$0xff]
      %690 = vmatprep.subr.mxu0 0.0
      %691 = vmatpush1.msra.mxu0 %v171
      %692 = vmatprep.subr.mxu0 0.0
      %693 = vmatpush1.msra.mxu0 %v172
      %694 = vmatprep.subr.mxu0 0.0
      %695 = vmatpush1.msra.mxu0 %v173
      %696 = vmatprep.subr.mxu0 0.0
      %697 = vmatpush1.msra.mxu0 %v174
      %698 = vmatprep.subr.mxu0 0.0
      %699 = vmatpush1.msra.mxu0 %v175
      %700 = vmatprep.subr.mxu0 0.0
      %701 = vmatpush1.msra.mxu0 %v176
      %702 = vmatprep.subr.mxu0 0.0
      %703 = vmatpush1.msra.mxu0 %v177
      %704 = vmatprep.subr.mxu0 0.0
      %705 = vmatpush1.msra.mxu0 %v178
      %706 = vmatprep.subr.mxu0 0.0
      %707 = vmatpush1.msra.mxu0 %v179
      %708 = vmatprep.subr.mxu0 0.0
      %709 = vmatpush1.msra.mxu0 %v180
      %710 = vmatprep.subr.mxu0 0.0
      %711 = vmatpush1.msra.mxu0 %v181
      %712 = vmatprep.subr.mxu0 0.0
      %713 = vmatpush1.msra.mxu0 %v182
      %714 = vmatprep.subr.mxu0 0.0
      %715 = vmatpush1.msra.mxu0 %v183
      %716 = vmatprep.subr.mxu0 0.0
      %717 = vmatpush1.msra.mxu0 %v184
      %718 = vmatprep.subr.mxu0 0.0
      %719 = vmatpush1.msra.mxu0 %v185
      %720 = vmatprep.subr.mxu0 0.0
      %721 = vmatpush1.msra.mxu0 %v186
      %722 = vmatprep.subr.mxu0 0.0
      %723 = vmatpush1.msra.mxu0 0.0
      %724 = vmatprep.subr.mxu0 0.0
      %725 = vmatpush1.msra.mxu0 0.0
      %726 = vmatprep.subr.mxu0 0.0
      %727 = vmatpush1.msra.mxu0 0.0
      %728 = vmatprep.subr.mxu0 0.0
      %729 = vmatpush1.msra.mxu0 0.0
      %730 = vmatprep.subr.mxu0 0.0
      %731 = vmatpush1.msra.mxu0 0.0
      %732 = vmatprep.subr.mxu0 0.0
      %733 = vmatpush1.msra.mxu0 0.0
      %734 = vmatprep.subr.mxu0 0.0
      %735 = vmatpush1.msra.mxu0 0.0
      %736 = vmatprep.subr.mxu0 0.0
      %737 = vmatpush1.msra.mxu0 0.0
      %738 = vmatprep.subr.mxu0 0.0
      %739 = vmatpush1.msra.mxu0 0.0
      %740 = vmatprep.subr.mxu0 0.0
      %741 = vmatpush1.msra.mxu0 0.0
      %742 = vmatprep.subr.mxu0 0.0
      %743 = vmatpush1.msra.mxu0 0.0
      %744 = vmatprep.subr.mxu0 0.0
      %745 = vmatpush1.msra.mxu0 0.0
      %746 = vmatprep.subr.mxu0 0.0
      %747 = vmatpush1.msra.mxu0 0.0
      %748 = vmatprep.subr.mxu0 0.0
      %749 = vmatpush1.msra.mxu0 0.0
      %750 = vmatprep.subr.mxu0 0.0
      %751 = vmatpush1.msra.mxu0 0.0
      %752 = vmatprep.subr.mxu0 0.0
      %753 = vmatpush1.msra.mxu0 0.0
      %754 = vmatprep.mubr.f32.mxu0 0.0
      %755 = vmatmul.mubr.f32.gmra.mrb[0].mxu0 %v689
      %v756 = vpop.f32.mrb[0].mxu0
      %v757 = vadd.f32 0.0, %v756
      %v758 = vpop.f32.mrb[0].mxu0
      %759 = vdwg.mxu0
      %760 = vmatprep.subr.mxu0 0.0
      %761 = vmatpush1.msra.mxu0 %v757
      %762 = vmatprep.subr.mxu0 0.0
      %763 = vmatpush1.msra.mxu0 0.0
      %764 = vmatprep.subr.mxu0 0.0
      %765 = vmatpush1.msra.mxu0 0.0
      %766 = vmatprep.subr.mxu0 0.0
      %767 = vmatpush1.msra.mxu0 0.0
      %768 = vmatprep.subr.mxu0 0.0
      %769 = vmatpush1.msra.mxu0 0.0
      %770 = vmatprep.subr.mxu0 0.0
      %771 = vmatpush1.msra.mxu0 0.0
      %772 = vmatprep.subr.mxu0 0.0
      %773 = vmatpush1.msra.mxu0 0.0
      %774 = vmatprep.subr.mxu0 0.0
      %775 = vmatpush1.msra.mxu0 0.0
      %776 = vmatprep.subr.mxu0 0.0
      %777 = vmatpush1.msra.mxu0 0.0
      %778 = vmatprep.subr.mxu0 0.0
      %779 = vmatpush1.msra.mxu0 0.0
      %780 = vmatprep.subr.mxu0 0.0
      %781 = vmatpush1.msra.mxu0 0.0
      %782 = vmatprep.subr.mxu0 0.0
      %783 = vmatpush1.msra.mxu0 0.0
      %784 = vmatprep.subr.mxu0 0.0
      %785 = vmatpush1.msra.mxu0 0.0
      %786 = vmatprep.subr.mxu0 0.0
      %787 = vmatpush1.msra.mxu0 0.0
      %788 = vmatprep.subr.mxu0 0.0
      %789 = vmatpush1.msra.mxu0 0.0
      %790 = vmatprep.subr.mxu0 0.0
      %791 = vmatpush1.msra.mxu0 0.0
      %792 = vmatprep.subr.mxu0 0.0
      %793 = vmatpush1.msra.mxu0 0.0
      %794 = vmatprep.subr.mxu0 0.0
      %795 = vmatpush1.msra.mxu0 0.0
      %796 = vmatprep.subr.mxu0 0.0
      %797 = vmatpush1.msra.mxu0 0.0
      %798 = vmatprep.subr.mxu0 0.0
      %799 = vmatpush1.msra.mxu0 0.0
      %800 = vmatprep.subr.mxu0 0.0
      %801 = vmatpush1.msra.mxu0 0.0
      %802 = vmatprep.subr.mxu0 0.0
      %803 = vmatpush1.msra.mxu0 0.0
      %804 = vmatprep.subr.mxu0 0.0
      %805 = vmatpush1.msra.mxu0 0.0
      %806 = vmatprep.subr.mxu0 0.0
      %807 = vmatpush1.msra.mxu0 0.0
      %808 = vmatprep.subr.mxu0 0.0
      %809 = vmatpush1.msra.mxu0 0.0
      %810 = vmatprep.subr.mxu0 0.0
      %811 = vmatpush1.msra.mxu0 0.0
      %812 = vmatprep.subr.mxu0 0.0
      %813 = vmatpush1.msra.mxu0 0.0
      %814 = vmatprep.subr.mxu0 0.0
      %815 = vmatpush1.msra.mxu0 0.0
      %816 = vmatprep.subr.mxu0 0.0
      %817 = vmatpush1.msra.mxu0 0.0
      %818 = vmatprep.subr.mxu0 0.0
      %819 = vmatpush1.msra.mxu0 0.0
      %820 = vmatprep.subr.mxu0 0.0
      %821 = vmatpush1.msra.mxu0 0.0
      %822 = vmatprep.subr.mxu0 0.0
      %823 = vmatpush1.msra.mxu0 0.0
      %824 = vmatprep.mubr.f32.mxu0 0.0
      %825 = vmatmul.mubr.f32.gmra.mrb[0].mxu0 %v264
      %v826 = vpop.f32.mrb[0].mxu0
      %v827 = vadd.f32 0.0, %v826
      %v828 = vpop.f32.mrb[0].mxu0
      %829 = vmatprep.mubr.f32.mxu0 0.0
      %830 = vmatmul.mubr.f32.gmra.mrb[0].mxu0 %v267
      %v831 = vpop.f32.mrb[0].mxu0
      %v832 = vadd.f32 0.0, %v831
      %v833 = vpop.f32.mrb[0].mxu0
      %834 = vmatprep.mubr.f32.mxu0 0.0
      %835 = vmatmul.mubr.f32.gmra.mrb[0].mxu0 %v270
      %v836 = vpop.f32.mrb[0].mxu0
      %v837 = vadd.f32 0.0, %v836
      %v838 = vpop.f32.mrb[0].mxu0
      %839 = vmatprep.mubr.f32.mxu0 0.0
      %840 = vmatmul.mubr.f32.gmra.mrb[0].mxu0 %v273
      %v841 = vpop.f32.mrb[0].mxu0
      %v842 = vadd.f32 0.0, %v841
      %v843 = vpop.f32.mrb[0].mxu0
      %844 = vdwg.mxu0
      %s845 = scalar_lea.vmem %s170, 96
      %846 = vst [vmem:[%s845] sm:$0xff] %v827
      %847 = vst [vmem:[%s845 + $0x8] sm:$0xff] %v832
      %848 = vst [vmem:[%s845 + $0x10] sm:$0xff] %v837
      %849 = vst [vmem:[%s845 + $0x18] sm:$0xff] %v842
      %s850 = scalar_lea.vmem %s165, 32
      %v851 = vld [vmem:[%s850] sm:$0xff]
      %852 = vmatprep.subr.mxu0 0.0
      %853 = vmatpush1.msra.mxu0 %v171
      %854 = vmatprep.subr.mxu0 0.0
      %855 = vmatpush1.msra.mxu0 %v172
      %856 = vmatprep.subr.mxu0 0.0
      %857 = vmatpush1.msra.mxu0 %v173
      %858 = vmatprep.subr.mxu0 0.0
      %859 = vmatpush1.msra.mxu0 %v174
      %860 = vmatprep.subr.mxu0 0.0
      %861 = vmatpush1.msra.mxu0 %v175
      %862 = vmatprep.subr.mxu0 0.0
      %863 = vmatpush1.msra.mxu0 %v176
      %864 = vmatprep.subr.mxu0 0.0
      %865 = vmatpush1.msra.mxu0 %v177
      %866 = vmatprep.subr.mxu0 0.0
      %867 = vmatpush1.msra.mxu0 %v178
      %868 = vmatprep.subr.mxu0 0.0
      %869 = vmatpush1.msra.mxu0 %v179
      %870 = vmatprep.subr.mxu0 0.0
      %871 = vmatpush1.msra.mxu0 %v180
      %872 = vmatprep.subr.mxu0 0.0
      %873 = vmatpush1.msra.mxu0 %v181
      %874 = vmatprep.subr.mxu0 0.0
      %875 = vmatpush1.msra.mxu0 %v182
      %876 = vmatprep.subr.mxu0 0.0
      %877 = vmatpush1.msra.mxu0 %v183
      %878 = vmatprep.subr.mxu0 0.0
      %879 = vmatpush1.msra.mxu0 %v184
      %880 = vmatprep.subr.mxu0 0.0
      %881 = vmatpush1.msra.mxu0 %v185
      %882 = vmatprep.subr.mxu0 0.0
      %883 = vmatpush1.msra.mxu0 %v186
      %884 = vmatprep.subr.mxu0 0.0
      %885 = vmatpush1.msra.mxu0 0.0
      %886 = vmatprep.subr.mxu0 0.0
      %887 = vmatpush1.msra.mxu0 0.0
      %888 = vmatprep.subr.mxu0 0.0
      %889 = vmatpush1.msra.mxu0 0.0
      %890 = vmatprep.subr.mxu0 0.0
      %891 = vmatpush1.msra.mxu0 0.0
      %892 = vmatprep.subr.mxu0 0.0
      %893 = vmatpush1.msra.mxu0 0.0
      %894 = vmatprep.subr.mxu0 0.0
      %895 = vmatpush1.msra.mxu0 0.0
      %896 = vmatprep.subr.mxu0 0.0
      %897 = vmatpush1.msra.mxu0 0.0
      %898 = vmatprep.subr.mxu0 0.0
      %899 = vmatpush1.msra.mxu0 0.0
      %900 = vmatprep.subr.mxu0 0.0
      %901 = vmatpush1.msra.mxu0 0.0
      %902 = vmatprep.subr.mxu0 0.0
      %903 = vmatpush1.msra.mxu0 0.0
      %904 = vmatprep.subr.mxu0 0.0
      %905 = vmatpush1.msra.mxu0 0.0
      %906 = vmatprep.subr.mxu0 0.0
      %907 = vmatpush1.msra.mxu0 0.0
      %908 = vmatprep.subr.mxu0 0.0
      %909 = vmatpush1.msra.mxu0 0.0
      %910 = vmatprep.subr.mxu0 0.0
      %911 = vmatpush1.msra.mxu0 0.0
      %912 = vmatprep.subr.mxu0 0.0
      %913 = vmatpush1.msra.mxu0 0.0
      %914 = vmatprep.subr.mxu0 0.0
      %915 = vmatpush1.msra.mxu0 0.0
      %916 = vmatprep.mubr.f32.mxu0 0.0
      %917 = vmatmul.mubr.f32.gmra.mrb[0].mxu0 %v851
      %v918 = vpop.f32.mrb[0].mxu0
      %v919 = vadd.f32 0.0, %v918
      %v920 = vpop.f32.mrb[0].mxu0
      %921 = vdwg.mxu0
      %922 = vmatprep.subr.mxu0 0.0
      %923 = vmatpush1.msra.mxu0 %v919
      %924 = vmatprep.subr.mxu0 0.0
      %925 = vmatpush1.msra.mxu0 0.0
      %926 = vmatprep.subr.mxu0 0.0
      %927 = vmatpush1.msra.mxu0 0.0
      %928 = vmatprep.subr.mxu0 0.0
      %929 = vmatpush1.msra.mxu0 0.0
      %930 = vmatprep.subr.mxu0 0.0
      %931 = vmatpush1.msra.mxu0 0.0
      %932 = vmatprep.subr.mxu0 0.0
      %933 = vmatpush1.msra.mxu0 0.0
      %934 = vmatprep.subr.mxu0 0.0
      %935 = vmatpush1.msra.mxu0 0.0
      %936 = vmatprep.subr.mxu0 0.0
      %937 = vmatpush1.msra.mxu0 0.0
      %938 = vmatprep.subr.mxu0 0.0
      %939 = vmatpush1.msra.mxu0 0.0
      %940 = vmatprep.subr.mxu0 0.0
      %941 = vmatpush1.msra.mxu0 0.0
      %942 = vmatprep.subr.mxu0 0.0
      %943 = vmatpush1.msra.mxu0 0.0
      %944 = vmatprep.subr.mxu0 0.0
      %945 = vmatpush1.msra.mxu0 0.0
      %946 = vmatprep.subr.mxu0 0.0
      %947 = vmatpush1.msra.mxu0 0.0
      %948 = vmatprep.subr.mxu0 0.0
      %949 = vmatpush1.msra.mxu0 0.0
      %950 = vmatprep.subr.mxu0 0.0
      %951 = vmatpush1.msra.mxu0 0.0
      %952 = vmatprep.subr.mxu0 0.0
      %953 = vmatpush1.msra.mxu0 0.0
      %954 = vmatprep.subr.mxu0 0.0
      %955 = vmatpush1.msra.mxu0 0.0
      %956 = vmatprep.subr.mxu0 0.0
      %957 = vmatpush1.msra.mxu0 0.0
      %958 = vmatprep.subr.mxu0 0.0
      %959 = vmatpush1.msra.mxu0 0.0
      %960 = vmatprep.subr.mxu0 0.0
      %961 = vmatpush1.msra.mxu0 0.0
      %962 = vmatprep.subr.mxu0 0.0
      %963 = vmatpush1.msra.mxu0 0.0
      %964 = vmatprep.subr.mxu0 0.0
      %965 = vmatpush1.msra.mxu0 0.0
      %966 = vmatprep.subr.mxu0 0.0
      %967 = vmatpush1.msra.mxu0 0.0
      %968 = vmatprep.subr.mxu0 0.0
      %969 = vmatpush1.msra.mxu0 0.0
      %970 = vmatprep.subr.mxu0 0.0
      %971 = vmatpush1.msra.mxu0 0.0
      %972 = vmatprep.subr.mxu0 0.0
      %973 = vmatpush1.msra.mxu0 0.0
      %974 = vmatprep.subr.mxu0 0.0
      %975 = vmatpush1.msra.mxu0 0.0
      %976 = vmatprep.subr.mxu0 0.0
      %977 = vmatpush1.msra.mxu0 0.0
      %978 = vmatprep.subr.mxu0 0.0
      %979 = vmatpush1.msra.mxu0 0.0
      %980 = vmatprep.subr.mxu0 0.0
      %981 = vmatpush1.msra.mxu0 0.0
      %982 = vmatprep.subr.mxu0 0.0
      %983 = vmatpush1.msra.mxu0 0.0
      %984 = vmatprep.subr.mxu0 0.0
      %985 = vmatpush1.msra.mxu0 0.0
      %986 = vmatprep.mubr.f32.mxu0 0.0
      %987 = vmatmul.mubr.f32.gmra.mrb[0].mxu0 %v264
      %v988 = vpop.f32.mrb[0].mxu0
      %v989 = vadd.f32 0.0, %v988
      %v990 = vpop.f32.mrb[0].mxu0
      %991 = vmatprep.mubr.f32.mxu0 0.0
      %992 = vmatmul.mubr.f32.gmra.mrb[0].mxu0 %v267
      %v993 = vpop.f32.mrb[0].mxu0
      %v994 = vadd.f32 0.0, %v993
      %v995 = vpop.f32.mrb[0].mxu0
      %996 = vmatprep.mubr.f32.mxu0 0.0
      %997 = vmatmul.mubr.f32.gmra.mrb[0].mxu0 %v270
      %v998 = vpop.f32.mrb[0].mxu0
      %v999 = vadd.f32 0.0, %v998
      %v1000 = vpop.f32.mrb[0].mxu0
      %1001 = vmatprep.mubr.f32.mxu0 0.0
      %1002 = vmatmul.mubr.f32.gmra.mrb[0].mxu0 %v273
      %v1003 = vpop.f32.mrb[0].mxu0
      %v1004 = vadd.f32 0.0, %v1003
      %v1005 = vpop.f32.mrb[0].mxu0
      %1006 = vdwg.mxu0
      %s1007 = scalar_lea.vmem %s170, 128
      %1008 = vst [vmem:[%s1007] sm:$0xff] %v989
      %1009 = vst [vmem:[%s1007 + $0x8] sm:$0xff] %v994
      %1010 = vst [vmem:[%s1007 + $0x10] sm:$0xff] %v999
      %1011 = vst [vmem:[%s1007 + $0x18] sm:$0xff] %v1004
      %s1012 = scalar_lea.vmem %s165, 40
      %v1013 = vld [vmem:[%s1012] sm:$0xff]
      %1014 = vmatprep.subr.mxu0 0.0
      %1015 = vmatpush1.msra.mxu0 %v171
      %1016 = vmatprep.subr.mxu0 0.0
      %1017 = vmatpush1.msra.mxu0 %v172
      %1018 = vmatprep.subr.mxu0 0.0
      %1019 = vmatpush1.msra.mxu0 %v173
      %1020 = vmatprep.subr.mxu0 0.0
      %1021 = vmatpush1.msra.mxu0 %v174
      %1022 = vmatprep.subr.mxu0 0.0
      %1023 = vmatpush1.msra.mxu0 %v175
      %1024 = vmatprep.subr.mxu0 0.0
      %1025 = vmatpush1.msra.mxu0 %v176
      %1026 = vmatprep.subr.mxu0 0.0
      %1027 = vmatpush1.msra.mxu0 %v177
      %1028 = vmatprep.subr.mxu0 0.0
      %1029 = vmatpush1.msra.mxu0 %v178
      %1030 = vmatprep.subr.mxu0 0.0
      %1031 = vmatpush1.msra.mxu0 %v179
      %1032 = vmatprep.subr.mxu0 0.0
      %1033 = vmatpush1.msra.mxu0 %v180
      %1034 = vmatprep.subr.mxu0 0.0
      %1035 = vmatpush1.msra.mxu0 %v181
      %1036 = vmatprep.subr.mxu0 0.0
      %1037 = vmatpush1.msra.mxu0 %v182
      %1038 = vmatprep.subr.mxu0 0.0
      %1039 = vmatpush1.msra.mxu0 %v183
      %1040 = vmatprep.subr.mxu0 0.0
      %1041 = vmatpush1.msra.mxu0 %v184
      %1042 = vmatprep.subr.mxu0 0.0
      %1043 = vmatpush1.msra.mxu0 %v185
      %1044 = vmatprep.subr.mxu0 0.0
      %1045 = vmatpush1.msra.mxu0 %v186
      %1046 = vmatprep.subr.mxu0 0.0
      %1047 = vmatpush1.msra.mxu0 0.0
      %1048 = vmatprep.subr.mxu0 0.0
      %1049 = vmatpush1.msra.mxu0 0.0
      %1050 = vmatprep.subr.mxu0 0.0
      %1051 = vmatpush1.msra.mxu0 0.0
      %1052 = vmatprep.subr.mxu0 0.0
      %1053 = vmatpush1.msra.mxu0 0.0
      %1054 = vmatprep.subr.mxu0 0.0
      %1055 = vmatpush1.msra.mxu0 0.0
      %1056 = vmatprep.subr.mxu0 0.0
      %1057 = vmatpush1.msra.mxu0 0.0
      %1058 = vmatprep.subr.mxu0 0.0
      %1059 = vmatpush1.msra.mxu0 0.0
      %1060 = vmatprep.subr.mxu0 0.0
      %1061 = vmatpush1.msra.mxu0 0.0
      %1062 = vmatprep.subr.mxu0 0.0
      %1063 = vmatpush1.msra.mxu0 0.0
      %1064 = vmatprep.subr.mxu0 0.0
      %1065 = vmatpush1.msra.mxu0 0.0
      %1066 = vmatprep.subr.mxu0 0.0
      %1067 = vmatpush1.msra.mxu0 0.0
      %1068 = vmatprep.subr.mxu0 0.0
      %1069 = vmatpush1.msra.mxu0 0.0
      %1070 = vmatprep.subr.mxu0 0.0
      %1071 = vmatpush1.msra.mxu0 0.0
      %1072 = vmatprep.subr.mxu0 0.0
      %1073 = vmatpush1.msra.mxu0 0.0
      %1074 = vmatprep.subr.mxu0 0.0
      %1075 = vmatpush1.msra.mxu0 0.0
      %1076 = vmatprep.subr.mxu0 0.0
      %1077 = vmatpush1.msra.mxu0 0.0
      %1078 = vmatprep.mubr.f32.mxu0 0.0
      %1079 = vmatmul.mubr.f32.gmra.mrb[0].mxu0 %v1013
      %v1080 = vpop.f32.mrb[0].mxu0
      %v1081 = vadd.f32 0.0, %v1080
      %v1082 = vpop.f32.mrb[0].mxu0
      %1083 = vdwg.mxu0
      %1084 = vmatprep.subr.mxu0 0.0
      %1085 = vmatpush1.msra.mxu0 %v1081
      %1086 = vmatprep.subr.mxu0 0.0
      %1087 = vmatpush1.msra.mxu0 0.0
      %1088 = vmatprep.subr.mxu0 0.0
      %1089 = vmatpush1.msra.mxu0 0.0
      %1090 = vmatprep.subr.mxu0 0.0
      %1091 = vmatpush1.msra.mxu0 0.0
      %1092 = vmatprep.subr.mxu0 0.0
      %1093 = vmatpush1.msra.mxu0 0.0
      %1094 = vmatprep.subr.mxu0 0.0
      %1095 = vmatpush1.msra.mxu0 0.0
      %1096 = vmatprep.subr.mxu0 0.0
      %1097 = vmatpush1.msra.mxu0 0.0
      %1098 = vmatprep.subr.mxu0 0.0
      %1099 = vmatpush1.msra.mxu0 0.0
      %1100 = vmatprep.subr.mxu0 0.0
      %1101 = vmatpush1.msra.mxu0 0.0
      %1102 = vmatprep.subr.mxu0 0.0
      %1103 = vmatpush1.msra.mxu0 0.0
      %1104 = vmatprep.subr.mxu0 0.0
      %1105 = vmatpush1.msra.mxu0 0.0
      %1106 = vmatprep.subr.mxu0 0.0
      %1107 = vmatpush1.msra.mxu0 0.0
      %1108 = vmatprep.subr.mxu0 0.0
      %1109 = vmatpush1.msra.mxu0 0.0
      %1110 = vmatprep.subr.mxu0 0.0
      %1111 = vmatpush1.msra.mxu0 0.0
      %1112 = vmatprep.subr.mxu0 0.0
      %1113 = vmatpush1.msra.mxu0 0.0
      %1114 = vmatprep.subr.mxu0 0.0
      %1115 = vmatpush1.msra.mxu0 0.0
      %1116 = vmatprep.subr.mxu0 0.0
      %1117 = vmatpush1.msra.mxu0 0.0
      %1118 = vmatprep.subr.mxu0 0.0
      %1119 = vmatpush1.msra.mxu0 0.0
      %1120 = vmatprep.subr.mxu0 0.0
      %1121 = vmatpush1.msra.mxu0 0.0
      %1122 = vmatprep.subr.mxu0 0.0
      %1123 = vmatpush1.msra.mxu0 0.0
      %1124 = vmatprep.subr.mxu0 0.0
      %1125 = vmatpush1.msra.mxu0 0.0
      %1126 = vmatprep.subr.mxu0 0.0
      %1127 = vmatpush1.msra.mxu0 0.0
      %1128 = vmatprep.subr.mxu0 0.0
      %1129 = vmatpush1.msra.mxu0 0.0
      %1130 = vmatprep.subr.mxu0 0.0
      %1131 = vmatpush1.msra.mxu0 0.0
      %1132 = vmatprep.subr.mxu0 0.0
      %1133 = vmatpush1.msra.mxu0 0.0
      %1134 = vmatprep.subr.mxu0 0.0
      %1135 = vmatpush1.msra.mxu0 0.0
      %1136 = vmatprep.subr.mxu0 0.0
      %1137 = vmatpush1.msra.mxu0 0.0
      %1138 = vmatprep.subr.mxu0 0.0
      %1139 = vmatpush1.msra.mxu0 0.0
      %1140 = vmatprep.subr.mxu0 0.0
      %1141 = vmatpush1.msra.mxu0 0.0
      %1142 = vmatprep.subr.mxu0 0.0
      %1143 = vmatpush1.msra.mxu0 0.0
      %1144 = vmatprep.subr.mxu0 0.0
      %1145 = vmatpush1.msra.mxu0 0.0
      %1146 = vmatprep.subr.mxu0 0.0
      %1147 = vmatpush1.msra.mxu0 0.0
      %1148 = vmatprep.mubr.f32.mxu0 0.0
      %1149 = vmatmul.mubr.f32.gmra.mrb[0].mxu0 %v264
      %v1150 = vpop.f32.mrb[0].mxu0
      %v1151 = vadd.f32 0.0, %v1150
      %v1152 = vpop.f32.mrb[0].mxu0
      %1153 = vmatprep.mubr.f32.mxu0 0.0
      %1154 = vmatmul.mubr.f32.gmra.mrb[0].mxu0 %v267
      %v1155 = vpop.f32.mrb[0].mxu0
      %v1156 = vadd.f32 0.0, %v1155
      %v1157 = vpop.f32.mrb[0].mxu0
      %1158 = vmatprep.mubr.f32.mxu0 0.0
      %1159 = vmatmul.mubr.f32.gmra.mrb[0].mxu0 %v270
      %v1160 = vpop.f32.mrb[0].mxu0
      %v1161 = vadd.f32 0.0, %v1160
      %v1162 = vpop.f32.mrb[0].mxu0
      %1163 = vmatprep.mubr.f32.mxu0 0.0
      %1164 = vmatmul.mubr.f32.gmra.mrb[0].mxu0 %v273
      %v1165 = vpop.f32.mrb[0].mxu0
      %v1166 = vadd.f32 0.0, %v1165
      %v1167 = vpop.f32.mrb[0].mxu0
      %1168 = vdwg.mxu0
      %s1169 = scalar_lea.vmem %s170, 160
      %1170 = vst [vmem:[%s1169] sm:$0xff] %v1151
      %1171 = vst [vmem:[%s1169 + $0x8] sm:$0xff] %v1156
      %1172 = vst [vmem:[%s1169 + $0x10] sm:$0xff] %v1161
      %1173 = vst [vmem:[%s1169 + $0x18] sm:$0xff] %v1166
      %s1174 = scalar_lea.vmem %s165, 48
      %v1175 = vld [vmem:[%s1174] sm:$0xff]
      %1176 = vmatprep.subr.mxu0 0.0
      %1177 = vmatpush1.msra.mxu0 %v171
      %1178 = vmatprep.subr.mxu0 0.0
      %1179 = vmatpush1.msra.mxu0 %v172
      %1180 = vmatprep.subr.mxu0 0.0
      %1181 = vmatpush1.msra.mxu0 %v173
      %1182 = vmatprep.subr.mxu0 0.0
      %1183 = vmatpush1.msra.mxu0 %v174
      %1184 = vmatprep.subr.mxu0 0.0
      %1185 = vmatpush1.msra.mxu0 %v175
      %1186 = vmatprep.subr.mxu0 0.0
      %1187 = vmatpush1.msra.mxu0 %v176
      %1188 = vmatprep.subr.mxu0 0.0
      %1189 = vmatpush1.msra.mxu0 %v177
      %1190 = vmatprep.subr.mxu0 0.0
      %1191 = vmatpush1.msra.mxu0 %v178
      %1192 = vmatprep.subr.mxu0 0.0
      %1193 = vmatpush1.msra.mxu0 %v179
      %1194 = vmatprep.subr.mxu0 0.0
      %1195 = vmatpush1.msra.mxu0 %v180
      %1196 = vmatprep.subr.mxu0 0.0
      %1197 = vmatpush1.msra.mxu0 %v181
      %1198 = vmatprep.subr.mxu0 0.0
      %1199 = vmatpush1.msra.mxu0 %v182
      %1200 = vmatprep.subr.mxu0 0.0
      %1201 = vmatpush1.msra.mxu0 %v183
      %1202 = vmatprep.subr.mxu0 0.0
      %1203 = vmatpush1.msra.mxu0 %v184
      %1204 = vmatprep.subr.mxu0 0.0
      %1205 = vmatpush1.msra.mxu0 %v185
      %1206 = vmatprep.subr.mxu0 0.0
      %1207 = vmatpush1.msra.mxu0 %v186
      %1208 = vmatprep.subr.mxu0 0.0
      %1209 = vmatpush1.msra.mxu0 0.0
      %1210 = vmatprep.subr.mxu0 0.0
      %1211 = vmatpush1.msra.mxu0 0.0
      %1212 = vmatprep.subr.mxu0 0.0
      %1213 = vmatpush1.msra.mxu0 0.0
      %1214 = vmatprep.subr.mxu0 0.0
      %1215 = vmatpush1.msra.mxu0 0.0
      %1216 = vmatprep.subr.mxu0 0.0
      %1217 = vmatpush1.msra.mxu0 0.0
      %1218 = vmatprep.subr.mxu0 0.0
      %1219 = vmatpush1.msra.mxu0 0.0
      %1220 = vmatprep.subr.mxu0 0.0
      %1221 = vmatpush1.msra.mxu0 0.0
      %1222 = vmatprep.subr.mxu0 0.0
      %1223 = vmatpush1.msra.mxu0 0.0
      %1224 = vmatprep.subr.mxu0 0.0
      %1225 = vmatpush1.msra.mxu0 0.0
      %1226 = vmatprep.subr.mxu0 0.0
      %1227 = vmatpush1.msra.mxu0 0.0
      %1228 = vmatprep.subr.mxu0 0.0
      %1229 = vmatpush1.msra.mxu0 0.0
      %1230 = vmatprep.subr.mxu0 0.0
      %1231 = vmatpush1.msra.mxu0 0.0
      %1232 = vmatprep.subr.mxu0 0.0
      %1233 = vmatpush1.msra.mxu0 0.0
      %1234 = vmatprep.subr.mxu0 0.0
      %1235 = vmatpush1.msra.mxu0 0.0
      %1236 = vmatprep.subr.mxu0 0.0
      %1237 = vmatpush1.msra.mxu0 0.0
      %1238 = vmatprep.subr.mxu0 0.0
      %1239 = vmatpush1.msra.mxu0 0.0
      %1240 = vmatprep.mubr.f32.mxu0 0.0
      %1241 = vmatmul.mubr.f32.gmra.mrb[0].mxu0 %v1175
      %v1242 = vpop.f32.mrb[0].mxu0
      %v1243 = vadd.f32 0.0, %v1242
      %v1244 = vpop.f32.mrb[0].mxu0
      %1245 = vdwg.mxu0
      %1246 = vmatprep.subr.mxu0 0.0
      %1247 = vmatpush1.msra.mxu0 %v1243
      %1248 = vmatprep.subr.mxu0 0.0
      %1249 = vmatpush1.msra.mxu0 0.0
      %1250 = vmatprep.subr.mxu0 0.0
      %1251 = vmatpush1.msra.mxu0 0.0
      %1252 = vmatprep.subr.mxu0 0.0
      %1253 = vmatpush1.msra.mxu0 0.0
      %1254 = vmatprep.subr.mxu0 0.0
      %1255 = vmatpush1.msra.mxu0 0.0
      %1256 = vmatprep.subr.mxu0 0.0
      %1257 = vmatpush1.msra.mxu0 0.0
      %1258 = vmatprep.subr.mxu0 0.0
      %1259 = vmatpush1.msra.mxu0 0.0
      %1260 = vmatprep.subr.mxu0 0.0
      %1261 = vmatpush1.msra.mxu0 0.0
      %1262 = vmatprep.subr.mxu0 0.0
      %1263 = vmatpush1.msra.mxu0 0.0
      %1264 = vmatprep.subr.mxu0 0.0
      %1265 = vmatpush1.msra.mxu0 0.0
      %1266 = vmatprep.subr.mxu0 0.0
      %1267 = vmatpush1.msra.mxu0 0.0
      %1268 = vmatprep.subr.mxu0 0.0
      %1269 = vmatpush1.msra.mxu0 0.0
      %1270 = vmatprep.subr.mxu0 0.0
      %1271 = vmatpush1.msra.mxu0 0.0
      %1272 = vmatprep.subr.mxu0 0.0
      %1273 = vmatpush1.msra.mxu0 0.0
      %1274 = vmatprep.subr.mxu0 0.0
      %1275 = vmatpush1.msra.mxu0 0.0
      %1276 = vmatprep.subr.mxu0 0.0
      %1277 = vmatpush1.msra.mxu0 0.0
      %1278 = vmatprep.subr.mxu0 0.0
      %1279 = vmatpush1.msra.mxu0 0.0
      %1280 = vmatprep.subr.mxu0 0.0
      %1281 = vmatpush1.msra.mxu0 0.0
      %1282 = vmatprep.subr.mxu0 0.0
      %1283 = vmatpush1.msra.mxu0 0.0
      %1284 = vmatprep.subr.mxu0 0.0
      %1285 = vmatpush1.msra.mxu0 0.0
      %1286 = vmatprep.subr.mxu0 0.0
      %1287 = vmatpush1.msra.mxu0 0.0
      %1288 = vmatprep.subr.mxu0 0.0
      %1289 = vmatpush1.msra.mxu0 0.0
      %1290 = vmatprep.subr.mxu0 0.0
      %1291 = vmatpush1.msra.mxu0 0.0
      %1292 = vmatprep.subr.mxu0 0.0
      %1293 = vmatpush1.msra.mxu0 0.0
      %1294 = vmatprep.subr.mxu0 0.0
      %1295 = vmatpush1.msra.mxu0 0.0
      %1296 = vmatprep.subr.mxu0 0.0
      %1297 = vmatpush1.msra.mxu0 0.0
      %1298 = vmatprep.subr.mxu0 0.0
      %1299 = vmatpush1.msra.mxu0 0.0
      %1300 = vmatprep.subr.mxu0 0.0
      %1301 = vmatpush1.msra.mxu0 0.0
      %1302 = vmatprep.subr.mxu0 0.0
      %1303 = vmatpush1.msra.mxu0 0.0
      %1304 = vmatprep.subr.mxu0 0.0
      %1305 = vmatpush1.msra.mxu0 0.0
      %1306 = vmatprep.subr.mxu0 0.0
      %1307 = vmatpush1.msra.mxu0 0.0
      %1308 = vmatprep.subr.mxu0 0.0
      %1309 = vmatpush1.msra.mxu0 0.0
      %1310 = vmatprep.mubr.f32.mxu0 0.0
      %1311 = vmatmul.mubr.f32.gmra.mrb[0].mxu0 %v264
      %v1312 = vpop.f32.mrb[0].mxu0
      %v1313 = vadd.f32 0.0, %v1312
      %v1314 = vpop.f32.mrb[0].mxu0
      %1315 = vmatprep.mubr.f32.mxu0 0.0
      %1316 = vmatmul.mubr.f32.gmra.mrb[0].mxu0 %v267
      %v1317 = vpop.f32.mrb[0].mxu0
      %v1318 = vadd.f32 0.0, %v1317
      %v1319 = vpop.f32.mrb[0].mxu0
      %1320 = vmatprep.mubr.f32.mxu0 0.0
      %1321 = vmatmul.mubr.f32.gmra.mrb[0].mxu0 %v270
      %v1322 = vpop.f32.mrb[0].mxu0
      %v1323 = vadd.f32 0.0, %v1322
      %v1324 = vpop.f32.mrb[0].mxu0
      %1325 = vmatprep.mubr.f32.mxu0 0.0
      %1326 = vmatmul.mubr.f32.gmra.mrb[0].mxu0 %v273
      %v1327 = vpop.f32.mrb[0].mxu0
      %v1328 = vadd.f32 0.0, %v1327
      %v1329 = vpop.f32.mrb[0].mxu0
      %1330 = vdwg.mxu0
      %s1331 = scalar_lea.vmem %s170, 192
      %1332 = vst [vmem:[%s1331] sm:$0xff] %v1313
      %1333 = vst [vmem:[%s1331 + $0x8] sm:$0xff] %v1318
      %1334 = vst [vmem:[%s1331 + $0x10] sm:$0xff] %v1323
      %1335 = vst [vmem:[%s1331 + $0x18] sm:$0xff] %v1328
      %s1336 = scalar_lea.vmem %s165, 56
      %v1337 = vld [vmem:[%s1336] sm:$0xff]
      %1338 = vmatprep.subr.mxu0 0.0
      %1339 = vmatpush1.msra.mxu0 %v171
      %1340 = vmatprep.subr.mxu0 0.0
      %1341 = vmatpush1.msra.mxu0 %v172
      %1342 = vmatprep.subr.mxu0 0.0
      %1343 = vmatpush1.msra.mxu0 %v173
      %1344 = vmatprep.subr.mxu0 0.0
      %1345 = vmatpush1.msra.mxu0 %v174
      %1346 = vmatprep.subr.mxu0 0.0
      %1347 = vmatpush1.msra.mxu0 %v175
      %1348 = vmatprep.subr.mxu0 0.0
      %1349 = vmatpush1.msra.mxu0 %v176
      %1350 = vmatprep.subr.mxu0 0.0
      %1351 = vmatpush1.msra.mxu0 %v177
      %1352 = vmatprep.subr.mxu0 0.0
      %1353 = vmatpush1.msra.mxu0 %v178
      %1354 = vmatprep.subr.mxu0 0.0
      %1355 = vmatpush1.msra.mxu0 %v179
      %1356 = vmatprep.subr.mxu0 0.0
      %1357 = vmatpush1.msra.mxu0 %v180
      %1358 = vmatprep.subr.mxu0 0.0
      %1359 = vmatpush1.msra.mxu0 %v181
      %1360 = vmatprep.subr.mxu0 0.0
      %1361 = vmatpush1.msra.mxu0 %v182
      %1362 = vmatprep.subr.mxu0 0.0
      %1363 = vmatpush1.msra.mxu0 %v183
      %1364 = vmatprep.subr.mxu0 0.0
      %1365 = vmatpush1.msra.mxu0 %v184
      %1366 = vmatprep.subr.mxu0 0.0
      %1367 = vmatpush1.msra.mxu0 %v185
      %1368 = vmatprep.subr.mxu0 0.0
      %1369 = vmatpush1.msra.mxu0 %v186
      %1370 = vmatprep.subr.mxu0 0.0
      %1371 = vmatpush1.msra.mxu0 0.0
      %1372 = vmatprep.subr.mxu0 0.0
      %1373 = vmatpush1.msra.mxu0 0.0
      %1374 = vmatprep.subr.mxu0 0.0
      %1375 = vmatpush1.msra.mxu0 0.0
      %1376 = vmatprep.subr.mxu0 0.0
      %1377 = vmatpush1.msra.mxu0 0.0
      %1378 = vmatprep.subr.mxu0 0.0
      %1379 = vmatpush1.msra.mxu0 0.0
      %1380 = vmatprep.subr.mxu0 0.0
      %1381 = vmatpush1.msra.mxu0 0.0
      %1382 = vmatprep.subr.mxu0 0.0
      %1383 = vmatpush1.msra.mxu0 0.0
      %1384 = vmatprep.subr.mxu0 0.0
      %1385 = vmatpush1.msra.mxu0 0.0
      %1386 = vmatprep.subr.mxu0 0.0
      %1387 = vmatpush1.msra.mxu0 0.0
      %1388 = vmatprep.subr.mxu0 0.0
      %1389 = vmatpush1.msra.mxu0 0.0
      %1390 = vmatprep.subr.mxu0 0.0
      %1391 = vmatpush1.msra.mxu0 0.0
      %1392 = vmatprep.subr.mxu0 0.0
      %1393 = vmatpush1.msra.mxu0 0.0
      %1394 = vmatprep.subr.mxu0 0.0
      %1395 = vmatpush1.msra.mxu0 0.0
      %1396 = vmatprep.subr.mxu0 0.0
      %1397 = vmatpush1.msra.mxu0 0.0
      %1398 = vmatprep.subr.mxu0 0.0
      %1399 = vmatpush1.msra.mxu0 0.0
      %1400 = vmatprep.subr.mxu0 0.0
      %1401 = vmatpush1.msra.mxu0 0.0
      %1402 = vmatprep.mubr.f32.mxu0 0.0
      %1403 = vmatmul.mubr.f32.gmra.mrb[0].mxu0 %v1337
      %v1404 = vpop.f32.mrb[0].mxu0
      %v1405 = vadd.f32 0.0, %v1404
      %v1406 = vpop.f32.mrb[0].mxu0
      %1407 = vdwg.mxu0
      %1408 = vmatprep.subr.mxu0 0.0
      %1409 = vmatpush1.msra.mxu0 %v1405
      %1410 = vmatprep.subr.mxu0 0.0
      %1411 = vmatpush1.msra.mxu0 0.0
      %1412 = vmatprep.subr.mxu0 0.0
      %1413 = vmatpush1.msra.mxu0 0.0
      %1414 = vmatprep.subr.mxu0 0.0
      %1415 = vmatpush1.msra.mxu0 0.0
      %1416 = vmatprep.subr.mxu0 0.0
      %1417 = vmatpush1.msra.mxu0 0.0
      %1418 = vmatprep.subr.mxu0 0.0
      %1419 = vmatpush1.msra.mxu0 0.0
      %1420 = vmatprep.subr.mxu0 0.0
      %1421 = vmatpush1.msra.mxu0 0.0
      %1422 = vmatprep.subr.mxu0 0.0
      %1423 = vmatpush1.msra.mxu0 0.0
      %1424 = vmatprep.subr.mxu0 0.0
      %1425 = vmatpush1.msra.mxu0 0.0
      %1426 = vmatprep.subr.mxu0 0.0
      %1427 = vmatpush1.msra.mxu0 0.0
      %1428 = vmatprep.subr.mxu0 0.0
      %1429 = vmatpush1.msra.mxu0 0.0
      %1430 = vmatprep.subr.mxu0 0.0
      %1431 = vmatpush1.msra.mxu0 0.0
      %1432 = vmatprep.subr.mxu0 0.0
      %1433 = vmatpush1.msra.mxu0 0.0
      %1434 = vmatprep.subr.mxu0 0.0
      %1435 = vmatpush1.msra.mxu0 0.0
      %1436 = vmatprep.subr.mxu0 0.0
      %1437 = vmatpush1.msra.mxu0 0.0
      %1438 = vmatprep.subr.mxu0 0.0
      %1439 = vmatpush1.msra.mxu0 0.0
      %1440 = vmatprep.subr.mxu0 0.0
      %1441 = vmatpush1.msra.mxu0 0.0
      %1442 = vmatprep.subr.mxu0 0.0
      %1443 = vmatpush1.msra.mxu0 0.0
      %1444 = vmatprep.subr.mxu0 0.0
      %1445 = vmatpush1.msra.mxu0 0.0
      %1446 = vmatprep.subr.mxu0 0.0
      %1447 = vmatpush1.msra.mxu0 0.0
      %1448 = vmatprep.subr.mxu0 0.0
      %1449 = vmatpush1.msra.mxu0 0.0
      %1450 = vmatprep.subr.mxu0 0.0
      %1451 = vmatpush1.msra.mxu0 0.0
      %1452 = vmatprep.subr.mxu0 0.0
      %1453 = vmatpush1.msra.mxu0 0.0
      %1454 = vmatprep.subr.mxu0 0.0
      %1455 = vmatpush1.msra.mxu0 0.0
      %1456 = vmatprep.subr.mxu0 0.0
      %1457 = vmatpush1.msra.mxu0 0.0
      %1458 = vmatprep.subr.mxu0 0.0
      %1459 = vmatpush1.msra.mxu0 0.0
      %1460 = vmatprep.subr.mxu0 0.0
      %1461 = vmatpush1.msra.mxu0 0.0
      %1462 = vmatprep.subr.mxu0 0.0
      %1463 = vmatpush1.msra.mxu0 0.0
      %1464 = vmatprep.subr.mxu0 0.0
      %1465 = vmatpush1.msra.mxu0 0.0
      %1466 = vmatprep.subr.mxu0 0.0
      %1467 = vmatpush1.msra.mxu0 0.0
      %1468 = vmatprep.subr.mxu0 0.0
      %1469 = vmatpush1.msra.mxu0 0.0
      %1470 = vmatprep.subr.mxu0 0.0
      %1471 = vmatpush1.msra.mxu0 0.0
      %1472 = vmatprep.mubr.f32.mxu0 0.0
      %1473 = vmatmul.mubr.f32.gmra.mrb[0].mxu0 %v264
      %v1474 = vpop.f32.mrb[0].mxu0
      %v1475 = vadd.f32 0.0, %v1474
      %v1476 = vpop.f32.mrb[0].mxu0
      %1477 = vmatprep.mubr.f32.mxu0 0.0
      %1478 = vmatmul.mubr.f32.gmra.mrb[0].mxu0 %v267
      %v1479 = vpop.f32.mrb[0].mxu0
      %v1480 = vadd.f32 0.0, %v1479
      %v1481 = vpop.f32.mrb[0].mxu0
      %1482 = vmatprep.mubr.f32.mxu0 0.0
      %1483 = vmatmul.mubr.f32.gmra.mrb[0].mxu0 %v270
      %v1484 = vpop.f32.mrb[0].mxu0
      %v1485 = vadd.f32 0.0, %v1484
      %v1486 = vpop.f32.mrb[0].mxu0
      %1487 = vmatprep.mubr.f32.mxu0 0.0
      %1488 = vmatmul.mubr.f32.gmra.mrb[0].mxu0 %v273
      %v1489 = vpop.f32.mrb[0].mxu0
      %v1490 = vadd.f32 0.0, %v1489
      %v1491 = vpop.f32.mrb[0].mxu0
      %1492 = vdwg.mxu0
      %s1493 = scalar_lea.vmem %s170, 224
      %1494 = vst [vmem:[%s1493] sm:$0xff] %v1475
      %1495 = vst [vmem:[%s1493 + $0x8] sm:$0xff] %v1480
      %1496 = vst [vmem:[%s1493 + $0x10] sm:$0xff] %v1485
      %1497 = vst [vmem:[%s1493 + $0x18] sm:$0xff] %v1490
      %p1498 = scmp.lt.s32.totalorder %s14, 1
      %s1499 = scalar_select %p1498, %s14, 1
      %s1500 = smul.addr %s1499, 32
      %s1501 = smul.addr %s1500, 8
      %s1502 = scalar_lea.vmem %s3, %s1501
      // Predicated region
      $region33: #{pspool_forward.12} parent=31 // pred_check
        %p1503 = pneg %p100
      $region34: #{pspool_forward.12} parent=31 // pred_check_branch
        %1505 = sbr.rel (%p1503) target = $region36
      $region35: #{pspool_forward.12} parent=31 // pred_region
        _
      $region36: #{pspool_forward.12} parent=31 // pred_fallthru
        _
    $region32: #{pspool_forward.12} parent=5 // pred_fallthru
      _
    %p1506 = scmp.le.s32.totalorder 2, %s9
    // Predicated region
    $region37: #{pspool_forward.12} parent=5 // pred_check
      %p1507 = pneg %p1506
    $region38: #{pspool_forward.12} parent=5 // pred_check_branch
      %1509 = sbr.rel (%p1507) target = $region40
    $region39: #{pspool_forward.12} parent=5 // pred_region
      %s1510 = ssub.s32 %s9, 2
      // Predicated region
      $region41: #{pspool_forward.12} parent=39 // pred_check
        %p1511 = pneg %p106
      $region42: #{pspool_forward.12} parent=39 // pred_check_branch
        %1513 = sbr.rel (%p1511) target = $region44
      $region43: #{pspool_forward.12} parent=39 // pred_region
        %p1514 = scmp.lt.s32.totalorder %s15, 1
        %s1515 = scalar_select %p1514, %s15, 1
        %s1516 = smul.addr %s1515, 32
        %s1517 = smul.addr %s1516, 8
        %s1518 = scalar_lea.vmem %s3, %s1517
      $region44: #{pspool_forward.12} parent=39 // pred_fallthru
        _
    $region40: #{pspool_forward.12} parent=5 // pred_fallthru
      _
  $region6: #{pspool_forward.12} parent=0 // loop_footer
    %s13 = sadd.s32 1, %s9
  $region7: #{pspool_forward.12} parent=0 // loop_footer_branch
    %8 = sbr.rel target = $region3
  $region8: #{pspool_forward.12} parent=0 // loop_exit
    _

// kernel: pspool_forward.13
$region0: #{pspool_forward.13}
  #allocation0 [shape = 'u32[]', space=smem, size = 0x4, offset = 0x4, fixed_abs, tag = 'smem constant byte address 0x4 - core index']
  #allocation1 [shape = 'u32[144,128]{1,0:T(1,128)}', space=vmem, size = 0x12000, scoped, tag = 'internal scratch']
  %s0 = inlined_call_operand.vmem [shape: f32[2,4,4,128], index: 0, kind: input, shape index: {}]
  %s1 = inlined_call_operand.vmem [shape: f32[128,128], index: 1, kind: input, shape index: {}]
  %s2 = inlined_call_operand.vmem [shape: f32[32,4], index: 2, kind: input, shape index: {}]
  %s3 = inlined_call_operand.vmem [shape: f32[2,4,32,128], index: 3, kind: output, shape index: {}]
  %s4 = sld [smem:[#allocation0]]
  $region45: #{pspool_forward.13} parent=0
    _
  %s6 = ssub.s32 1, %s4
  %s7 = scalar_select 0, %s6, %s4
  loop: start=0, step=1, limit=4
  $region2: #{pspool_forward.13} parent=0 // loop_pre_header
    _
  $region3: #{pspool_forward.13} parent=0 // loop_header
    %s9 = sphi 0, %s13
    %p10 = scmp.ge.s32.totalorder %s9, 4
    %s19 = sphi 0, %s21
    %s22 = sphi 0, %s19
    %s23 = sphi 0, %s22
    %s39 = sphi 0, %s23
    %s43 = sphi 0, %s43
    %s45 = sphi 0, %s43
    %s46 = sphi 0, %s45
    %s60 = sphi 0, %s46
    %s64 = sphi 0, %s64
    %s66 = sphi 0, %s64
    %s67 = sphi 0, %s66
    %s81 = sphi 0, %s67
    %s87 = sphi 0, %s89
    %s90 = sphi 0, %s87
    %s91 = sphi 0, %s90
    %s107 = sphi 0, %s91
  $region4: #{pspool_forward.13} parent=0 // loop_header_branch
    %12 = sbr.rel (%p10) target = $region8
  $region5: #{pspool_forward.13} parent=0 // loop_body
    %s14 = ssub.s32 %s9, 1
    %s15 = ssub.s32 %s9, 2
    %s16 = sadd.s32 %s9, 1
    %s17 = ssub.s32 %s9, %s16
    %p18 = scmp.eq.s32.totalorder %s17, 0
    %s20 = sadd.s32 %s19, 1
    %s21 = scalar_select %p18, %s19, %s20
    %p24 = pneg %p18
    %p25 = scmp.eq.s32.totalorder %s9, 1
    %p26 = por %p24, %p25
    %p27 = scmp.ne.s32.totalorder %s19, %s22
    %p28 = scmp.eq.s32.totalorder %s9, 0
    %p29 = por %p27, %p28
    %p30 = scmp.ne.s32.totalorder %s19, %s22
    %p31 = scmp.eq.s32.totalorder %s14, 1
    %p32 = por %p30, %p31
    %p33 = scmp.ne.s32.totalorder %s22, %s23
    %p34 = scmp.eq.s32.totalorder %s14, 0
    %p35 = por %p33, %p34
    %p36 = scmp.ne.s32.totalorder %s22, %s23
    %p37 = scmp.eq.s32.totalorder %s15, 1
    %p38 = por %p36, %p37
    %p40 = scmp.ne.s32.totalorder %s23, %s39
    %p41 = scmp.eq.s32.totalorder %s15, 0
    %p42 = por %p40, %p41
    %s44 = sadd.s32 %s43, 1
    %p47 = scmp.eq.s32.totalorder %s9, 1
    %p48 = scmp.ne.s32.totalorder %s43, %s45
    %p49 = scmp.eq.s32.totalorder %s9, 0
    %p50 = por %p48, %p49
    %p51 = scmp.ne.s32.totalorder %s43, %s45
    %p52 = scmp.eq.s32.totalorder %s14, 1
    %p53 = por %p51, %p52
    %p54 = scmp.ne.s32.totalorder %s45, %s46
    %p55 = scmp.eq.s32.totalorder %s14, 0
    %p56 = por %p54, %p55
    %p57 = scmp.ne.s32.totalorder %s45, %s46
    %p58 = scmp.eq.s32.totalorder %s15, 1
    %p59 = por %p57, %p58
    %p61 = scmp.ne.s32.totalorder %s46, %s60
    %p62 = scmp.eq.s32.totalorder %s15, 0
    %p63 = por %p61, %p62
    %s65 = sadd.s32 %s64, 1
    %p68 = scmp.eq.s32.totalorder %s9, 1
    %p69 = scmp.ne.s32.totalorder %s64, %s66
    %p70 = scmp.eq.s32.totalorder %s9, 0
    %p71 = por %p69, %p70
    %p72 = scmp.ne.s32.totalorder %s64, %s66
    %p73 = scmp.eq.s32.totalorder %s14, 1
    %p74 = por %p72, %p73
    %p75 = scmp.ne.s32.totalorder %s66, %s67
    %p76 = scmp.eq.s32.totalorder %s14, 0
    %p77 = por %p75, %p76
    %p78 = scmp.ne.s32.totalorder %s66, %s67
    %p79 = scmp.eq.s32.totalorder %s15, 1
    %p80 = por %p78, %p79
    %p82 = scmp.ne.s32.totalorder %s67, %s81
    %p83 = scmp.eq.s32.totalorder %s15, 0
    %p84 = por %p82, %p83
    %s85 = ssub.s32 %s9, %s16
    %p86 = scmp.eq.s32.totalorder %s85, 0
    %s88 = sadd.s32 %s87, 1
    %s89 = scalar_select %p86, %s87, %s88
    %p92 = pneg %p86
    %p93 = scmp.eq.s32.totalorder %s9, 1
    %p94 = por %p92, %p93
    %p95 = scmp.ne.s32.totalorder %s87, %s90
    %p96 = scmp.eq.s32.totalorder %s9, 0
    %p97 = por %p95, %p96
    %p98 = scmp.ne.s32.totalorder %s87, %s90
    %p99 = scmp.eq.s32.totalorder %s14, 1
    %p100 = por %p98, %p99
    %p101 = scmp.ne.s32.totalorder %s90, %s91
    %p102 = scmp.eq.s32.totalorder %s14, 0
    %p103 = por %p101, %p102
    %p104 = scmp.ne.s32.totalorder %s90, %s91
    %p105 = scmp.eq.s32.totalorder %s15, 1
    %p106 = por %p104, %p105
    %p108 = scmp.ne.s32.totalorder %s91, %s107
    %p109 = scmp.eq.s32.totalorder %s15, 0
    %p110 = por %p108, %p109
    %p111 = scmp.le.s32.totalorder 1, %s9
    %p112 = scmp.lt.s32.totalorder %s9, 3
    %p113 = pnand %p111, %p112
    %p114 = pneg %p113
    // Predicated region
    $region9: #{pspool_forward.13} parent=5 // pred_check
      _
    $region10: #{pspool_forward.13} parent=5 // pred_check_branch
      %116 = sbr.rel (%p113) target = $region12
    $region11: #{pspool_forward.13} parent=5 // pred_region
      %s117 = ssub.s32 %s9, 1
      // Predicated region
      $region13: #{pspool_forward.13} parent=11 // pred_check
        %p118 = pneg %p56
      $region14: #{pspool_forward.13} parent=11 // pred_check_branch
        %120 = sbr.rel (%p118) target = $region16
      $region15: #{pspool_forward.13} parent=11 // pred_region
        _
      $region16: #{pspool_forward.13} parent=11 // pred_fallthru
        _
      // Predicated region
      $region17: #{pspool_forward.13} parent=11 // pred_check
        %p121 = pneg %p77
      $region18: #{pspool_forward.13} parent=11 // pred_check_branch
        %123 = sbr.rel (%p121) target = $region20
      $region19: #{pspool_forward.13} parent=11 // pred_region
        _
      $region20: #{pspool_forward.13} parent=11 // pred_fallthru
        _
    $region12: #{pspool_forward.13} parent=5 // pred_fallthru
      _
    %p124 = scmp.lt.s32.totalorder %s9, 2
    // Predicated region
    $region21: #{pspool_forward.13} parent=5 // pred_check
      %p125 = pneg %p124
    $region22: #{pspool_forward.13} parent=5 // pred_check_branch
      %127 = sbr.rel (%p125) target = $region24
    $region23: #{pspool_forward.13} parent=5 // pred_region
      // Predicated region
      $region25: #{pspool_forward.13} parent=23 // pred_check
        %p128 = pneg %p29
      $region26: #{pspool_forward.13} parent=23 // pred_check_branch
        %130 = sbr.rel (%p128) target = $region28
      $region27: #{pspool_forward.13} parent=23 // pred_region
        %p131 = scmp.lt.s32.totalorder %s9, 1
        %s132 = scalar_select %p131, %s9, 1
        %s133 = smul.addr %s132, 4
        %s134 = smul.addr %s133, 4
        %s135 = scalar_lea.vmem %s0, %s134
      $region28: #{pspool_forward.13} parent=23 // pred_fallthru
        _
    $region24: #{pspool_forward.13} parent=5 // pred_fallthru
      _
    %p136 = scmp.le.s32.totalorder 1, %s9
    %p137 = scmp.lt.s32.totalorder %s9, 3
    %p138 = pnand %p136, %p137
    %p139 = pneg %p138
    // Predicated region
    $region29: #{pspool_forward.13} parent=5 // pred_check
      _
    $region30: #{pspool_forward.13} parent=5 // pred_check_branch
      %141 = sbr.rel (%p138) target = $region32
    $region31: #{pspool_forward.13} parent=5 // pred_region
      %s142 = ssub.s32 %s9, 1
      %p143 = scmp.lt.s32.totalorder %s14, 1
      %s144 = scalar_select %p143, %s14, 1
      %s145 = smul.addr %s144, 4
      %s146 = smul.addr %s145, 4
      %s147 = scalar_lea.vmem %s0, %s146
      %p148 = pneg %p35
      %p149 = pneg %p32
      %p150 = pneg %p56
      %p151 = pneg %p53
      %p152 = pneg %p77
      %p153 = pneg %p74
      %p154 = pneg %p103
      %p155 = pneg %p100
      %p156 = scmp.lt.s32.totalorder %s14, 1
      %s157 = scalar_select %p156, %s14, 1
      %s158 = smul.addr %s157, 16
      %s159 = smul.addr %s158, 8
      %s160 = scalar_lea.vmem %s3, %s159
      %p161 = scmp.lt.s32.totalorder %s14, 1
      %s162 = scalar_select %p161, %s14, 1
      %s163 = smul.addr %s162, 4
      %s164 = smul.addr %s163, 4
      %s165 = scalar_lea.vmem %s0, %s164
      %p166 = scmp.lt.s32.totalorder %s14, 1
      %s167 = scalar_select %p166, %s14, 1
      %s168 = smul.addr %s167, 16
      %s169 = smul.addr %s168, 8
      %s170 = scalar_lea.vmem %s3, %s169
      %v171 = vld [vmem:[%s1] sm:$0xff]
      %v172 = vld [vmem:[%s1 + $0x8] sm:$0xff]
      %v173 = vld [vmem:[%s1 + $0x10] sm:$0xff]
      %v174 = vld [vmem:[%s1 + $0x18] sm:$0xff]
      %v175 = vld [vmem:[%s1 + $0x20] sm:$0xff]
      %v176 = vld [vmem:[%s1 + $0x28] sm:$0xff]
      %v177 = vld [vmem:[%s1 + $0x30] sm:$0xff]
      %v178 = vld [vmem:[%s1 + $0x38] sm:$0xff]
      %v179 = vld [vmem:[%s1 + $0x40] sm:$0xff]
      %v180 = vld [vmem:[%s1 + $0x48] sm:$0xff]
      %v181 = vld [vmem:[%s1 + $0x50] sm:$0xff]
      %v182 = vld [vmem:[%s1 + $0x58] sm:$0xff]
      %v183 = vld [vmem:[%s1 + $0x60] sm:$0xff]
      %v184 = vld [vmem:[%s1 + $0x68] sm:$0xff]
      %v185 = vld [vmem:[%s1 + $0x70] sm:$0xff]
      %v186 = vld [vmem:[%s1 + $0x78] sm:$0xff]
      %v187 = vld [vmem:[%s2] sm:$0xff]
      %v188 = vld [vmem:[%s2 + $0x8] sm:$0xff]
      %v189 = vld [vmem:[%s2 + $0x10] sm:$0xff]
      %v190 = vld [vmem:[%s2 + $0x18] sm:$0xff]
      %v191 = vld [vmem:[%s165] sm:$0xf]
      %192 = vmatprep.subr.mxu0 0.0
      %193 = vmatpush1.msra.mxu0 %v171
      %194 = vmatprep.subr.mxu0 0.0
      %195 = vmatpush1.msra.mxu0 %v172
      %196 = vmatprep.subr.mxu0 0.0
      %197 = vmatpush1.msra.mxu0 %v173
      %198 = vmatprep.subr.mxu0 0.0
      %199 = vmatpush1.msra.mxu0 %v174
      %200 = vmatprep.subr.mxu0 0.0
      %201 = vmatpush1.msra.mxu0 %v175
      %202 = vmatprep.subr.mxu0 0.0
      %203 = vmatpush1.msra.mxu0 %v176
      %204 = vmatprep.subr.mxu0 0.0
      %205 = vmatpush1.msra.mxu0 %v177
      %206 = vmatprep.subr.mxu0 0.0
      %207 = vmatpush1.msra.mxu0 %v178
      %208 = vmatprep.subr.mxu0 0.0
      %209 = vmatpush1.msra.mxu0 %v179
      %210 = vmatprep.subr.mxu0 0.0
      %211 = vmatpush1.msra.mxu0 %v180
      %212 = vmatprep.subr.mxu0 0.0
      %213 = vmatpush1.msra.mxu0 %v181
      %214 = vmatprep.subr.mxu0 0.0
      %215 = vmatpush1.msra.mxu0 %v182
      %216 = vmatprep.subr.mxu0 0.0
      %217 = vmatpush1.msra.mxu0 %v183
      %218 = vmatprep.subr.mxu0 0.0
      %219 = vmatpush1.msra.mxu0 %v184
      %220 = vmatprep.subr.mxu0 0.0
      %221 = vmatpush1.msra.mxu0 %v185
      %222 = vmatprep.subr.mxu0 0.0
      %223 = vmatpush1.msra.mxu0 %v186
      %224 = vmatprep.subr.mxu0 0.0
      %225 = vmatpush1.msra.mxu0 0.0
      %226 = vmatprep.subr.mxu0 0.0
      %227 = vmatpush1.msra.mxu0 0.0
      %228 = vmatprep.subr.mxu0 0.0
      %229 = vmatpush1.msra.mxu0 0.0
      %230 = vmatprep.subr.mxu0 0.0
      %231 = vmatpush1.msra.mxu0 0.0
      %232 = vmatprep.subr.mxu0 0.0
      %233 = vmatpush1.msra.mxu0 0.0
      %234 = vmatprep.subr.mxu0 0.0
      %235 = vmatpush1.msra.mxu0 0.0
      %236 = vmatprep.subr.mxu0 0.0
      %237 = vmatpush1.msra.mxu0 0.0
      %238 = vmatprep.subr.mxu0 0.0
      %239 = vmatpush1.msra.mxu0 0.0
      %240 = vmatprep.subr.mxu0 0.0
      %241 = vmatpush1.msra.mxu0 0.0
      %242 = vmatprep.subr.mxu0 0.0
      %243 = vmatpush1.msra.mxu0 0.0
      %244 = vmatprep.subr.mxu0 0.0
      %245 = vmatpush1.msra.mxu0 0.0
      %246 = vmatprep.subr.mxu0 0.0
      %247 = vmatpush1.msra.mxu0 0.0
      %248 = vmatprep.subr.mxu0 0.0
      %249 = vmatpush1.msra.mxu0 0.0
      %250 = vmatprep.subr.mxu0 0.0
      %251 = vmatpush1.msra.mxu0 0.0
      %252 = vmatprep.subr.mxu0 0.0
      %253 = vmatpush1.msra.mxu0 0.0
      %254 = vmatprep.subr.mxu0 0.0
      %255 = vmatpush1.msra.mxu0 0.0
      %256 = vmatprep.mubr.f32.mxu0 0.0
      %257 = vmatmul.mubr.f32.gmra.mrb[0].mxu0 %v191
      %v258 = vpop.f32.mrb[0].mxu0
      %v259 = vadd.f32 0.0, %v258
      %v260 = vpop.f32.mrb[0].mxu0
      %261 = vdwg.mxu0
      %vm262 = vcmask 31744
      %v264 = vsel %vm262, %v187, 0
      %v267 = vsel %vm262, %v188, 0
      %v270 = vsel %vm262, %v189, 0
      %v273 = vsel %vm262, %v190, 0
      %vm275 = vcmask 1043456
      %v277 = vsel %vm275, %v259, 0
      %279 = vmatprep.subr.mxu0 0.0
      %280 = vmatpush1.msra.mxu0 %v277
      %281 = vmatprep.subr.mxu0 0.0
      %282 = vmatpush1.msra.mxu0 0.0
      %283 = vmatprep.subr.mxu0 0.0
      %284 = vmatpush1.msra.mxu0 0.0
      %285 = vmatprep.subr.mxu0 0.0
      %286 = vmatpush1.msra.mxu0 0.0
      %287 = vmatprep.subr.mxu0 0.0
      %288 = vmatpush1.msra.mxu0 0.0
      %289 = vmatprep.subr.mxu0 0.0
      %290 = vmatpush1.msra.mxu0 0.0
      %291 = vmatprep.subr.mxu0 0.0
      %292 = vmatpush1.msra.mxu0 0.0
      %293 = vmatprep.subr.mxu0 0.0
      %294 = vmatpush1.msra.mxu0 0.0
      %295 = vmatprep.subr.mxu0 0.0
      %296 = vmatpush1.msra.mxu0 0.0
      %297 = vmatprep.subr.mxu0 0.0
      %298 = vmatpush1.msra.mxu0 0.0
      %299 = vmatprep.subr.mxu0 0.0
      %300 = vmatpush1.msra.mxu0 0.0
      %301 = vmatprep.subr.mxu0 0.0
      %302 = vmatpush1.msra.mxu0 0.0
      %303 = vmatprep.subr.mxu0 0.0
      %304 = vmatpush1.msra.mxu0 0.0
      %305 = vmatprep.subr.mxu0 0.0
      %306 = vmatpush1.msra.mxu0 0.0
      %307 = vmatprep.subr.mxu0 0.0
      %308 = vmatpush1.msra.mxu0 0.0
      %309 = vmatprep.subr.mxu0 0.0
      %310 = vmatpush1.msra.mxu0 0.0
      %311 = vmatprep.subr.mxu0 0.0
      %312 = vmatpush1.msra.mxu0 0.0
      %313 = vmatprep.subr.mxu0 0.0
      %314 = vmatpush1.msra.mxu0 0.0
      %315 = vmatprep.subr.mxu0 0.0
      %316 = vmatpush1.msra.mxu0 0.0
      %317 = vmatprep.subr.mxu0 0.0
      %318 = vmatpush1.msra.mxu0 0.0
      %319 = vmatprep.subr.mxu0 0.0
      %320 = vmatpush1.msra.mxu0 0.0
      %321 = vmatprep.subr.mxu0 0.0
      %322 = vmatpush1.msra.mxu0 0.0
      %323 = vmatprep.subr.mxu0 0.0
      %324 = vmatpush1.msra.mxu0 0.0
      %325 = vmatprep.subr.mxu0 0.0
      %326 = vmatpush1.msra.mxu0 0.0
      %327 = vmatprep.subr.mxu0 0.0
      %328 = vmatpush1.msra.mxu0 0.0
      %329 = vmatprep.subr.mxu0 0.0
      %330 = vmatpush1.msra.mxu0 0.0
      %331 = vmatprep.subr.mxu0 0.0
      %332 = vmatpush1.msra.mxu0 0.0
      %333 = vmatprep.subr.mxu0 0.0
      %334 = vmatpush1.msra.mxu0 0.0
      %335 = vmatprep.subr.mxu0 0.0
      %336 = vmatpush1.msra.mxu0 0.0
      %337 = vmatprep.subr.mxu0 0.0
      %338 = vmatpush1.msra.mxu0 0.0
      %339 = vmatprep.subr.mxu0 0.0
      %340 = vmatpush1.msra.mxu0 0.0
      %341 = vmatprep.subr.mxu0 0.0
      %342 = vmatpush1.msra.mxu0 0.0
      %343 = vmatprep.mubr.f32.mxu0 0.0
      %344 = vmatmul.mubr.f32.gmra.mrb[0].mxu0 %v264
      %v345 = vpop.f32.mrb[0].mxu0
      %v346 = vadd.f32 0.0, %v345
      %v347 = vpop.f32.mrb[0].mxu0
      %348 = vmatprep.mubr.f32.mxu0 0.0
      %349 = vmatmul.mubr.f32.gmra.mrb[0].mxu0 %v267
      %v350 = vpop.f32.mrb[0].mxu0
      %v351 = vadd.f32 0.0, %v350
      %v352 = vpop.f32.mrb[0].mxu0
      %353 = vmatprep.mubr.f32.mxu0 0.0
      %354 = vmatmul.mubr.f32.gmra.mrb[0].mxu0 %v270
      %v355 = vpop.f32.mrb[0].mxu0
      %v356 = vadd.f32 0.0, %v355
      %v357 = vpop.f32.mrb[0].mxu0
      %358 = vmatprep.mubr.f32.mxu0 0.0
      %359 = vmatmul.mubr.f32.gmra.mrb[0].mxu0 %v273
      %v360 = vpop.f32.mrb[0].mxu0
      %v361 = vadd.f32 0.0, %v360
      %v362 = vpop.f32.mrb[0].mxu0
      %363 = vdwg.mxu0
      %364 = vst [vmem:[%s170] sm:$0xff] %v346
      %365 = vst [vmem:[%s170 + $0x8] sm:$0xff] %v351
      %366 = vst [vmem:[%s170 + $0x10] sm:$0xff] %v356
      %367 = vst [vmem:[%s170 + $0x18] sm:$0xff] %v361
      %s368 = scalar_lea.vmem %s165, 4
      %v369 = vld [vmem:[%s368] sm:$0xf]
      %370 = vmatprep.subr.mxu0 0.0
      %371 = vmatpush1.msra.mxu0 %v171
      %372 = vmatprep.subr.mxu0 0.0
      %373 = vmatpush1.msra.mxu0 %v172
      %374 = vmatprep.subr.mxu0 0.0
      %375 = vmatpush1.msra.mxu0 %v173
      %376 = vmatprep.subr.mxu0 0.0
      %377 = vmatpush1.msra.mxu0 %v174
      %378 = vmatprep.subr.mxu0 0.0
      %379 = vmatpush1.msra.mxu0 %v175
      %380 = vmatprep.subr.mxu0 0.0
      %381 = vmatpush1.msra.mxu0 %v176
      %382 = vmatprep.subr.mxu0 0.0
      %383 = vmatpush1.msra.mxu0 %v177
      %384 = vmatprep.subr.mxu0 0.0
      %385 = vmatpush1.msra.mxu0 %v178
      %386 = vmatprep.subr.mxu0 0.0
      %387 = vmatpush1.msra.mxu0 %v179
      %388 = vmatprep.subr.mxu0 0.0
      %389 = vmatpush1.msra.mxu0 %v180
      %390 = vmatprep.subr.mxu0 0.0
      %391 = vmatpush1.msra.mxu0 %v181
      %392 = vmatprep.subr.mxu0 0.0
      %393 = vmatpush1.msra.mxu0 %v182
      %394 = vmatprep.subr.mxu0 0.0
      %395 = vmatpush1.msra.mxu0 %v183
      %396 = vmatprep.subr.mxu0 0.0
      %397 = vmatpush1.msra.mxu0 %v184
      %398 = vmatprep.subr.mxu0 0.0
      %399 = vmatpush1.msra.mxu0 %v185
      %400 = vmatprep.subr.mxu0 0.0
      %401 = vmatpush1.msra.mxu0 %v186
      %402 = vmatprep.subr.mxu0 0.0
      %403 = vmatpush1.msra.mxu0 0.0
      %404 = vmatprep.subr.mxu0 0.0
      %405 = vmatpush1.msra.mxu0 0.0
      %406 = vmatprep.subr.mxu0 0.0
      %407 = vmatpush1.msra.mxu0 0.0
      %408 = vmatprep.subr.mxu0 0.0
      %409 = vmatpush1.msra.mxu0 0.0
      %410 = vmatprep.subr.mxu0 0.0
      %411 = vmatpush1.msra.mxu0 0.0
      %412 = vmatprep.subr.mxu0 0.0
      %413 = vmatpush1.msra.mxu0 0.0
      %414 = vmatprep.subr.mxu0 0.0
      %415 = vmatpush1.msra.mxu0 0.0
      %416 = vmatprep.subr.mxu0 0.0
      %417 = vmatpush1.msra.mxu0 0.0
      %418 = vmatprep.subr.mxu0 0.0
      %419 = vmatpush1.msra.mxu0 0.0
      %420 = vmatprep.subr.mxu0 0.0
      %421 = vmatpush1.msra.mxu0 0.0
      %422 = vmatprep.subr.mxu0 0.0
      %423 = vmatpush1.msra.mxu0 0.0
      %424 = vmatprep.subr.mxu0 0.0
      %425 = vmatpush1.msra.mxu0 0.0
      %426 = vmatprep.subr.mxu0 0.0
      %427 = vmatpush1.msra.mxu0 0.0
      %428 = vmatprep.subr.mxu0 0.0
      %429 = vmatpush1.msra.mxu0 0.0
      %430 = vmatprep.subr.mxu0 0.0
      %431 = vmatpush1.msra.mxu0 0.0
      %432 = vmatprep.subr.mxu0 0.0
      %433 = vmatpush1.msra.mxu0 0.0
      %434 = vmatprep.mubr.f32.mxu0 0.0
      %435 = vmatmul.mubr.f32.gmra.mrb[0].mxu0 %v369
      %v436 = vpop.f32.mrb[0].mxu0
      %v437 = vadd.f32 0.0, %v436
      %v438 = vpop.f32.mrb[0].mxu0
      %439 = vdwg.mxu0
      %v441 = vsel %vm275, %v437, 0
      %443 = vmatprep.subr.mxu0 0.0
      %444 = vmatpush1.msra.mxu0 %v441
      %445 = vmatprep.subr.mxu0 0.0
      %446 = vmatpush1.msra.mxu0 0.0
      %447 = vmatprep.subr.mxu0 0.0
      %448 = vmatpush1.msra.mxu0 0.0
      %449 = vmatprep.subr.mxu0 0.0
      %450 = vmatpush1.msra.mxu0 0.0
      %451 = vmatprep.subr.mxu0 0.0
      %452 = vmatpush1.msra.mxu0 0.0
      %453 = vmatprep.subr.mxu0 0.0
      %454 = vmatpush1.msra.mxu0 0.0
      %455 = vmatprep.subr.mxu0 0.0
      %456 = vmatpush1.msra.mxu0 0.0
      %457 = vmatprep.subr.mxu0 0.0
      %458 = vmatpush1.msra.mxu0 0.0
      %459 = vmatprep.subr.mxu0 0.0
      %460 = vmatpush1.msra.mxu0 0.0
      %461 = vmatprep.subr.mxu0 0.0
      %462 = vmatpush1.msra.mxu0 0.0
      %463 = vmatprep.subr.mxu0 0.0
      %464 = vmatpush1.msra.mxu0 0.0
      %465 = vmatprep.subr.mxu0 0.0
      %466 = vmatpush1.msra.mxu0 0.0
      %467 = vmatprep.subr.mxu0 0.0
      %468 = vmatpush1.msra.mxu0 0.0
      %469 = vmatprep.subr.mxu0 0.0
      %470 = vmatpush1.msra.mxu0 0.0
      %471 = vmatprep.subr.mxu0 0.0
      %472 = vmatpush1.msra.mxu0 0.0
      %473 = vmatprep.subr.mxu0 0.0
      %474 = vmatpush1.msra.mxu0 0.0
      %475 = vmatprep.subr.mxu0 0.0
      %476 = vmatpush1.msra.mxu0 0.0
      %477 = vmatprep.subr.mxu0 0.0
      %478 = vmatpush1.msra.mxu0 0.0
      %479 = vmatprep.subr.mxu0 0.0
      %480 = vmatpush1.msra.mxu0 0.0
      %481 = vmatprep.subr.mxu0 0.0
      %482 = vmatpush1.msra.mxu0 0.0
      %483 = vmatprep.subr.mxu0 0.0
      %484 = vmatpush1.msra.mxu0 0.0
      %485 = vmatprep.subr.mxu0 0.0
      %486 = vmatpush1.msra.mxu0 0.0
      %487 = vmatprep.subr.mxu0 0.0
      %488 = vmatpush1.msra.mxu0 0.0
      %489 = vmatprep.subr.mxu0 0.0
      %490 = vmatpush1.msra.mxu0 0.0
      %491 = vmatprep.subr.mxu0 0.0
      %492 = vmatpush1.msra.mxu0 0.0
      %493 = vmatprep.subr.mxu0 0.0
      %494 = vmatpush1.msra.mxu0 0.0
      %495 = vmatprep.subr.mxu0 0.0
      %496 = vmatpush1.msra.mxu0 0.0
      %497 = vmatprep.subr.mxu0 0.0
      %498 = vmatpush1.msra.mxu0 0.0
      %499 = vmatprep.subr.mxu0 0.0
      %500 = vmatpush1.msra.mxu0 0.0
      %501 = vmatprep.subr.mxu0 0.0
      %502 = vmatpush1.msra.mxu0 0.0
      %503 = vmatprep.subr.mxu0 0.0
      %504 = vmatpush1.msra.mxu0 0.0
      %505 = vmatprep.subr.mxu0 0.0
      %506 = vmatpush1.msra.mxu0 0.0
      %507 = vmatprep.mubr.f32.mxu0 0.0
      %508 = vmatmul.mubr.f32.gmra.mrb[0].mxu0 %v264
      %v509 = vpop.f32.mrb[0].mxu0
      %v510 = vadd.f32 0.0, %v509
      %v511 = vpop.f32.mrb[0].mxu0
      %512 = vmatprep.mubr.f32.mxu0 0.0
      %513 = vmatmul.mubr.f32.gmra.mrb[0].mxu0 %v267
      %v514 = vpop.f32.mrb[0].mxu0
      %v515 = vadd.f32 0.0, %v514
      %v516 = vpop.f32.mrb[0].mxu0
      %517 = vmatprep.mubr.f32.mxu0 0.0
      %518 = vmatmul.mubr.f32.gmra.mrb[0].mxu0 %v270
      %v519 = vpop.f32.mrb[0].mxu0
      %v520 = vadd.f32 0.0, %v519
      %v521 = vpop.f32.mrb[0].mxu0
      %522 = vmatprep.mubr.f32.mxu0 0.0
      %523 = vmatmul.mubr.f32.gmra.mrb[0].mxu0 %v273
      %v524 = vpop.f32.mrb[0].mxu0
      %v525 = vadd.f32 0.0, %v524
      %v526 = vpop.f32.mrb[0].mxu0
      %527 = vdwg.mxu0
      %s528 = scalar_lea.vmem %s170, 32
      %529 = vst [vmem:[%s528] sm:$0xff] %v510
      %530 = vst [vmem:[%s528 + $0x8] sm:$0xff] %v515
      %531 = vst [vmem:[%s528 + $0x10] sm:$0xff] %v520
      %532 = vst [vmem:[%s528 + $0x18] sm:$0xff] %v525
      %s533 = scalar_lea.vmem %s165, 8
      %v534 = vld [vmem:[%s533] sm:$0xf]
      %535 = vmatprep.subr.mxu0 0.0
      %536 = vmatpush1.msra.mxu0 %v171
      %537 = vmatprep.subr.mxu0 0.0
      %538 = vmatpush1.msra.mxu0 %v172
      %539 = vmatprep.subr.mxu0 0.0
      %540 = vmatpush1.msra.mxu0 %v173
      %541 = vmatprep.subr.mxu0 0.0
      %542 = vmatpush1.msra.mxu0 %v174
      %543 = vmatprep.subr.mxu0 0.0
      %544 = vmatpush1.msra.mxu0 %v175
      %545 = vmatprep.subr.mxu0 0.0
      %546 = vmatpush1.msra.mxu0 %v176
      %547 = vmatprep.subr.mxu0 0.0
      %548 = vmatpush1.msra.mxu0 %v177
      %549 = vmatprep.subr.mxu0 0.0
      %550 = vmatpush1.msra.mxu0 %v178
      %551 = vmatprep.subr.mxu0 0.0
      %552 = vmatpush1.msra.mxu0 %v179
      %553 = vmatprep.subr.mxu0 0.0
      %554 = vmatpush1.msra.mxu0 %v180
      %555 = vmatprep.subr.mxu0 0.0
      %556 = vmatpush1.msra.mxu0 %v181
      %557 = vmatprep.subr.mxu0 0.0
      %558 = vmatpush1.msra.mxu0 %v182
      %559 = vmatprep.subr.mxu0 0.0
      %560 = vmatpush1.msra.mxu0 %v183
      %561 = vmatprep.subr.mxu0 0.0
      %562 = vmatpush1.msra.mxu0 %v184
      %563 = vmatprep.subr.mxu0 0.0
      %564 = vmatpush1.msra.mxu0 %v185
      %565 = vmatprep.subr.mxu0 0.0
      %566 = vmatpush1.msra.mxu0 %v186
      %567 = vmatprep.subr.mxu0 0.0
      %568 = vmatpush1.msra.mxu0 0.0
      %569 = vmatprep.subr.mxu0 0.0
      %570 = vmatpush1.msra.mxu0 0.0
      %571 = vmatprep.subr.mxu0 0.0
      %572 = vmatpush1.msra.mxu0 0.0
      %573 = vmatprep.subr.mxu0 0.0
      %574 = vmatpush1.msra.mxu0 0.0
      %575 = vmatprep.subr.mxu0 0.0
      %576 = vmatpush1.msra.mxu0 0.0
      %577 = vmatprep.subr.mxu0 0.0
      %578 = vmatpush1.msra.mxu0 0.0
      %579 = vmatprep.subr.mxu0 0.0
      %580 = vmatpush1.msra.mxu0 0.0
      %581 = vmatprep.subr.mxu0 0.0
      %582 = vmatpush1.msra.mxu0 0.0
      %583 = vmatprep.subr.mxu0 0.0
      %584 = vmatpush1.msra.mxu0 0.0
      %585 = vmatprep.subr.mxu0 0.0
      %586 = vmatpush1.msra.mxu0 0.0
      %587 = vmatprep.subr.mxu0 0.0
      %588 = vmatpush1.msra.mxu0 0.0
      %589 = vmatprep.subr.mxu0 0.0
      %590 = vmatpush1.msra.mxu0 0.0
      %591 = vmatprep.subr.mxu0 0.0
      %592 = vmatpush1.msra.mxu0 0.0
      %593 = vmatprep.subr.mxu0 0.0
      %594 = vmatpush1.msra.mxu0 0.0
      %595 = vmatprep.subr.mxu0 0.0
      %596 = vmatpush1.msra.mxu0 0.0
      %597 = vmatprep.subr.mxu0 0.0
      %598 = vmatpush1.msra.mxu0 0.0
      %599 = vmatprep.mubr.f32.mxu0 0.0
      %600 = vmatmul.mubr.f32.gmra.mrb[0].mxu0 %v534
      %v601 = vpop.f32.mrb[0].mxu0
      %v602 = vadd.f32 0.0, %v601
      %v603 = vpop.f32.mrb[0].mxu0
      %604 = vdwg.mxu0
      %v606 = vsel %vm275, %v602, 0
      %608 = vmatprep.subr.mxu0 0.0
      %609 = vmatpush1.msra.mxu0 %v606
      %610 = vmatprep.subr.mxu0 0.0
      %611 = vmatpush1.msra.mxu0 0.0
      %612 = vmatprep.subr.mxu0 0.0
      %613 = vmatpush1.msra.mxu0 0.0
      %614 = vmatprep.subr.mxu0 0.0
      %615 = vmatpush1.msra.mxu0 0.0
      %616 = vmatprep.subr.mxu0 0.0
      %617 = vmatpush1.msra.mxu0 0.0
      %618 = vmatprep.subr.mxu0 0.0
      %619 = vmatpush1.msra.mxu0 0.0
      %620 = vmatprep.subr.mxu0 0.0
      %621 = vmatpush1.msra.mxu0 0.0
      %622 = vmatprep.subr.mxu0 0.0
      %623 = vmatpush1.msra.mxu0 0.0
      %624 = vmatprep.subr.mxu0 0.0
      %625 = vmatpush1.msra.mxu0 0.0
      %626 = vmatprep.subr.mxu0 0.0
      %627 = vmatpush1.msra.mxu0 0.0
      %628 = vmatprep.subr.mxu0 0.0
      %629 = vmatpush1.msra.mxu0 0.0
      %630 = vmatprep.subr.mxu0 0.0
      %631 = vmatpush1.msra.mxu0 0.0
      %632 = vmatprep.subr.mxu0 0.0
      %633 = vmatpush1.msra.mxu0 0.0
      %634 = vmatprep.subr.mxu0 0.0
      %635 = vmatpush1.msra.mxu0 0.0
      %636 = vmatprep.subr.mxu0 0.0
      %637 = vmatpush1.msra.mxu0 0.0
      %638 = vmatprep.subr.mxu0 0.0
      %639 = vmatpush1.msra.mxu0 0.0
      %640 = vmatprep.subr.mxu0 0.0
      %641 = vmatpush1.msra.mxu0 0.0
      %642 = vmatprep.subr.mxu0 0.0
      %643 = vmatpush1.msra.mxu0 0.0
      %644 = vmatprep.subr.mxu0 0.0
      %645 = vmatpush1.msra.mxu0 0.0
      %646 = vmatprep.subr.mxu0 0.0
      %647 = vmatpush1.msra.mxu0 0.0
      %648 = vmatprep.subr.mxu0 0.0
      %649 = vmatpush1.msra.mxu0 0.0
      %650 = vmatprep.subr.mxu0 0.0
      %651 = vmatpush1.msra.mxu0 0.0
      %652 = vmatprep.subr.mxu0 0.0
      %653 = vmatpush1.msra.mxu0 0.0
      %654 = vmatprep.subr.mxu0 0.0
      %655 = vmatpush1.msra.mxu0 0.0
      %656 = vmatprep.subr.mxu0 0.0
      %657 = vmatpush1.msra.mxu0 0.0
      %658 = vmatprep.subr.mxu0 0.0
      %659 = vmatpush1.msra.mxu0 0.0
      %660 = vmatprep.subr.mxu0 0.0
      %661 = vmatpush1.msra.mxu0 0.0
      %662 = vmatprep.subr.mxu0 0.0
      %663 = vmatpush1.msra.mxu0 0.0
      %664 = vmatprep.subr.mxu0 0.0
      %665 = vmatpush1.msra.mxu0 0.0
      %666 = vmatprep.subr.mxu0 0.0
      %667 = vmatpush1.msra.mxu0 0.0
      %668 = vmatprep.subr.mxu0 0.0
      %669 = vmatpush1.msra.mxu0 0.0
      %670 = vmatprep.subr.mxu0 0.0
      %671 = vmatpush1.msra.mxu0 0.0
      %672 = vmatprep.mubr.f32.mxu0 0.0
      %673 = vmatmul.mubr.f32.gmra.mrb[0].mxu0 %v264
      %v674 = vpop.f32.mrb[0].mxu0
      %v675 = vadd.f32 0.0, %v674
      %v676 = vpop.f32.mrb[0].mxu0
      %677 = vmatprep.mubr.f32.mxu0 0.0
      %678 = vmatmul.mubr.f32.gmra.mrb[0].mxu0 %v267
      %v679 = vpop.f32.mrb[0].mxu0
      %v680 = vadd.f32 0.0, %v679
      %v681 = vpop.f32.mrb[0].mxu0
      %682 = vmatprep.mubr.f32.mxu0 0.0
      %683 = vmatmul.mubr.f32.gmra.mrb[0].mxu0 %v270
      %v684 = vpop.f32.mrb[0].mxu0
      %v685 = vadd.f32 0.0, %v684
      %v686 = vpop.f32.mrb[0].mxu0
      %687 = vmatprep.mubr.f32.mxu0 0.0
      %688 = vmatmul.mubr.f32.gmra.mrb[0].mxu0 %v273
      %v689 = vpop.f32.mrb[0].mxu0
      %v690 = vadd.f32 0.0, %v689
      %v691 = vpop.f32.mrb[0].mxu0
      %692 = vdwg.mxu0
      %s693 = scalar_lea.vmem %s170, 64
      %694 = vst [vmem:[%s693] sm:$0xff] %v675
      %695 = vst [vmem:[%s693 + $0x8] sm:$0xff] %v680
      %696 = vst [vmem:[%s693 + $0x10] sm:$0xff] %v685
      %697 = vst [vmem:[%s693 + $0x18] sm:$0xff] %v690
      %s698 = scalar_lea.vmem %s165, 12
      %v699 = vld [vmem:[%s698] sm:$0xf]
      %700 = vmatprep.subr.mxu0 0.0
      %701 = vmatpush1.msra.mxu0 %v171
      %702 = vmatprep.subr.mxu0 0.0
      %703 = vmatpush1.msra.mxu0 %v172
      %704 = vmatprep.subr.mxu0 0.0
      %705 = vmatpush1.msra.mxu0 %v173
      %706 = vmatprep.subr.mxu0 0.0
      %707 = vmatpush1.msra.mxu0 %v174
      %708 = vmatprep.subr.mxu0 0.0
      %709 = vmatpush1.msra.mxu0 %v175
      %710 = vmatprep.subr.mxu0 0.0
      %711 = vmatpush1.msra.mxu0 %v176
      %712 = vmatprep.subr.mxu0 0.0
      %713 = vmatpush1.msra.mxu0 %v177
      %714 = vmatprep.subr.mxu0 0.0
      %715 = vmatpush1.msra.mxu0 %v178
      %716 = vmatprep.subr.mxu0 0.0
      %717 = vmatpush1.msra.mxu0 %v179
      %718 = vmatprep.subr.mxu0 0.0
      %719 = vmatpush1.msra.mxu0 %v180
      %720 = vmatprep.subr.mxu0 0.0
      %721 = vmatpush1.msra.mxu0 %v181
      %722 = vmatprep.subr.mxu0 0.0
      %723 = vmatpush1.msra.mxu0 %v182
      %724 = vmatprep.subr.mxu0 0.0
      %725 = vmatpush1.msra.mxu0 %v183
      %726 = vmatprep.subr.mxu0 0.0
      %727 = vmatpush1.msra.mxu0 %v184
      %728 = vmatprep.subr.mxu0 0.0
      %729 = vmatpush1.msra.mxu0 %v185
      %730 = vmatprep.subr.mxu0 0.0
      %731 = vmatpush1.msra.mxu0 %v186
      %732 = vmatprep.subr.mxu0 0.0
      %733 = vmatpush1.msra.mxu0 0.0
      %734 = vmatprep.subr.mxu0 0.0
      %735 = vmatpush1.msra.mxu0 0.0
      %736 = vmatprep.subr.mxu0 0.0
      %737 = vmatpush1.msra.mxu0 0.0
      %738 = vmatprep.subr.mxu0 0.0
      %739 = vmatpush1.msra.mxu0 0.0
      %740 = vmatprep.subr.mxu0 0.0
      %741 = vmatpush1.msra.mxu0 0.0
      %742 = vmatprep.subr.mxu0 0.0
      %743 = vmatpush1.msra.mxu0 0.0
      %744 = vmatprep.subr.mxu0 0.0
      %745 = vmatpush1.msra.mxu0 0.0
      %746 = vmatprep.subr.mxu0 0.0
      %747 = vmatpush1.msra.mxu0 0.0
      %748 = vmatprep.subr.mxu0 0.0
      %749 = vmatpush1.msra.mxu0 0.0
      %750 = vmatprep.subr.mxu0 0.0
      %751 = vmatpush1.msra.mxu0 0.0
      %752 = vmatprep.subr.mxu0 0.0
      %753 = vmatpush1.msra.mxu0 0.0
      %754 = vmatprep.subr.mxu0 0.0
      %755 = vmatpush1.msra.mxu0 0.0
      %756 = vmatprep.subr.mxu0 0.0
      %757 = vmatpush1.msra.mxu0 0.0
      %758 = vmatprep.subr.mxu0 0.0
      %759 = vmatpush1.msra.mxu0 0.0
      %760 = vmatprep.subr.mxu0 0.0
      %761 = vmatpush1.msra.mxu0 0.0
      %762 = vmatprep.subr.mxu0 0.0
      %763 = vmatpush1.msra.mxu0 0.0
      %764 = vmatprep.mubr.f32.mxu0 0.0
      %765 = vmatmul.mubr.f32.gmra.mrb[0].mxu0 %v699
      %v766 = vpop.f32.mrb[0].mxu0
      %v767 = vadd.f32 0.0, %v766
      %v768 = vpop.f32.mrb[0].mxu0
      %769 = vdwg.mxu0
      %v771 = vsel %vm275, %v767, 0
      %773 = vmatprep.subr.mxu0 0.0
      %774 = vmatpush1.msra.mxu0 %v771
      %775 = vmatprep.subr.mxu0 0.0
      %776 = vmatpush1.msra.mxu0 0.0
      %777 = vmatprep.subr.mxu0 0.0
      %778 = vmatpush1.msra.mxu0 0.0
      %779 = vmatprep.subr.mxu0 0.0
      %780 = vmatpush1.msra.mxu0 0.0
      %781 = vmatprep.subr.mxu0 0.0
      %782 = vmatpush1.msra.mxu0 0.0
      %783 = vmatprep.subr.mxu0 0.0
      %784 = vmatpush1.msra.mxu0 0.0
      %785 = vmatprep.subr.mxu0 0.0
      %786 = vmatpush1.msra.mxu0 0.0
      %787 = vmatprep.subr.mxu0 0.0
      %788 = vmatpush1.msra.mxu0 0.0
      %789 = vmatprep.subr.mxu0 0.0
      %790 = vmatpush1.msra.mxu0 0.0
      %791 = vmatprep.subr.mxu0 0.0
      %792 = vmatpush1.msra.mxu0 0.0
      %793 = vmatprep.subr.mxu0 0.0
      %794 = vmatpush1.msra.mxu0 0.0
      %795 = vmatprep.subr.mxu0 0.0
      %796 = vmatpush1.msra.mxu0 0.0
      %797 = vmatprep.subr.mxu0 0.0
      %798 = vmatpush1.msra.mxu0 0.0
      %799 = vmatprep.subr.mxu0 0.0
      %800 = vmatpush1.msra.mxu0 0.0
      %801 = vmatprep.subr.mxu0 0.0
      %802 = vmatpush1.msra.mxu0 0.0
      %803 = vmatprep.subr.mxu0 0.0
      %804 = vmatpush1.msra.mxu0 0.0
      %805 = vmatprep.subr.mxu0 0.0
      %806 = vmatpush1.msra.mxu0 0.0
      %807 = vmatprep.subr.mxu0 0.0
      %808 = vmatpush1.msra.mxu0 0.0
      %809 = vmatprep.subr.mxu0 0.0
      %810 = vmatpush1.msra.mxu0 0.0
      %811 = vmatprep.subr.mxu0 0.0
      %812 = vmatpush1.msra.mxu0 0.0
      %813 = vmatprep.subr.mxu0 0.0
      %814 = vmatpush1.msra.mxu0 0.0
      %815 = vmatprep.subr.mxu0 0.0
      %816 = vmatpush1.msra.mxu0 0.0
      %817 = vmatprep.subr.mxu0 0.0
      %818 = vmatpush1.msra.mxu0 0.0
      %819 = vmatprep.subr.mxu0 0.0
      %820 = vmatpush1.msra.mxu0 0.0
      %821 = vmatprep.subr.mxu0 0.0
      %822 = vmatpush1.msra.mxu0 0.0
      %823 = vmatprep.subr.mxu0 0.0
      %824 = vmatpush1.msra.mxu0 0.0
      %825 = vmatprep.subr.mxu0 0.0
      %826 = vmatpush1.msra.mxu0 0.0
      %827 = vmatprep.subr.mxu0 0.0
      %828 = vmatpush1.msra.mxu0 0.0
      %829 = vmatprep.subr.mxu0 0.0
      %830 = vmatpush1.msra.mxu0 0.0
      %831 = vmatprep.subr.mxu0 0.0
      %832 = vmatpush1.msra.mxu0 0.0
      %833 = vmatprep.subr.mxu0 0.0
      %834 = vmatpush1.msra.mxu0 0.0
      %835 = vmatprep.subr.mxu0 0.0
      %836 = vmatpush1.msra.mxu0 0.0
      %837 = vmatprep.mubr.f32.mxu0 0.0
      %838 = vmatmul.mubr.f32.gmra.mrb[0].mxu0 %v264
      %v839 = vpop.f32.mrb[0].mxu0
      %v840 = vadd.f32 0.0, %v839
      %v841 = vpop.f32.mrb[0].mxu0
      %842 = vmatprep.mubr.f32.mxu0 0.0
      %843 = vmatmul.mubr.f32.gmra.mrb[0].mxu0 %v267
      %v844 = vpop.f32.mrb[0].mxu0
      %v845 = vadd.f32 0.0, %v844
      %v846 = vpop.f32.mrb[0].mxu0
      %847 = vmatprep.mubr.f32.mxu0 0.0
      %848 = vmatmul.mubr.f32.gmra.mrb[0].mxu0 %v270
      %v849 = vpop.f32.mrb[0].mxu0
      %v850 = vadd.f32 0.0, %v849
      %v851 = vpop.f32.mrb[0].mxu0
      %852 = vmatprep.mubr.f32.mxu0 0.0
      %853 = vmatmul.mubr.f32.gmra.mrb[0].mxu0 %v273
      %v854 = vpop.f32.mrb[0].mxu0
      %v855 = vadd.f32 0.0, %v854
      %v856 = vpop.f32.mrb[0].mxu0
      %857 = vdwg.mxu0
      %s858 = scalar_lea.vmem %s170, 96
      %859 = vst [vmem:[%s858] sm:$0xff] %v840
      %860 = vst [vmem:[%s858 + $0x8] sm:$0xff] %v845
      %861 = vst [vmem:[%s858 + $0x10] sm:$0xff] %v850
      %862 = vst [vmem:[%s858 + $0x18] sm:$0xff] %v855
      %p863 = scmp.lt.s32.totalorder %s14, 1
      %s864 = scalar_select %p863, %s14, 1
      %s865 = smul.addr %s864, 16
      %s866 = smul.addr %s865, 8
      %s867 = scalar_lea.vmem %s3, %s866
      // Predicated region
      $region33: #{pspool_forward.13} parent=31 // pred_check
        %p868 = pneg %p100
      $region34: #{pspool_forward.13} parent=31 // pred_check_branch
        %870 = sbr.rel (%p868) target = $region36
      $region35: #{pspool_forward.13} parent=31 // pred_region
        _
      $region36: #{pspool_forward.13} parent=31 // pred_fallthru
        _
    $region32: #{pspool_forward.13} parent=5 // pred_fallthru
      _
    %p871 = scmp.le.s32.totalorder 2, %s9
    // Predicated region
    $region37: #{pspool_forward.13} parent=5 // pred_check
      %p872 = pneg %p871
    $region38: #{pspool_forward.13} parent=5 // pred_check_branch
      %874 = sbr.rel (%p872) target = $region40
    $region39: #{pspool_forward.13} parent=5 // pred_region
      %s875 = ssub.s32 %s9, 2
      // Predicated region
      $region41: #{pspool_forward.13} parent=39 // pred_check
        %p876 = pneg %p106
      $region42: #{pspool_forward.13} parent=39 // pred_check_branch
        %878 = sbr.rel (%p876) target = $region44
      $region43: #{pspool_forward.13} parent=39 // pred_region
        %p879 = scmp.lt.s32.totalorder %s15, 1
        %s880 = scalar_select %p879, %s15, 1
        %s881 = smul.addr %s880, 16
        %s882 = smul.addr %s881, 8
        %s883 = scalar_lea.vmem %s3, %s882
      $region44: #{pspool_forward.13} parent=39 // pred_fallthru
        _
    $region40: #{pspool_forward.13} parent=5 // pred_fallthru
      _
  $region6: #{pspool_forward.13} parent=0 // loop_footer
    %s13 = sadd.s32 1, %s9
  $region7: #{pspool_forward.13} parent=0 // loop_footer_branch
    %8 = sbr.rel target = $region3
  $region8: #{pspool_forward.13} parent=0 // loop_exit
    _

// kernel: pspool_forward.11
$region0: #{pspool_forward.11}
  #allocation0 [shape = 'u32[]', space=smem, size = 0x4, offset = 0x4, fixed_abs, tag = 'smem constant byte address 0x4 - core index']
  #allocation1 [shape = 'u32[144,128]{1,0:T(1,128)}', space=vmem, size = 0x12000, scoped, tag = 'internal scratch']
  %s0 = inlined_call_operand.vmem [shape: f32[2,16,16,128], index: 0, kind: input, shape index: {}]
  %s1 = inlined_call_operand.vmem [shape: f32[128,128], index: 1, kind: input, shape index: {}]
  %s2 = inlined_call_operand.vmem [shape: f32[32,16], index: 2, kind: input, shape index: {}]
  %s3 = inlined_call_operand.vmem [shape: f32[2,16,32,128], index: 3, kind: output, shape index: {}]
  %s4 = sld [smem:[#allocation0]]
  $region45: #{pspool_forward.11} parent=0
    _
  %s6 = ssub.s32 1, %s4
  %s7 = scalar_select 0, %s6, %s4
  loop: start=0, step=1, limit=4
  $region2: #{pspool_forward.11} parent=0 // loop_pre_header
    _
  $region3: #{pspool_forward.11} parent=0 // loop_header
    %s9 = sphi 0, %s13
    %p10 = scmp.ge.s32.totalorder %s9, 4
    %s19 = sphi 0, %s21
    %s22 = sphi 0, %s19
    %s23 = sphi 0, %s22
    %s39 = sphi 0, %s23
    %s43 = sphi 0, %s43
    %s45 = sphi 0, %s43
    %s46 = sphi 0, %s45
    %s60 = sphi 0, %s46
    %s64 = sphi 0, %s64
    %s66 = sphi 0, %s64
    %s67 = sphi 0, %s66
    %s81 = sphi 0, %s67
    %s87 = sphi 0, %s89
    %s90 = sphi 0, %s87
    %s91 = sphi 0, %s90
    %s107 = sphi 0, %s91
  $region4: #{pspool_forward.11} parent=0 // loop_header_branch
    %12 = sbr.rel (%p10) target = $region8
  $region5: #{pspool_forward.11} parent=0 // loop_body
    %s14 = ssub.s32 %s9, 1
    %s15 = ssub.s32 %s9, 2
    %s16 = sadd.s32 %s9, 1
    %s17 = ssub.s32 %s9, %s16
    %p18 = scmp.eq.s32.totalorder %s17, 0
    %s20 = sadd.s32 %s19, 1
    %s21 = scalar_select %p18, %s19, %s20
    %p24 = pneg %p18
    %p25 = scmp.eq.s32.totalorder %s9, 1
    %p26 = por %p24, %p25
    %p27 = scmp.ne.s32.totalorder %s19, %s22
    %p28 = scmp.eq.s32.totalorder %s9, 0
    %p29 = por %p27, %p28
    %p30 = scmp.ne.s32.totalorder %s19, %s22
    %p31 = scmp.eq.s32.totalorder %s14, 1
    %p32 = por %p30, %p31
    %p33 = scmp.ne.s32.totalorder %s22, %s23
    %p34 = scmp.eq.s32.totalorder %s14, 0
    %p35 = por %p33, %p34
    %p36 = scmp.ne.s32.totalorder %s22, %s23
    %p37 = scmp.eq.s32.totalorder %s15, 1
    %p38 = por %p36, %p37
    %p40 = scmp.ne.s32.totalorder %s23, %s39
    %p41 = scmp.eq.s32.totalorder %s15, 0
    %p42 = por %p40, %p41
    %s44 = sadd.s32 %s43, 1
    %p47 = scmp.eq.s32.totalorder %s9, 1
    %p48 = scmp.ne.s32.totalorder %s43, %s45
    %p49 = scmp.eq.s32.totalorder %s9, 0
    %p50 = por %p48, %p49
    %p51 = scmp.ne.s32.totalorder %s43, %s45
    %p52 = scmp.eq.s32.totalorder %s14, 1
    %p53 = por %p51, %p52
    %p54 = scmp.ne.s32.totalorder %s45, %s46
    %p55 = scmp.eq.s32.totalorder %s14, 0
    %p56 = por %p54, %p55
    %p57 = scmp.ne.s32.totalorder %s45, %s46
    %p58 = scmp.eq.s32.totalorder %s15, 1
    %p59 = por %p57, %p58
    %p61 = scmp.ne.s32.totalorder %s46, %s60
    %p62 = scmp.eq.s32.totalorder %s15, 0
    %p63 = por %p61, %p62
    %s65 = sadd.s32 %s64, 1
    %p68 = scmp.eq.s32.totalorder %s9, 1
    %p69 = scmp.ne.s32.totalorder %s64, %s66
    %p70 = scmp.eq.s32.totalorder %s9, 0
    %p71 = por %p69, %p70
    %p72 = scmp.ne.s32.totalorder %s64, %s66
    %p73 = scmp.eq.s32.totalorder %s14, 1
    %p74 = por %p72, %p73
    %p75 = scmp.ne.s32.totalorder %s66, %s67
    %p76 = scmp.eq.s32.totalorder %s14, 0
    %p77 = por %p75, %p76
    %p78 = scmp.ne.s32.totalorder %s66, %s67
    %p79 = scmp.eq.s32.totalorder %s15, 1
    %p80 = por %p78, %p79
    %p82 = scmp.ne.s32.totalorder %s67, %s81
    %p83 = scmp.eq.s32.totalorder %s15, 0
    %p84 = por %p82, %p83
    %s85 = ssub.s32 %s9, %s16
    %p86 = scmp.eq.s32.totalorder %s85, 0
    %s88 = sadd.s32 %s87, 1
    %s89 = scalar_select %p86, %s87, %s88
    %p92 = pneg %p86
    %p93 = scmp.eq.s32.totalorder %s9, 1
    %p94 = por %p92, %p93
    %p95 = scmp.ne.s32.totalorder %s87, %s90
    %p96 = scmp.eq.s32.totalorder %s9, 0
    %p97 = por %p95, %p96
    %p98 = scmp.ne.s32.totalorder %s87, %s90
    %p99 = scmp.eq.s32.totalorder %s14, 1
    %p100 = por %p98, %p99
    %p101 = scmp.ne.s32.totalorder %s90, %s91
    %p102 = scmp.eq.s32.totalorder %s14, 0
    %p103 = por %p101, %p102
    %p104 = scmp.ne.s32.totalorder %s90, %s91
    %p105 = scmp.eq.s32.totalorder %s15, 1
    %p106 = por %p104, %p105
    %p108 = scmp.ne.s32.totalorder %s91, %s107
    %p109 = scmp.eq.s32.totalorder %s15, 0
    %p110 = por %p108, %p109
    %p111 = scmp.le.s32.totalorder 1, %s9
    %p112 = scmp.lt.s32.totalorder %s9, 3
    %p113 = pnand %p111, %p112
    %p114 = pneg %p113
    // Predicated region
    $region9: #{pspool_forward.11} parent=5 // pred_check
      _
    $region10: #{pspool_forward.11} parent=5 // pred_check_branch
      %116 = sbr.rel (%p113) target = $region12
    $region11: #{pspool_forward.11} parent=5 // pred_region
      %s117 = ssub.s32 %s9, 1
      // Predicated region
      $region13: #{pspool_forward.11} parent=11 // pred_check
        %p118 = pneg %p56
      $region14: #{pspool_forward.11} parent=11 // pred_check_branch
        %120 = sbr.rel (%p118) target = $region16
      $region15: #{pspool_forward.11} parent=11 // pred_region
        _
      $region16: #{pspool_forward.11} parent=11 // pred_fallthru
        _
      // Predicated region
      $region17: #{pspool_forward.11} parent=11 // pred_check
        %p121 = pneg %p77
      $region18: #{pspool_forward.11} parent=11 // pred_check_branch
        %123 = sbr.rel (%p121) target = $region20
      $region19: #{pspool_forward.11} parent=11 // pred_region
        _
      $region20: #{pspool_forward.11} parent=11 // pred_fallthru
        _
    $region12: #{pspool_forward.11} parent=5 // pred_fallthru
      _
    %p124 = scmp.lt.s32.totalorder %s9, 2
    // Predicated region
    $region21: #{pspool_forward.11} parent=5 // pred_check
      %p125 = pneg %p124
    $region22: #{pspool_forward.11} parent=5 // pred_check_branch
      %127 = sbr.rel (%p125) target = $region24
    $region23: #{pspool_forward.11} parent=5 // pred_region
      // Predicated region
      $region25: #{pspool_forward.11} parent=23 // pred_check
        %p128 = pneg %p29
      $region26: #{pspool_forward.11} parent=23 // pred_check_branch
        %130 = sbr.rel (%p128) target = $region28
      $region27: #{pspool_forward.11} parent=23 // pred_region
        %p131 = scmp.lt.s32.totalorder %s9, 1
        %s132 = scalar_select %p131, %s9, 1
        %s133 = smul.addr %s132, 32
        %s134 = smul.addr %s133, 8
        %s135 = scalar_lea.vmem %s0, %s134
      $region28: #{pspool_forward.11} parent=23 // pred_fallthru
        _
    $region24: #{pspool_forward.11} parent=5 // pred_fallthru
      _
    %p136 = scmp.le.s32.totalorder 1, %s9
    %p137 = scmp.lt.s32.totalorder %s9, 3
    %p138 = pnand %p136, %p137
    %p139 = pneg %p138
    // Predicated region
    $region29: #{pspool_forward.11} parent=5 // pred_check
      _
    $region30: #{pspool_forward.11} parent=5 // pred_check_branch
      %141 = sbr.rel (%p138) target = $region32
    $region31: #{pspool_forward.11} parent=5 // pred_region
      %s142 = ssub.s32 %s9, 1
      %p143 = scmp.lt.s32.totalorder %s14, 1
      %s144 = scalar_select %p143, %s14, 1
      %s145 = smul.addr %s144, 32
      %s146 = smul.addr %s145, 8
      %s147 = scalar_lea.vmem %s0, %s146
      %p148 = pneg %p35
      %p149 = pneg %p32
      %p150 = pneg %p56
      %p151 = pneg %p53
      %p152 = pneg %p77
      %p153 = pneg %p74
      %p154 = pneg %p103
      %p155 = pneg %p100
      %p156 = scmp.lt.s32.totalorder %s14, 1
      %s157 = scalar_select %p156, %s14, 1
      %s158 = smul.addr %s157, 64
      %s159 = smul.addr %s158, 8
      %s160 = scalar_lea.vmem %s3, %s159
      %p161 = scmp.lt.s32.totalorder %s14, 1
      %s162 = scalar_select %p161, %s14, 1
      %s163 = smul.addr %s162, 32
      %s164 = smul.addr %s163, 8
      %s165 = scalar_lea.vmem %s0, %s164
      %p166 = scmp.lt.s32.totalorder %s14, 1
      %s167 = scalar_select %p166, %s14, 1
      %s168 = smul.addr %s167, 64
      %s169 = smul.addr %s168, 8
      %s170 = scalar_lea.vmem %s3, %s169
      %v171 = vld [vmem:[%s1] sm:$0xff]
      %v172 = vld [vmem:[%s1 + $0x8] sm:$0xff]
      %v173 = vld [vmem:[%s1 + $0x10] sm:$0xff]
      %v174 = vld [vmem:[%s1 + $0x18] sm:$0xff]
      %v175 = vld [vmem:[%s1 + $0x20] sm:$0xff]
      %v176 = vld [vmem:[%s1 + $0x28] sm:$0xff]
      %v177 = vld [vmem:[%s1 + $0x30] sm:$0xff]
      %v178 = vld [vmem:[%s1 + $0x38] sm:$0xff]
      %v179 = vld [vmem:[%s1 + $0x40] sm:$0xff]
      %v180 = vld [vmem:[%s1 + $0x48] sm:$0xff]
      %v181 = vld [vmem:[%s1 + $0x50] sm:$0xff]
      %v182 = vld [vmem:[%s1 + $0x58] sm:$0xff]
      %v183 = vld [vmem:[%s1 + $0x60] sm:$0xff]
      %v184 = vld [vmem:[%s1 + $0x68] sm:$0xff]
      %v185 = vld [vmem:[%s1 + $0x70] sm:$0xff]
      %v186 = vld [vmem:[%s1 + $0x78] sm:$0xff]
      %v187 = vld [vmem:[%s2] sm:$0xff]
      %v188 = vld [vmem:[%s2 + $0x8] sm:$0xff]
      %v189 = vld [vmem:[%s2 + $0x10] sm:$0xff]
      %v190 = vld [vmem:[%s2 + $0x18] sm:$0xff]
      %v191 = vld [vmem:[%s165] sm:$0xff]
      %v192 = vld [vmem:[%s165 + $0x8] sm:$0xff]
      %193 = vmatprep.subr.mxu0 0.0
      %194 = vmatpush1.msra.mxu0 %v171
      %195 = vmatprep.subr.mxu0 0.0
      %196 = vmatpush1.msra.mxu0 %v172
      %197 = vmatprep.subr.mxu0 0.0
      %198 = vmatpush1.msra.mxu0 %v173
      %199 = vmatprep.subr.mxu0 0.0
      %200 = vmatpush1.msra.mxu0 %v174
      %201 = vmatprep.subr.mxu0 0.0
      %202 = vmatpush1.msra.mxu0 %v175
      %203 = vmatprep.subr.mxu0 0.0
      %204 = vmatpush1.msra.mxu0 %v176
      %205 = vmatprep.subr.mxu0 0.0
      %206 = vmatpush1.msra.mxu0 %v177
      %207 = vmatprep.subr.mxu0 0.0
      %208 = vmatpush1.msra.mxu0 %v178
      %209 = vmatprep.subr.mxu0 0.0
      %210 = vmatpush1.msra.mxu0 %v179
      %211 = vmatprep.subr.mxu0 0.0
      %212 = vmatpush1.msra.mxu0 %v180
      %213 = vmatprep.subr.mxu0 0.0
      %214 = vmatpush1.msra.mxu0 %v181
      %215 = vmatprep.subr.mxu0 0.0
      %216 = vmatpush1.msra.mxu0 %v182
      %217 = vmatprep.subr.mxu0 0.0
      %218 = vmatpush1.msra.mxu0 %v183
      %219 = vmatprep.subr.mxu0 0.0
      %220 = vmatpush1.msra.mxu0 %v184
      %221 = vmatprep.subr.mxu0 0.0
      %222 = vmatpush1.msra.mxu0 %v185
      %223 = vmatprep.subr.mxu0 0.0
      %224 = vmatpush1.msra.mxu0 %v186
      %225 = vmatprep.subr.mxu0 0.0
      %226 = vmatpush1.msra.mxu0 0.0
      %227 = vmatprep.subr.mxu0 0.0
      %228 = vmatpush1.msra.mxu0 0.0
      %229 = vmatprep.subr.mxu0 0.0
      %230 = vmatpush1.msra.mxu0 0.0
      %231 = vmatprep.subr.mxu0 0.0
      %232 = vmatpush1.msra.mxu0 0.0
      %233 = vmatprep.subr.mxu0 0.0
      %234 = vmatpush1.msra.mxu0 0.0
      %235 = vmatprep.subr.mxu0 0.0
      %236 = vmatpush1.msra.mxu0 0.0
      %237 = vmatprep.subr.mxu0 0.0
      %238 = vmatpush1.msra.mxu0 0.0
      %239 = vmatprep.subr.mxu0 0.0
      %240 = vmatpush1.msra.mxu0 0.0
      %241 = vmatprep.subr.mxu0 0.0
      %242 = vmatpush1.msra.mxu0 0.0
      %243 = vmatprep.subr.mxu0 0.0
      %244 = vmatpush1.msra.mxu0 0.0
      %245 = vmatprep.subr.mxu0 0.0
      %246 = vmatpush1.msra.mxu0 0.0
      %247 = vmatprep.subr.mxu0 0.0
      %248 = vmatpush1.msra.mxu0 0.0
      %249 = vmatprep.subr.mxu0 0.0
      %250 = vmatpush1.msra.mxu0 0.0
      %251 = vmatprep.subr.mxu0 0.0
      %252 = vmatpush1.msra.mxu0 0.0
      %253 = vmatprep.subr.mxu0 0.0
      %254 = vmatpush1.msra.mxu0 0.0
      %255 = vmatprep.subr.mxu0 0.0
      %256 = vmatpush1.msra.mxu0 0.0
      %257 = vmatprep.mubr.f32.mxu0 0.0
      %258 = vmatmul.mubr.f32.gmra.mrb[0].mxu0 %v191
      %v259 = vpop.f32.mrb[0].mxu0
      %v260 = vadd.f32 0.0, %v259
      %v261 = vpop.f32.mrb[0].mxu0
      %262 = vmatprep.mubr.f32.mxu0 0.0
      %263 = vmatmul.mubr.f32.gmra.mrb[0].mxu0 %v192
      %v264 = vpop.f32.mrb[0].mxu0
      %v265 = vadd.f32 0.0, %v264
      %v266 = vpop.f32.mrb[0].mxu0
      %267 = vdwg.mxu0
      %vm268 = vcmask 130048
      %v270 = vsel %vm268, %v187, 0
      %v273 = vsel %vm268, %v188, 0
      %v276 = vsel %vm268, %v189, 0
      %v279 = vsel %vm268, %v190, 0
      %281 = vmatprep.subr.mxu0 0.0
      %282 = vmatpush1.msra.mxu0 %v260
      %283 = vmatprep.subr.mxu0 0.0
      %284 = vmatpush1.msra.mxu0 %v265
      %285 = vmatprep.subr.mxu0 0.0
      %286 = vmatpush1.msra.mxu0 0.0
      %287 = vmatprep.subr.mxu0 0.0
      %288 = vmatpush1.msra.mxu0 0.0
      %289 = vmatprep.subr.mxu0 0.0
      %290 = vmatpush1.msra.mxu0 0.0
      %291 = vmatprep.subr.mxu0 0.0
      %292 = vmatpush1.msra.mxu0 0.0
      %293 = vmatprep.subr.mxu0 0.0
      %294 = vmatpush1.msra.mxu0 0.0
      %295 = vmatprep.subr.mxu0 0.0
      %296 = vmatpush1.msra.mxu0 0.0
      %297 = vmatprep.subr.mxu0 0.0
      %298 = vmatpush1.msra.mxu0 0.0
      %299 = vmatprep.subr.mxu0 0.0
      %300 = vmatpush1.msra.mxu0 0.0
      %301 = vmatprep.subr.mxu0 0.0
      %302 = vmatpush1.msra.mxu0 0.0
      %303 = vmatprep.subr.mxu0 0.0
      %304 = vmatpush1.msra.mxu0 0.0
      %305 = vmatprep.subr.mxu0 0.0
      %306 = vmatpush1.msra.mxu0 0.0
      %307 = vmatprep.subr.mxu0 0.0
      %308 = vmatpush1.msra.mxu0 0.0
      %309 = vmatprep.subr.mxu0 0.0
      %310 = vmatpush1.msra.mxu0 0.0
      %311 = vmatprep.subr.mxu0 0.0
      %312 = vmatpush1.msra.mxu0 0.0
      %313 = vmatprep.subr.mxu0 0.0
      %314 = vmatpush1.msra.mxu0 0.0
      %315 = vmatprep.subr.mxu0 0.0
      %316 = vmatpush1.msra.mxu0 0.0
      %317 = vmatprep.subr.mxu0 0.0
      %318 = vmatpush1.msra.mxu0 0.0
      %319 = vmatprep.subr.mxu0 0.0
      %320 = vmatpush1.msra.mxu0 0.0
      %321 = vmatprep.subr.mxu0 0.0
      %322 = vmatpush1.msra.mxu0 0.0
      %323 = vmatprep.subr.mxu0 0.0
      %324 = vmatpush1.msra.mxu0 0.0
      %325 = vmatprep.subr.mxu0 0.0
      %326 = vmatpush1.msra.mxu0 0.0
      %327 = vmatprep.subr.mxu0 0.0
      %328 = vmatpush1.msra.mxu0 0.0
      %329 = vmatprep.subr.mxu0 0.0
      %330 = vmatpush1.msra.mxu0 0.0
      %331 = vmatprep.subr.mxu0 0.0
      %332 = vmatpush1.msra.mxu0 0.0
      %333 = vmatprep.subr.mxu0 0.0
      %334 = vmatpush1.msra.mxu0 0.0
      %335 = vmatprep.subr.mxu0 0.0
      %336 = vmatpush1.msra.mxu0 0.0
      %337 = vmatprep.subr.mxu0 0.0
      %338 = vmatpush1.msra.mxu0 0.0
      %339 = vmatprep.subr.mxu0 0.0
      %340 = vmatpush1.msra.mxu0 0.0
      %341 = vmatprep.subr.mxu0 0.0
      %342 = vmatpush1.msra.mxu0 0.0
      %343 = vmatprep.subr.mxu0 0.0
      %344 = vmatpush1.msra.mxu0 0.0
      %345 = vmatprep.mubr.f32.mxu0 0.0
      %346 = vmatmul.mubr.f32.gmra.mrb[0].mxu0 %v270
      %v347 = vpop.f32.mrb[0].mxu0
      %v348 = vadd.f32 0.0, %v347
      %v349 = vpop.f32.mrb[0].mxu0
      %350 = vmatprep.mubr.f32.mxu0 0.0
      %351 = vmatmul.mubr.f32.gmra.mrb[0].mxu0 %v273
      %v352 = vpop.f32.mrb[0].mxu0
      %v353 = vadd.f32 0.0, %v352
      %v354 = vpop.f32.mrb[0].mxu0
      %355 = vmatprep.mubr.f32.mxu0 0.0
      %356 = vmatmul.mubr.f32.gmra.mrb[0].mxu0 %v276
      %v357 = vpop.f32.mrb[0].mxu0
      %v358 = vadd.f32 0.0, %v357
      %v359 = vpop.f32.mrb[0].mxu0
      %360 = vmatprep.mubr.f32.mxu0 0.0
      %361 = vmatmul.mubr.f32.gmra.mrb[0].mxu0 %v279
      %v362 = vpop.f32.mrb[0].mxu0
      %v363 = vadd.f32 0.0, %v362
      %v364 = vpop.f32.mrb[0].mxu0
      %365 = vdwg.mxu0
      %366 = vst [vmem:[%s170] sm:$0xff] %v348
      %367 = vst [vmem:[%s170 + $0x8] sm:$0xff] %v353
      %368 = vst [vmem:[%s170 + $0x10] sm:$0xff] %v358
      %369 = vst [vmem:[%s170 + $0x18] sm:$0xff] %v363
      %s370 = scalar_lea.vmem %s165, 16
      %v371 = vld [vmem:[%s370] sm:$0xff]
      %v372 = vld [vmem:[%s370 + $0x8] sm:$0xff]
      %373 = vmatprep.subr.mxu0 0.0
      %374 = vmatpush1.msra.mxu0 %v171
      %375 = vmatprep.subr.mxu0 0.0
      %376 = vmatpush1.msra.mxu0 %v172
      %377 = vmatprep.subr.mxu0 0.0
      %378 = vmatpush1.msra.mxu0 %v173
      %379 = vmatprep.subr.mxu0 0.0
      %380 = vmatpush1.msra.mxu0 %v174
      %381 = vmatprep.subr.mxu0 0.0
      %382 = vmatpush1.msra.mxu0 %v175
      %383 = vmatprep.subr.mxu0 0.0
      %384 = vmatpush1.msra.mxu0 %v176
      %385 = vmatprep.subr.mxu0 0.0
      %386 = vmatpush1.msra.mxu0 %v177
      %387 = vmatprep.subr.mxu0 0.0
      %388 = vmatpush1.msra.mxu0 %v178
      %389 = vmatprep.subr.mxu0 0.0
      %390 = vmatpush1.msra.mxu0 %v179
      %391 = vmatprep.subr.mxu0 0.0
      %392 = vmatpush1.msra.mxu0 %v180
      %393 = vmatprep.subr.mxu0 0.0
      %394 = vmatpush1.msra.mxu0 %v181
      %395 = vmatprep.subr.mxu0 0.0
      %396 = vmatpush1.msra.mxu0 %v182
      %397 = vmatprep.subr.mxu0 0.0
      %398 = vmatpush1.msra.mxu0 %v183
      %399 = vmatprep.subr.mxu0 0.0
      %400 = vmatpush1.msra.mxu0 %v184
      %401 = vmatprep.subr.mxu0 0.0
      %402 = vmatpush1.msra.mxu0 %v185
      %403 = vmatprep.subr.mxu0 0.0
      %404 = vmatpush1.msra.mxu0 %v186
      %405 = vmatprep.subr.mxu0 0.0
      %406 = vmatpush1.msra.mxu0 0.0
      %407 = vmatprep.subr.mxu0 0.0
      %408 = vmatpush1.msra.mxu0 0.0
      %409 = vmatprep.subr.mxu0 0.0
      %410 = vmatpush1.msra.mxu0 0.0
      %411 = vmatprep.subr.mxu0 0.0
      %412 = vmatpush1.msra.mxu0 0.0
      %413 = vmatprep.subr.mxu0 0.0
      %414 = vmatpush1.msra.mxu0 0.0
      %415 = vmatprep.subr.mxu0 0.0
      %416 = vmatpush1.msra.mxu0 0.0
      %417 = vmatprep.subr.mxu0 0.0
      %418 = vmatpush1.msra.mxu0 0.0
      %419 = vmatprep.subr.mxu0 0.0
      %420 = vmatpush1.msra.mxu0 0.0
      %421 = vmatprep.subr.mxu0 0.0
      %422 = vmatpush1.msra.mxu0 0.0
      %423 = vmatprep.subr.mxu0 0.0
      %424 = vmatpush1.msra.mxu0 0.0
      %425 = vmatprep.subr.mxu0 0.0
      %426 = vmatpush1.msra.mxu0 0.0
      %427 = vmatprep.subr.mxu0 0.0
      %428 = vmatpush1.msra.mxu0 0.0
      %429 = vmatprep.subr.mxu0 0.0
      %430 = vmatpush1.msra.mxu0 0.0
      %431 = vmatprep.subr.mxu0 0.0
      %432 = vmatpush1.msra.mxu0 0.0
      %433 = vmatprep.subr.mxu0 0.0
      %434 = vmatpush1.msra.mxu0 0.0
      %435 = vmatprep.subr.mxu0 0.0
      %436 = vmatpush1.msra.mxu0 0.0
      %437 = vmatprep.mubr.f32.mxu0 0.0
      %438 = vmatmul.mubr.f32.gmra.mrb[0].mxu0 %v371
      %v439 = vpop.f32.mrb[0].mxu0
      %v440 = vadd.f32 0.0, %v439
      %v441 = vpop.f32.mrb[0].mxu0
      %442 = vmatprep.mubr.f32.mxu0 0.0
      %443 = vmatmul.mubr.f32.gmra.mrb[0].mxu0 %v372
      %v444 = vpop.f32.mrb[0].mxu0
      %v445 = vadd.f32 0.0, %v444
      %v446 = vpop.f32.mrb[0].mxu0
      %447 = vdwg.mxu0
      %448 = vmatprep.subr.mxu0 0.0
      %449 = vmatpush1.msra.mxu0 %v440
      %450 = vmatprep.subr.mxu0 0.0
      %451 = vmatpush1.msra.mxu0 %v445
      %452 = vmatprep.subr.mxu0 0.0
      %453 = vmatpush1.msra.mxu0 0.0
      %454 = vmatprep.subr.mxu0 0.0
      %455 = vmatpush1.msra.mxu0 0.0
      %456 = vmatprep.subr.mxu0 0.0
      %457 = vmatpush1.msra.mxu0 0.0
      %458 = vmatprep.subr.mxu0 0.0
      %459 = vmatpush1.msra.mxu0 0.0
      %460 = vmatprep.subr.mxu0 0.0
      %461 = vmatpush1.msra.mxu0 0.0
      %462 = vmatprep.subr.mxu0 0.0
      %463 = vmatpush1.msra.mxu0 0.0
      %464 = vmatprep.subr.mxu0 0.0
      %465 = vmatpush1.msra.mxu0 0.0
      %466 = vmatprep.subr.mxu0 0.0
      %467 = vmatpush1.msra.mxu0 0.0
      %468 = vmatprep.subr.mxu0 0.0
      %469 = vmatpush1.msra.mxu0 0.0
      %470 = vmatprep.subr.mxu0 0.0
      %471 = vmatpush1.msra.mxu0 0.0
      %472 = vmatprep.subr.mxu0 0.0
      %473 = vmatpush1.msra.mxu0 0.0
      %474 = vmatprep.subr.mxu0 0.0
      %475 = vmatpush1.msra.mxu0 0.0
      %476 = vmatprep.subr.mxu0 0.0
      %477 = vmatpush1.msra.mxu0 0.0
      %478 = vmatprep.subr.mxu0 0.0
      %479 = vmatpush1.msra.mxu0 0.0
      %480 = vmatprep.subr.mxu0 0.0
      %481 = vmatpush1.msra.mxu0 0.0
      %482 = vmatprep.subr.mxu0 0.0
      %483 = vmatpush1.msra.mxu0 0.0
      %484 = vmatprep.subr.mxu0 0.0
      %485 = vmatpush1.msra.mxu0 0.0
      %486 = vmatprep.subr.mxu0 0.0
      %487 = vmatpush1.msra.mxu0 0.0
      %488 = vmatprep.subr.mxu0 0.0
      %489 = vmatpush1.msra.mxu0 0.0
      %490 = vmatprep.subr.mxu0 0.0
      %491 = vmatpush1.msra.mxu0 0.0
      %492 = vmatprep.subr.mxu0 0.0
      %493 = vmatpush1.msra.mxu0 0.0
      %494 = vmatprep.subr.mxu0 0.0
      %495 = vmatpush1.msra.mxu0 0.0
      %496 = vmatprep.subr.mxu0 0.0
      %497 = vmatpush1.msra.mxu0 0.0
      %498 = vmatprep.subr.mxu0 0.0
      %499 = vmatpush1.msra.mxu0 0.0
      %500 = vmatprep.subr.mxu0 0.0
      %501 = vmatpush1.msra.mxu0 0.0
      %502 = vmatprep.subr.mxu0 0.0
      %503 = vmatpush1.msra.mxu0 0.0
      %504 = vmatprep.subr.mxu0 0.0
      %505 = vmatpush1.msra.mxu0 0.0
      %506 = vmatprep.subr.mxu0 0.0
      %507 = vmatpush1.msra.mxu0 0.0
      %508 = vmatprep.subr.mxu0 0.0
      %509 = vmatpush1.msra.mxu0 0.0
      %510 = vmatprep.subr.mxu0 0.0
      %511 = vmatpush1.msra.mxu0 0.0
      %512 = vmatprep.mubr.f32.mxu0 0.0
      %513 = vmatmul.mubr.f32.gmra.mrb[0].mxu0 %v270
      %v514 = vpop.f32.mrb[0].mxu0
      %v515 = vadd.f32 0.0, %v514
      %v516 = vpop.f32.mrb[0].mxu0
      %517 = vmatprep.mubr.f32.mxu0 0.0
      %518 = vmatmul.mubr.f32.gmra.mrb[0].mxu0 %v273
      %v519 = vpop.f32.mrb[0].mxu0
      %v520 = vadd.f32 0.0, %v519
      %v521 = vpop.f32.mrb[0].mxu0
      %522 = vmatprep.mubr.f32.mxu0 0.0
      %523 = vmatmul.mubr.f32.gmra.mrb[0].mxu0 %v276
      %v524 = vpop.f32.mrb[0].mxu0
      %v525 = vadd.f32 0.0, %v524
      %v526 = vpop.f32.mrb[0].mxu0
      %527 = vmatprep.mubr.f32.mxu0 0.0
      %528 = vmatmul.mubr.f32.gmra.mrb[0].mxu0 %v279
      %v529 = vpop.f32.mrb[0].mxu0
      %v530 = vadd.f32 0.0, %v529
      %v531 = vpop.f32.mrb[0].mxu0
      %532 = vdwg.mxu0
      %s533 = scalar_lea.vmem %s170, 32
      %534 = vst [vmem:[%s533] sm:$0xff] %v515
      %535 = vst [vmem:[%s533 + $0x8] sm:$0xff] %v520
      %536 = vst [vmem:[%s533 + $0x10] sm:$0xff] %v525
      %537 = vst [vmem:[%s533 + $0x18] sm:$0xff] %v530
      %s538 = scalar_lea.vmem %s165, 32
      %v539 = vld [vmem:[%s538] sm:$0xff]
      %v540 = vld [vmem:[%s538 + $0x8] sm:$0xff]
      %541 = vmatprep.subr.mxu0 0.0
      %542 = vmatpush1.msra.mxu0 %v171
      %543 = vmatprep.subr.mxu0 0.0
      %544 = vmatpush1.msra.mxu0 %v172
      %545 = vmatprep.subr.mxu0 0.0
      %546 = vmatpush1.msra.mxu0 %v173
      %547 = vmatprep.subr.mxu0 0.0
      %548 = vmatpush1.msra.mxu0 %v174
      %549 = vmatprep.subr.mxu0 0.0
      %550 = vmatpush1.msra.mxu0 %v175
      %551 = vmatprep.subr.mxu0 0.0
      %552 = vmatpush1.msra.mxu0 %v176
      %553 = vmatprep.subr.mxu0 0.0
      %554 = vmatpush1.msra.mxu0 %v177
      %555 = vmatprep.subr.mxu0 0.0
      %556 = vmatpush1.msra.mxu0 %v178
      %557 = vmatprep.subr.mxu0 0.0
      %558 = vmatpush1.msra.mxu0 %v179
      %559 = vmatprep.subr.mxu0 0.0
      %560 = vmatpush1.msra.mxu0 %v180
      %561 = vmatprep.subr.mxu0 0.0
      %562 = vmatpush1.msra.mxu0 %v181
      %563 = vmatprep.subr.mxu0 0.0
      %564 = vmatpush1.msra.mxu0 %v182
      %565 = vmatprep.subr.mxu0 0.0
      %566 = vmatpush1.msra.mxu0 %v183
      %567 = vmatprep.subr.mxu0 0.0
      %568 = vmatpush1.msra.mxu0 %v184
      %569 = vmatprep.subr.mxu0 0.0
      %570 = vmatpush1.msra.mxu0 %v185
      %571 = vmatprep.subr.mxu0 0.0
      %572 = vmatpush1.msra.mxu0 %v186
      %573 = vmatprep.subr.mxu0 0.0
      %574 = vmatpush1.msra.mxu0 0.0
      %575 = vmatprep.subr.mxu0 0.0
      %576 = vmatpush1.msra.mxu0 0.0
      %577 = vmatprep.subr.mxu0 0.0
      %578 = vmatpush1.msra.mxu0 0.0
      %579 = vmatprep.subr.mxu0 0.0
      %580 = vmatpush1.msra.mxu0 0.0
      %581 = vmatprep.subr.mxu0 0.0
      %582 = vmatpush1.msra.mxu0 0.0
      %583 = vmatprep.subr.mxu0 0.0
      %584 = vmatpush1.msra.mxu0 0.0
      %585 = vmatprep.subr.mxu0 0.0
      %586 = vmatpush1.msra.mxu0 0.0
      %587 = vmatprep.subr.mxu0 0.0
      %588 = vmatpush1.msra.mxu0 0.0
      %589 = vmatprep.subr.mxu0 0.0
      %590 = vmatpush1.msra.mxu0 0.0
      %591 = vmatprep.subr.mxu0 0.0
      %592 = vmatpush1.msra.mxu0 0.0
      %593 = vmatprep.subr.mxu0 0.0
      %594 = vmatpush1.msra.mxu0 0.0
      %595 = vmatprep.subr.mxu0 0.0
      %596 = vmatpush1.msra.mxu0 0.0
      %597 = vmatprep.subr.mxu0 0.0
      %598 = vmatpush1.msra.mxu0 0.0
      %599 = vmatprep.subr.mxu0 0.0
      %600 = vmatpush1.msra.mxu0 0.0
      %601 = vmatprep.subr.mxu0 0.0
      %602 = vmatpush1.msra.mxu0 0.0
      %603 = vmatprep.subr.mxu0 0.0
      %604 = vmatpush1.msra.mxu0 0.0
      %605 = vmatprep.mubr.f32.mxu0 0.0
      %606 = vmatmul.mubr.f32.gmra.mrb[0].mxu0 %v539
      %v607 = vpop.f32.mrb[0].mxu0
      %v608 = vadd.f32 0.0, %v607
      %v609 = vpop.f32.mrb[0].mxu0
      %610 = vmatprep.mubr.f32.mxu0 0.0
      %611 = vmatmul.mubr.f32.gmra.mrb[0].mxu0 %v540
      %v612 = vpop.f32.mrb[0].mxu0
      %v613 = vadd.f32 0.0, %v612
      %v614 = vpop.f32.mrb[0].mxu0
      %615 = vdwg.mxu0
      %616 = vmatprep.subr.mxu0 0.0
      %617 = vmatpush1.msra.mxu0 %v608
      %618 = vmatprep.subr.mxu0 0.0
      %619 = vmatpush1.msra.mxu0 %v613
      %620 = vmatprep.subr.mxu0 0.0
      %621 = vmatpush1.msra.mxu0 0.0
      %622 = vmatprep.subr.mxu0 0.0
      %623 = vmatpush1.msra.mxu0 0.0
      %624 = vmatprep.subr.mxu0 0.0
      %625 = vmatpush1.msra.mxu0 0.0
      %626 = vmatprep.subr.mxu0 0.0
      %627 = vmatpush1.msra.mxu0 0.0
      %628 = vmatprep.subr.mxu0 0.0
      %629 = vmatpush1.msra.mxu0 0.0
      %630 = vmatprep.subr.mxu0 0.0
      %631 = vmatpush1.msra.mxu0 0.0
      %632 = vmatprep.subr.mxu0 0.0
      %633 = vmatpush1.msra.mxu0 0.0
      %634 = vmatprep.subr.mxu0 0.0
      %635 = vmatpush1.msra.mxu0 0.0
      %636 = vmatprep.subr.mxu0 0.0
      %637 = vmatpush1.msra.mxu0 0.0
      %638 = vmatprep.subr.mxu0 0.0
      %639 = vmatpush1.msra.mxu0 0.0
      %640 = vmatprep.subr.mxu0 0.0
      %641 = vmatpush1.msra.mxu0 0.0
      %642 = vmatprep.subr.mxu0 0.0
      %643 = vmatpush1.msra.mxu0 0.0
      %644 = vmatprep.subr.mxu0 0.0
      %645 = vmatpush1.msra.mxu0 0.0
      %646 = vmatprep.subr.mxu0 0.0
      %647 = vmatpush1.msra.mxu0 0.0
      %648 = vmatprep.subr.mxu0 0.0
      %649 = vmatpush1.msra.mxu0 0.0
      %650 = vmatprep.subr.mxu0 0.0
      %651 = vmatpush1.msra.mxu0 0.0
      %652 = vmatprep.subr.mxu0 0.0
      %653 = vmatpush1.msra.mxu0 0.0
      %654 = vmatprep.subr.mxu0 0.0
      %655 = vmatpush1.msra.mxu0 0.0
      %656 = vmatprep.subr.mxu0 0.0
      %657 = vmatpush1.msra.mxu0 0.0
      %658 = vmatprep.subr.mxu0 0.0
      %659 = vmatpush1.msra.mxu0 0.0
      %660 = vmatprep.subr.mxu0 0.0
      %661 = vmatpush1.msra.mxu0 0.0
      %662 = vmatprep.subr.mxu0 0.0
      %663 = vmatpush1.msra.mxu0 0.0
      %664 = vmatprep.subr.mxu0 0.0
      %665 = vmatpush1.msra.mxu0 0.0
      %666 = vmatprep.subr.mxu0 0.0
      %667 = vmatpush1.msra.mxu0 0.0
      %668 = vmatprep.subr.mxu0 0.0
      %669 = vmatpush1.msra.mxu0 0.0
      %670 = vmatprep.subr.mxu0 0.0
      %671 = vmatpush1.msra.mxu0 0.0
      %672 = vmatprep.subr.mxu0 0.0
      %673 = vmatpush1.msra.mxu0 0.0
      %674 = vmatprep.subr.mxu0 0.0
      %675 = vmatpush1.msra.mxu0 0.0
      %676 = vmatprep.subr.mxu0 0.0
      %677 = vmatpush1.msra.mxu0 0.0
      %678 = vmatprep.subr.mxu0 0.0
      %679 = vmatpush1.msra.mxu0 0.0
      %680 = vmatprep.mubr.f32.mxu0 0.0
      %681 = vmatmul.mubr.f32.gmra.mrb[0].mxu0 %v270
      %v682 = vpop.f32.mrb[0].mxu0
      %v683 = vadd.f32 0.0, %v682
      %v684 = vpop.f32.mrb[0].mxu0
      %685 = vmatprep.mubr.f32.mxu0 0.0
      %686 = vmatmul.mubr.f32.gmra.mrb[0].mxu0 %v273
      %v687 = vpop.f32.mrb[0].mxu0
      %v688 = vadd.f32 0.0, %v687
      %v689 = vpop.f32.mrb[0].mxu0
      %690 = vmatprep.mubr.f32.mxu0 0.0
      %691 = vmatmul.mubr.f32.gmra.mrb[0].mxu0 %v276
      %v692 = vpop.f32.mrb[0].mxu0
      %v693 = vadd.f32 0.0, %v692
      %v694 = vpop.f32.mrb[0].mxu0
      %695 = vmatprep.mubr.f32.mxu0 0.0
      %696 = vmatmul.mubr.f32.gmra.mrb[0].mxu0 %v279
      %v697 = vpop.f32.mrb[0].mxu0
      %v698 = vadd.f32 0.0, %v697
      %v699 = vpop.f32.mrb[0].mxu0
      %700 = vdwg.mxu0
      %s701 = scalar_lea.vmem %s170, 64
      %702 = vst [vmem:[%s701] sm:$0xff] %v683
      %703 = vst [vmem:[%s701 + $0x8] sm:$0xff] %v688
      %704 = vst [vmem:[%s701 + $0x10] sm:$0xff] %v693
      %705 = vst [vmem:[%s701 + $0x18] sm:$0xff] %v698
      %s706 = scalar_lea.vmem %s165, 48
      %v707 = vld [vmem:[%s706] sm:$0xff]
      %v708 = vld [vmem:[%s706 + $0x8] sm:$0xff]
      %709 = vmatprep.subr.mxu0 0.0
      %710 = vmatpush1.msra.mxu0 %v171
      %711 = vmatprep.subr.mxu0 0.0
      %712 = vmatpush1.msra.mxu0 %v172
      %713 = vmatprep.subr.mxu0 0.0
      %714 = vmatpush1.msra.mxu0 %v173
      %715 = vmatprep.subr.mxu0 0.0
      %716 = vmatpush1.msra.mxu0 %v174
      %717 = vmatprep.subr.mxu0 0.0
      %718 = vmatpush1.msra.mxu0 %v175
      %719 = vmatprep.subr.mxu0 0.0
      %720 = vmatpush1.msra.mxu0 %v176
      %721 = vmatprep.subr.mxu0 0.0
      %722 = vmatpush1.msra.mxu0 %v177
      %723 = vmatprep.subr.mxu0 0.0
      %724 = vmatpush1.msra.mxu0 %v178
      %725 = vmatprep.subr.mxu0 0.0
      %726 = vmatpush1.msra.mxu0 %v179
      %727 = vmatprep.subr.mxu0 0.0
      %728 = vmatpush1.msra.mxu0 %v180
      %729 = vmatprep.subr.mxu0 0.0
      %730 = vmatpush1.msra.mxu0 %v181
      %731 = vmatprep.subr.mxu0 0.0
      %732 = vmatpush1.msra.mxu0 %v182
      %733 = vmatprep.subr.mxu0 0.0
      %734 = vmatpush1.msra.mxu0 %v183
      %735 = vmatprep.subr.mxu0 0.0
      %736 = vmatpush1.msra.mxu0 %v184
      %737 = vmatprep.subr.mxu0 0.0
      %738 = vmatpush1.msra.mxu0 %v185
      %739 = vmatprep.subr.mxu0 0.0
      %740 = vmatpush1.msra.mxu0 %v186
      %741 = vmatprep.subr.mxu0 0.0
      %742 = vmatpush1.msra.mxu0 0.0
      %743 = vmatprep.subr.mxu0 0.0
      %744 = vmatpush1.msra.mxu0 0.0
      %745 = vmatprep.subr.mxu0 0.0
      %746 = vmatpush1.msra.mxu0 0.0
      %747 = vmatprep.subr.mxu0 0.0
      %748 = vmatpush1.msra.mxu0 0.0
      %749 = vmatprep.subr.mxu0 0.0
      %750 = vmatpush1.msra.mxu0 0.0
      %751 = vmatprep.subr.mxu0 0.0
      %752 = vmatpush1.msra.mxu0 0.0
      %753 = vmatprep.subr.mxu0 0.0
      %754 = vmatpush1.msra.mxu0 0.0
      %755 = vmatprep.subr.mxu0 0.0
      %756 = vmatpush1.msra.mxu0 0.0
      %757 = vmatprep.subr.mxu0 0.0
      %758 = vmatpush1.msra.mxu0 0.0
      %759 = vmatprep.subr.mxu0 0.0
      %760 = vmatpush1.msra.mxu0 0.0
      %761 = vmatprep.subr.mxu0 0.0
      %762 = vmatpush1.msra.mxu0 0.0
      %763 = vmatprep.subr.mxu0 0.0
      %764 = vmatpush1.msra.mxu0 0.0
      %765 = vmatprep.subr.mxu0 0.0
      %766 = vmatpush1.msra.mxu0 0.0
      %767 = vmatprep.subr.mxu0 0.0
      %768 = vmatpush1.msra.mxu0 0.0
      %769 = vmatprep.subr.mxu0 0.0
      %770 = vmatpush1.msra.mxu0 0.0
      %771 = vmatprep.subr.mxu0 0.0
      %772 = vmatpush1.msra.mxu0 0.0
      %773 = vmatprep.mubr.f32.mxu0 0.0
      %774 = vmatmul.mubr.f32.gmra.mrb[0].mxu0 %v707
      %v775 = vpop.f32.mrb[0].mxu0
      %v776 = vadd.f32 0.0, %v775
      %v777 = vpop.f32.mrb[0].mxu0
      %778 = vmatprep.mubr.f32.mxu0 0.0
      %779 = vmatmul.mubr.f32.gmra.mrb[0].mxu0 %v708
      %v780 = vpop.f32.mrb[0].mxu0
      %v781 = vadd.f32 0.0, %v780
      %v782 = vpop.f32.mrb[0].mxu0
      %783 = vdwg.mxu0
      %784 = vmatprep.subr.mxu0 0.0
      %785 = vmatpush1.msra.mxu0 %v776
      %786 = vmatprep.subr.mxu0 0.0
      %787 = vmatpush1.msra.mxu0 %v781
      %788 = vmatprep.subr.mxu0 0.0
      %789 = vmatpush1.msra.mxu0 0.0
      %790 = vmatprep.subr.mxu0 0.0
      %791 = vmatpush1.msra.mxu0 0.0
      %792 = vmatprep.subr.mxu0 0.0
      %793 = vmatpush1.msra.mxu0 0.0
      %794 = vmatprep.subr.mxu0 0.0
      %795 = vmatpush1.msra.mxu0 0.0
      %796 = vmatprep.subr.mxu0 0.0
      %797 = vmatpush1.msra.mxu0 0.0
      %798 = vmatprep.subr.mxu0 0.0
      %799 = vmatpush1.msra.mxu0 0.0
      %800 = vmatprep.subr.mxu0 0.0
      %801 = vmatpush1.msra.mxu0 0.0
      %802 = vmatprep.subr.mxu0 0.0
      %803 = vmatpush1.msra.mxu0 0.0
      %804 = vmatprep.subr.mxu0 0.0
      %805 = vmatpush1.msra.mxu0 0.0
      %806 = vmatprep.subr.mxu0 0.0
      %807 = vmatpush1.msra.mxu0 0.0
      %808 = vmatprep.subr.mxu0 0.0
      %809 = vmatpush1.msra.mxu0 0.0
      %810 = vmatprep.subr.mxu0 0.0
      %811 = vmatpush1.msra.mxu0 0.0
      %812 = vmatprep.subr.mxu0 0.0
      %813 = vmatpush1.msra.mxu0 0.0
      %814 = vmatprep.subr.mxu0 0.0
      %815 = vmatpush1.msra.mxu0 0.0
      %816 = vmatprep.subr.mxu0 0.0
      %817 = vmatpush1.msra.mxu0 0.0
      %818 = vmatprep.subr.mxu0 0.0
      %819 = vmatpush1.msra.mxu0 0.0
      %820 = vmatprep.subr.mxu0 0.0
      %821 = vmatpush1.msra.mxu0 0.0
      %822 = vmatprep.subr.mxu0 0.0
      %823 = vmatpush1.msra.mxu0 0.0
      %824 = vmatprep.subr.mxu0 0.0
      %825 = vmatpush1.msra.mxu0 0.0
      %826 = vmatprep.subr.mxu0 0.0
      %827 = vmatpush1.msra.mxu0 0.0
      %828 = vmatprep.subr.mxu0 0.0
      %829 = vmatpush1.msra.mxu0 0.0
      %830 = vmatprep.subr.mxu0 0.0
      %831 = vmatpush1.msra.mxu0 0.0
      %832 = vmatprep.subr.mxu0 0.0
      %833 = vmatpush1.msra.mxu0 0.0
      %834 = vmatprep.subr.mxu0 0.0
      %835 = vmatpush1.msra.mxu0 0.0
      %836 = vmatprep.subr.mxu0 0.0
      %837 = vmatpush1.msra.mxu0 0.0
      %838 = vmatprep.subr.mxu0 0.0
      %839 = vmatpush1.msra.mxu0 0.0
      %840 = vmatprep.subr.mxu0 0.0
      %841 = vmatpush1.msra.mxu0 0.0
      %842 = vmatprep.subr.mxu0 0.0
      %843 = vmatpush1.msra.mxu0 0.0
      %844 = vmatprep.subr.mxu0 0.0
      %845 = vmatpush1.msra.mxu0 0.0
      %846 = vmatprep.subr.mxu0 0.0
      %847 = vmatpush1.msra.mxu0 0.0
      %848 = vmatprep.mubr.f32.mxu0 0.0
      %849 = vmatmul.mubr.f32.gmra.mrb[0].mxu0 %v270
      %v850 = vpop.f32.mrb[0].mxu0
      %v851 = vadd.f32 0.0, %v850
      %v852 = vpop.f32.mrb[0].mxu0
      %853 = vmatprep.mubr.f32.mxu0 0.0
      %854 = vmatmul.mubr.f32.gmra.mrb[0].mxu0 %v273
      %v855 = vpop.f32.mrb[0].mxu0
      %v856 = vadd.f32 0.0, %v855
      %v857 = vpop.f32.mrb[0].mxu0
      %858 = vmatprep.mubr.f32.mxu0 0.0
      %859 = vmatmul.mubr.f32.gmra.mrb[0].mxu0 %v276
      %v860 = vpop.f32.mrb[0].mxu0
      %v861 = vadd.f32 0.0, %v860
      %v862 = vpop.f32.mrb[0].mxu0
      %863 = vmatprep.mubr.f32.mxu0 0.0
      %864 = vmatmul.mubr.f32.gmra.mrb[0].mxu0 %v279
      %v865 = vpop.f32.mrb[0].mxu0
      %v866 = vadd.f32 0.0, %v865
      %v867 = vpop.f32.mrb[0].mxu0
      %868 = vdwg.mxu0
      %s869 = scalar_lea.vmem %s170, 96
      %870 = vst [vmem:[%s869] sm:$0xff] %v851
      %871 = vst [vmem:[%s869 + $0x8] sm:$0xff] %v856
      %872 = vst [vmem:[%s869 + $0x10] sm:$0xff] %v861
      %873 = vst [vmem:[%s869 + $0x18] sm:$0xff] %v866
      %s874 = scalar_lea.vmem %s165, 64
      %v875 = vld [vmem:[%s874] sm:$0xff]
      %v876 = vld [vmem:[%s874 + $0x8] sm:$0xff]
      %877 = vmatprep.subr.mxu0 0.0
      %878 = vmatpush1.msra.mxu0 %v171
      %879 = vmatprep.subr.mxu0 0.0
      %880 = vmatpush1.msra.mxu0 %v172
      %881 = vmatprep.subr.mxu0 0.0
      %882 = vmatpush1.msra.mxu0 %v173
      %883 = vmatprep.subr.mxu0 0.0
      %884 = vmatpush1.msra.mxu0 %v174
      %885 = vmatprep.subr.mxu0 0.0
      %886 = vmatpush1.msra.mxu0 %v175
      %887 = vmatprep.subr.mxu0 0.0
      %888 = vmatpush1.msra.mxu0 %v176
      %889 = vmatprep.subr.mxu0 0.0
      %890 = vmatpush1.msra.mxu0 %v177
      %891 = vmatprep.subr.mxu0 0.0
      %892 = vmatpush1.msra.mxu0 %v178
      %893 = vmatprep.subr.mxu0 0.0
      %894 = vmatpush1.msra.mxu0 %v179
      %895 = vmatprep.subr.mxu0 0.0
      %896 = vmatpush1.msra.mxu0 %v180
      %897 = vmatprep.subr.mxu0 0.0
      %898 = vmatpush1.msra.mxu0 %v181
      %899 = vmatprep.subr.mxu0 0.0
      %900 = vmatpush1.msra.mxu0 %v182
      %901 = vmatprep.subr.mxu0 0.0
      %902 = vmatpush1.msra.mxu0 %v183
      %903 = vmatprep.subr.mxu0 0.0
      %904 = vmatpush1.msra.mxu0 %v184
      %905 = vmatprep.subr.mxu0 0.0
      %906 = vmatpush1.msra.mxu0 %v185
      %907 = vmatprep.subr.mxu0 0.0
      %908 = vmatpush1.msra.mxu0 %v186
      %909 = vmatprep.subr.mxu0 0.0
      %910 = vmatpush1.msra.mxu0 0.0
      %911 = vmatprep.subr.mxu0 0.0
      %912 = vmatpush1.msra.mxu0 0.0
      %913 = vmatprep.subr.mxu0 0.0
      %914 = vmatpush1.msra.mxu0 0.0
      %915 = vmatprep.subr.mxu0 0.0
      %916 = vmatpush1.msra.mxu0 0.0
      %917 = vmatprep.subr.mxu0 0.0
      %918 = vmatpush1.msra.mxu0 0.0
      %919 = vmatprep.subr.mxu0 0.0
      %920 = vmatpush1.msra.mxu0 0.0
      %921 = vmatprep.subr.mxu0 0.0
      %922 = vmatpush1.msra.mxu0 0.0
      %923 = vmatprep.subr.mxu0 0.0
      %924 = vmatpush1.msra.mxu0 0.0
      %925 = vmatprep.subr.mxu0 0.0
      %926 = vmatpush1.msra.mxu0 0.0
      %927 = vmatprep.subr.mxu0 0.0
      %928 = vmatpush1.msra.mxu0 0.0
      %929 = vmatprep.subr.mxu0 0.0
      %930 = vmatpush1.msra.mxu0 0.0
      %931 = vmatprep.subr.mxu0 0.0
      %932 = vmatpush1.msra.mxu0 0.0
      %933 = vmatprep.subr.mxu0 0.0
      %934 = vmatpush1.msra.mxu0 0.0
      %935 = vmatprep.subr.mxu0 0.0
      %936 = vmatpush1.msra.mxu0 0.0
      %937 = vmatprep.subr.mxu0 0.0
      %938 = vmatpush1.msra.mxu0 0.0
      %939 = vmatprep.subr.mxu0 0.0
      %940 = vmatpush1.msra.mxu0 0.0
      %941 = vmatprep.mubr.f32.mxu0 0.0
      %942 = vmatmul.mubr.f32.gmra.mrb[0].mxu0 %v875
      %v943 = vpop.f32.mrb[0].mxu0
      %v944 = vadd.f32 0.0, %v943
      %v945 = vpop.f32.mrb[0].mxu0
      %946 = vmatprep.mubr.f32.mxu0 0.0
      %947 = vmatmul.mubr.f32.gmra.mrb[0].mxu0 %v876
      %v948 = vpop.f32.mrb[0].mxu0
      %v949 = vadd.f32 0.0, %v948
      %v950 = vpop.f32.mrb[0].mxu0
      %951 = vdwg.mxu0
      %952 = vmatprep.subr.mxu0 0.0
      %953 = vmatpush1.msra.mxu0 %v944
      %954 = vmatprep.subr.mxu0 0.0
      %955 = vmatpush1.msra.mxu0 %v949
      %956 = vmatprep.subr.mxu0 0.0
      %957 = vmatpush1.msra.mxu0 0.0
      %958 = vmatprep.subr.mxu0 0.0
      %959 = vmatpush1.msra.mxu0 0.0
      %960 = vmatprep.subr.mxu0 0.0
      %961 = vmatpush1.msra.mxu0 0.0
      %962 = vmatprep.subr.mxu0 0.0
      %963 = vmatpush1.msra.mxu0 0.0
      %964 = vmatprep.subr.mxu0 0.0
      %965 = vmatpush1.msra.mxu0 0.0
      %966 = vmatprep.subr.mxu0 0.0
      %967 = vmatpush1.msra.mxu0 0.0
      %968 = vmatprep.subr.mxu0 0.0
      %969 = vmatpush1.msra.mxu0 0.0
      %970 = vmatprep.subr.mxu0 0.0
      %971 = vmatpush1.msra.mxu0 0.0
      %972 = vmatprep.subr.mxu0 0.0
      %973 = vmatpush1.msra.mxu0 0.0
      %974 = vmatprep.subr.mxu0 0.0
      %975 = vmatpush1.msra.mxu0 0.0
      %976 = vmatprep.subr.mxu0 0.0
      %977 = vmatpush1.msra.mxu0 0.0
      %978 = vmatprep.subr.mxu0 0.0
      %979 = vmatpush1.msra.mxu0 0.0
      %980 = vmatprep.subr.mxu0 0.0
      %981 = vmatpush1.msra.mxu0 0.0
      %982 = vmatprep.subr.mxu0 0.0
      %983 = vmatpush1.msra.mxu0 0.0
      %984 = vmatprep.subr.mxu0 0.0
      %985 = vmatpush1.msra.mxu0 0.0
      %986 = vmatprep.subr.mxu0 0.0
      %987 = vmatpush1.msra.mxu0 0.0
      %988 = vmatprep.subr.mxu0 0.0
      %989 = vmatpush1.msra.mxu0 0.0
      %990 = vmatprep.subr.mxu0 0.0
      %991 = vmatpush1.msra.mxu0 0.0
      %992 = vmatprep.subr.mxu0 0.0
      %993 = vmatpush1.msra.mxu0 0.0
      %994 = vmatprep.subr.mxu0 0.0
      %995 = vmatpush1.msra.mxu0 0.0
      %996 = vmatprep.subr.mxu0 0.0
      %997 = vmatpush1.msra.mxu0 0.0
      %998 = vmatprep.subr.mxu0 0.0
      %999 = vmatpush1.msra.mxu0 0.0
      %1000 = vmatprep.subr.mxu0 0.0
      %1001 = vmatpush1.msra.mxu0 0.0
      %1002 = vmatprep.subr.mxu0 0.0
      %1003 = vmatpush1.msra.mxu0 0.0
      %1004 = vmatprep.subr.mxu0 0.0
      %1005 = vmatpush1.msra.mxu0 0.0
      %1006 = vmatprep.subr.mxu0 0.0
      %1007 = vmatpush1.msra.mxu0 0.0
      %1008 = vmatprep.subr.mxu0 0.0
      %1009 = vmatpush1.msra.mxu0 0.0
      %1010 = vmatprep.subr.mxu0 0.0
      %1011 = vmatpush1.msra.mxu0 0.0
      %1012 = vmatprep.subr.mxu0 0.0
      %1013 = vmatpush1.msra.mxu0 0.0
      %1014 = vmatprep.subr.mxu0 0.0
      %1015 = vmatpush1.msra.mxu0 0.0
      %1016 = vmatprep.mubr.f32.mxu0 0.0
      %1017 = vmatmul.mubr.f32.gmra.mrb[0].mxu0 %v270
      %v1018 = vpop.f32.mrb[0].mxu0
      %v1019 = vadd.f32 0.0, %v1018
      %v1020 = vpop.f32.mrb[0].mxu0
      %1021 = vmatprep.mubr.f32.mxu0 0.0
      %1022 = vmatmul.mubr.f32.gmra.mrb[0].mxu0 %v273
      %v1023 = vpop.f32.mrb[0].mxu0
      %v1024 = vadd.f32 0.0, %v1023
      %v1025 = vpop.f32.mrb[0].mxu0
      %1026 = vmatprep.mubr.f32.mxu0 0.0
      %1027 = vmatmul.mubr.f32.gmra.mrb[0].mxu0 %v276
      %v1028 = vpop.f32.mrb[0].mxu0
      %v1029 = vadd.f32 0.0, %v1028
      %v1030 = vpop.f32.mrb[0].mxu0
      %1031 = vmatprep.mubr.f32.mxu0 0.0
      %1032 = vmatmul.mubr.f32.gmra.mrb[0].mxu0 %v279
      %v1033 = vpop.f32.mrb[0].mxu0
      %v1034 = vadd.f32 0.0, %v1033
      %v1035 = vpop.f32.mrb[0].mxu0
      %1036 = vdwg.mxu0
      %s1037 = scalar_lea.vmem %s170, 128
      %1038 = vst [vmem:[%s1037] sm:$0xff] %v1019
      %1039 = vst [vmem:[%s1037 + $0x8] sm:$0xff] %v1024
      %1040 = vst [vmem:[%s1037 + $0x10] sm:$0xff] %v1029
      %1041 = vst [vmem:[%s1037 + $0x18] sm:$0xff] %v1034
      %s1042 = scalar_lea.vmem %s165, 80
      %v1043 = vld [vmem:[%s1042] sm:$0xff]
      %v1044 = vld [vmem:[%s1042 + $0x8] sm:$0xff]
      %1045 = vmatprep.subr.mxu0 0.0
      %1046 = vmatpush1.msra.mxu0 %v171
      %1047 = vmatprep.subr.mxu0 0.0
      %1048 = vmatpush1.msra.mxu0 %v172
      %1049 = vmatprep.subr.mxu0 0.0
      %1050 = vmatpush1.msra.mxu0 %v173
      %1051 = vmatprep.subr.mxu0 0.0
      %1052 = vmatpush1.msra.mxu0 %v174
      %1053 = vmatprep.subr.mxu0 0.0
      %1054 = vmatpush1.msra.mxu0 %v175
      %1055 = vmatprep.subr.mxu0 0.0
      %1056 = vmatpush1.msra.mxu0 %v176
      %1057 = vmatprep.subr.mxu0 0.0
      %1058 = vmatpush1.msra.mxu0 %v177
      %1059 = vmatprep.subr.mxu0 0.0
      %1060 = vmatpush1.msra.mxu0 %v178
      %1061 = vmatprep.subr.mxu0 0.0
      %1062 = vmatpush1.msra.mxu0 %v179
      %1063 = vmatprep.subr.mxu0 0.0
      %1064 = vmatpush1.msra.mxu0 %v180
      %1065 = vmatprep.subr.mxu0 0.0
      %1066 = vmatpush1.msra.mxu0 %v181
      %1067 = vmatprep.subr.mxu0 0.0
      %1068 = vmatpush1.msra.mxu0 %v182
      %1069 = vmatprep.subr.mxu0 0.0
      %1070 = vmatpush1.msra.mxu0 %v183
      %1071 = vmatprep.subr.mxu0 0.0
      %1072 = vmatpush1.msra.mxu0 %v184
      %1073 = vmatprep.subr.mxu0 0.0
      %1074 = vmatpush1.msra.mxu0 %v185
      %1075 = vmatprep.subr.mxu0 0.0
      %1076 = vmatpush1.msra.mxu0 %v186
      %1077 = vmatprep.subr.mxu0 0.0
      %1078 = vmatpush1.msra.mxu0 0.0
      %1079 = vmatprep.subr.mxu0 0.0
      %1080 = vmatpush1.msra.mxu0 0.0
      %1081 = vmatprep.subr.mxu0 0.0
      %1082 = vmatpush1.msra.mxu0 0.0
      %1083 = vmatprep.subr.mxu0 0.0
      %1084 = vmatpush1.msra.mxu0 0.0
      %1085 = vmatprep.subr.mxu0 0.0
      %1086 = vmatpush1.msra.mxu0 0.0
      %1087 = vmatprep.subr.mxu0 0.0
      %1088 = vmatpush1.msra.mxu0 0.0
      %1089 = vmatprep.subr.mxu0 0.0
      %1090 = vmatpush1.msra.mxu0 0.0
      %1091 = vmatprep.subr.mxu0 0.0
      %1092 = vmatpush1.msra.mxu0 0.0
      %1093 = vmatprep.subr.mxu0 0.0
      %1094 = vmatpush1.msra.mxu0 0.0
      %1095 = vmatprep.subr.mxu0 0.0
      %1096 = vmatpush1.msra.mxu0 0.0
      %1097 = vmatprep.subr.mxu0 0.0
      %1098 = vmatpush1.msra.mxu0 0.0
      %1099 = vmatprep.subr.mxu0 0.0
      %1100 = vmatpush1.msra.mxu0 0.0
      %1101 = vmatprep.subr.mxu0 0.0
      %1102 = vmatpush1.msra.mxu0 0.0
      %1103 = vmatprep.subr.mxu0 0.0
      %1104 = vmatpush1.msra.mxu0 0.0
      %1105 = vmatprep.subr.mxu0 0.0
      %1106 = vmatpush1.msra.mxu0 0.0
      %1107 = vmatprep.subr.mxu0 0.0
      %1108 = vmatpush1.msra.mxu0 0.0
      %1109 = vmatprep.mubr.f32.mxu0 0.0
      %1110 = vmatmul.mubr.f32.gmra.mrb[0].mxu0 %v1043
      %v1111 = vpop.f32.mrb[0].mxu0
      %v1112 = vadd.f32 0.0, %v1111
      %v1113 = vpop.f32.mrb[0].mxu0
      %1114 = vmatprep.mubr.f32.mxu0 0.0
      %1115 = vmatmul.mubr.f32.gmra.mrb[0].mxu0 %v1044
      %v1116 = vpop.f32.mrb[0].mxu0
      %v1117 = vadd.f32 0.0, %v1116
      %v1118 = vpop.f32.mrb[0].mxu0
      %1119 = vdwg.mxu0
      %1120 = vmatprep.subr.mxu0 0.0
      %1121 = vmatpush1.msra.mxu0 %v1112
      %1122 = vmatprep.subr.mxu0 0.0
      %1123 = vmatpush1.msra.mxu0 %v1117
      %1124 = vmatprep.subr.mxu0 0.0
      %1125 = vmatpush1.msra.mxu0 0.0
      %1126 = vmatprep.subr.mxu0 0.0
      %1127 = vmatpush1.msra.mxu0 0.0
      %1128 = vmatprep.subr.mxu0 0.0
      %1129 = vmatpush1.msra.mxu0 0.0
      %1130 = vmatprep.subr.mxu0 0.0
      %1131 = vmatpush1.msra.mxu0 0.0
      %1132 = vmatprep.subr.mxu0 0.0
      %1133 = vmatpush1.msra.mxu0 0.0
      %1134 = vmatprep.subr.mxu0 0.0
      %1135 = vmatpush1.msra.mxu0 0.0
      %1136 = vmatprep.subr.mxu0 0.0
      %1137 = vmatpush1.msra.mxu0 0.0
      %1138 = vmatprep.subr.mxu0 0.0
      %1139 = vmatpush1.msra.mxu0 0.0
      %1140 = vmatprep.subr.mxu0 0.0
      %1141 = vmatpush1.msra.mxu0 0.0
      %1142 = vmatprep.subr.mxu0 0.0
      %1143 = vmatpush1.msra.mxu0 0.0
      %1144 = vmatprep.subr.mxu0 0.0
      %1145 = vmatpush1.msra.mxu0 0.0
      %1146 = vmatprep.subr.mxu0 0.0
      %1147 = vmatpush1.msra.mxu0 0.0
      %1148 = vmatprep.subr.mxu0 0.0
      %1149 = vmatpush1.msra.mxu0 0.0
      %1150 = vmatprep.subr.mxu0 0.0
      %1151 = vmatpush1.msra.mxu0 0.0
      %1152 = vmatprep.subr.mxu0 0.0
      %1153 = vmatpush1.msra.mxu0 0.0
      %1154 = vmatprep.subr.mxu0 0.0
      %1155 = vmatpush1.msra.mxu0 0.0
      %1156 = vmatprep.subr.mxu0 0.0
      %1157 = vmatpush1.msra.mxu0 0.0
      %1158 = vmatprep.subr.mxu0 0.0
      %1159 = vmatpush1.msra.mxu0 0.0
      %1160 = vmatprep.subr.mxu0 0.0
      %1161 = vmatpush1.msra.mxu0 0.0
      %1162 = vmatprep.subr.mxu0 0.0
      %1163 = vmatpush1.msra.mxu0 0.0
      %1164 = vmatprep.subr.mxu0 0.0
      %1165 = vmatpush1.msra.mxu0 0.0
      %1166 = vmatprep.subr.mxu0 0.0
      %1167 = vmatpush1.msra.mxu0 0.0
      %1168 = vmatprep.subr.mxu0 0.0
      %1169 = vmatpush1.msra.mxu0 0.0
      %1170 = vmatprep.subr.mxu0 0.0
      %1171 = vmatpush1.msra.mxu0 0.0
      %1172 = vmatprep.subr.mxu0 0.0
      %1173 = vmatpush1.msra.mxu0 0.0
      %1174 = vmatprep.subr.mxu0 0.0
      %1175 = vmatpush1.msra.mxu0 0.0
      %1176 = vmatprep.subr.mxu0 0.0
      %1177 = vmatpush1.msra.mxu0 0.0
      %1178 = vmatprep.subr.mxu0 0.0
      %1179 = vmatpush1.msra.mxu0 0.0
      %1180 = vmatprep.subr.mxu0 0.0
      %1181 = vmatpush1.msra.mxu0 0.0
      %1182 = vmatprep.subr.mxu0 0.0
      %1183 = vmatpush1.msra.mxu0 0.0
      %1184 = vmatprep.mubr.f32.mxu0 0.0
      %1185 = vmatmul.mubr.f32.gmra.mrb[0].mxu0 %v270
      %v1186 = vpop.f32.mrb[0].mxu0
      %v1187 = vadd.f32 0.0, %v1186
      %v1188 = vpop.f32.mrb[0].mxu0
      %1189 = vmatprep.mubr.f32.mxu0 0.0
      %1190 = vmatmul.mubr.f32.gmra.mrb[0].mxu0 %v273
      %v1191 = vpop.f32.mrb[0].mxu0
      %v1192 = vadd.f32 0.0, %v1191
      %v1193 = vpop.f32.mrb[0].mxu0
      %1194 = vmatprep.mubr.f32.mxu0 0.0
      %1195 = vmatmul.mubr.f32.gmra.mrb[0].mxu0 %v276
      %v1196 = vpop.f32.mrb[0].mxu0
      %v1197 = vadd.f32 0.0, %v1196
      %v1198 = vpop.f32.mrb[0].mxu0
      %1199 = vmatprep.mubr.f32.mxu0 0.0
      %1200 = vmatmul.mubr.f32.gmra.mrb[0].mxu0 %v279
      %v1201 = vpop.f32.mrb[0].mxu0
      %v1202 = vadd.f32 0.0, %v1201
      %v1203 = vpop.f32.mrb[0].mxu0
      %1204 = vdwg.mxu0
      %s1205 = scalar_lea.vmem %s170, 160
      %1206 = vst [vmem:[%s1205] sm:$0xff] %v1187
      %1207 = vst [vmem:[%s1205 + $0x8] sm:$0xff] %v1192
      %1208 = vst [vmem:[%s1205 + $0x10] sm:$0xff] %v1197
      %1209 = vst [vmem:[%s1205 + $0x18] sm:$0xff] %v1202
      %s1210 = scalar_lea.vmem %s165, 96
      %v1211 = vld [vmem:[%s1210] sm:$0xff]
      %v1212 = vld [vmem:[%s1210 + $0x8] sm:$0xff]
      %1213 = vmatprep.subr.mxu0 0.0
      %1214 = vmatpush1.msra.mxu0 %v171
      %1215 = vmatprep.subr.mxu0 0.0
      %1216 = vmatpush1.msra.mxu0 %v172
      %1217 = vmatprep.subr.mxu0 0.0
      %1218 = vmatpush1.msra.mxu0 %v173
      %1219 = vmatprep.subr.mxu0 0.0
      %1220 = vmatpush1.msra.mxu0 %v174
      %1221 = vmatprep.subr.mxu0 0.0
      %1222 = vmatpush1.msra.mxu0 %v175
      %1223 = vmatprep.subr.mxu0 0.0
      %1224 = vmatpush1.msra.mxu0 %v176
      %1225 = vmatprep.subr.mxu0 0.0
      %1226 = vmatpush1.msra.mxu0 %v177
      %1227 = vmatprep.subr.mxu0 0.0
      %1228 = vmatpush1.msra.mxu0 %v178
      %1229 = vmatprep.subr.mxu0 0.0
      %1230 = vmatpush1.msra.mxu0 %v179
      %1231 = vmatprep.subr.mxu0 0.0
      %1232 = vmatpush1.msra.mxu0 %v180
      %1233 = vmatprep.subr.mxu0 0.0
      %1234 = vmatpush1.msra.mxu0 %v181
      %1235 = vmatprep.subr.mxu0 0.0
      %1236 = vmatpush1.msra.mxu0 %v182
      %1237 = vmatprep.subr.mxu0 0.0
      %1238 = vmatpush1.msra.mxu0 %v183
      %1239 = vmatprep.subr.mxu0 0.0
      %1240 = vmatpush1.msra.mxu0 %v184
      %1241 = vmatprep.subr.mxu0 0.0
      %1242 = vmatpush1.msra.mxu0 %v185
      %1243 = vmatprep.subr.mxu0 0.0
      %1244 = vmatpush1.msra.mxu0 %v186
      %1245 = vmatprep.subr.mxu0 0.0
      %1246 = vmatpush1.msra.mxu0 0.0
      %1247 = vmatprep.subr.mxu0 0.0
      %1248 = vmatpush1.msra.mxu0 0.0
      %1249 = vmatprep.subr.mxu0 0.0
      %1250 = vmatpush1.msra.mxu0 0.0
      %1251 = vmatprep.subr.mxu0 0.0
      %1252 = vmatpush1.msra.mxu0 0.0
      %1253 = vmatprep.subr.mxu0 0.0
      %1254 = vmatpush1.msra.mxu0 0.0
      %1255 = vmatprep.subr.mxu0 0.0
      %1256 = vmatpush1.msra.mxu0 0.0
      %1257 = vmatprep.subr.mxu0 0.0
      %1258 = vmatpush1.msra.mxu0 0.0
      %1259 = vmatprep.subr.mxu0 0.0
      %1260 = vmatpush1.msra.mxu0 0.0
      %1261 = vmatprep.subr.mxu0 0.0
      %1262 = vmatpush1.msra.mxu0 0.0
      %1263 = vmatprep.subr.mxu0 0.0
      %1264 = vmatpush1.msra.mxu0 0.0
      %1265 = vmatprep.subr.mxu0 0.0
      %1266 = vmatpush1.msra.mxu0 0.0
      %1267 = vmatprep.subr.mxu0 0.0
      %1268 = vmatpush1.msra.mxu0 0.0
      %1269 = vmatprep.subr.mxu0 0.0
      %1270 = vmatpush1.msra.mxu0 0.0
      %1271 = vmatprep.subr.mxu0 0.0
      %1272 = vmatpush1.msra.mxu0 0.0
      %1273 = vmatprep.subr.mxu0 0.0
      %1274 = vmatpush1.msra.mxu0 0.0
      %1275 = vmatprep.subr.mxu0 0.0
      %1276 = vmatpush1.msra.mxu0 0.0
      %1277 = vmatprep.mubr.f32.mxu0 0.0
      %1278 = vmatmul.mubr.f32.gmra.mrb[0].mxu0 %v1211
      %v1279 = vpop.f32.mrb[0].mxu0
      %v1280 = vadd.f32 0.0, %v1279
      %v1281 = vpop.f32.mrb[0].mxu0
      %1282 = vmatprep.mubr.f32.mxu0 0.0
      %1283 = vmatmul.mubr.f32.gmra.mrb[0].mxu0 %v1212
      %v1284 = vpop.f32.mrb[0].mxu0
      %v1285 = vadd.f32 0.0, %v1284
      %v1286 = vpop.f32.mrb[0].mxu0
      %1287 = vdwg.mxu0
      %1288 = vmatprep.subr.mxu0 0.0
      %1289 = vmatpush1.msra.mxu0 %v1280
      %1290 = vmatprep.subr.mxu0 0.0
      %1291 = vmatpush1.msra.mxu0 %v1285
      %1292 = vmatprep.subr.mxu0 0.0
      %1293 = vmatpush1.msra.mxu0 0.0
      %1294 = vmatprep.subr.mxu0 0.0
      %1295 = vmatpush1.msra.mxu0 0.0
      %1296 = vmatprep.subr.mxu0 0.0
      %1297 = vmatpush1.msra.mxu0 0.0
      %1298 = vmatprep.subr.mxu0 0.0
      %1299 = vmatpush1.msra.mxu0 0.0
      %1300 = vmatprep.subr.mxu0 0.0
      %1301 = vmatpush1.msra.mxu0 0.0
      %1302 = vmatprep.subr.mxu0 0.0
      %1303 = vmatpush1.msra.mxu0 0.0
      %1304 = vmatprep.subr.mxu0 0.0
      %1305 = vmatpush1.msra.mxu0 0.0
      %1306 = vmatprep.subr.mxu0 0.0
      %1307 = vmatpush1.msra.mxu0 0.0
      %1308 = vmatprep.subr.mxu0 0.0
      %1309 = vmatpush1.msra.mxu0 0.0
      %1310 = vmatprep.subr.mxu0 0.0
      %1311 = vmatpush1.msra.mxu0 0.0
      %1312 = vmatprep.subr.mxu0 0.0
      %1313 = vmatpush1.msra.mxu0 0.0
      %1314 = vmatprep.subr.mxu0 0.0
      %1315 = vmatpush1.msra.mxu0 0.0
      %1316 = vmatprep.subr.mxu0 0.0
      %1317 = vmatpush1.msra.mxu0 0.0
      %1318 = vmatprep.subr.mxu0 0.0
      %1319 = vmatpush1.msra.mxu0 0.0
      %1320 = vmatprep.subr.mxu0 0.0
      %1321 = vmatpush1.msra.mxu0 0.0
      %1322 = vmatprep.subr.mxu0 0.0
      %1323 = vmatpush1.msra.mxu0 0.0
      %1324 = vmatprep.subr.mxu0 0.0
      %1325 = vmatpush1.msra.mxu0 0.0
      %1326 = vmatprep.subr.mxu0 0.0
      %1327 = vmatpush1.msra.mxu0 0.0
      %1328 = vmatprep.subr.mxu0 0.0
      %1329 = vmatpush1.msra.mxu0 0.0
      %1330 = vmatprep.subr.mxu0 0.0
      %1331 = vmatpush1.msra.mxu0 0.0
      %1332 = vmatprep.subr.mxu0 0.0
      %1333 = vmatpush1.msra.mxu0 0.0
      %1334 = vmatprep.subr.mxu0 0.0
      %1335 = vmatpush1.msra.mxu0 0.0
      %1336 = vmatprep.subr.mxu0 0.0
      %1337 = vmatpush1.msra.mxu0 0.0
      %1338 = vmatprep.subr.mxu0 0.0
      %1339 = vmatpush1.msra.mxu0 0.0
      %1340 = vmatprep.subr.mxu0 0.0
      %1341 = vmatpush1.msra.mxu0 0.0
      %1342 = vmatprep.subr.mxu0 0.0
      %1343 = vmatpush1.msra.mxu0 0.0
      %1344 = vmatprep.subr.mxu0 0.0
      %1345 = vmatpush1.msra.mxu0 0.0
      %1346 = vmatprep.subr.mxu0 0.0
      %1347 = vmatpush1.msra.mxu0 0.0
      %1348 = vmatprep.subr.mxu0 0.0
      %1349 = vmatpush1.msra.mxu0 0.0
      %1350 = vmatprep.subr.mxu0 0.0
      %1351 = vmatpush1.msra.mxu0 0.0
      %1352 = vmatprep.mubr.f32.mxu0 0.0
      %1353 = vmatmul.mubr.f32.gmra.mrb[0].mxu0 %v270
      %v1354 = vpop.f32.mrb[0].mxu0
      %v1355 = vadd.f32 0.0, %v1354
      %v1356 = vpop.f32.mrb[0].mxu0
      %1357 = vmatprep.mubr.f32.mxu0 0.0
      %1358 = vmatmul.mubr.f32.gmra.mrb[0].mxu0 %v273
      %v1359 = vpop.f32.mrb[0].mxu0
      %v1360 = vadd.f32 0.0, %v1359
      %v1361 = vpop.f32.mrb[0].mxu0
      %1362 = vmatprep.mubr.f32.mxu0 0.0
      %1363 = vmatmul.mubr.f32.gmra.mrb[0].mxu0 %v276
      %v1364 = vpop.f32.mrb[0].mxu0
      %v1365 = vadd.f32 0.0, %v1364
      %v1366 = vpop.f32.mrb[0].mxu0
      %1367 = vmatprep.mubr.f32.mxu0 0.0
      %1368 = vmatmul.mubr.f32.gmra.mrb[0].mxu0 %v279
      %v1369 = vpop.f32.mrb[0].mxu0
      %v1370 = vadd.f32 0.0, %v1369
      %v1371 = vpop.f32.mrb[0].mxu0
      %1372 = vdwg.mxu0
      %s1373 = scalar_lea.vmem %s170, 192
      %1374 = vst [vmem:[%s1373] sm:$0xff] %v1355
      %1375 = vst [vmem:[%s1373 + $0x8] sm:$0xff] %v1360
      %1376 = vst [vmem:[%s1373 + $0x10] sm:$0xff] %v1365
      %1377 = vst [vmem:[%s1373 + $0x18] sm:$0xff] %v1370
      %s1378 = scalar_lea.vmem %s165, 112
      %v1379 = vld [vmem:[%s1378] sm:$0xff]
      %v1380 = vld [vmem:[%s1378 + $0x8] sm:$0xff]
      %1381 = vmatprep.subr.mxu0 0.0
      %1382 = vmatpush1.msra.mxu0 %v171
      %1383 = vmatprep.subr.mxu0 0.0
      %1384 = vmatpush1.msra.mxu0 %v172
      %1385 = vmatprep.subr.mxu0 0.0
      %1386 = vmatpush1.msra.mxu0 %v173
      %1387 = vmatprep.subr.mxu0 0.0
      %1388 = vmatpush1.msra.mxu0 %v174
      %1389 = vmatprep.subr.mxu0 0.0
      %1390 = vmatpush1.msra.mxu0 %v175
      %1391 = vmatprep.subr.mxu0 0.0
      %1392 = vmatpush1.msra.mxu0 %v176
      %1393 = vmatprep.subr.mxu0 0.0
      %1394 = vmatpush1.msra.mxu0 %v177
      %1395 = vmatprep.subr.mxu0 0.0
      %1396 = vmatpush1.msra.mxu0 %v178
      %1397 = vmatprep.subr.mxu0 0.0
      %1398 = vmatpush1.msra.mxu0 %v179
      %1399 = vmatprep.subr.mxu0 0.0
      %1400 = vmatpush1.msra.mxu0 %v180
      %1401 = vmatprep.subr.mxu0 0.0
      %1402 = vmatpush1.msra.mxu0 %v181
      %1403 = vmatprep.subr.mxu0 0.0
      %1404 = vmatpush1.msra.mxu0 %v182
      %1405 = vmatprep.subr.mxu0 0.0
      %1406 = vmatpush1.msra.mxu0 %v183
      %1407 = vmatprep.subr.mxu0 0.0
      %1408 = vmatpush1.msra.mxu0 %v184
      %1409 = vmatprep.subr.mxu0 0.0
      %1410 = vmatpush1.msra.mxu0 %v185
      %1411 = vmatprep.subr.mxu0 0.0
      %1412 = vmatpush1.msra.mxu0 %v186
      %1413 = vmatprep.subr.mxu0 0.0
      %1414 = vmatpush1.msra.mxu0 0.0
      %1415 = vmatprep.subr.mxu0 0.0
      %1416 = vmatpush1.msra.mxu0 0.0
      %1417 = vmatprep.subr.mxu0 0.0
      %1418 = vmatpush1.msra.mxu0 0.0
      %1419 = vmatprep.subr.mxu0 0.0
      %1420 = vmatpush1.msra.mxu0 0.0
      %1421 = vmatprep.subr.mxu0 0.0
      %1422 = vmatpush1.msra.mxu0 0.0
      %1423 = vmatprep.subr.mxu0 0.0
      %1424 = vmatpush1.msra.mxu0 0.0
      %1425 = vmatprep.subr.mxu0 0.0
      %1426 = vmatpush1.msra.mxu0 0.0
      %1427 = vmatprep.subr.mxu0 0.0
      %1428 = vmatpush1.msra.mxu0 0.0
      %1429 = vmatprep.subr.mxu0 0.0
      %1430 = vmatpush1.msra.mxu0 0.0
      %1431 = vmatprep.subr.mxu0 0.0
      %1432 = vmatpush1.msra.mxu0 0.0
      %1433 = vmatprep.subr.mxu0 0.0
      %1434 = vmatpush1.msra.mxu0 0.0
      %1435 = vmatprep.subr.mxu0 0.0
      %1436 = vmatpush1.msra.mxu0 0.0
      %1437 = vmatprep.subr.mxu0 0.0
      %1438 = vmatpush1.msra.mxu0 0.0
      %1439 = vmatprep.subr.mxu0 0.0
      %1440 = vmatpush1.msra.mxu0 0.0
      %1441 = vmatprep.subr.mxu0 0.0
      %1442 = vmatpush1.msra.mxu0 0.0
      %1443 = vmatprep.subr.mxu0 0.0
      %1444 = vmatpush1.msra.mxu0 0.0
      %1445 = vmatprep.mubr.f32.mxu0 0.0
      %1446 = vmatmul.mubr.f32.gmra.mrb[0].mxu0 %v1379
      %v1447 = vpop.f32.mrb[0].mxu0
      %v1448 = vadd.f32 0.0, %v1447
      %v1449 = vpop.f32.mrb[0].mxu0
      %1450 = vmatprep.mubr.f32.mxu0 0.0
      %1451 = vmatmul.mubr.f32.gmra.mrb[0].mxu0 %v1380
      %v1452 = vpop.f32.mrb[0].mxu0
      %v1453 = vadd.f32 0.0, %v1452
      %v1454 = vpop.f32.mrb[0].mxu0
      %1455 = vdwg.mxu0
      %1456 = vmatprep.subr.mxu0 0.0
      %1457 = vmatpush1.msra.mxu0 %v1448
      %1458 = vmatprep.subr.mxu0 0.0
      %1459 = vmatpush1.msra.mxu0 %v1453
      %1460 = vmatprep.subr.mxu0 0.0
      %1461 = vmatpush1.msra.mxu0 0.0
      %1462 = vmatprep.subr.mxu0 0.0
      %1463 = vmatpush1.msra.mxu0 0.0
      %1464 = vmatprep.subr.mxu0 0.0
      %1465 = vmatpush1.msra.mxu0 0.0
      %1466 = vmatprep.subr.mxu0 0.0
      %1467 = vmatpush1.msra.mxu0 0.0
      %1468 = vmatprep.subr.mxu0 0.0
      %1469 = vmatpush1.msra.mxu0 0.0
      %1470 = vmatprep.subr.mxu0 0.0
      %1471 = vmatpush1.msra.mxu0 0.0
      %1472 = vmatprep.subr.mxu0 0.0
      %1473 = vmatpush1.msra.mxu0 0.0
      %1474 = vmatprep.subr.mxu0 0.0
      %1475 = vmatpush1.msra.mxu0 0.0
      %1476 = vmatprep.subr.mxu0 0.0
      %1477 = vmatpush1.msra.mxu0 0.0
      %1478 = vmatprep.subr.mxu0 0.0
      %1479 = vmatpush1.msra.mxu0 0.0
      %1480 = vmatprep.subr.mxu0 0.0
      %1481 = vmatpush1.msra.mxu0 0.0
      %1482 = vmatprep.subr.mxu0 0.0
      %1483 = vmatpush1.msra.mxu0 0.0
      %1484 = vmatprep.subr.mxu0 0.0
      %1485 = vmatpush1.msra.mxu0 0.0
      %1486 = vmatprep.subr.mxu0 0.0
      %1487 = vmatpush1.msra.mxu0 0.0
      %1488 = vmatprep.subr.mxu0 0.0
      %1489 = vmatpush1.msra.mxu0 0.0
      %1490 = vmatprep.subr.mxu0 0.0
      %1491 = vmatpush1.msra.mxu0 0.0
      %1492 = vmatprep.subr.mxu0 0.0
      %1493 = vmatpush1.msra.mxu0 0.0
      %1494 = vmatprep.subr.mxu0 0.0
      %1495 = vmatpush1.msra.mxu0 0.0
      %1496 = vmatprep.subr.mxu0 0.0
      %1497 = vmatpush1.msra.mxu0 0.0
      %1498 = vmatprep.subr.mxu0 0.0
      %1499 = vmatpush1.msra.mxu0 0.0
      %1500 = vmatprep.subr.mxu0 0.0
      %1501 = vmatpush1.msra.mxu0 0.0
      %1502 = vmatprep.subr.mxu0 0.0
      %1503 = vmatpush1.msra.mxu0 0.0
      %1504 = vmatprep.subr.mxu0 0.0
      %1505 = vmatpush1.msra.mxu0 0.0
      %1506 = vmatprep.subr.mxu0 0.0
      %1507 = vmatpush1.msra.mxu0 0.0
      %1508 = vmatprep.subr.mxu0 0.0
      %1509 = vmatpush1.msra.mxu0 0.0
      %1510 = vmatprep.subr.mxu0 0.0
      %1511 = vmatpush1.msra.mxu0 0.0
      %1512 = vmatprep.subr.mxu0 0.0
      %1513 = vmatpush1.msra.mxu0 0.0
      %1514 = vmatprep.subr.mxu0 0.0
      %1515 = vmatpush1.msra.mxu0 0.0
      %1516 = vmatprep.subr.mxu0 0.0
      %1517 = vmatpush1.msra.mxu0 0.0
      %1518 = vmatprep.subr.mxu0 0.0
      %1519 = vmatpush1.msra.mxu0 0.0
      %1520 = vmatprep.mubr.f32.mxu0 0.0
      %1521 = vmatmul.mubr.f32.gmra.mrb[0].mxu0 %v270
      %v1522 = vpop.f32.mrb[0].mxu0
      %v1523 = vadd.f32 0.0, %v1522
      %v1524 = vpop.f32.mrb[0].mxu0
      %1525 = vmatprep.mubr.f32.mxu0 0.0
      %1526 = vmatmul.mubr.f32.gmra.mrb[0].mxu0 %v273
      %v1527 = vpop.f32.mrb[0].mxu0
      %v1528 = vadd.f32 0.0, %v1527
      %v1529 = vpop.f32.mrb[0].mxu0
      %1530 = vmatprep.mubr.f32.mxu0 0.0
      %1531 = vmatmul.mubr.f32.gmra.mrb[0].mxu0 %v276
      %v1532 = vpop.f32.mrb[0].mxu0
      %v1533 = vadd.f32 0.0, %v1532
      %v1534 = vpop.f32.mrb[0].mxu0
      %1535 = vmatprep.mubr.f32.mxu0 0.0
      %1536 = vmatmul.mubr.f32.gmra.mrb[0].mxu0 %v279
      %v1537 = vpop.f32.mrb[0].mxu0
      %v1538 = vadd.f32 0.0, %v1537
      %v1539 = vpop.f32.mrb[0].mxu0
      %1540 = vdwg.mxu0
      %s1541 = scalar_lea.vmem %s170, 224
      %1542 = vst [vmem:[%s1541] sm:$0xff] %v1523
      %1543 = vst [vmem:[%s1541 + $0x8] sm:$0xff] %v1528
      %1544 = vst [vmem:[%s1541 + $0x10] sm:$0xff] %v1533
      %1545 = vst [vmem:[%s1541 + $0x18] sm:$0xff] %v1538
      %s1546 = scalar_lea.vmem %s165, 128
      %v1547 = vld [vmem:[%s1546] sm:$0xff]
      %v1548 = vld [vmem:[%s1546 + $0x8] sm:$0xff]
      %1549 = vmatprep.subr.mxu0 0.0
      %1550 = vmatpush1.msra.mxu0 %v171
      %1551 = vmatprep.subr.mxu0 0.0
      %1552 = vmatpush1.msra.mxu0 %v172
      %1553 = vmatprep.subr.mxu0 0.0
      %1554 = vmatpush1.msra.mxu0 %v173
      %1555 = vmatprep.subr.mxu0 0.0
      %1556 = vmatpush1.msra.mxu0 %v174
      %1557 = vmatprep.subr.mxu0 0.0
      %1558 = vmatpush1.msra.mxu0 %v175
      %1559 = vmatprep.subr.mxu0 0.0
      %1560 = vmatpush1.msra.mxu0 %v176
      %1561 = vmatprep.subr.mxu0 0.0
      %1562 = vmatpush1.msra.mxu0 %v177
      %1563 = vmatprep.subr.mxu0 0.0
      %1564 = vmatpush1.msra.mxu0 %v178
      %1565 = vmatprep.subr.mxu0 0.0
      %1566 = vmatpush1.msra.mxu0 %v179
      %1567 = vmatprep.subr.mxu0 0.0
      %1568 = vmatpush1.msra.mxu0 %v180
      %1569 = vmatprep.subr.mxu0 0.0
      %1570 = vmatpush1.msra.mxu0 %v181
      %1571 = vmatprep.subr.mxu0 0.0
      %1572 = vmatpush1.msra.mxu0 %v182
      %1573 = vmatprep.subr.mxu0 0.0
      %1574 = vmatpush1.msra.mxu0 %v183
      %1575 = vmatprep.subr.mxu0 0.0
      %1576 = vmatpush1.msra.mxu0 %v184
      %1577 = vmatprep.subr.mxu0 0.0
      %1578 = vmatpush1.msra.mxu0 %v185
      %1579 = vmatprep.subr.mxu0 0.0
      %1580 = vmatpush1.msra.mxu0 %v186
      %1581 = vmatprep.subr.mxu0 0.0
      %1582 = vmatpush1.msra.mxu0 0.0
      %1583 = vmatprep.subr.mxu0 0.0
      %1584 = vmatpush1.msra.mxu0 0.0
      %1585 = vmatprep.subr.mxu0 0.0
      %1586 = vmatpush1.msra.mxu0 0.0
      %1587 = vmatprep.subr.mxu0 0.0
      %1588 = vmatpush1.msra.mxu0 0.0
      %1589 = vmatprep.subr.mxu0 0.0
      %1590 = vmatpush1.msra.mxu0 0.0
      %1591 = vmatprep.subr.mxu0 0.0
      %1592 = vmatpush1.msra.mxu0 0.0
      %1593 = vmatprep.subr.mxu0 0.0
      %1594 = vmatpush1.msra.mxu0 0.0
      %1595 = vmatprep.subr.mxu0 0.0
      %1596 = vmatpush1.msra.mxu0 0.0
      %1597 = vmatprep.subr.mxu0 0.0
      %1598 = vmatpush1.msra.mxu0 0.0
      %1599 = vmatprep.subr.mxu0 0.0
      %1600 = vmatpush1.msra.mxu0 0.0
      %1601 = vmatprep.subr.mxu0 0.0
      %1602 = vmatpush1.msra.mxu0 0.0
      %1603 = vmatprep.subr.mxu0 0.0
      %1604 = vmatpush1.msra.mxu0 0.0
      %1605 = vmatprep.subr.mxu0 0.0
      %1606 = vmatpush1.msra.mxu0 0.0
      %1607 = vmatprep.subr.mxu0 0.0
      %1608 = vmatpush1.msra.mxu0 0.0
      %1609 = vmatprep.subr.mxu0 0.0
      %1610 = vmatpush1.msra.mxu0 0.0
      %1611 = vmatprep.subr.mxu0 0.0
      %1612 = vmatpush1.msra.mxu0 0.0
      %1613 = vmatprep.mubr.f32.mxu0 0.0
      %1614 = vmatmul.mubr.f32.gmra.mrb[0].mxu0 %v1547
      %v1615 = vpop.f32.mrb[0].mxu0
      %v1616 = vadd.f32 0.0, %v1615
      %v1617 = vpop.f32.mrb[0].mxu0
      %1618 = vmatprep.mubr.f32.mxu0 0.0
      %1619 = vmatmul.mubr.f32.gmra.mrb[0].mxu0 %v1548
      %v1620 = vpop.f32.mrb[0].mxu0
      %v1621 = vadd.f32 0.0, %v1620
      %v1622 = vpop.f32.mrb[0].mxu0
      %1623 = vdwg.mxu0
      %1624 = vmatprep.subr.mxu0 0.0
      %1625 = vmatpush1.msra.mxu0 %v1616
      %1626 = vmatprep.subr.mxu0 0.0
      %1627 = vmatpush1.msra.mxu0 %v1621
      %1628 = vmatprep.subr.mxu0 0.0
      %1629 = vmatpush1.msra.mxu0 0.0
      %1630 = vmatprep.subr.mxu0 0.0
      %1631 = vmatpush1.msra.mxu0 0.0
      %1632 = vmatprep.subr.mxu0 0.0
      %1633 = vmatpush1.msra.mxu0 0.0
      %1634 = vmatprep.subr.mxu0 0.0
      %1635 = vmatpush1.msra.mxu0 0.0
      %1636 = vmatprep.subr.mxu0 0.0
      %1637 = vmatpush1.msra.mxu0 0.0
      %1638 = vmatprep.subr.mxu0 0.0
      %1639 = vmatpush1.msra.mxu0 0.0
      %1640 = vmatprep.subr.mxu0 0.0
      %1641 = vmatpush1.msra.mxu0 0.0
      %1642 = vmatprep.subr.mxu0 0.0
      %1643 = vmatpush1.msra.mxu0 0.0
      %1644 = vmatprep.subr.mxu0 0.0
      %1645 = vmatpush1.msra.mxu0 0.0
      %1646 = vmatprep.subr.mxu0 0.0
      %1647 = vmatpush1.msra.mxu0 0.0
      %1648 = vmatprep.subr.mxu0 0.0
      %1649 = vmatpush1.msra.mxu0 0.0
      %1650 = vmatprep.subr.mxu0 0.0
      %1651 = vmatpush1.msra.mxu0 0.0
      %1652 = vmatprep.subr.mxu0 0.0
      %1653 = vmatpush1.msra.mxu0 0.0
      %1654 = vmatprep.subr.mxu0 0.0
      %1655 = vmatpush1.msra.mxu0 0.0
      %1656 = vmatprep.subr.mxu0 0.0
      %1657 = vmatpush1.msra.mxu0 0.0
      %1658 = vmatprep.subr.mxu0 0.0
      %1659 = vmatpush1.msra.mxu0 0.0
      %1660 = vmatprep.subr.mxu0 0.0
      %1661 = vmatpush1.msra.mxu0 0.0
      %1662 = vmatprep.subr.mxu0 0.0
      %1663 = vmatpush1.msra.mxu0 0.0
      %1664 = vmatprep.subr.mxu0 0.0
      %1665 = vmatpush1.msra.mxu0 0.0
      %1666 = vmatprep.subr.mxu0 0.0
      %1667 = vmatpush1.msra.mxu0 0.0
      %1668 = vmatprep.subr.mxu0 0.0
      %1669 = vmatpush1.msra.mxu0 0.0
      %1670 = vmatprep.subr.mxu0 0.0
      %1671 = vmatpush1.msra.mxu0 0.0
      %1672 = vmatprep.subr.mxu0 0.0
      %1673 = vmatpush1.msra.mxu0 0.0
      %1674 = vmatprep.subr.mxu0 0.0
      %1675 = vmatpush1.msra.mxu0 0.0
      %1676 = vmatprep.subr.mxu0 0.0
      %1677 = vmatpush1.msra.mxu0 0.0
      %1678 = vmatprep.subr.mxu0 0.0
      %1679 = vmatpush1.msra.mxu0 0.0
      %1680 = vmatprep.subr.mxu0 0.0
      %1681 = vmatpush1.msra.mxu0 0.0
      %1682 = vmatprep.subr.mxu0 0.0
      %1683 = vmatpush1.msra.mxu0 0.0
      %1684 = vmatprep.subr.mxu0 0.0
      %1685 = vmatpush1.msra.mxu0 0.0
      %1686 = vmatprep.subr.mxu0 0.0
      %1687 = vmatpush1.msra.mxu0 0.0
      %1688 = vmatprep.mubr.f32.mxu0 0.0
      %1689 = vmatmul.mubr.f32.gmra.mrb[0].mxu0 %v270
      %v1690 = vpop.f32.mrb[0].mxu0
      %v1691 = vadd.f32 0.0, %v1690
      %v1692 = vpop.f32.mrb[0].mxu0
      %1693 = vmatprep.mubr.f32.mxu0 0.0
      %1694 = vmatmul.mubr.f32.gmra.mrb[0].mxu0 %v273
      %v1695 = vpop.f32.mrb[0].mxu0
      %v1696 = vadd.f32 0.0, %v1695
      %v1697 = vpop.f32.mrb[0].mxu0
      %1698 = vmatprep.mubr.f32.mxu0 0.0
      %1699 = vmatmul.mubr.f32.gmra.mrb[0].mxu0 %v276
      %v1700 = vpop.f32.mrb[0].mxu0
      %v1701 = vadd.f32 0.0, %v1700
      %v1702 = vpop.f32.mrb[0].mxu0
      %1703 = vmatprep.mubr.f32.mxu0 0.0
      %1704 = vmatmul.mubr.f32.gmra.mrb[0].mxu0 %v279
      %v1705 = vpop.f32.mrb[0].mxu0
      %v1706 = vadd.f32 0.0, %v1705
      %v1707 = vpop.f32.mrb[0].mxu0
      %1708 = vdwg.mxu0
      %s1709 = scalar_lea.vmem %s170, 256
      %1710 = vst [vmem:[%s1709] sm:$0xff] %v1691
      %1711 = vst [vmem:[%s1709 + $0x8] sm:$0xff] %v1696
      %1712 = vst [vmem:[%s1709 + $0x10] sm:$0xff] %v1701
      %1713 = vst [vmem:[%s1709 + $0x18] sm:$0xff] %v1706
      %s1714 = scalar_lea.vmem %s165, 144
      %v1715 = vld [vmem:[%s1714] sm:$0xff]
      %v1716 = vld [vmem:[%s1714 + $0x8] sm:$0xff]
      %1717 = vmatprep.subr.mxu0 0.0
      %1718 = vmatpush1.msra.mxu0 %v171
      %1719 = vmatprep.subr.mxu0 0.0
      %1720 = vmatpush1.msra.mxu0 %v172
      %1721 = vmatprep.subr.mxu0 0.0
      %1722 = vmatpush1.msra.mxu0 %v173
      %1723 = vmatprep.subr.mxu0 0.0
      %1724 = vmatpush1.msra.mxu0 %v174
      %1725 = vmatprep.subr.mxu0 0.0
      %1726 = vmatpush1.msra.mxu0 %v175
      %1727 = vmatprep.subr.mxu0 0.0
      %1728 = vmatpush1.msra.mxu0 %v176
      %1729 = vmatprep.subr.mxu0 0.0
      %1730 = vmatpush1.msra.mxu0 %v177
      %1731 = vmatprep.subr.mxu0 0.0
      %1732 = vmatpush1.msra.mxu0 %v178
      %1733 = vmatprep.subr.mxu0 0.0
      %1734 = vmatpush1.msra.mxu0 %v179
      %1735 = vmatprep.subr.mxu0 0.0
      %1736 = vmatpush1.msra.mxu0 %v180
      %1737 = vmatprep.subr.mxu0 0.0
      %1738 = vmatpush1.msra.mxu0 %v181
      %1739 = vmatprep.subr.mxu0 0.0
      %1740 = vmatpush1.msra.mxu0 %v182
      %1741 = vmatprep.subr.mxu0 0.0
      %1742 = vmatpush1.msra.mxu0 %v183
      %1743 = vmatprep.subr.mxu0 0.0
      %1744 = vmatpush1.msra.mxu0 %v184
      %1745 = vmatprep.subr.mxu0 0.0
      %1746 = vmatpush1.msra.mxu0 %v185
      %1747 = vmatprep.subr.mxu0 0.0
      %1748 = vmatpush1.msra.mxu0 %v186
      %1749 = vmatprep.subr.mxu0 0.0
      %1750 = vmatpush1.msra.mxu0 0.0
      %1751 = vmatprep.subr.mxu0 0.0
      %1752 = vmatpush1.msra.mxu0 0.0
      %1753 = vmatprep.subr.mxu0 0.0
      %1754 = vmatpush1.msra.mxu0 0.0
      %1755 = vmatprep.subr.mxu0 0.0
      %1756 = vmatpush1.msra.mxu0 0.0
      %1757 = vmatprep.subr.mxu0 0.0
      %1758 = vmatpush1.msra.mxu0 0.0
      %1759 = vmatprep.subr.mxu0 0.0
      %1760 = vmatpush1.msra.mxu0 0.0
      %1761 = vmatprep.subr.mxu0 0.0
      %1762 = vmatpush1.msra.mxu0 0.0
      %1763 = vmatprep.subr.mxu0 0.0
      %1764 = vmatpush1.msra.mxu0 0.0
      %1765 = vmatprep.subr.mxu0 0.0
      %1766 = vmatpush1.msra.mxu0 0.0
      %1767 = vmatprep.subr.mxu0 0.0
      %1768 = vmatpush1.msra.mxu0 0.0
      %1769 = vmatprep.subr.mxu0 0.0
      %1770 = vmatpush1.msra.mxu0 0.0
      %1771 = vmatprep.subr.mxu0 0.0
      %1772 = vmatpush1.msra.mxu0 0.0
      %1773 = vmatprep.subr.mxu0 0.0
      %1774 = vmatpush1.msra.mxu0 0.0
      %1775 = vmatprep.subr.mxu0 0.0
      %1776 = vmatpush1.msra.mxu0 0.0
      %1777 = vmatprep.subr.mxu0 0.0
      %1778 = vmatpush1.msra.mxu0 0.0
      %1779 = vmatprep.subr.mxu0 0.0
      %1780 = vmatpush1.msra.mxu0 0.0
      %1781 = vmatprep.mubr.f32.mxu0 0.0
      %1782 = vmatmul.mubr.f32.gmra.mrb[0].mxu0 %v1715
      %v1783 = vpop.f32.mrb[0].mxu0
      %v1784 = vadd.f32 0.0, %v1783
      %v1785 = vpop.f32.mrb[0].mxu0
      %1786 = vmatprep.mubr.f32.mxu0 0.0
      %1787 = vmatmul.mubr.f32.gmra.mrb[0].mxu0 %v1716
      %v1788 = vpop.f32.mrb[0].mxu0
      %v1789 = vadd.f32 0.0, %v1788
      %v1790 = vpop.f32.mrb[0].mxu0
      %1791 = vdwg.mxu0
      %1792 = vmatprep.subr.mxu0 0.0
      %1793 = vmatpush1.msra.mxu0 %v1784
      %1794 = vmatprep.subr.mxu0 0.0
      %1795 = vmatpush1.msra.mxu0 %v1789
      %1796 = vmatprep.subr.mxu0 0.0
      %1797 = vmatpush1.msra.mxu0 0.0
      %1798 = vmatprep.subr.mxu0 0.0
      %1799 = vmatpush1.msra.mxu0 0.0
      %1800 = vmatprep.subr.mxu0 0.0
      %1801 = vmatpush1.msra.mxu0 0.0
      %1802 = vmatprep.subr.mxu0 0.0
      %1803 = vmatpush1.msra.mxu0 0.0
      %1804 = vmatprep.subr.mxu0 0.0
      %1805 = vmatpush1.msra.mxu0 0.0
      %1806 = vmatprep.subr.mxu0 0.0
      %1807 = vmatpush1.msra.mxu0 0.0
      %1808 = vmatprep.subr.mxu0 0.0
      %1809 = vmatpush1.msra.mxu0 0.0
      %1810 = vmatprep.subr.mxu0 0.0
      %1811 = vmatpush1.msra.mxu0 0.0
      %1812 = vmatprep.subr.mxu0 0.0
      %1813 = vmatpush1.msra.mxu0 0.0
      %1814 = vmatprep.subr.mxu0 0.0
      %1815 = vmatpush1.msra.mxu0 0.0
      %1816 = vmatprep.subr.mxu0 0.0
      %1817 = vmatpush1.msra.mxu0 0.0
      %1818 = vmatprep.subr.mxu0 0.0
      %1819 = vmatpush1.msra.mxu0 0.0
      %1820 = vmatprep.subr.mxu0 0.0
      %1821 = vmatpush1.msra.mxu0 0.0
      %1822 = vmatprep.subr.mxu0 0.0
      %1823 = vmatpush1.msra.mxu0 0.0
      %1824 = vmatprep.subr.mxu0 0.0
      %1825 = vmatpush1.msra.mxu0 0.0
      %1826 = vmatprep.subr.mxu0 0.0
      %1827 = vmatpush1.msra.mxu0 0.0
      %1828 = vmatprep.subr.mxu0 0.0
      %1829 = vmatpush1.msra.mxu0 0.0
      %1830 = vmatprep.subr.mxu0 0.0
      %1831 = vmatpush1.msra.mxu0 0.0
      %1832 = vmatprep.subr.mxu0 0.0
      %1833 = vmatpush1.msra.mxu0 0.0
      %1834 = vmatprep.subr.mxu0 0.0
      %1835 = vmatpush1.msra.mxu0 0.0
      %1836 = vmatprep.subr.mxu0 0.0
      %1837 = vmatpush1.msra.mxu0 0.0
      %1838 = vmatprep.subr.mxu0 0.0
      %1839 = vmatpush1.msra.mxu0 0.0
      %1840 = vmatprep.subr.mxu0 0.0
      %1841 = vmatpush1.msra.mxu0 0.0
      %1842 = vmatprep.subr.mxu0 0.0
      %1843 = vmatpush1.msra.mxu0 0.0
      %1844 = vmatprep.subr.mxu0 0.0
      %1845 = vmatpush1.msra.mxu0 0.0
      %1846 = vmatprep.subr.mxu0 0.0
      %1847 = vmatpush1.msra.mxu0 0.0
      %1848 = vmatprep.subr.mxu0 0.0
      %1849 = vmatpush1.msra.mxu0 0.0
      %1850 = vmatprep.subr.mxu0 0.0
      %1851 = vmatpush1.msra.mxu0 0.0
      %1852 = vmatprep.subr.mxu0 0.0
      %1853 = vmatpush1.msra.mxu0 0.0
      %1854 = vmatprep.subr.mxu0 0.0
      %1855 = vmatpush1.msra.mxu0 0.0
      %1856 = vmatprep.mubr.f32.mxu0 0.0
      %1857 = vmatmul.mubr.f32.gmra.mrb[0].mxu0 %v270
      %v1858 = vpop.f32.mrb[0].mxu0
      %v1859 = vadd.f32 0.0, %v1858
      %v1860 = vpop.f32.mrb[0].mxu0
      %1861 = vmatprep.mubr.f32.mxu0 0.0
      %1862 = vmatmul.mubr.f32.gmra.mrb[0].mxu0 %v273
      %v1863 = vpop.f32.mrb[0].mxu0
      %v1864 = vadd.f32 0.0, %v1863
      %v1865 = vpop.f32.mrb[0].mxu0
      %1866 = vmatprep.mubr.f32.mxu0 0.0
      %1867 = vmatmul.mubr.f32.gmra.mrb[0].mxu0 %v276
      %v1868 = vpop.f32.mrb[0].mxu0
      %v1869 = vadd.f32 0.0, %v1868
      %v1870 = vpop.f32.mrb[0].mxu0
      %1871 = vmatprep.mubr.f32.mxu0 0.0
      %1872 = vmatmul.mubr.f32.gmra.mrb[0].mxu0 %v279
      %v1873 = vpop.f32.mrb[0].mxu0
      %v1874 = vadd.f32 0.0, %v1873
      %v1875 = vpop.f32.mrb[0].mxu0
      %1876 = vdwg.mxu0
      %s1877 = scalar_lea.vmem %s170, 288
      %1878 = vst [vmem:[%s1877] sm:$0xff] %v1859
      %1879 = vst [vmem:[%s1877 + $0x8] sm:$0xff] %v1864
      %1880 = vst [vmem:[%s1877 + $0x10] sm:$0xff] %v1869
      %1881 = vst [vmem:[%s1877 + $0x18] sm:$0xff] %v1874
      %s1882 = scalar_lea.vmem %s165, 160
      %v1883 = vld [vmem:[%s1882] sm:$0xff]
      %v1884 = vld [vmem:[%s1882 + $0x8] sm:$0xff]
      %1885 = vmatprep.subr.mxu0 0.0
      %1886 = vmatpush1.msra.mxu0 %v171
      %1887 = vmatprep.subr.mxu0 0.0
      %1888 = vmatpush1.msra.mxu0 %v172
      %1889 = vmatprep.subr.mxu0 0.0
      %1890 = vmatpush1.msra.mxu0 %v173
      %1891 = vmatprep.subr.mxu0 0.0
      %1892 = vmatpush1.msra.mxu0 %v174
      %1893 = vmatprep.subr.mxu0 0.0
      %1894 = vmatpush1.msra.mxu0 %v175
      %1895 = vmatprep.subr.mxu0 0.0
      %1896 = vmatpush1.msra.mxu0 %v176
      %1897 = vmatprep.subr.mxu0 0.0
      %1898 = vmatpush1.msra.mxu0 %v177
      %1899 = vmatprep.subr.mxu0 0.0
      %1900 = vmatpush1.msra.mxu0 %v178
      %1901 = vmatprep.subr.mxu0 0.0
      %1902 = vmatpush1.msra.mxu0 %v179
      %1903 = vmatprep.subr.mxu0 0.0
      %1904 = vmatpush1.msra.mxu0 %v180
      %1905 = vmatprep.subr.mxu0 0.0
      %1906 = vmatpush1.msra.mxu0 %v181
      %1907 = vmatprep.subr.mxu0 0.0
      %1908 = vmatpush1.msra.mxu0 %v182
      %1909 = vmatprep.subr.mxu0 0.0
      %1910 = vmatpush1.msra.mxu0 %v183
      %1911 = vmatprep.subr.mxu0 0.0
      %1912 = vmatpush1.msra.mxu0 %v184
      %1913 = vmatprep.subr.mxu0 0.0
      %1914 = vmatpush1.msra.mxu0 %v185
      %1915 = vmatprep.subr.mxu0 0.0
      %1916 = vmatpush1.msra.mxu0 %v186
      %1917 = vmatprep.subr.mxu0 0.0
      %1918 = vmatpush1.msra.mxu0 0.0
      %1919 = vmatprep.subr.mxu0 0.0
      %1920 = vmatpush1.msra.mxu0 0.0
      %1921 = vmatprep.subr.mxu0 0.0
      %1922 = vmatpush1.msra.mxu0 0.0
      %1923 = vmatprep.subr.mxu0 0.0
      %1924 = vmatpush1.msra.mxu0 0.0
      %1925 = vmatprep.subr.mxu0 0.0
      %1926 = vmatpush1.msra.mxu0 0.0
      %1927 = vmatprep.subr.mxu0 0.0
      %1928 = vmatpush1.msra.mxu0 0.0
      %1929 = vmatprep.subr.mxu0 0.0
      %1930 = vmatpush1.msra.mxu0 0.0
      %1931 = vmatprep.subr.mxu0 0.0
      %1932 = vmatpush1.msra.mxu0 0.0
      %1933 = vmatprep.subr.mxu0 0.0
      %1934 = vmatpush1.msra.mxu0 0.0
      %1935 = vmatprep.subr.mxu0 0.0
      %1936 = vmatpush1.msra.mxu0 0.0
      %1937 = vmatprep.subr.mxu0 0.0
      %1938 = vmatpush1.msra.mxu0 0.0
      %1939 = vmatprep.subr.mxu0 0.0
      %1940 = vmatpush1.msra.mxu0 0.0
      %1941 = vmatprep.subr.mxu0 0.0
      %1942 = vmatpush1.msra.mxu0 0.0
      %1943 = vmatprep.subr.mxu0 0.0
      %1944 = vmatpush1.msra.mxu0 0.0
      %1945 = vmatprep.subr.mxu0 0.0
      %1946 = vmatpush1.msra.mxu0 0.0
      %1947 = vmatprep.subr.mxu0 0.0
      %1948 = vmatpush1.msra.mxu0 0.0
      %1949 = vmatprep.mubr.f32.mxu0 0.0
      %1950 = vmatmul.mubr.f32.gmra.mrb[0].mxu0 %v1883
      %v1951 = vpop.f32.mrb[0].mxu0
      %v1952 = vadd.f32 0.0, %v1951
      %v1953 = vpop.f32.mrb[0].mxu0
      %1954 = vmatprep.mubr.f32.mxu0 0.0
      %1955 = vmatmul.mubr.f32.gmra.mrb[0].mxu0 %v1884
      %v1956 = vpop.f32.mrb[0].mxu0
      %v1957 = vadd.f32 0.0, %v1956
      %v1958 = vpop.f32.mrb[0].mxu0
      %1959 = vdwg.mxu0
      %1960 = vmatprep.subr.mxu0 0.0
      %1961 = vmatpush1.msra.mxu0 %v1952
      %1962 = vmatprep.subr.mxu0 0.0
      %1963 = vmatpush1.msra.mxu0 %v1957
      %1964 = vmatprep.subr.mxu0 0.0
      %1965 = vmatpush1.msra.mxu0 0.0
      %1966 = vmatprep.subr.mxu0 0.0
      %1967 = vmatpush1.msra.mxu0 0.0
      %1968 = vmatprep.subr.mxu0 0.0
      %1969 = vmatpush1.msra.mxu0 0.0
      %1970 = vmatprep.subr.mxu0 0.0
      %1971 = vmatpush1.msra.mxu0 0.0
      %1972 = vmatprep.subr.mxu0 0.0
      %1973 = vmatpush1.msra.mxu0 0.0
      %1974 = vmatprep.subr.mxu0 0.0
      %1975 = vmatpush1.msra.mxu0 0.0
      %1976 = vmatprep.subr.mxu0 0.0
      %1977 = vmatpush1.msra.mxu0 0.0
      %1978 = vmatprep.subr.mxu0 0.0
      %1979 = vmatpush1.msra.mxu0 0.0
      %1980 = vmatprep.subr.mxu0 0.0
      %1981 = vmatpush1.msra.mxu0 0.0
      %1982 = vmatprep.subr.mxu0 0.0
      %1983 = vmatpush1.msra.mxu0 0.0
      %1984 = vmatprep.subr.mxu0 0.0
      %1985 = vmatpush1.msra.mxu0 0.0
      %1986 = vmatprep.subr.mxu0 0.0
      %1987 = vmatpush1.msra.mxu0 0.0
      %1988 = vmatprep.subr.mxu0 0.0
      %1989 = vmatpush1.msra.mxu0 0.0
      %1990 = vmatprep.subr.mxu0 0.0
      %1991 = vmatpush1.msra.mxu0 0.0
      %1992 = vmatprep.subr.mxu0 0.0
      %1993 = vmatpush1.msra.mxu0 0.0
      %1994 = vmatprep.subr.mxu0 0.0
      %1995 = vmatpush1.msra.mxu0 0.0
      %1996 = vmatprep.subr.mxu0 0.0
      %1997 = vmatpush1.msra.mxu0 0.0
      %1998 = vmatprep.subr.mxu0 0.0
      %1999 = vmatpush1.msra.mxu0 0.0
      %2000 = vmatprep.subr.mxu0 0.0
      %2001 = vmatpush1.msra.mxu0 0.0
      %2002 = vmatprep.subr.mxu0 0.0
      %2003 = vmatpush1.msra.mxu0 0.0
      %2004 = vmatprep.subr.mxu0 0.0
      %2005 = vmatpush1.msra.mxu0 0.0
      %2006 = vmatprep.subr.mxu0 0.0
      %2007 = vmatpush1.msra.mxu0 0.0
      %2008 = vmatprep.subr.mxu0 0.0
      %2009 = vmatpush1.msra.mxu0 0.0
      %2010 = vmatprep.subr.mxu0 0.0
      %2011 = vmatpush1.msra.mxu0 0.0
      %2012 = vmatprep.subr.mxu0 0.0
      %2013 = vmatpush1.msra.mxu0 0.0
      %2014 = vmatprep.subr.mxu0 0.0
      %2015 = vmatpush1.msra.mxu0 0.0
      %2016 = vmatprep.subr.mxu0 0.0
      %2017 = vmatpush1.msra.mxu0 0.0
      %2018 = vmatprep.subr.mxu0 0.0
      %2019 = vmatpush1.msra.mxu0 0.0
      %2020 = vmatprep.subr.mxu0 0.0
      %2021 = vmatpush1.msra.mxu0 0.0
      %2022 = vmatprep.subr.mxu0 0.0
      %2023 = vmatpush1.msra.mxu0 0.0
      %2024 = vmatprep.mubr.f32.mxu0 0.0
      %2025 = vmatmul.mubr.f32.gmra.mrb[0].mxu0 %v270
      %v2026 = vpop.f32.mrb[0].mxu0
      %v2027 = vadd.f32 0.0, %v2026
      %v2028 = vpop.f32.mrb[0].mxu0
      %2029 = vmatprep.mubr.f32.mxu0 0.0
      %2030 = vmatmul.mubr.f32.gmra.mrb[0].mxu0 %v273
      %v2031 = vpop.f32.mrb[0].mxu0
      %v2032 = vadd.f32 0.0, %v2031
      %v2033 = vpop.f32.mrb[0].mxu0
      %2034 = vmatprep.mubr.f32.mxu0 0.0
      %2035 = vmatmul.mubr.f32.gmra.mrb[0].mxu0 %v276
      %v2036 = vpop.f32.mrb[0].mxu0
      %v2037 = vadd.f32 0.0, %v2036
      %v2038 = vpop.f32.mrb[0].mxu0
      %2039 = vmatprep.mubr.f32.mxu0 0.0
      %2040 = vmatmul.mubr.f32.gmra.mrb[0].mxu0 %v279
      %v2041 = vpop.f32.mrb[0].mxu0
      %v2042 = vadd.f32 0.0, %v2041
      %v2043 = vpop.f32.mrb[0].mxu0
      %2044 = vdwg.mxu0
      %s2045 = scalar_lea.vmem %s170, 320
      %2046 = vst [vmem:[%s2045] sm:$0xff] %v2027
      %2047 = vst [vmem:[%s2045 + $0x8] sm:$0xff] %v2032
      %2048 = vst [vmem:[%s2045 + $0x10] sm:$0xff] %v2037
      %2049 = vst [vmem:[%s2045 + $0x18] sm:$0xff] %v2042
      %s2050 = scalar_lea.vmem %s165, 176
      %v2051 = vld [vmem:[%s2050] sm:$0xff]
      %v2052 = vld [vmem:[%s2050 + $0x8] sm:$0xff]
      %2053 = vmatprep.subr.mxu0 0.0
      %2054 = vmatpush1.msra.mxu0 %v171
      %2055 = vmatprep.subr.mxu0 0.0
      %2056 = vmatpush1.msra.mxu0 %v172
      %2057 = vmatprep.subr.mxu0 0.0
      %2058 = vmatpush1.msra.mxu0 %v173
      %2059 = vmatprep.subr.mxu0 0.0
      %2060 = vmatpush1.msra.mxu0 %v174
      %2061 = vmatprep.subr.mxu0 0.0
      %2062 = vmatpush1.msra.mxu0 %v175
      %2063 = vmatprep.subr.mxu0 0.0
      %2064 = vmatpush1.msra.mxu0 %v176
      %2065 = vmatprep.subr.mxu0 0.0
      %2066 = vmatpush1.msra.mxu0 %v177
      %2067 = vmatprep.subr.mxu0 0.0
      %2068 = vmatpush1.msra.mxu0 %v178
      %2069 = vmatprep.subr.mxu0 0.0
      %2070 = vmatpush1.msra.mxu0 %v179
      %2071 = vmatprep.subr.mxu0 0.0
      %2072 = vmatpush1.msra.mxu0 %v180
      %2073 = vmatprep.subr.mxu0 0.0
      %2074 = vmatpush1.msra.mxu0 %v181
      %2075 = vmatprep.subr.mxu0 0.0
      %2076 = vmatpush1.msra.mxu0 %v182
      %2077 = vmatprep.subr.mxu0 0.0
      %2078 = vmatpush1.msra.mxu0 %v183
      %2079 = vmatprep.subr.mxu0 0.0
      %2080 = vmatpush1.msra.mxu0 %v184
      %2081 = vmatprep.subr.mxu0 0.0
      %2082 = vmatpush1.msra.mxu0 %v185
      %2083 = vmatprep.subr.mxu0 0.0
      %2084 = vmatpush1.msra.mxu0 %v186
      %2085 = vmatprep.subr.mxu0 0.0
      %2086 = vmatpush1.msra.mxu0 0.0
      %2087 = vmatprep.subr.mxu0 0.0
      %2088 = vmatpush1.msra.mxu0 0.0
      %2089 = vmatprep.subr.mxu0 0.0
      %2090 = vmatpush1.msra.mxu0 0.0
      %2091 = vmatprep.subr.mxu0 0.0
      %2092 = vmatpush1.msra.mxu0 0.0
      %2093 = vmatprep.subr.mxu0 0.0
      %2094 = vmatpush1.msra.mxu0 0.0
      %2095 = vmatprep.subr.mxu0 0.0
      %2096 = vmatpush1.msra.mxu0 0.0
      %2097 = vmatprep.subr.mxu0 0.0
      %2098 = vmatpush1.msra.mxu0 0.0
      %2099 = vmatprep.subr.mxu0 0.0
      %2100 = vmatpush1.msra.mxu0 0.0
      %2101 = vmatprep.subr.mxu0 0.0
      %2102 = vmatpush1.msra.mxu0 0.0
      %2103 = vmatprep.subr.mxu0 0.0
      %2104 = vmatpush1.msra.mxu0 0.0
      %2105 = vmatprep.subr.mxu0 0.0
      %2106 = vmatpush1.msra.mxu0 0.0
      %2107 = vmatprep.subr.mxu0 0.0
      %2108 = vmatpush1.msra.mxu0 0.0
      %2109 = vmatprep.subr.mxu0 0.0
      %2110 = vmatpush1.msra.mxu0 0.0
      %2111 = vmatprep.subr.mxu0 0.0
      %2112 = vmatpush1.msra.mxu0 0.0
      %2113 = vmatprep.subr.mxu0 0.0
      %2114 = vmatpush1.msra.mxu0 0.0
      %2115 = vmatprep.subr.mxu0 0.0
      %2116 = vmatpush1.msra.mxu0 0.0
      %2117 = vmatprep.mubr.f32.mxu0 0.0
      %2118 = vmatmul.mubr.f32.gmra.mrb[0].mxu0 %v2051
      %v2119 = vpop.f32.mrb[0].mxu0
      %v2120 = vadd.f32 0.0, %v2119
      %v2121 = vpop.f32.mrb[0].mxu0
      %2122 = vmatprep.mubr.f32.mxu0 0.0
      %2123 = vmatmul.mubr.f32.gmra.mrb[0].mxu0 %v2052
      %v2124 = vpop.f32.mrb[0].mxu0
      %v2125 = vadd.f32 0.0, %v2124
      %v2126 = vpop.f32.mrb[0].mxu0
      %2127 = vdwg.mxu0
      %2128 = vmatprep.subr.mxu0 0.0
      %2129 = vmatpush1.msra.mxu0 %v2120
      %2130 = vmatprep.subr.mxu0 0.0
      %2131 = vmatpush1.msra.mxu0 %v2125
      %2132 = vmatprep.subr.mxu0 0.0
      %2133 = vmatpush1.msra.mxu0 0.0
      %2134 = vmatprep.subr.mxu0 0.0
      %2135 = vmatpush1.msra.mxu0 0.0
      %2136 = vmatprep.subr.mxu0 0.0
      %2137 = vmatpush1.msra.mxu0 0.0
      %2138 = vmatprep.subr.mxu0 0.0
      %2139 = vmatpush1.msra.mxu0 0.0
      %2140 = vmatprep.subr.mxu0 0.0
      %2141 = vmatpush1.msra.mxu0 0.0
      %2142 = vmatprep.subr.mxu0 0.0
      %2143 = vmatpush1.msra.mxu0 0.0
      %2144 = vmatprep.subr.mxu0 0.0
      %2145 = vmatpush1.msra.mxu0 0.0
      %2146 = vmatprep.subr.mxu0 0.0
      %2147 = vmatpush1.msra.mxu0 0.0
      %2148 = vmatprep.subr.mxu0 0.0
      %2149 = vmatpush1.msra.mxu0 0.0
      %2150 = vmatprep.subr.mxu0 0.0
      %2151 = vmatpush1.msra.mxu0 0.0
      %2152 = vmatprep.subr.mxu0 0.0
      %2153 = vmatpush1.msra.mxu0 0.0
      %2154 = vmatprep.subr.mxu0 0.0
      %2155 = vmatpush1.msra.mxu0 0.0
      %2156 = vmatprep.subr.mxu0 0.0
      %2157 = vmatpush1.msra.mxu0 0.0
      %2158 = vmatprep.subr.mxu0 0.0
      %2159 = vmatpush1.msra.mxu0 0.0
      %2160 = vmatprep.subr.mxu0 0.0
      %2161 = vmatpush1.msra.mxu0 0.0
      %2162 = vmatprep.subr.mxu0 0.0
      %2163 = vmatpush1.msra.mxu0 0.0
      %2164 = vmatprep.subr.mxu0 0.0
      %2165 = vmatpush1.msra.mxu0 0.0
      %2166 = vmatprep.subr.mxu0 0.0
      %2167 = vmatpush1.msra.mxu0 0.0
      %2168 = vmatprep.subr.mxu0 0.0
      %2169 = vmatpush1.msra.mxu0 0.0
      %2170 = vmatprep.subr.mxu0 0.0
      %2171 = vmatpush1.msra.mxu0 0.0
      %2172 = vmatprep.subr.mxu0 0.0
      %2173 = vmatpush1.msra.mxu0 0.0
      %2174 = vmatprep.subr.mxu0 0.0
      %2175 = vmatpush1.msra.mxu0 0.0
      %2176 = vmatprep.subr.mxu0 0.0
      %2177 = vmatpush1.msra.mxu0 0.0
      %2178 = vmatprep.subr.mxu0 0.0
      %2179 = vmatpush1.msra.mxu0 0.0
      %2180 = vmatprep.subr.mxu0 0.0
      %2181 = vmatpush1.msra.mxu0 0.0
      %2182 = vmatprep.subr.mxu0 0.0
      %2183 = vmatpush1.msra.mxu0 0.0
      %2184 = vmatprep.subr.mxu0 0.0
      %2185 = vmatpush1.msra.mxu0 0.0
      %2186 = vmatprep.subr.mxu0 0.0
      %2187 = vmatpush1.msra.mxu0 0.0
      %2188 = vmatprep.subr.mxu0 0.0
      %2189 = vmatpush1.msra.mxu0 0.0
      %2190 = vmatprep.subr.mxu0 0.0
      %2191 = vmatpush1.msra.mxu0 0.0
      %2192 = vmatprep.mubr.f32.mxu0 0.0
      %2193 = vmatmul.mubr.f32.gmra.mrb[0].mxu0 %v270
      %v2194 = vpop.f32.mrb[0].mxu0
      %v2195 = vadd.f32 0.0, %v2194
      %v2196 = vpop.f32.mrb[0].mxu0
      %2197 = vmatprep.mubr.f32.mxu0 0.0
      %2198 = vmatmul.mubr.f32.gmra.mrb[0].mxu0 %v273
      %v2199 = vpop.f32.mrb[0].mxu0
      %v2200 = vadd.f32 0.0, %v2199
      %v2201 = vpop.f32.mrb[0].mxu0
      %2202 = vmatprep.mubr.f32.mxu0 0.0
      %2203 = vmatmul.mubr.f32.gmra.mrb[0].mxu0 %v276
      %v2204 = vpop.f32.mrb[0].mxu0
      %v2205 = vadd.f32 0.0, %v2204
      %v2206 = vpop.f32.mrb[0].mxu0
      %2207 = vmatprep.mubr.f32.mxu0 0.0
      %2208 = vmatmul.mubr.f32.gmra.mrb[0].mxu0 %v279
      %v2209 = vpop.f32.mrb[0].mxu0
      %v2210 = vadd.f32 0.0, %v2209
      %v2211 = vpop.f32.mrb[0].mxu0
      %2212 = vdwg.mxu0
      %s2213 = scalar_lea.vmem %s170, 352
      %2214 = vst [vmem:[%s2213] sm:$0xff] %v2195
      %2215 = vst [vmem:[%s2213 + $0x8] sm:$0xff] %v2200
      %2216 = vst [vmem:[%s2213 + $0x10] sm:$0xff] %v2205
      %2217 = vst [vmem:[%s2213 + $0x18] sm:$0xff] %v2210
      %s2218 = scalar_lea.vmem %s165, 192
      %v2219 = vld [vmem:[%s2218] sm:$0xff]
      %v2220 = vld [vmem:[%s2218 + $0x8] sm:$0xff]
      %2221 = vmatprep.subr.mxu0 0.0
      %2222 = vmatpush1.msra.mxu0 %v171
      %2223 = vmatprep.subr.mxu0 0.0
      %2224 = vmatpush1.msra.mxu0 %v172
      %2225 = vmatprep.subr.mxu0 0.0
      %2226 = vmatpush1.msra.mxu0 %v173
      %2227 = vmatprep.subr.mxu0 0.0
      %2228 = vmatpush1.msra.mxu0 %v174
      %2229 = vmatprep.subr.mxu0 0.0
      %2230 = vmatpush1.msra.mxu0 %v175
      %2231 = vmatprep.subr.mxu0 0.0
      %2232 = vmatpush1.msra.mxu0 %v176
      %2233 = vmatprep.subr.mxu0 0.0
      %2234 = vmatpush1.msra.mxu0 %v177
      %2235 = vmatprep.subr.mxu0 0.0
      %2236 = vmatpush1.msra.mxu0 %v178
      %2237 = vmatprep.subr.mxu0 0.0
      %2238 = vmatpush1.msra.mxu0 %v179
      %2239 = vmatprep.subr.mxu0 0.0
      %2240 = vmatpush1.msra.mxu0 %v180
      %2241 = vmatprep.subr.mxu0 0.0
      %2242 = vmatpush1.msra.mxu0 %v181
      %2243 = vmatprep.subr.mxu0 0.0
      %2244 = vmatpush1.msra.mxu0 %v182
      %2245 = vmatprep.subr.mxu0 0.0
      %2246 = vmatpush1.msra.mxu0 %v183
      %2247 = vmatprep.subr.mxu0 0.0
      %2248 = vmatpush1.msra.mxu0 %v184
      %2249 = vmatprep.subr.mxu0 0.0
      %2250 = vmatpush1.msra.mxu0 %v185
      %2251 = vmatprep.subr.mxu0 0.0
      %2252 = vmatpush1.msra.mxu0 %v186
      %2253 = vmatprep.subr.mxu0 0.0
      %2254 = vmatpush1.msra.mxu0 0.0
      %2255 = vmatprep.subr.mxu0 0.0
      %2256 = vmatpush1.msra.mxu0 0.0
      %2257 = vmatprep.subr.mxu0 0.0
      %2258 = vmatpush1.msra.mxu0 0.0
      %2259 = vmatprep.subr.mxu0 0.0
      %2260 = vmatpush1.msra.mxu0 0.0
      %2261 = vmatprep.subr.mxu0 0.0
      %2262 = vmatpush1.msra.mxu0 0.0
      %2263 = vmatprep.subr.mxu0 0.0
      %2264 = vmatpush1.msra.mxu0 0.0
      %2265 = vmatprep.subr.mxu0 0.0
      %2266 = vmatpush1.msra.mxu0 0.0
      %2267 = vmatprep.subr.mxu0 0.0
      %2268 = vmatpush1.msra.mxu0 0.0
      %2269 = vmatprep.subr.mxu0 0.0
      %2270 = vmatpush1.msra.mxu0 0.0
      %2271 = vmatprep.subr.mxu0 0.0
      %2272 = vmatpush1.msra.mxu0 0.0
      %2273 = vmatprep.subr.mxu0 0.0
      %2274 = vmatpush1.msra.mxu0 0.0
      %2275 = vmatprep.subr.mxu0 0.0
      %2276 = vmatpush1.msra.mxu0 0.0
      %2277 = vmatprep.subr.mxu0 0.0
      %2278 = vmatpush1.msra.mxu0 0.0
      %2279 = vmatprep.subr.mxu0 0.0
      %2280 = vmatpush1.msra.mxu0 0.0
      %2281 = vmatprep.subr.mxu0 0.0
      %2282 = vmatpush1.msra.mxu0 0.0
      %2283 = vmatprep.subr.mxu0 0.0
      %2284 = vmatpush1.msra.mxu0 0.0
      %2285 = vmatprep.mubr.f32.mxu0 0.0
      %2286 = vmatmul.mubr.f32.gmra.mrb[0].mxu0 %v2219
      %v2287 = vpop.f32.mrb[0].mxu0
      %v2288 = vadd.f32 0.0, %v2287
      %v2289 = vpop.f32.mrb[0].mxu0
      %2290 = vmatprep.mubr.f32.mxu0 0.0
      %2291 = vmatmul.mubr.f32.gmra.mrb[0].mxu0 %v2220
      %v2292 = vpop.f32.mrb[0].mxu0
      %v2293 = vadd.f32 0.0, %v2292
      %v2294 = vpop.f32.mrb[0].mxu0
      %2295 = vdwg.mxu0
      %2296 = vmatprep.subr.mxu0 0.0
      %2297 = vmatpush1.msra.mxu0 %v2288
      %2298 = vmatprep.subr.mxu0 0.0
      %2299 = vmatpush1.msra.mxu0 %v2293
      %2300 = vmatprep.subr.mxu0 0.0
      %2301 = vmatpush1.msra.mxu0 0.0
      %2302 = vmatprep.subr.mxu0 0.0
      %2303 = vmatpush1.msra.mxu0 0.0
      %2304 = vmatprep.subr.mxu0 0.0
      %2305 = vmatpush1.msra.mxu0 0.0
      %2306 = vmatprep.subr.mxu0 0.0
      %2307 = vmatpush1.msra.mxu0 0.0
      %2308 = vmatprep.subr.mxu0 0.0
      %2309 = vmatpush1.msra.mxu0 0.0
      %2310 = vmatprep.subr.mxu0 0.0
      %2311 = vmatpush1.msra.mxu0 0.0
      %2312 = vmatprep.subr.mxu0 0.0
      %2313 = vmatpush1.msra.mxu0 0.0
      %2314 = vmatprep.subr.mxu0 0.0
      %2315 = vmatpush1.msra.mxu0 0.0
      %2316 = vmatprep.subr.mxu0 0.0
      %2317 = vmatpush1.msra.mxu0 0.0
      %2318 = vmatprep.subr.mxu0 0.0
      %2319 = vmatpush1.msra.mxu0 0.0
      %2320 = vmatprep.subr.mxu0 0.0
      %2321 = vmatpush1.msra.mxu0 0.0
      %2322 = vmatprep.subr.mxu0 0.0
      %2323 = vmatpush1.msra.mxu0 0.0
      %2324 = vmatprep.subr.mxu0 0.0
      %2325 = vmatpush1.msra.mxu0 0.0
      %2326 = vmatprep.subr.mxu0 0.0
      %2327 = vmatpush1.msra.mxu0 0.0
      %2328 = vmatprep.subr.mxu0 0.0
      %2329 = vmatpush1.msra.mxu0 0.0
      %2330 = vmatprep.subr.mxu0 0.0
      %2331 = vmatpush1.msra.mxu0 0.0
      %2332 = vmatprep.subr.mxu0 0.0
      %2333 = vmatpush1.msra.mxu0 0.0
      %2334 = vmatprep.subr.mxu0 0.0
      %2335 = vmatpush1.msra.mxu0 0.0
      %2336 = vmatprep.subr.mxu0 0.0
      %2337 = vmatpush1.msra.mxu0 0.0
      %2338 = vmatprep.subr.mxu0 0.0
      %2339 = vmatpush1.msra.mxu0 0.0
      %2340 = vmatprep.subr.mxu0 0.0
      %2341 = vmatpush1.msra.mxu0 0.0
      %2342 = vmatprep.subr.mxu0 0.0
      %2343 = vmatpush1.msra.mxu0 0.0
      %2344 = vmatprep.subr.mxu0 0.0
      %2345 = vmatpush1.msra.mxu0 0.0
      %2346 = vmatprep.subr.mxu0 0.0
      %2347 = vmatpush1.msra.mxu0 0.0
      %2348 = vmatprep.subr.mxu0 0.0
      %2349 = vmatpush1.msra.mxu0 0.0
      %2350 = vmatprep.subr.mxu0 0.0
      %2351 = vmatpush1.msra.mxu0 0.0
      %2352 = vmatprep.subr.mxu0 0.0
      %2353 = vmatpush1.msra.mxu0 0.0
      %2354 = vmatprep.subr.mxu0 0.0
      %2355 = vmatpush1.msra.mxu0 0.0
      %2356 = vmatprep.subr.mxu0 0.0
      %2357 = vmatpush1.msra.mxu0 0.0
      %2358 = vmatprep.subr.mxu0 0.0
      %2359 = vmatpush1.msra.mxu0 0.0
      %2360 = vmatprep.mubr.f32.mxu0 0.0
      %2361 = vmatmul.mubr.f32.gmra.mrb[0].mxu0 %v270
      %v2362 = vpop.f32.mrb[0].mxu0
      %v2363 = vadd.f32 0.0, %v2362
      %v2364 = vpop.f32.mrb[0].mxu0
      %2365 = vmatprep.mubr.f32.mxu0 0.0
      %2366 = vmatmul.mubr.f32.gmra.mrb[0].mxu0 %v273
      %v2367 = vpop.f32.mrb[0].mxu0
      %v2368 = vadd.f32 0.0, %v2367
      %v2369 = vpop.f32.mrb[0].mxu0
      %2370 = vmatprep.mubr.f32.mxu0 0.0
      %2371 = vmatmul.mubr.f32.gmra.mrb[0].mxu0 %v276
      %v2372 = vpop.f32.mrb[0].mxu0
      %v2373 = vadd.f32 0.0, %v2372
      %v2374 = vpop.f32.mrb[0].mxu0
      %2375 = vmatprep.mubr.f32.mxu0 0.0
      %2376 = vmatmul.mubr.f32.gmra.mrb[0].mxu0 %v279
      %v2377 = vpop.f32.mrb[0].mxu0
      %v2378 = vadd.f32 0.0, %v2377
      %v2379 = vpop.f32.mrb[0].mxu0
      %2380 = vdwg.mxu0
      %s2381 = scalar_lea.vmem %s170, 384
      %2382 = vst [vmem:[%s2381] sm:$0xff] %v2363
      %2383 = vst [vmem:[%s2381 + $0x8] sm:$0xff] %v2368
      %2384 = vst [vmem:[%s2381 + $0x10] sm:$0xff] %v2373
      %2385 = vst [vmem:[%s2381 + $0x18] sm:$0xff] %v2378
      %s2386 = scalar_lea.vmem %s165, 208
      %v2387 = vld [vmem:[%s2386] sm:$0xff]
      %v2388 = vld [vmem:[%s2386 + $0x8] sm:$0xff]
      %2389 = vmatprep.subr.mxu0 0.0
      %2390 = vmatpush1.msra.mxu0 %v171
      %2391 = vmatprep.subr.mxu0 0.0
      %2392 = vmatpush1.msra.mxu0 %v172
      %2393 = vmatprep.subr.mxu0 0.0
      %2394 = vmatpush1.msra.mxu0 %v173
      %2395 = vmatprep.subr.mxu0 0.0
      %2396 = vmatpush1.msra.mxu0 %v174
      %2397 = vmatprep.subr.mxu0 0.0
      %2398 = vmatpush1.msra.mxu0 %v175
      %2399 = vmatprep.subr.mxu0 0.0
      %2400 = vmatpush1.msra.mxu0 %v176
      %2401 = vmatprep.subr.mxu0 0.0
      %2402 = vmatpush1.msra.mxu0 %v177
      %2403 = vmatprep.subr.mxu0 0.0
      %2404 = vmatpush1.msra.mxu0 %v178
      %2405 = vmatprep.subr.mxu0 0.0
      %2406 = vmatpush1.msra.mxu0 %v179
      %2407 = vmatprep.subr.mxu0 0.0
      %2408 = vmatpush1.msra.mxu0 %v180
      %2409 = vmatprep.subr.mxu0 0.0
      %2410 = vmatpush1.msra.mxu0 %v181
      %2411 = vmatprep.subr.mxu0 0.0
      %2412 = vmatpush1.msra.mxu0 %v182
      %2413 = vmatprep.subr.mxu0 0.0
      %2414 = vmatpush1.msra.mxu0 %v183
      %2415 = vmatprep.subr.mxu0 0.0
      %2416 = vmatpush1.msra.mxu0 %v184
      %2417 = vmatprep.subr.mxu0 0.0
      %2418 = vmatpush1.msra.mxu0 %v185
      %2419 = vmatprep.subr.mxu0 0.0
      %2420 = vmatpush1.msra.mxu0 %v186
      %2421 = vmatprep.subr.mxu0 0.0
      %2422 = vmatpush1.msra.mxu0 0.0
      %2423 = vmatprep.subr.mxu0 0.0
      %2424 = vmatpush1.msra.mxu0 0.0
      %2425 = vmatprep.subr.mxu0 0.0
      %2426 = vmatpush1.msra.mxu0 0.0
      %2427 = vmatprep.subr.mxu0 0.0
      %2428 = vmatpush1.msra.mxu0 0.0
      %2429 = vmatprep.subr.mxu0 0.0
      %2430 = vmatpush1.msra.mxu0 0.0
      %2431 = vmatprep.subr.mxu0 0.0
      %2432 = vmatpush1.msra.mxu0 0.0
      %2433 = vmatprep.subr.mxu0 0.0
      %2434 = vmatpush1.msra.mxu0 0.0
      %2435 = vmatprep.subr.mxu0 0.0
      %2436 = vmatpush1.msra.mxu0 0.0
      %2437 = vmatprep.subr.mxu0 0.0
      %2438 = vmatpush1.msra.mxu0 0.0
      %2439 = vmatprep.subr.mxu0 0.0
      %2440 = vmatpush1.msra.mxu0 0.0
      %2441 = vmatprep.subr.mxu0 0.0
      %2442 = vmatpush1.msra.mxu0 0.0
      %2443 = vmatprep.subr.mxu0 0.0
      %2444 = vmatpush1.msra.mxu0 0.0
      %2445 = vmatprep.subr.mxu0 0.0
      %2446 = vmatpush1.msra.mxu0 0.0
      %2447 = vmatprep.subr.mxu0 0.0
      %2448 = vmatpush1.msra.mxu0 0.0
      %2449 = vmatprep.subr.mxu0 0.0
      %2450 = vmatpush1.msra.mxu0 0.0
      %2451 = vmatprep.subr.mxu0 0.0
      %2452 = vmatpush1.msra.mxu0 0.0
      %2453 = vmatprep.mubr.f32.mxu0 0.0
      %2454 = vmatmul.mubr.f32.gmra.mrb[0].mxu0 %v2387
      %v2455 = vpop.f32.mrb[0].mxu0
      %v2456 = vadd.f32 0.0, %v2455
      %v2457 = vpop.f32.mrb[0].mxu0
      %2458 = vmatprep.mubr.f32.mxu0 0.0
      %2459 = vmatmul.mubr.f32.gmra.mrb[0].mxu0 %v2388
      %v2460 = vpop.f32.mrb[0].mxu0
      %v2461 = vadd.f32 0.0, %v2460
      %v2462 = vpop.f32.mrb[0].mxu0
      %2463 = vdwg.mxu0
      %2464 = vmatprep.subr.mxu0 0.0
      %2465 = vmatpush1.msra.mxu0 %v2456
      %2466 = vmatprep.subr.mxu0 0.0
      %2467 = vmatpush1.msra.mxu0 %v2461
      %2468 = vmatprep.subr.mxu0 0.0
      %2469 = vmatpush1.msra.mxu0 0.0
      %2470 = vmatprep.subr.mxu0 0.0
      %2471 = vmatpush1.msra.mxu0 0.0
      %2472 = vmatprep.subr.mxu0 0.0
      %2473 = vmatpush1.msra.mxu0 0.0
      %2474 = vmatprep.subr.mxu0 0.0
      %2475 = vmatpush1.msra.mxu0 0.0
      %2476 = vmatprep.subr.mxu0 0.0
      %2477 = vmatpush1.msra.mxu0 0.0
      %2478 = vmatprep.subr.mxu0 0.0
      %2479 = vmatpush1.msra.mxu0 0.0
      %2480 = vmatprep.subr.mxu0 0.0
      %2481 = vmatpush1.msra.mxu0 0.0
      %2482 = vmatprep.subr.mxu0 0.0
      %2483 = vmatpush1.msra.mxu0 0.0
      %2484 = vmatprep.subr.mxu0 0.0
      %2485 = vmatpush1.msra.mxu0 0.0
      %2486 = vmatprep.subr.mxu0 0.0
      %2487 = vmatpush1.msra.mxu0 0.0
      %2488 = vmatprep.subr.mxu0 0.0
      %2489 = vmatpush1.msra.mxu0 0.0
      %2490 = vmatprep.subr.mxu0 0.0
      %2491 = vmatpush1.msra.mxu0 0.0
      %2492 = vmatprep.subr.mxu0 0.0
      %2493 = vmatpush1.msra.mxu0 0.0
      %2494 = vmatprep.subr.mxu0 0.0
      %2495 = vmatpush1.msra.mxu0 0.0
      %2496 = vmatprep.subr.mxu0 0.0
      %2497 = vmatpush1.msra.mxu0 0.0
      %2498 = vmatprep.subr.mxu0 0.0
      %2499 = vmatpush1.msra.mxu0 0.0
      %2500 = vmatprep.subr.mxu0 0.0
      %2501 = vmatpush1.msra.mxu0 0.0
      %2502 = vmatprep.subr.mxu0 0.0
      %2503 = vmatpush1.msra.mxu0 0.0
      %2504 = vmatprep.subr.mxu0 0.0
      %2505 = vmatpush1.msra.mxu0 0.0
      %2506 = vmatprep.subr.mxu0 0.0
      %2507 = vmatpush1.msra.mxu0 0.0
      %2508 = vmatprep.subr.mxu0 0.0
      %2509 = vmatpush1.msra.mxu0 0.0
      %2510 = vmatprep.subr.mxu0 0.0
      %2511 = vmatpush1.msra.mxu0 0.0
      %2512 = vmatprep.subr.mxu0 0.0
      %2513 = vmatpush1.msra.mxu0 0.0
      %2514 = vmatprep.subr.mxu0 0.0
      %2515 = vmatpush1.msra.mxu0 0.0
      %2516 = vmatprep.subr.mxu0 0.0
      %2517 = vmatpush1.msra.mxu0 0.0
      %2518 = vmatprep.subr.mxu0 0.0
      %2519 = vmatpush1.msra.mxu0 0.0
      %2520 = vmatprep.subr.mxu0 0.0
      %2521 = vmatpush1.msra.mxu0 0.0
      %2522 = vmatprep.subr.mxu0 0.0
      %2523 = vmatpush1.msra.mxu0 0.0
      %2524 = vmatprep.subr.mxu0 0.0
      %2525 = vmatpush1.msra.mxu0 0.0
      %2526 = vmatprep.subr.mxu0 0.0
      %2527 = vmatpush1.msra.mxu0 0.0
      %2528 = vmatprep.mubr.f32.mxu0 0.0
      %2529 = vmatmul.mubr.f32.gmra.mrb[0].mxu0 %v270
      %v2530 = vpop.f32.mrb[0].mxu0
      %v2531 = vadd.f32 0.0, %v2530
      %v2532 = vpop.f32.mrb[0].mxu0
      %2533 = vmatprep.mubr.f32.mxu0 0.0
      %2534 = vmatmul.mubr.f32.gmra.mrb[0].mxu0 %v273
      %v2535 = vpop.f32.mrb[0].mxu0
      %v2536 = vadd.f32 0.0, %v2535
      %v2537 = vpop.f32.mrb[0].mxu0
      %2538 = vmatprep.mubr.f32.mxu0 0.0
      %2539 = vmatmul.mubr.f32.gmra.mrb[0].mxu0 %v276
      %v2540 = vpop.f32.mrb[0].mxu0
      %v2541 = vadd.f32 0.0, %v2540
      %v2542 = vpop.f32.mrb[0].mxu0
      %2543 = vmatprep.mubr.f32.mxu0 0.0
      %2544 = vmatmul.mubr.f32.gmra.mrb[0].mxu0 %v279
      %v2545 = vpop.f32.mrb[0].mxu0
      %v2546 = vadd.f32 0.0, %v2545
      %v2547 = vpop.f32.mrb[0].mxu0
      %2548 = vdwg.mxu0
      %s2549 = scalar_lea.vmem %s170, 416
      %2550 = vst [vmem:[%s2549] sm:$0xff] %v2531
      %2551 = vst [vmem:[%s2549 + $0x8] sm:$0xff] %v2536
      %2552 = vst [vmem:[%s2549 + $0x10] sm:$0xff] %v2541
      %2553 = vst [vmem:[%s2549 + $0x18] sm:$0xff] %v2546
      %s2554 = scalar_lea.vmem %s165, 224
      %v2555 = vld [vmem:[%s2554] sm:$0xff]
      %v2556 = vld [vmem:[%s2554 + $0x8] sm:$0xff]
      %2557 = vmatprep.subr.mxu0 0.0
      %2558 = vmatpush1.msra.mxu0 %v171
      %2559 = vmatprep.subr.mxu0 0.0
      %2560 = vmatpush1.msra.mxu0 %v172
      %2561 = vmatprep.subr.mxu0 0.0
      %2562 = vmatpush1.msra.mxu0 %v173
      %2563 = vmatprep.subr.mxu0 0.0
      %2564 = vmatpush1.msra.mxu0 %v174
      %2565 = vmatprep.subr.mxu0 0.0
      %2566 = vmatpush1.msra.mxu0 %v175
      %2567 = vmatprep.subr.mxu0 0.0
      %2568 = vmatpush1.msra.mxu0 %v176
      %2569 = vmatprep.subr.mxu0 0.0
      %2570 = vmatpush1.msra.mxu0 %v177
      %2571 = vmatprep.subr.mxu0 0.0
      %2572 = vmatpush1.msra.mxu0 %v178
      %2573 = vmatprep.subr.mxu0 0.0
      %2574 = vmatpush1.msra.mxu0 %v179
      %2575 = vmatprep.subr.mxu0 0.0
      %2576 = vmatpush1.msra.mxu0 %v180
      %2577 = vmatprep.subr.mxu0 0.0
      %2578 = vmatpush1.msra.mxu0 %v181
      %2579 = vmatprep.subr.mxu0 0.0
      %2580 = vmatpush1.msra.mxu0 %v182
      %2581 = vmatprep.subr.mxu0 0.0
      %2582 = vmatpush1.msra.mxu0 %v183
      %2583 = vmatprep.subr.mxu0 0.0
      %2584 = vmatpush1.msra.mxu0 %v184
      %2585 = vmatprep.subr.mxu0 0.0
      %2586 = vmatpush1.msra.mxu0 %v185
      %2587 = vmatprep.subr.mxu0 0.0
      %2588 = vmatpush1.msra.mxu0 %v186
      %2589 = vmatprep.subr.mxu0 0.0
      %2590 = vmatpush1.msra.mxu0 0.0
      %2591 = vmatprep.subr.mxu0 0.0
      %2592 = vmatpush1.msra.mxu0 0.0
      %2593 = vmatprep.subr.mxu0 0.0
      %2594 = vmatpush1.msra.mxu0 0.0
      %2595 = vmatprep.subr.mxu0 0.0
      %2596 = vmatpush1.msra.mxu0 0.0
      %2597 = vmatprep.subr.mxu0 0.0
      %2598 = vmatpush1.msra.mxu0 0.0
      %2599 = vmatprep.subr.mxu0 0.0
      %2600 = vmatpush1.msra.mxu0 0.0
      %2601 = vmatprep.subr.mxu0 0.0
      %2602 = vmatpush1.msra.mxu0 0.0
      %2603 = vmatprep.subr.mxu0 0.0
      %2604 = vmatpush1.msra.mxu0 0.0
      %2605 = vmatprep.subr.mxu0 0.0
      %2606 = vmatpush1.msra.mxu0 0.0
      %2607 = vmatprep.subr.mxu0 0.0
      %2608 = vmatpush1.msra.mxu0 0.0
      %2609 = vmatprep.subr.mxu0 0.0
      %2610 = vmatpush1.msra.mxu0 0.0
      %2611 = vmatprep.subr.mxu0 0.0
      %2612 = vmatpush1.msra.mxu0 0.0
      %2613 = vmatprep.subr.mxu0 0.0
      %2614 = vmatpush1.msra.mxu0 0.0
      %2615 = vmatprep.subr.mxu0 0.0
      %2616 = vmatpush1.msra.mxu0 0.0
      %2617 = vmatprep.subr.mxu0 0.0
      %2618 = vmatpush1.msra.mxu0 0.0
      %2619 = vmatprep.subr.mxu0 0.0
      %2620 = vmatpush1.msra.mxu0 0.0
      %2621 = vmatprep.mubr.f32.mxu0 0.0
      %2622 = vmatmul.mubr.f32.gmra.mrb[0].mxu0 %v2555
      %v2623 = vpop.f32.mrb[0].mxu0
      %v2624 = vadd.f32 0.0, %v2623
      %v2625 = vpop.f32.mrb[0].mxu0
      %2626 = vmatprep.mubr.f32.mxu0 0.0
      %2627 = vmatmul.mubr.f32.gmra.mrb[0].mxu0 %v2556
      %v2628 = vpop.f32.mrb[0].mxu0
      %v2629 = vadd.f32 0.0, %v2628
      %v2630 = vpop.f32.mrb[0].mxu0
      %2631 = vdwg.mxu0
      %2632 = vmatprep.subr.mxu0 0.0
      %2633 = vmatpush1.msra.mxu0 %v2624
      %2634 = vmatprep.subr.mxu0 0.0
      %2635 = vmatpush1.msra.mxu0 %v2629
      %2636 = vmatprep.subr.mxu0 0.0
      %2637 = vmatpush1.msra.mxu0 0.0
      %2638 = vmatprep.subr.mxu0 0.0
      %2639 = vmatpush1.msra.mxu0 0.0
      %2640 = vmatprep.subr.mxu0 0.0
      %2641 = vmatpush1.msra.mxu0 0.0
      %2642 = vmatprep.subr.mxu0 0.0
      %2643 = vmatpush1.msra.mxu0 0.0
      %2644 = vmatprep.subr.mxu0 0.0
      %2645 = vmatpush1.msra.mxu0 0.0
      %2646 = vmatprep.subr.mxu0 0.0
      %2647 = vmatpush1.msra.mxu0 0.0
      %2648 = vmatprep.subr.mxu0 0.0
      %2649 = vmatpush1.msra.mxu0 0.0
      %2650 = vmatprep.subr.mxu0 0.0
      %2651 = vmatpush1.msra.mxu0 0.0
      %2652 = vmatprep.subr.mxu0 0.0
      %2653 = vmatpush1.msra.mxu0 0.0
      %2654 = vmatprep.subr.mxu0 0.0
      %2655 = vmatpush1.msra.mxu0 0.0
      %2656 = vmatprep.subr.mxu0 0.0
      %2657 = vmatpush1.msra.mxu0 0.0
      %2658 = vmatprep.subr.mxu0 0.0
      %2659 = vmatpush1.msra.mxu0 0.0
      %2660 = vmatprep.subr.mxu0 0.0
      %2661 = vmatpush1.msra.mxu0 0.0
      %2662 = vmatprep.subr.mxu0 0.0
      %2663 = vmatpush1.msra.mxu0 0.0
      %2664 = vmatprep.subr.mxu0 0.0
      %2665 = vmatpush1.msra.mxu0 0.0
      %2666 = vmatprep.subr.mxu0 0.0
      %2667 = vmatpush1.msra.mxu0 0.0
      %2668 = vmatprep.subr.mxu0 0.0
      %2669 = vmatpush1.msra.mxu0 0.0
      %2670 = vmatprep.subr.mxu0 0.0
      %2671 = vmatpush1.msra.mxu0 0.0
      %2672 = vmatprep.subr.mxu0 0.0
      %2673 = vmatpush1.msra.mxu0 0.0
      %2674 = vmatprep.subr.mxu0 0.0
      %2675 = vmatpush1.msra.mxu0 0.0
      %2676 = vmatprep.subr.mxu0 0.0
      %2677 = vmatpush1.msra.mxu0 0.0
      %2678 = vmatprep.subr.mxu0 0.0
      %2679 = vmatpush1.msra.mxu0 0.0
      %2680 = vmatprep.subr.mxu0 0.0
      %2681 = vmatpush1.msra.mxu0 0.0
      %2682 = vmatprep.subr.mxu0 0.0
      %2683 = vmatpush1.msra.mxu0 0.0
      %2684 = vmatprep.subr.mxu0 0.0
      %2685 = vmatpush1.msra.mxu0 0.0
      %2686 = vmatprep.subr.mxu0 0.0
      %2687 = vmatpush1.msra.mxu0 0.0
      %2688 = vmatprep.subr.mxu0 0.0
      %2689 = vmatpush1.msra.mxu0 0.0
      %2690 = vmatprep.subr.mxu0 0.0
      %2691 = vmatpush1.msra.mxu0 0.0
      %2692 = vmatprep.subr.mxu0 0.0
      %2693 = vmatpush1.msra.mxu0 0.0
      %2694 = vmatprep.subr.mxu0 0.0
      %2695 = vmatpush1.msra.mxu0 0.0
      %2696 = vmatprep.mubr.f32.mxu0 0.0
      %2697 = vmatmul.mubr.f32.gmra.mrb[0].mxu0 %v270
      %v2698 = vpop.f32.mrb[0].mxu0
      %v2699 = vadd.f32 0.0, %v2698
      %v2700 = vpop.f32.mrb[0].mxu0
      %2701 = vmatprep.mubr.f32.mxu0 0.0
      %2702 = vmatmul.mubr.f32.gmra.mrb[0].mxu0 %v273
      %v2703 = vpop.f32.mrb[0].mxu0
      %v2704 = vadd.f32 0.0, %v2703
      %v2705 = vpop.f32.mrb[0].mxu0
      %2706 = vmatprep.mubr.f32.mxu0 0.0
      %2707 = vmatmul.mubr.f32.gmra.mrb[0].mxu0 %v276
      %v2708 = vpop.f32.mrb[0].mxu0
      %v2709 = vadd.f32 0.0, %v2708
      %v2710 = vpop.f32.mrb[0].mxu0
      %2711 = vmatprep.mubr.f32.mxu0 0.0
      %2712 = vmatmul.mubr.f32.gmra.mrb[0].mxu0 %v279
      %v2713 = vpop.f32.mrb[0].mxu0
      %v2714 = vadd.f32 0.0, %v2713
      %v2715 = vpop.f32.mrb[0].mxu0
      %2716 = vdwg.mxu0
      %s2717 = scalar_lea.vmem %s170, 448
      %2718 = vst [vmem:[%s2717] sm:$0xff] %v2699
      %2719 = vst [vmem:[%s2717 + $0x8] sm:$0xff] %v2704
      %2720 = vst [vmem:[%s2717 + $0x10] sm:$0xff] %v2709
      %2721 = vst [vmem:[%s2717 + $0x18] sm:$0xff] %v2714
      %s2722 = scalar_lea.vmem %s165, 240
      %v2723 = vld [vmem:[%s2722] sm:$0xff]
      %v2724 = vld [vmem:[%s2722 + $0x8] sm:$0xff]
      %2725 = vmatprep.subr.mxu0 0.0
      %2726 = vmatpush1.msra.mxu0 %v171
      %2727 = vmatprep.subr.mxu0 0.0
      %2728 = vmatpush1.msra.mxu0 %v172
      %2729 = vmatprep.subr.mxu0 0.0
      %2730 = vmatpush1.msra.mxu0 %v173
      %2731 = vmatprep.subr.mxu0 0.0
      %2732 = vmatpush1.msra.mxu0 %v174
      %2733 = vmatprep.subr.mxu0 0.0
      %2734 = vmatpush1.msra.mxu0 %v175
      %2735 = vmatprep.subr.mxu0 0.0
      %2736 = vmatpush1.msra.mxu0 %v176
      %2737 = vmatprep.subr.mxu0 0.0
      %2738 = vmatpush1.msra.mxu0 %v177
      %2739 = vmatprep.subr.mxu0 0.0
      %2740 = vmatpush1.msra.mxu0 %v178
      %2741 = vmatprep.subr.mxu0 0.0
      %2742 = vmatpush1.msra.mxu0 %v179
      %2743 = vmatprep.subr.mxu0 0.0
      %2744 = vmatpush1.msra.mxu0 %v180
      %2745 = vmatprep.subr.mxu0 0.0
      %2746 = vmatpush1.msra.mxu0 %v181
      %2747 = vmatprep.subr.mxu0 0.0
      %2748 = vmatpush1.msra.mxu0 %v182
      %2749 = vmatprep.subr.mxu0 0.0
      %2750 = vmatpush1.msra.mxu0 %v183
      %2751 = vmatprep.subr.mxu0 0.0
      %2752 = vmatpush1.msra.mxu0 %v184
      %2753 = vmatprep.subr.mxu0 0.0
      %2754 = vmatpush1.msra.mxu0 %v185
      %2755 = vmatprep.subr.mxu0 0.0
      %2756 = vmatpush1.msra.mxu0 %v186
      %2757 = vmatprep.subr.mxu0 0.0
      %2758 = vmatpush1.msra.mxu0 0.0
      %2759 = vmatprep.subr.mxu0 0.0
      %2760 = vmatpush1.msra.mxu0 0.0
      %2761 = vmatprep.subr.mxu0 0.0
      %2762 = vmatpush1.msra.mxu0 0.0
      %2763 = vmatprep.subr.mxu0 0.0
      %2764 = vmatpush1.msra.mxu0 0.0
      %2765 = vmatprep.subr.mxu0 0.0
      %2766 = vmatpush1.msra.mxu0 0.0
      %2767 = vmatprep.subr.mxu0 0.0
      %2768 = vmatpush1.msra.mxu0 0.0
      %2769 = vmatprep.subr.mxu0 0.0
      %2770 = vmatpush1.msra.mxu0 0.0
      %2771 = vmatprep.subr.mxu0 0.0
      %2772 = vmatpush1.msra.mxu0 0.0
      %2773 = vmatprep.subr.mxu0 0.0
      %2774 = vmatpush1.msra.mxu0 0.0
      %2775 = vmatprep.subr.mxu0 0.0
      %2776 = vmatpush1.msra.mxu0 0.0
      %2777 = vmatprep.subr.mxu0 0.0
      %2778 = vmatpush1.msra.mxu0 0.0
      %2779 = vmatprep.subr.mxu0 0.0
      %2780 = vmatpush1.msra.mxu0 0.0
      %2781 = vmatprep.subr.mxu0 0.0
      %2782 = vmatpush1.msra.mxu0 0.0
      %2783 = vmatprep.subr.mxu0 0.0
      %2784 = vmatpush1.msra.mxu0 0.0
      %2785 = vmatprep.subr.mxu0 0.0
      %2786 = vmatpush1.msra.mxu0 0.0
      %2787 = vmatprep.subr.mxu0 0.0
      %2788 = vmatpush1.msra.mxu0 0.0
      %2789 = vmatprep.mubr.f32.mxu0 0.0
      %2790 = vmatmul.mubr.f32.gmra.mrb[0].mxu0 %v2723
      %v2791 = vpop.f32.mrb[0].mxu0
      %v2792 = vadd.f32 0.0, %v2791
      %v2793 = vpop.f32.mrb[0].mxu0
      %2794 = vmatprep.mubr.f32.mxu0 0.0
      %2795 = vmatmul.mubr.f32.gmra.mrb[0].mxu0 %v2724
      %v2796 = vpop.f32.mrb[0].mxu0
      %v2797 = vadd.f32 0.0, %v2796
      %v2798 = vpop.f32.mrb[0].mxu0
      %2799 = vdwg.mxu0
      %2800 = vmatprep.subr.mxu0 0.0
      %2801 = vmatpush1.msra.mxu0 %v2792
      %2802 = vmatprep.subr.mxu0 0.0
      %2803 = vmatpush1.msra.mxu0 %v2797
      %2804 = vmatprep.subr.mxu0 0.0
      %2805 = vmatpush1.msra.mxu0 0.0
      %2806 = vmatprep.subr.mxu0 0.0
      %2807 = vmatpush1.msra.mxu0 0.0
      %2808 = vmatprep.subr.mxu0 0.0
      %2809 = vmatpush1.msra.mxu0 0.0
      %2810 = vmatprep.subr.mxu0 0.0
      %2811 = vmatpush1.msra.mxu0 0.0
      %2812 = vmatprep.subr.mxu0 0.0
      %2813 = vmatpush1.msra.mxu0 0.0
      %2814 = vmatprep.subr.mxu0 0.0
      %2815 = vmatpush1.msra.mxu0 0.0
      %2816 = vmatprep.subr.mxu0 0.0
      %2817 = vmatpush1.msra.mxu0 0.0
      %2818 = vmatprep.subr.mxu0 0.0
      %2819 = vmatpush1.msra.mxu0 0.0
      %2820 = vmatprep.subr.mxu0 0.0
      %2821 = vmatpush1.msra.mxu0 0.0
      %2822 = vmatprep.subr.mxu0 0.0
      %2823 = vmatpush1.msra.mxu0 0.0
      %2824 = vmatprep.subr.mxu0 0.0
      %2825 = vmatpush1.msra.mxu0 0.0
      %2826 = vmatprep.subr.mxu0 0.0
      %2827 = vmatpush1.msra.mxu0 0.0
      %2828 = vmatprep.subr.mxu0 0.0
      %2829 = vmatpush1.msra.mxu0 0.0
      %2830 = vmatprep.subr.mxu0 0.0
      %2831 = vmatpush1.msra.mxu0 0.0
      %2832 = vmatprep.subr.mxu0 0.0
      %2833 = vmatpush1.msra.mxu0 0.0
      %2834 = vmatprep.subr.mxu0 0.0
      %2835 = vmatpush1.msra.mxu0 0.0
      %2836 = vmatprep.subr.mxu0 0.0
      %2837 = vmatpush1.msra.mxu0 0.0
      %2838 = vmatprep.subr.mxu0 0.0
      %2839 = vmatpush1.msra.mxu0 0.0
      %2840 = vmatprep.subr.mxu0 0.0
      %2841 = vmatpush1.msra.mxu0 0.0
      %2842 = vmatprep.subr.mxu0 0.0
      %2843 = vmatpush1.msra.mxu0 0.0
      %2844 = vmatprep.subr.mxu0 0.0
      %2845 = vmatpush1.msra.mxu0 0.0
      %2846 = vmatprep.subr.mxu0 0.0
      %2847 = vmatpush1.msra.mxu0 0.0
      %2848 = vmatprep.subr.mxu0 0.0
      %2849 = vmatpush1.msra.mxu0 0.0
      %2850 = vmatprep.subr.mxu0 0.0
      %2851 = vmatpush1.msra.mxu0 0.0
      %2852 = vmatprep.subr.mxu0 0.0
      %2853 = vmatpush1.msra.mxu0 0.0
      %2854 = vmatprep.subr.mxu0 0.0
      %2855 = vmatpush1.msra.mxu0 0.0
      %2856 = vmatprep.subr.mxu0 0.0
      %2857 = vmatpush1.msra.mxu0 0.0
      %2858 = vmatprep.subr.mxu0 0.0
      %2859 = vmatpush1.msra.mxu0 0.0
      %2860 = vmatprep.subr.mxu0 0.0
      %2861 = vmatpush1.msra.mxu0 0.0
      %2862 = vmatprep.subr.mxu0 0.0
      %2863 = vmatpush1.msra.mxu0 0.0
      %2864 = vmatprep.mubr.f32.mxu0 0.0
      %2865 = vmatmul.mubr.f32.gmra.mrb[0].mxu0 %v270
      %v2866 = vpop.f32.mrb[0].mxu0
      %v2867 = vadd.f32 0.0, %v2866
      %v2868 = vpop.f32.mrb[0].mxu0
      %2869 = vmatprep.mubr.f32.mxu0 0.0
      %2870 = vmatmul.mubr.f32.gmra.mrb[0].mxu0 %v273
      %v2871 = vpop.f32.mrb[0].mxu0
      %v2872 = vadd.f32 0.0, %v2871
      %v2873 = vpop.f32.mrb[0].mxu0
      %2874 = vmatprep.mubr.f32.mxu0 0.0
      %2875 = vmatmul.mubr.f32.gmra.mrb[0].mxu0 %v276
      %v2876 = vpop.f32.mrb[0].mxu0
      %v2877 = vadd.f32 0.0, %v2876
      %v2878 = vpop.f32.mrb[0].mxu0
      %2879 = vmatprep.mubr.f32.mxu0 0.0
      %2880 = vmatmul.mubr.f32.gmra.mrb[0].mxu0 %v279
      %v2881 = vpop.f32.mrb[0].mxu0
      %v2882 = vadd.f32 0.0, %v2881
      %v2883 = vpop.f32.mrb[0].mxu0
      %2884 = vdwg.mxu0
      %s2885 = scalar_lea.vmem %s170, 480
      %2886 = vst [vmem:[%s2885] sm:$0xff] %v2867
      %2887 = vst [vmem:[%s2885 + $0x8] sm:$0xff] %v2872
      %2888 = vst [vmem:[%s2885 + $0x10] sm:$0xff] %v2877
      %2889 = vst [vmem:[%s2885 + $0x18] sm:$0xff] %v2882
      %p2890 = scmp.lt.s32.totalorder %s14, 1
      %s2891 = scalar_select %p2890, %s14, 1
      %s2892 = smul.addr %s2891, 64
      %s2893 = smul.addr %s2892, 8
      %s2894 = scalar_lea.vmem %s3, %s2893
      // Predicated region
      $region33: #{pspool_forward.11} parent=31 // pred_check
        %p2895 = pneg %p100
      $region34: #{pspool_forward.11} parent=31 // pred_check_branch
        %2897 = sbr.rel (%p2895) target = $region36
      $region35: #{pspool_forward.11} parent=31 // pred_region
        _
      $region36: #{pspool_forward.11} parent=31 // pred_fallthru
        _
    $region32: #{pspool_forward.11} parent=5 // pred_fallthru
      _
    %p2898 = scmp.le.s32.totalorder 2, %s9
    // Predicated region
    $region37: #{pspool_forward.11} parent=5 // pred_check
      %p2899 = pneg %p2898
    $region38: #{pspool_forward.11} parent=5 // pred_check_branch
      %2901 = sbr.rel (%p2899) target = $region40
    $region39: #{pspool_forward.11} parent=5 // pred_region
      %s2902 = ssub.s32 %s9, 2
      // Predicated region
      $region41: #{pspool_forward.11} parent=39 // pred_check
        %p2903 = pneg %p106
      $region42: #{pspool_forward.11} parent=39 // pred_check_branch
        %2905 = sbr.rel (%p2903) target = $region44
      $region43: #{pspool_forward.11} parent=39 // pred_region
        %p2906 = scmp.lt.s32.totalorder %s15, 1
        %s2907 = scalar_select %p2906, %s15, 1
        %s2908 = smul.addr %s2907, 64
        %s2909 = smul.addr %s2908, 8
        %s2910 = scalar_lea.vmem %s3, %s2909
      $region44: #{pspool_forward.11} parent=39 // pred_fallthru
        _
    $region40: #{pspool_forward.11} parent=5 // pred_fallthru
      _
  $region6: #{pspool_forward.11} parent=0 // loop_footer
    %s13 = sadd.s32 1, %s9
  $region7: #{pspool_forward.11} parent=0 // loop_footer_branch
    %8 = sbr.rel target = $region3
  $region8: #{pspool_forward.11} parent=0 // loop_exit
    _

// kernel: pspool_forward.15
$region0: #{pspool_forward.15}
  #allocation0 [shape = 'u32[]', space=smem, size = 0x4, offset = 0x4, fixed_abs, tag = 'smem constant byte address 0x4 - core index']
  #allocation1 [shape = 'u32[144,128]{1,0:T(1,128)}', space=vmem, size = 0x12000, scoped, tag = 'internal scratch']
  %s0 = inlined_call_operand.vmem [shape: f32[2,16,16,256], index: 0, kind: input, shape index: {}]
  %s1 = inlined_call_operand.hbm [shape: f32[2,16,16,128], index: 1, kind: output, shape index: {}]
  %s2 = sld [smem:[#allocation0]]
  $region37: #{pspool_forward.15} parent=0
    _
  %s4 = ssub.s32 1, %s2
  %s5 = scalar_select 0, %s4, %s2
  $region1: #{pspool_forward.15} parent=0
    #allocation2 [shape = 'u8[65536]{0}', space=vmem, size = 0x10000, scoped, tag = 'output window, operand 0']
    #allocation3 [shape = 's32[2]{0}', space=sflag, size = 0x8, scoped, tag = 'scoped memory for pspool_forward.15']
    %6 = vsyncpa [#allocation3], 0
    %s7 = scalar_lea.sflag [#allocation3], 1
    %8 = vsyncpa %s7, 0
    loop: start=0, step=1, limit=10
    $region2: #{pspool_forward.15} parent=1 // loop_pre_header
      _
    $region3: #{pspool_forward.15} parent=1 // loop_header
      %s10 = sphi 0, %s14
      %p11 = scmp.ge.s32.totalorder %s10, 10
      %s17 = sphi 0, %s29
      %s18 = sphi 0, %s25
      %s19 = sphi 0, %s17
      %s20 = sphi 0, %s18
      %s21 = sphi 0, %s19
      %s22 = sphi 0, %s20
      %s34 = sphi 0, %s36
      %s37 = sphi 0, %s34
      %s38 = sphi 0, %s37
      %s54 = sphi 0, %s38
      %s62 = sphi 0, %s64
      %s65 = sphi 0, %s62
      %s66 = sphi 0, %s65
      %s82 = sphi 0, %s66
    $region4: #{pspool_forward.15} parent=1 // loop_header_branch
      %13 = sbr.rel (%p11) target = $region8
    $region5: #{pspool_forward.15} parent=1 // loop_body
      %s15 = ssub.s32 %s10, 1
      %s16 = ssub.s32 %s10, 2
      %s23 = sadd.s32 1, %s18
      %p24 = scmp.ge.s32.totalorder %s23, 4
      %s25 = scalar_select %p24, 0, %s23
      %s26 = sadd.s32 1, %s17
      %s27 = scalar_select %p24, %s26, %s17
      %p28 = scmp.ge.s32.totalorder %s27, 2
      %s29 = scalar_select %p28, 0, %s27
      %s30 = ssub.s32 %s17, %s29
      %s31 = ssub.s32 %s18, %s25
      %s32 = sor.u32 %s30, %s31
      %p33 = scmp.eq.s32.totalorder %s32, 0
      %s35 = sadd.s32 %s34, 1
      %s36 = scalar_select %p33, %s34, %s35
      %p39 = pneg %p33
      %p40 = scmp.eq.s32.totalorder %s10, 7
      %p41 = por %p39, %p40
      %p42 = scmp.ne.s32.totalorder %s34, %s37
      %p43 = scmp.eq.s32.totalorder %s10, 0
      %p44 = por %p42, %p43
      %p45 = scmp.ne.s32.totalorder %s34, %s37
      %p46 = scmp.eq.s32.totalorder %s15, 7
      %p47 = por %p45, %p46
      %p48 = scmp.ne.s32.totalorder %s37, %s38
      %p49 = scmp.eq.s32.totalorder %s15, 0
      %p50 = por %p48, %p49
      %p51 = scmp.ne.s32.totalorder %s37, %s38
      %p52 = scmp.eq.s32.totalorder %s16, 7
      %p53 = por %p51, %p52
      %p55 = scmp.ne.s32.totalorder %s38, %s54
      %p56 = scmp.eq.s32.totalorder %s16, 0
      %p57 = por %p55, %p56
      %s58 = ssub.s32 %s17, %s29
      %s59 = ssub.s32 %s18, %s25
      %s60 = sor.u32 %s58, %s59
      %p61 = scmp.eq.s32.totalorder %s60, 0
      %s63 = sadd.s32 %s62, 1
      %s64 = scalar_select %p61, %s62, %s63
      %p67 = pneg %p61
      %p68 = scmp.eq.s32.totalorder %s10, 7
      %p69 = por %p67, %p68
      %p70 = scmp.ne.s32.totalorder %s62, %s65
      %p71 = scmp.eq.s32.totalorder %s10, 0
      %p72 = por %p70, %p71
      %p73 = scmp.ne.s32.totalorder %s62, %s65
      %p74 = scmp.eq.s32.totalorder %s15, 7
      %p75 = por %p73, %p74
      %p76 = scmp.ne.s32.totalorder %s65, %s66
      %p77 = scmp.eq.s32.totalorder %s15, 0
      %p78 = por %p76, %p77
      %p79 = scmp.ne.s32.totalorder %s65, %s66
      %p80 = scmp.eq.s32.totalorder %s16, 7
      %p81 = por %p79, %p80
      %p83 = scmp.ne.s32.totalorder %s66, %s82
      %p84 = scmp.eq.s32.totalorder %s16, 0
      %p85 = por %p83, %p84
      %p86 = scmp.le.s32.totalorder 1, %s10
      %p87 = scmp.lt.s32.totalorder %s10, 9
      %p88 = pnand %p86, %p87
      %p89 = pneg %p88
      // Predicated region
      $region9: #{pspool_forward.15} parent=5 // pred_check
        _
      $region10: #{pspool_forward.15} parent=5 // pred_check_branch
        %91 = sbr.rel (%p88) target = $region12
      $region11: #{pspool_forward.15} parent=5 // pred_region
        %s92 = ssub.s32 %s10, 1
      $region12: #{pspool_forward.15} parent=5 // pred_fallthru
        _
      %p93 = scmp.lt.s32.totalorder %s10, 8
      // Predicated region
      $region13: #{pspool_forward.15} parent=5 // pred_check
        %p94 = pneg %p93
      $region14: #{pspool_forward.15} parent=5 // pred_check_branch
        %96 = sbr.rel (%p94) target = $region16
      $region15: #{pspool_forward.15} parent=5 // pred_region
        // Predicated region
        $region17: #{pspool_forward.15} parent=15 // pred_check
          %p97 = pneg %p44
        $region18: #{pspool_forward.15} parent=15 // pred_check_branch
          %99 = sbr.rel (%p97) target = $region20
        $region19: #{pspool_forward.15} parent=15 // pred_region
          %s100 = smul.u32 4, %s18
          %p101 = scmp.lt.s32.totalorder %s17, 1
          %s102 = scalar_select %p101, %s17, 1
          %p103 = scmp.lt.s32.totalorder %s100, 15
          %s104 = scalar_select %p103, %s100, 15
          %s105 = smul.addr %s104, 4
          %s106 = smul.addr %s102, 64
          %s107 = sadd.s32 %s105, %s106
          %s108 = smul.addr %s107, 8
          %s109 = scalar_lea.vmem %s0, %s108
          %s110 = smul.u32 4, %s18
        $region20: #{pspool_forward.15} parent=15 // pred_fallthru
          _
      $region16: #{pspool_forward.15} parent=5 // pred_fallthru
        _
      %p111 = scmp.le.s32.totalorder 1, %s10
      %p112 = scmp.lt.s32.totalorder %s10, 9
      %p113 = pnand %p111, %p112
      %p114 = pneg %p113
      // Predicated region
      $region21: #{pspool_forward.15} parent=5 // pred_check
        _
      $region22: #{pspool_forward.15} parent=5 // pred_check_branch
        %116 = sbr.rel (%p113) target = $region24
      $region23: #{pspool_forward.15} parent=5 // pred_region
        %s117 = ssub.s32 %s10, 1
        %s118 = smul.u32 4, %s20
        %p119 = scmp.lt.s32.totalorder %s19, 1
        %s120 = scalar_select %p119, %s19, 1
        %p121 = scmp.lt.s32.totalorder %s118, 15
        %s122 = scalar_select %p121, %s118, 15
        %s123 = smul.addr %s122, 4
        %s124 = smul.addr %s120, 64
        %s125 = sadd.s32 %s123, %s124
        %s126 = smul.addr %s125, 8
        %s127 = scalar_lea.vmem %s0, %s126
        %p128 = pneg %p50
        %p129 = pneg %p47
        %p130 = pneg %p78
        %p131 = pneg %p75
        %s132 = sand.u32 %s65, 1
        %s133 = scalar_lea.sflag [#allocation3], %s132
        %s134 = sand.u32 %s65, 1
        %s135 = smul.addr %s134, 64
        %s136 = scalar_lea.vmem [#allocation2], %s135
        %s137 = smul.u32 4, %s20
        %p138 = scmp.lt.s32.totalorder %s19, 1
        %s139 = scalar_select %p138, %s19, 1
        %p140 = scmp.lt.s32.totalorder %s137, 15
        %s141 = scalar_select %p140, %s137, 15
        %s142 = smul.addr %s141, 4
        %s143 = smul.addr %s139, 64
        %s144 = sadd.s32 %s142, %s143
        %s145 = smul.addr %s144, 8
        %s146 = scalar_lea.vmem %s0, %s145
        %s147 = smul.u32 4, %s20
        %s148 = smul.u32 4, %s20
        %v149 = vld [vmem:[%s146] sm:$0xff]
        %v150 = vld [vmem:[%s146 + $0x8] sm:$0xff]
        %v151 = vld [vmem:[%s146 + $0x10] sm:$0xff]
        %v152 = vld [vmem:[%s146 + $0x18] sm:$0xff]
        %v153 = vld [vmem:[%s146 + $0x20] sm:$0xff]
        %v154 = vld [vmem:[%s146 + $0x28] sm:$0xff]
        %v155 = vld [vmem:[%s146 + $0x30] sm:$0xff]
        %v156 = vld [vmem:[%s146 + $0x38] sm:$0xff]
        %v157 = vld [vmem:[%s146 + $0x40] sm:$0xff]
        %v158 = vld [vmem:[%s146 + $0x48] sm:$0xff]
        %v159 = vld [vmem:[%s146 + $0x50] sm:$0xff]
        %v160 = vld [vmem:[%s146 + $0x58] sm:$0xff]
        %v161 = vld [vmem:[%s146 + $0x60] sm:$0xff]
        %v162 = vld [vmem:[%s146 + $0x68] sm:$0xff]
        %v163 = vld [vmem:[%s146 + $0x70] sm:$0xff]
        %v164 = vld [vmem:[%s146 + $0x78] sm:$0xff]
        %v165 = vmax.f32 %v149, %v150
        %v166 = vmax.f32 %v151, %v152
        %v167 = vmax.f32 %v153, %v154
        %v168 = vmax.f32 %v155, %v156
        %v169 = vmax.f32 %v157, %v158
        %v170 = vmax.f32 %v159, %v160
        %v171 = vmax.f32 %v161, %v162
        %v172 = vmax.f32 %v163, %v164
        %173 = vst [vmem:[%s136] sm:$0xff] %v165
        %174 = vst [vmem:[%s136 + $0x8] sm:$0xff] %v166
        %175 = vst [vmem:[%s136 + $0x10] sm:$0xff] %v167
        %176 = vst [vmem:[%s136 + $0x18] sm:$0xff] %v168
        %177 = vst [vmem:[%s136 + $0x20] sm:$0xff] %v169
        %178 = vst [vmem:[%s136 + $0x28] sm:$0xff] %v170
        %179 = vst [vmem:[%s136 + $0x30] sm:$0xff] %v171
        %180 = vst [vmem:[%s136 + $0x38] sm:$0xff] %v172
        %s181 = sand.u32 %s65, 1
        %s182 = scalar_lea.sflag [#allocation3], %s181
        %s183 = sand.u32 %s65, 1
        %s184 = smul.addr %s183, 64
        %s185 = scalar_lea.vmem [#allocation2], %s184
        // Predicated region
        $region25: #{pspool_forward.15} parent=23 // pred_check
          %p186 = pneg %p75
        $region26: #{pspool_forward.15} parent=23 // pred_check_branch
          %188 = sbr.rel (%p186) target = $region28
        $region27: #{pspool_forward.15} parent=23 // pred_region
          %s189 = smul.u32 4, %s20
          %s191 = ssub.s32 1024, 1024
          %192 = vsyncadd %s182, %s191
          %s193 = smul.addr %s189, 2
          %s194 = smul.addr %s19, 32
          %s195 = sadd.s32 %s193, %s194
          %s196 = smul.addr %s195, 128
          %s197 = scalar_lea.hbm %s1, %s196
          %s198 = sshll.u32 %s185, 4
          %s199 = int_to_ptr.vmem [resolvable:$true] %s198
          %204 = dma.vmem_to_hbm [thread:$0]  %s199, 1024, %s197, %s182, 128, 128, 8
        $region28: #{pspool_forward.15} parent=23 // pred_fallthru
          _
      $region24: #{pspool_forward.15} parent=5 // pred_fallthru
        _
      %p205 = scmp.le.s32.totalorder 2, %s10
      // Predicated region
      $region29: #{pspool_forward.15} parent=5 // pred_check
        %p206 = pneg %p205
      $region30: #{pspool_forward.15} parent=5 // pred_check_branch
        %208 = sbr.rel (%p206) target = $region32
      $region31: #{pspool_forward.15} parent=5 // pred_region
        %s209 = ssub.s32 %s10, 2
        // Predicated region
        $region33: #{pspool_forward.15} parent=31 // pred_check
          %p210 = pneg %p81
        $region34: #{pspool_forward.15} parent=31 // pred_check_branch
          %212 = sbr.rel (%p210) target = $region36
        $region35: #{pspool_forward.15} parent=31 // pred_region
          %s213 = sand.u32 %s66, 1
          %s214 = scalar_lea.sflag [#allocation3], %s213
          %s215 = sand.u32 %s66, 1
          %s216 = smul.addr %s215, 64
          %s217 = scalar_lea.vmem [#allocation2], %s216
          %218 = dma.done %s214, 1024
        $region36: #{pspool_forward.15} parent=31 // pred_fallthru
          _
      $region32: #{pspool_forward.15} parent=5 // pred_fallthru
        _
    $region6: #{pspool_forward.15} parent=1 // loop_footer
      %s14 = sadd.s32 1, %s10
    $region7: #{pspool_forward.15} parent=1 // loop_footer_branch
      %9 = sbr.rel target = $region3
    $region8: #{pspool_forward.15} parent=1 // loop_exit
      _
    %219 = vsyncpa [#allocation3], 1
    %s220 = scalar_lea.sflag [#allocation3], 1
    %221 = vsyncpa %s220, 1

// kernel: pspool_forward.14
$region0: #{pspool_forward.14}
  #allocation0 [shape = 'u32[]', space=smem, size = 0x4, offset = 0x4, fixed_abs, tag = 'smem constant byte address 0x4 - core index']
  #allocation1 [shape = 'u32[144,128]{1,0:T(1,128)}', space=vmem, size = 0x12000, scoped, tag = 'internal scratch']
  %s0 = inlined_call_operand.vmem [shape: s32[192], index: 0, kind: input, shape index: {}]
  %s1 = inlined_call_operand.vmem [shape: f32[192], index: 1, kind: input, shape index: {}]
  %s2 = inlined_call_operand.vmem [shape: f32[2,32,32,128], index: 2, kind: input, shape index: {}]
  %s3 = inlined_call_operand.vmem [shape: f32[2,16,32,128], index: 3, kind: input, shape index: {}]
  %s4 = inlined_call_operand.vmem [shape: f32[2,8,32,128], index: 4, kind: input, shape index: {}]
  %s5 = inlined_call_operand.vmem [shape: f32[2,4,32,128], index: 5, kind: input, shape index: {}]
  %s6 = inlined_call_operand.vmem [shape: f32[128,128], index: 6, kind: input, shape index: {}]
  %s7 = inlined_call_operand.vmem [shape: f32[1,128], index: 7, kind: input, shape index: {}]
  %s8 = inlined_call_operand.vmem [shape: f32[2,16,32,128], index: 8, kind: output, shape index: {}]
  %s9 = sld [smem:[#allocation0]]
  $region73: #{pspool_forward.14} parent=0
    _
  %s11 = ssub.s32 1, %s9
  %s12 = scalar_select 0, %s11, %s9
  $region1: #{pspool_forward.14} parent=0
    #allocation2 [shape = 'u8[1024]{0}', space=smem, size = 0x400, scoped, tag = 'input window, operand 0, single buffered']
    #allocation3 [shape = 's32[2]{0}', space=sflag, size = 0x8, scoped, tag = 'scoped memory for pspool_forward.14']
    #allocation4 [shape = 'u8[1024]{0}', space=smem, size = 0x400, scoped, tag = 'input window, operand 1, single buffered']
    #allocation5 [shape = 's32[1]{0}', space=sflag, size = 0x4, scoped, tag = 'scoped memory for pspool_forward.14']
    %13 = vsyncpa [#allocation3], 0
    %14 = vsyncpa [#allocation5], 0
    loop: start=0, step=1, limit=10
    $region2: #{pspool_forward.14} parent=1 // loop_pre_header
      _
    $region3: #{pspool_forward.14} parent=1 // loop_header
      %s16 = sphi 0, %s20
      %p17 = scmp.ge.s32.totalorder %s16, 10
      %s23 = sphi 0, %s35
      %s24 = sphi 0, %s31
      %s25 = sphi 0, %s23
      %s26 = sphi 0, %s24
      %s27 = sphi 0, %s25
      %s28 = sphi 0, %s26
      %s36 = sphi 0, %s36
      %s38 = sphi 0, %s36
      %s39 = sphi 0, %s38
      %s53 = sphi 0, %s39
      %s57 = sphi 0, %s57
      %s59 = sphi 0, %s57
      %s60 = sphi 0, %s59
      %s74 = sphi 0, %s60
      %s82 = sphi 0, %s84
      %s85 = sphi 0, %s82
      %s86 = sphi 0, %s85
      %s102 = sphi 0, %s86
      %s108 = sphi 0, %s110
      %s111 = sphi 0, %s108
      %s112 = sphi 0, %s111
      %s128 = sphi 0, %s112
      %s134 = sphi 0, %s136
      %s137 = sphi 0, %s134
      %s138 = sphi 0, %s137
      %s154 = sphi 0, %s138
      %s160 = sphi 0, %s162
      %s163 = sphi 0, %s160
      %s164 = sphi 0, %s163
      %s180 = sphi 0, %s164
      %s184 = sphi 0, %s184
      %s186 = sphi 0, %s184
      %s187 = sphi 0, %s186
      %s201 = sphi 0, %s187
      %s205 = sphi 0, %s205
      %s207 = sphi 0, %s205
      %s208 = sphi 0, %s207
      %s222 = sphi 0, %s208
      %s230 = sphi 0, %s232
      %s233 = sphi 0, %s230
      %s234 = sphi 0, %s233
      %s250 = sphi 0, %s234
    $region4: #{pspool_forward.14} parent=1 // loop_header_branch
      %19 = sbr.rel (%p17) target = $region8
    $region5: #{pspool_forward.14} parent=1 // loop_body
      %s21 = ssub.s32 %s16, 1
      %s22 = ssub.s32 %s16, 2
      %s29 = sadd.s32 1, %s24
      %p30 = scmp.ge.s32.totalorder %s29, 4
      %s31 = scalar_select %p30, 0, %s29
      %s32 = sadd.s32 1, %s23
      %s33 = scalar_select %p30, %s32, %s23
      %p34 = scmp.ge.s32.totalorder %s33, 2
      %s35 = scalar_select %p34, 0, %s33
      %s37 = sadd.s32 %s36, 1
      %p40 = scmp.eq.s32.totalorder %s16, 7
      %p41 = scmp.ne.s32.totalorder %s36, %s38
      %p42 = scmp.eq.s32.totalorder %s16, 0
      %p43 = por %p41, %p42
      %p44 = scmp.ne.s32.totalorder %s36, %s38
      %p45 = scmp.eq.s32.totalorder %s21, 7
      %p46 = por %p44, %p45
      %p47 = scmp.ne.s32.totalorder %s38, %s39
      %p48 = scmp.eq.s32.totalorder %s21, 0
      %p49 = por %p47, %p48
      %p50 = scmp.ne.s32.totalorder %s38, %s39
      %p51 = scmp.eq.s32.totalorder %s22, 7
      %p52 = por %p50, %p51
      %p54 = scmp.ne.s32.totalorder %s39, %s53
      %p55 = scmp.eq.s32.totalorder %s22, 0
      %p56 = por %p54, %p55
      %s58 = sadd.s32 %s57, 1
      %p61 = scmp.eq.s32.totalorder %s16, 7
      %p62 = scmp.ne.s32.totalorder %s57, %s59
      %p63 = scmp.eq.s32.totalorder %s16, 0
      %p64 = por %p62, %p63
      %p65 = scmp.ne.s32.totalorder %s57, %s59
      %p66 = scmp.eq.s32.totalorder %s21, 7
      %p67 = por %p65, %p66
      %p68 = scmp.ne.s32.totalorder %s59, %s60
      %p69 = scmp.eq.s32.totalorder %s21, 0
      %p70 = por %p68, %p69
      %p71 = scmp.ne.s32.totalorder %s59, %s60
      %p72 = scmp.eq.s32.totalorder %s22, 7
      %p73 = por %p71, %p72
      %p75 = scmp.ne.s32.totalorder %s60, %s74
      %p76 = scmp.eq.s32.totalorder %s22, 0
      %p77 = por %p75, %p76
      %s78 = ssub.s32 %s23, %s35
      %s79 = ssub.s32 %s24, %s31
      %s80 = sor.u32 %s78, %s79
      %p81 = scmp.eq.s32.totalorder %s80, 0
      %s83 = sadd.s32 %s82, 1
      %s84 = scalar_select %p81, %s82, %s83
      %p87 = pneg %p81
      %p88 = scmp.eq.s32.totalorder %s16, 7
      %p89 = por %p87, %p88
      %p90 = scmp.ne.s32.totalorder %s82, %s85
      %p91 = scmp.eq.s32.totalorder %s16, 0
      %p92 = por %p90, %p91
      %p93 = scmp.ne.s32.totalorder %s82, %s85
      %p94 = scmp.eq.s32.totalorder %s21, 7
      %p95 = por %p93, %p94
      %p96 = scmp.ne.s32.totalorder %s85, %s86
      %p97 = scmp.eq.s32.totalorder %s21, 0
      %p98 = por %p96, %p97
      %p99 = scmp.ne.s32.totalorder %s85, %s86
      %p100 = scmp.eq.s32.totalorder %s22, 7
      %p101 = por %p99, %p100
      %p103 = scmp.ne.s32.totalorder %s86, %s102
      %p104 = scmp.eq.s32.totalorder %s22, 0
      %p105 = por %p103, %p104
      %s106 = ssub.s32 %s23, %s35
      %p107 = scmp.eq.s32.totalorder %s106, 0
      %s109 = sadd.s32 %s108, 1
      %s110 = scalar_select %p107, %s108, %s109
      %p113 = pneg %p107
      %p114 = scmp.eq.s32.totalorder %s16, 7
      %p115 = por %p113, %p114
      %p116 = scmp.ne.s32.totalorder %s108, %s111
      %p117 = scmp.eq.s32.totalorder %s16, 0
      %p118 = por %p116, %p117
      %p119 = scmp.ne.s32.totalorder %s108, %s111
      %p120 = scmp.eq.s32.totalorder %s21, 7
      %p121 = por %p119, %p120
      %p122 = scmp.ne.s32.totalorder %s111, %s112
      %p123 = scmp.eq.s32.totalorder %s21, 0
      %p124 = por %p122, %p123
      %p125 = scmp.ne.s32.totalorder %s111, %s112
      %p126 = scmp.eq.s32.totalorder %s22, 7
      %p127 = por %p125, %p126
      %p129 = scmp.ne.s32.totalorder %s112, %s128
      %p130 = scmp.eq.s32.totalorder %s22, 0
      %p131 = por %p129, %p130
      %s132 = ssub.s32 %s23, %s35
      %p133 = scmp.eq.s32.totalorder %s132, 0
      %s135 = sadd.s32 %s134, 1
      %s136 = scalar_select %p133, %s134, %s135
      %p139 = pneg %p133
      %p140 = scmp.eq.s32.totalorder %s16, 7
      %p141 = por %p139, %p140
      %p142 = scmp.ne.s32.totalorder %s134, %s137
      %p143 = scmp.eq.s32.totalorder %s16, 0
      %p144 = por %p142, %p143
      %p145 = scmp.ne.s32.totalorder %s134, %s137
      %p146 = scmp.eq.s32.totalorder %s21, 7
      %p147 = por %p145, %p146
      %p148 = scmp.ne.s32.totalorder %s137, %s138
      %p149 = scmp.eq.s32.totalorder %s21, 0
      %p150 = por %p148, %p149
      %p151 = scmp.ne.s32.totalorder %s137, %s138
      %p152 = scmp.eq.s32.totalorder %s22, 7
      %p153 = por %p151, %p152
      %p155 = scmp.ne.s32.totalorder %s138, %s154
      %p156 = scmp.eq.s32.totalorder %s22, 0
      %p157 = por %p155, %p156
      %s158 = ssub.s32 %s23, %s35
      %p159 = scmp.eq.s32.totalorder %s158, 0
      %s161 = sadd.s32 %s160, 1
      %s162 = scalar_select %p159, %s160, %s161
      %p165 = pneg %p159
      %p166 = scmp.eq.s32.totalorder %s16, 7
      %p167 = por %p165, %p166
      %p168 = scmp.ne.s32.totalorder %s160, %s163
      %p169 = scmp.eq.s32.totalorder %s16, 0
      %p170 = por %p168, %p169
      %p171 = scmp.ne.s32.totalorder %s160, %s163
      %p172 = scmp.eq.s32.totalorder %s21, 7
      %p173 = por %p171, %p172
      %p174 = scmp.ne.s32.totalorder %s163, %s164
      %p175 = scmp.eq.s32.totalorder %s21, 0
      %p176 = por %p174, %p175
      %p177 = scmp.ne.s32.totalorder %s163, %s164
      %p178 = scmp.eq.s32.totalorder %s22, 7
      %p179 = por %p177, %p178
      %p181 = scmp.ne.s32.totalorder %s164, %s180
      %p182 = scmp.eq.s32.totalorder %s22, 0
      %p183 = por %p181, %p182
      %s185 = sadd.s32 %s184, 1
      %p188 = scmp.eq.s32.totalorder %s16, 7
      %p189 = scmp.ne.s32.totalorder %s184, %s186
      %p190 = scmp.eq.s32.totalorder %s16, 0
      %p191 = por %p189, %p190
      %p192 = scmp.ne.s32.totalorder %s184, %s186
      %p193 = scmp.eq.s32.totalorder %s21, 7
      %p194 = por %p192, %p193
      %p195 = scmp.ne.s32.totalorder %s186, %s187
      %p196 = scmp.eq.s32.totalorder %s21, 0
      %p197 = por %p195, %p196
      %p198 = scmp.ne.s32.totalorder %s186, %s187
      %p199 = scmp.eq.s32.totalorder %s22, 7
      %p200 = por %p198, %p199
      %p202 = scmp.ne.s32.totalorder %s187, %s201
      %p203 = scmp.eq.s32.totalorder %s22, 0
      %p204 = por %p202, %p203
      %s206 = sadd.s32 %s205, 1
      %p209 = scmp.eq.s32.totalorder %s16, 7
      %p210 = scmp.ne.s32.totalorder %s205, %s207
      %p211 = scmp.eq.s32.totalorder %s16, 0
      %p212 = por %p210, %p211
      %p213 = scmp.ne.s32.totalorder %s205, %s207
      %p214 = scmp.eq.s32.totalorder %s21, 7
      %p215 = por %p213, %p214
      %p216 = scmp.ne.s32.totalorder %s207, %s208
      %p217 = scmp.eq.s32.totalorder %s21, 0
      %p218 = por %p216, %p217
      %p219 = scmp.ne.s32.totalorder %s207, %s208
      %p220 = scmp.eq.s32.totalorder %s22, 7
      %p221 = por %p219, %p220
      %p223 = scmp.ne.s32.totalorder %s208, %s222
      %p224 = scmp.eq.s32.totalorder %s22, 0
      %p225 = por %p223, %p224
      %s226 = ssub.s32 %s23, %s35
      %s227 = ssub.s32 %s24, %s31
      %s228 = sor.u32 %s226, %s227
      %p229 = scmp.eq.s32.totalorder %s228, 0
      %s231 = sadd.s32 %s230, 1
      %s232 = scalar_select %p229, %s230, %s231
      %p235 = pneg %p229
      %p236 = scmp.eq.s32.totalorder %s16, 7
      %p237 = por %p235, %p236
      %p238 = scmp.ne.s32.totalorder %s230, %s233
      %p239 = scmp.eq.s32.totalorder %s16, 0
      %p240 = por %p238, %p239
      %p241 = scmp.ne.s32.totalorder %s230, %s233
      %p242 = scmp.eq.s32.totalorder %s21, 7
      %p243 = por %p241, %p242
      %p244 = scmp.ne.s32.totalorder %s233, %s234
      %p245 = scmp.eq.s32.totalorder %s21, 0
      %p246 = por %p244, %p245
      %p247 = scmp.ne.s32.totalorder %s233, %s234
      %p248 = scmp.eq.s32.totalorder %s22, 7
      %p249 = por %p247, %p248
      %p251 = scmp.ne.s32.totalorder %s234, %s250
      %p252 = scmp.eq.s32.totalorder %s22, 0
      %p253 = por %p251, %p252
      %p254 = scmp.le.s32.totalorder 1, %s16
      %p255 = scmp.lt.s32.totalorder %s16, 9
      %p256 = pnand %p254, %p255
      %p257 = pneg %p256
      // Predicated region
      $region9: #{pspool_forward.14} parent=5 // pred_check
        _
      $region10: #{pspool_forward.14} parent=5 // pred_check_branch
        %259 = sbr.rel (%p256) target = $region12
      $region11: #{pspool_forward.14} parent=5 // pred_region
        %s260 = ssub.s32 %s16, 1
        // Predicated region
        $region13: #{pspool_forward.14} parent=11 // pred_check
          %p261 = pneg %p49
        $region14: #{pspool_forward.14} parent=11 // pred_check_branch
          %263 = sbr.rel (%p261) target = $region16
        $region15: #{pspool_forward.14} parent=11 // pred_region
          %s265 = ssub.s32 32, 32
          %266 = vsyncadd [#allocation3], %s265
          %s268 = sshll.u32 %s0, 4
          %s269 = int_to_ptr.vmem [resolvable:$true] %s268
          %271 = dma.vmem_to_smem %s269, 32, [#allocation2], [#allocation3]
        $region16: #{pspool_forward.14} parent=11 // pred_fallthru
          _
        // Predicated region
        $region17: #{pspool_forward.14} parent=11 // pred_check
          %p272 = pneg %p70
        $region18: #{pspool_forward.14} parent=11 // pred_check_branch
          %274 = sbr.rel (%p272) target = $region20
        $region19: #{pspool_forward.14} parent=11 // pred_region
          %s276 = ssub.s32 32, 32
          %277 = vsyncadd [#allocation5], %s276
          %s279 = sshll.u32 %s1, 4
          %s280 = int_to_ptr.vmem [resolvable:$true] %s279
          %282 = dma.vmem_to_smem %s280, 32, [#allocation4], [#allocation5]
        $region20: #{pspool_forward.14} parent=11 // pred_fallthru
          _
        // Predicated region
        $region21: #{pspool_forward.14} parent=11 // pred_check
          %p283 = pneg %p197
        $region22: #{pspool_forward.14} parent=11 // pred_check_branch
          %285 = sbr.rel (%p283) target = $region24
        $region23: #{pspool_forward.14} parent=11 // pred_region
          _
        $region24: #{pspool_forward.14} parent=11 // pred_fallthru
          _
        // Predicated region
        $region25: #{pspool_forward.14} parent=11 // pred_check
          %p286 = pneg %p218
        $region26: #{pspool_forward.14} parent=11 // pred_check_branch
          %288 = sbr.rel (%p286) target = $region28
        $region27: #{pspool_forward.14} parent=11 // pred_region
          _
        $region28: #{pspool_forward.14} parent=11 // pred_fallthru
          _
      $region12: #{pspool_forward.14} parent=5 // pred_fallthru
        _
      %p289 = scmp.lt.s32.totalorder %s16, 8
      // Predicated region
      $region29: #{pspool_forward.14} parent=5 // pred_check
        %p290 = pneg %p289
      $region30: #{pspool_forward.14} parent=5 // pred_check_branch
        %292 = sbr.rel (%p290) target = $region32
      $region31: #{pspool_forward.14} parent=5 // pred_region
        // Predicated region
        $region33: #{pspool_forward.14} parent=31 // pred_check
          %p293 = pneg %p92
        $region34: #{pspool_forward.14} parent=31 // pred_check_branch
          %295 = sbr.rel (%p293) target = $region36
        $region35: #{pspool_forward.14} parent=31 // pred_region
          %s296 = smul.u32 8, %s24
          %p297 = scmp.lt.s32.totalorder %s23, 1
          %s298 = scalar_select %p297, %s23, 1
          %p299 = scmp.lt.s32.totalorder %s296, 31
          %s300 = scalar_select %p299, %s296, 31
          %s301 = smul.addr %s300, 4
          %s302 = smul.addr %s298, 128
          %s303 = sadd.s32 %s301, %s302
          %s304 = smul.addr %s303, 8
          %s305 = scalar_lea.vmem %s2, %s304
          %s306 = smul.u32 8, %s24
        $region36: #{pspool_forward.14} parent=31 // pred_fallthru
          _
        // Predicated region
        $region37: #{pspool_forward.14} parent=31 // pred_check
          %p307 = pneg %p118
        $region38: #{pspool_forward.14} parent=31 // pred_check_branch
          %309 = sbr.rel (%p307) target = $region40
        $region39: #{pspool_forward.14} parent=31 // pred_region
          %p310 = scmp.lt.s32.totalorder %s23, 1
          %s311 = scalar_select %p310, %s23, 1
          %s312 = smul.addr %s311, 64
          %s313 = smul.addr %s312, 8
          %s314 = scalar_lea.vmem %s3, %s313
        $region40: #{pspool_forward.14} parent=31 // pred_fallthru
          _
        // Predicated region
        $region41: #{pspool_forward.14} parent=31 // pred_check
          %p315 = pneg %p144
        $region42: #{pspool_forward.14} parent=31 // pred_check_branch
          %317 = sbr.rel (%p315) target = $region44
        $region43: #{pspool_forward.14} parent=31 // pred_region
          %p318 = scmp.lt.s32.totalorder %s23, 1
          %s319 = scalar_select %p318, %s23, 1
          %s320 = smul.addr %s319, 32
          %s321 = smul.addr %s320, 8
          %s322 = scalar_lea.vmem %s4, %s321
        $region44: #{pspool_forward.14} parent=31 // pred_fallthru
          _
        // Predicated region
        $region45: #{pspool_forward.14} parent=31 // pred_check
          %p323 = pneg %p170
        $region46: #{pspool_forward.14} parent=31 // pred_check_branch
          %325 = sbr.rel (%p323) target = $region48
        $region47: #{pspool_forward.14} parent=31 // pred_region
          %p326 = scmp.lt.s32.totalorder %s23, 1
          %s327 = scalar_select %p326, %s23, 1
          %s328 = smul.addr %s327, 16
          %s329 = smul.addr %s328, 8
          %s330 = scalar_lea.vmem %s5, %s329
        $region48: #{pspool_forward.14} parent=31 // pred_fallthru
          _
      $region32: #{pspool_forward.14} parent=5 // pred_fallthru
        _
      %p331 = scmp.le.s32.totalorder 1, %s16
      %p332 = scmp.lt.s32.totalorder %s16, 9
      %p333 = pnand %p331, %p332
      %p334 = pneg %p333
      // Predicated region
      $region49: #{pspool_forward.14} parent=5 // pred_check
        _
      $region50: #{pspool_forward.14} parent=5 // pred_check_branch
        %336 = sbr.rel (%p333) target = $region52
      $region51: #{pspool_forward.14} parent=5 // pred_region
        %s337 = ssub.s32 %s16, 1
        // Predicated region
        $region53: #{pspool_forward.14} parent=51 // pred_check
          %p338 = pneg %p49
        $region54: #{pspool_forward.14} parent=51 // pred_check_branch
          %340 = sbr.rel (%p338) target = $region56
        $region55: #{pspool_forward.14} parent=51 // pred_region
          %341 = dma.done [#allocation3], 32
        $region56: #{pspool_forward.14} parent=51 // pred_fallthru
          _
        // Predicated region
        $region57: #{pspool_forward.14} parent=51 // pred_check
          %p342 = pneg %p70
        $region58: #{pspool_forward.14} parent=51 // pred_check_branch
          %344 = sbr.rel (%p342) target = $region60
        $region59: #{pspool_forward.14} parent=51 // pred_region
          %345 = dma.done [#allocation5], 32
        $region60: #{pspool_forward.14} parent=51 // pred_fallthru
          _
        %346 = sfence
        %p347 = pneg %p49
        %p348 = pneg %p46
        %p349 = pneg %p70
        %p350 = pneg %p67
        %s351 = smul.u32 8, %s26
        %p352 = scmp.lt.s32.totalorder %s25, 1
        %s353 = scalar_select %p352, %s25, 1
        %p354 = scmp.lt.s32.totalorder %s351, 31
        %s355 = scalar_select %p354, %s351, 31
        %s356 = smul.addr %s355, 4
        %s357 = smul.addr %s353, 128
        %s358 = sadd.s32 %s356, %s357
        %s359 = smul.addr %s358, 8
        %s360 = scalar_lea.vmem %s2, %s359
        %p361 = pneg %p98
        %p362 = pneg %p95
        %p363 = scmp.lt.s32.totalorder %s25, 1
        %s364 = scalar_select %p363, %s25, 1
        %s365 = smul.addr %s364, 64
        %s366 = smul.addr %s365, 8
        %s367 = scalar_lea.vmem %s3, %s366
        %p368 = pneg %p124
        %p369 = pneg %p121
        %p370 = scmp.lt.s32.totalorder %s25, 1
        %s371 = scalar_select %p370, %s25, 1
        %s372 = smul.addr %s371, 32
        %s373 = smul.addr %s372, 8
        %s374 = scalar_lea.vmem %s4, %s373
        %p375 = pneg %p150
        %p376 = pneg %p147
        %p377 = scmp.lt.s32.totalorder %s25, 1
        %s378 = scalar_select %p377, %s25, 1
        %s379 = smul.addr %s378, 16
        %s380 = smul.addr %s379, 8
        %s381 = scalar_lea.vmem %s5, %s380
        %p382 = pneg %p176
        %p383 = pneg %p173
        %p384 = pneg %p197
        %p385 = pneg %p194
        %p386 = pneg %p218
        %p387 = pneg %p215
        %p388 = pneg %p246
        %p389 = pneg %p243
        %s390 = smul.u32 4, %s26
        %p391 = scmp.lt.s32.totalorder %s25, 1
        %s392 = scalar_select %p391, %s25, 1
        %p393 = scmp.lt.s32.totalorder %s390, 15
        %s394 = scalar_select %p393, %s390, 15
        %s395 = smul.addr %s394, 4
        %s396 = smul.addr %s392, 64
        %s397 = sadd.s32 %s395, %s396
        %s398 = smul.addr %s397, 8
        %s399 = scalar_lea.vmem %s8, %s398
        %s400 = smul.u32 8, %s26
        %p401 = scmp.lt.s32.totalorder %s25, 1
        %s402 = scalar_select %p401, %s25, 1
        %p403 = scmp.lt.s32.totalorder %s400, 31
        %s404 = scalar_select %p403, %s400, 31
        %s405 = smul.addr %s404, 4
        %s406 = smul.addr %s402, 128
        %s407 = sadd.s32 %s405, %s406
        %s408 = smul.addr %s407, 8
        %s409 = scalar_lea.vmem %s2, %s408
        %s410 = smul.u32 8, %s26
        %p411 = scmp.lt.s32.totalorder %s25, 1
        %s412 = scalar_select %p411, %s25, 1
        %s413 = smul.addr %s412, 64
        %s414 = smul.addr %s413, 8
        %s415 = scalar_lea.vmem %s3, %s414
        %p416 = scmp.lt.s32.totalorder %s25, 1
        %s417 = scalar_select %p416, %s25, 1
        %s418 = smul.addr %s417, 32
        %s419 = smul.addr %s418, 8
        %s420 = scalar_lea.vmem %s4, %s419
        %p421 = scmp.lt.s32.totalorder %s25, 1
        %s422 = scalar_select %p421, %s25, 1
        %s423 = smul.addr %s422, 16
        %s424 = smul.addr %s423, 8
        %s425 = scalar_lea.vmem %s5, %s424
        %s426 = smul.u32 4, %s26
        %p427 = scmp.lt.s32.totalorder %s25, 1
        %s428 = scalar_select %p427, %s25, 1
        %p429 = scmp.lt.s32.totalorder %s426, 15
        %s430 = scalar_select %p429, %s426, 15
        %s431 = smul.addr %s430, 4
        %s432 = smul.addr %s428, 64
        %s433 = sadd.s32 %s431, %s432
        %s434 = smul.addr %s433, 8
        %s435 = scalar_lea.vmem %s8, %s434
        %s436 = smul.u32 4, %s26
        %v437 = vld [vmem:[%s6] sm:$0xff]
        %v438 = vld [vmem:[%s6 + $0x8] sm:$0xff]
        %v439 = vld [vmem:[%s6 + $0x10] sm:$0xff]
        %v440 = vld [vmem:[%s6 + $0x18] sm:$0xff]
        %v441 = vld [vmem:[%s6 + $0x20] sm:$0xff]
        %v442 = vld [vmem:[%s6 + $0x28] sm:$0xff]
        %v443 = vld [vmem:[%s6 + $0x30] sm:$0xff]
        %v444 = vld [vmem:[%s6 + $0x38] sm:$0xff]
        %v445 = vld [vmem:[%s6 + $0x40] sm:$0xff]
        %v446 = vld [vmem:[%s6 + $0x48] sm:$0xff]
        %v447 = vld [vmem:[%s6 + $0x50] sm:$0xff]
        %v448 = vld [vmem:[%s6 + $0x58] sm:$0xff]
        %v449 = vld [vmem:[%s6 + $0x60] sm:$0xff]
        %v450 = vld [vmem:[%s6 + $0x68] sm:$0xff]
        %v451 = vld [vmem:[%s6 + $0x70] sm:$0xff]
        %v452 = vld [vmem:[%s6 + $0x78] sm:$0xff]
        %v453 = vld [vmem:[%s7] sm:$0x1]
        %v455 = vlaneseq
        %v456 = vshrl.u32 %v455, 7
        %v457 = vsub.s32 0, %v456
        %v458 = vrot.slane %v453, %v457
        %v460 = vld [vmem:[%s409] sm:$0xff]
        %v461 = vld [vmem:[%s409 + $0x8] sm:$0xff]
        %v462 = vld [vmem:[%s409 + $0x10] sm:$0xff]
        %v463 = vld [vmem:[%s409 + $0x18] sm:$0xff]
        %464 = vmatprep.subr.mxu0 0.0
        %465 = vmatpush1.msra.mxu0 %v437
        %466 = vmatprep.subr.mxu0 0.0
        %467 = vmatpush1.msra.mxu0 %v438
        %468 = vmatprep.subr.mxu0 0.0
        %469 = vmatpush1.msra.mxu0 %v439
        %470 = vmatprep.subr.mxu0 0.0
        %471 = vmatpush1.msra.mxu0 %v440
        %472 = vmatprep.subr.mxu0 0.0
        %473 = vmatpush1.msra.mxu0 %v441
        %474 = vmatprep.subr.mxu0 0.0
        %475 = vmatpush1.msra.mxu0 %v442
        %476 = vmatprep.subr.mxu0 0.0
        %477 = vmatpush1.msra.mxu0 %v443
        %478 = vmatprep.subr.mxu0 0.0
        %479 = vmatpush1.msra.mxu0 %v444
        %480 = vmatprep.subr.mxu0 0.0
        %481 = vmatpush1.msra.mxu0 %v445
        %482 = vmatprep.subr.mxu0 0.0
        %483 = vmatpush1.msra.mxu0 %v446
        %484 = vmatprep.subr.mxu0 0.0
        %485 = vmatpush1.msra.mxu0 %v447
        %486 = vmatprep.subr.mxu0 0.0
        %487 = vmatpush1.msra.mxu0 %v448
        %488 = vmatprep.subr.mxu0 0.0
        %489 = vmatpush1.msra.mxu0 %v449
        %490 = vmatprep.subr.mxu0 0.0
        %491 = vmatpush1.msra.mxu0 %v450
        %492 = vmatprep.subr.mxu0 0.0
        %493 = vmatpush1.msra.mxu0 %v451
        %494 = vmatprep.subr.mxu0 0.0
        %495 = vmatpush1.msra.mxu0 %v452
        %496 = vmatprep.subr.mxu0 0.0
        %497 = vmatpush1.msra.mxu0 0.0
        %498 = vmatprep.subr.mxu0 0.0
        %499 = vmatpush1.msra.mxu0 0.0
        %500 = vmatprep.subr.mxu0 0.0
        %501 = vmatpush1.msra.mxu0 0.0
        %502 = vmatprep.subr.mxu0 0.0
        %503 = vmatpush1.msra.mxu0 0.0
        %504 = vmatprep.subr.mxu0 0.0
        %505 = vmatpush1.msra.mxu0 0.0
        %506 = vmatprep.subr.mxu0 0.0
        %507 = vmatpush1.msra.mxu0 0.0
        %508 = vmatprep.subr.mxu0 0.0
        %509 = vmatpush1.msra.mxu0 0.0
        %510 = vmatprep.subr.mxu0 0.0
        %511 = vmatpush1.msra.mxu0 0.0
        %512 = vmatprep.subr.mxu0 0.0
        %513 = vmatpush1.msra.mxu0 0.0
        %514 = vmatprep.subr.mxu0 0.0
        %515 = vmatpush1.msra.mxu0 0.0
        %516 = vmatprep.subr.mxu0 0.0
        %517 = vmatpush1.msra.mxu0 0.0
        %518 = vmatprep.subr.mxu0 0.0
        %519 = vmatpush1.msra.mxu0 0.0
        %520 = vmatprep.subr.mxu0 0.0
        %521 = vmatpush1.msra.mxu0 0.0
        %522 = vmatprep.subr.mxu0 0.0
        %523 = vmatpush1.msra.mxu0 0.0
        %524 = vmatprep.subr.mxu0 0.0
        %525 = vmatpush1.msra.mxu0 0.0
        %526 = vmatprep.subr.mxu0 0.0
        %527 = vmatpush1.msra.mxu0 0.0
        %528 = vmatprep.mubr.f32.mxu0 0.0
        %529 = vmatmul.mubr.f32.gmra.mrb[0].mxu0 %v460
        %v530 = vpop.f32.mrb[0].mxu0
        %v531 = vadd.f32 %v458, %v530
        %v532 = vpop.f32.mrb[0].mxu0
        %533 = vmatprep.mubr.f32.mxu0 0.0
        %534 = vmatmul.mubr.f32.gmra.mrb[0].mxu0 %v461
        %v535 = vpop.f32.mrb[0].mxu0
        %v536 = vadd.f32 %v458, %v535
        %v537 = vpop.f32.mrb[0].mxu0
        %538 = vmatprep.mubr.f32.mxu0 0.0
        %539 = vmatmul.mubr.f32.gmra.mrb[0].mxu0 %v462
        %v540 = vpop.f32.mrb[0].mxu0
        %v541 = vadd.f32 %v458, %v540
        %v542 = vpop.f32.mrb[0].mxu0
        %543 = vmatprep.mubr.f32.mxu0 0.0
        %544 = vmatmul.mubr.f32.gmra.mrb[0].mxu0 %v463
        %v545 = vpop.f32.mrb[0].mxu0
        %v546 = vadd.f32 %v458, %v545
        %v547 = vpop.f32.mrb[0].mxu0
        %548 = vdwg.mxu0
        %s549 = smul.u32 %s26, 8
        %s550 = sld [smem:[#allocation2 + %s549]]
        %s551 = sld [smem:[#allocation4 + %s549]]
        %s552 = smul.u32 %s550, 32
        %s553 = scalar_lea.vmem %s415, %s552
        %v554 = vld [vmem:[%s553] sm:$0xff]
        %v555 = vld [vmem:[%s553 + $0x8] sm:$0xff]
        %v556 = vld [vmem:[%s553 + $0x10] sm:$0xff]
        %v557 = vld [vmem:[%s553 + $0x18] sm:$0xff]
        %v558 = vstv %s551
        %v559 = vmul.f32 %v558, %v554
        %v560 = vmul.f32 %v558, %v555
        %v561 = vmul.f32 %v558, %v556
        %v562 = vmul.f32 %v558, %v557
        %v563 = vadd.f32 %v531, %v559
        %v564 = vadd.f32 %v536, %v560
        %v565 = vadd.f32 %v541, %v561
        %v566 = vadd.f32 %v546, %v562
        %s567 = sadd.s32 %s549, 32
        %s568 = sld [smem:[#allocation2 + %s567]]
        %s569 = sld [smem:[#allocation4 + %s567]]
        %s570 = smul.u32 %s568, 32
        %s571 = scalar_lea.vmem %s415, %s570
        %v572 = vld [vmem:[%s571] sm:$0xff]
        %v573 = vld [vmem:[%s571 + $0x8] sm:$0xff]
        %v574 = vld [vmem:[%s571 + $0x10] sm:$0xff]
        %v575 = vld [vmem:[%s571 + $0x18] sm:$0xff]
        %v576 = vstv %s569
        %v577 = vmul.f32 %v576, %v572
        %v578 = vmul.f32 %v576, %v573
        %v579 = vmul.f32 %v576, %v574
        %v580 = vmul.f32 %v576, %v575
        %v581 = vadd.f32 %v563, %v577
        %v582 = vadd.f32 %v564, %v578
        %v583 = vadd.f32 %v565, %v579
        %v584 = vadd.f32 %v566, %v580
        %s585 = sadd.s32 %s549, 64
        %s586 = sld [smem:[#allocation2 + %s585]]
        %s587 = sld [smem:[#allocation4 + %s585]]
        %s588 = smul.u32 %s586, 32
        %s589 = scalar_lea.vmem %s420, %s588
        %v590 = vld [vmem:[%s589] sm:$0xff]
        %v591 = vld [vmem:[%s589 + $0x8] sm:$0xff]
        %v592 = vld [vmem:[%s589 + $0x10] sm:$0xff]
        %v593 = vld [vmem:[%s589 + $0x18] sm:$0xff]
        %v594 = vstv %s587
        %v595 = vmul.f32 %v594, %v590
        %v596 = vmul.f32 %v594, %v591
        %v597 = vmul.f32 %v594, %v592
        %v598 = vmul.f32 %v594, %v593
        %v599 = vadd.f32 %v581, %v595
        %v600 = vadd.f32 %v582, %v596
        %v601 = vadd.f32 %v583, %v597
        %v602 = vadd.f32 %v584, %v598
        %s603 = sadd.s32 %s549, 96
        %s604 = sld [smem:[#allocation2 + %s603]]
        %s605 = sld [smem:[#allocation4 + %s603]]
        %s606 = smul.u32 %s604, 32
        %s607 = scalar_lea.vmem %s420, %s606
        %v608 = vld [vmem:[%s607] sm:$0xff]
        %v609 = vld [vmem:[%s607 + $0x8] sm:$0xff]
        %v610 = vld [vmem:[%s607 + $0x10] sm:$0xff]
        %v611 = vld [vmem:[%s607 + $0x18] sm:$0xff]
        %v612 = vstv %s605
        %v613 = vmul.f32 %v612, %v608
        %v614 = vmul.f32 %v612, %v609
        %v615 = vmul.f32 %v612, %v610
        %v616 = vmul.f32 %v612, %v611
        %v617 = vadd.f32 %v599, %v613
        %v618 = vadd.f32 %v600, %v614
        %v619 = vadd.f32 %v601, %v615
        %v620 = vadd.f32 %v602, %v616
        %s621 = sadd.s32 %s549, 128
        %s622 = sld [smem:[#allocation2 + %s621]]
        %s623 = sld [smem:[#allocation4 + %s621]]
        %s624 = smul.u32 %s622, 32
        %s625 = scalar_lea.vmem %s425, %s624
        %v626 = vld [vmem:[%s625] sm:$0xff]
        %v627 = vld [vmem:[%s625 + $0x8] sm:$0xff]
        %v628 = vld [vmem:[%s625 + $0x10] sm:$0xff]
        %v629 = vld [vmem:[%s625 + $0x18] sm:$0xff]
        %v630 = vstv %s623
        %v631 = vmul.f32 %v630, %v626
        %v632 = vmul.f32 %v630, %v627
        %v633 = vmul.f32 %v630, %v628
        %v634 = vmul.f32 %v630, %v629
        %v635 = vadd.f32 %v617, %v631
        %v636 = vadd.f32 %v618, %v632
        %v637 = vadd.f32 %v619, %v633
        %v638 = vadd.f32 %v620, %v634
        %s639 = sadd.s32 %s549, 160
        %s640 = sld [smem:[#allocation2 + %s639]]
        %s641 = sld [smem:[#allocation4 + %s639]]
        %s642 = smul.u32 %s640, 32
        %s643 = scalar_lea.vmem %s425, %s642
        %v644 = vld [vmem:[%s643] sm:$0xff]
        %v645 = vld [vmem:[%s643 + $0x8] sm:$0xff]
        %v646 = vld [vmem:[%s643 + $0x10] sm:$0xff]
        %v647 = vld [vmem:[%s643 + $0x18] sm:$0xff]
        %v648 = vstv %s641
        %v649 = vmul.f32 %v648, %v644
        %v650 = vmul.f32 %v648, %v645
        %v651 = vmul.f32 %v648, %v646
        %v652 = vmul.f32 %v648, %v647
        %v653 = vadd.f32 %v635, %v649
        %v654 = vadd.f32 %v636, %v650
        %v655 = vadd.f32 %v637, %v651
        %v656 = vadd.f32 %v638, %v652
        %s657 = scalar_lea.vmem %s409, 32
        %v658 = vld [vmem:[%s657] sm:$0xff]
        %v659 = vld [vmem:[%s657 + $0x8] sm:$0xff]
        %v660 = vld [vmem:[%s657 + $0x10] sm:$0xff]
        %v661 = vld [vmem:[%s657 + $0x18] sm:$0xff]
        %662 = vmatprep.subr.mxu0 0.0
        %663 = vmatpush1.msra.mxu0 %v437
        %664 = vmatprep.subr.mxu0 0.0
        %665 = vmatpush1.msra.mxu0 %v438
        %666 = vmatprep.subr.mxu0 0.0
        %667 = vmatpush1.msra.mxu0 %v439
        %668 = vmatprep.subr.mxu0 0.0
        %669 = vmatpush1.msra.mxu0 %v440
        %670 = vmatprep.subr.mxu0 0.0
        %671 = vmatpush1.msra.mxu0 %v441
        %672 = vmatprep.subr.mxu0 0.0
        %673 = vmatpush1.msra.mxu0 %v442
        %674 = vmatprep.subr.mxu0 0.0
        %675 = vmatpush1.msra.mxu0 %v443
        %676 = vmatprep.subr.mxu0 0.0
        %677 = vmatpush1.msra.mxu0 %v444
        %678 = vmatprep.subr.mxu0 0.0
        %679 = vmatpush1.msra.mxu0 %v445
        %680 = vmatprep.subr.mxu0 0.0
        %681 = vmatpush1.msra.mxu0 %v446
        %682 = vmatprep.subr.mxu0 0.0
        %683 = vmatpush1.msra.mxu0 %v447
        %684 = vmatprep.subr.mxu0 0.0
        %685 = vmatpush1.msra.mxu0 %v448
        %686 = vmatprep.subr.mxu0 0.0
        %687 = vmatpush1.msra.mxu0 %v449
        %688 = vmatprep.subr.mxu0 0.0
        %689 = vmatpush1.msra.mxu0 %v450
        %690 = vmatprep.subr.mxu0 0.0
        %691 = vmatpush1.msra.mxu0 %v451
        %692 = vmatprep.subr.mxu0 0.0
        %693 = vmatpush1.msra.mxu0 %v452
        %694 = vmatprep.subr.mxu0 0.0
        %695 = vmatpush1.msra.mxu0 0.0
        %696 = vmatprep.subr.mxu0 0.0
        %697 = vmatpush1.msra.mxu0 0.0
        %698 = vmatprep.subr.mxu0 0.0
        %699 = vmatpush1.msra.mxu0 0.0
        %700 = vmatprep.subr.mxu0 0.0
        %701 = vmatpush1.msra.mxu0 0.0
        %702 = vmatprep.subr.mxu0 0.0
        %703 = vmatpush1.msra.mxu0 0.0
        %704 = vmatprep.subr.mxu0 0.0
        %705 = vmatpush1.msra.mxu0 0.0
        %706 = vmatprep.subr.mxu0 0.0
        %707 = vmatpush1.msra.mxu0 0.0
        %708 = vmatprep.subr.mxu0 0.0
        %709 = vmatpush1.msra.mxu0 0.0
        %710 = vmatprep.subr.mxu0 0.0
        %711 = vmatpush1.msra.mxu0 0.0
        %712 = vmatprep.subr.mxu0 0.0
        %713 = vmatpush1.msra.mxu0 0.0
        %714 = vmatprep.subr.mxu0 0.0
        %715 = vmatpush1.msra.mxu0 0.0
        %716 = vmatprep.subr.mxu0 0.0
        %717 = vmatpush1.msra.mxu0 0.0
        %718 = vmatprep.subr.mxu0 0.0
        %719 = vmatpush1.msra.mxu0 0.0
        %720 = vmatprep.subr.mxu0 0.0
        %721 = vmatpush1.msra.mxu0 0.0
        %722 = vmatprep.subr.mxu0 0.0
        %723 = vmatpush1.msra.mxu0 0.0
        %724 = vmatprep.subr.mxu0 0.0
        %725 = vmatpush1.msra.mxu0 0.0
        %726 = vmatprep.mubr.f32.mxu0 0.0
        %727 = vmatmul.mubr.f32.gmra.mrb[0].mxu0 %v658
        %v728 = vpop.f32.mrb[0].mxu0
        %v729 = vadd.f32 %v458, %v728
        %v730 = vpop.f32.mrb[0].mxu0
        %731 = vmatprep.mubr.f32.mxu0 0.0
        %732 = vmatmul.mubr.f32.gmra.mrb[0].mxu0 %v659
        %v733 = vpop.f32.mrb[0].mxu0
        %v734 = vadd.f32 %v458, %v733
        %v735 = vpop.f32.mrb[0].mxu0
        %736 = vmatprep.mubr.f32.mxu0 0.0
        %737 = vmatmul.mubr.f32.gmra.mrb[0].mxu0 %v660
        %v738 = vpop.f32.mrb[0].mxu0
        %v739 = vadd.f32 %v458, %v738
        %v740 = vpop.f32.mrb[0].mxu0
        %741 = vmatprep.mubr.f32.mxu0 0.0
        %742 = vmatmul.mubr.f32.gmra.mrb[0].mxu0 %v661
        %v743 = vpop.f32.mrb[0].mxu0
        %v744 = vadd.f32 %v458, %v743
        %v745 = vpop.f32.mrb[0].mxu0
        %746 = vdwg.mxu0
        %s747 = sadd.s32 %s549, 1
        %s748 = sld [smem:[#allocation2 + %s747]]
        %s749 = sld [smem:[#allocation4 + %s747]]
        %s750 = smul.u32 %s748, 32
        %s751 = scalar_lea.vmem %s415, %s750
        %v752 = vld [vmem:[%s751] sm:$0xff]
        %v753 = vld [vmem:[%s751 + $0x8] sm:$0xff]
        %v754 = vld [vmem:[%s751 + $0x10] sm:$0xff]
        %v755 = vld [vmem:[%s751 + $0x18] sm:$0xff]
        %v756 = vstv %s749
        %v757 = vmul.f32 %v756, %v752
        %v758 = vmul.f32 %v756, %v753
        %v759 = vmul.f32 %v756, %v754
        %v760 = vmul.f32 %v756, %v755
        %v761 = vadd.f32 %v729, %v757
        %v762 = vadd.f32 %v734, %v758
        %v763 = vadd.f32 %v739, %v759
        %v764 = vadd.f32 %v744, %v760
        %s765 = sadd.s32 %s549, 33
        %s766 = sld [smem:[#allocation2 + %s765]]
        %s767 = sld [smem:[#allocation4 + %s765]]
        %s768 = smul.u32 %s766, 32
        %s769 = scalar_lea.vmem %s415, %s768
        %v770 = vld [vmem:[%s769] sm:$0xff]
        %v771 = vld [vmem:[%s769 + $0x8] sm:$0xff]
        %v772 = vld [vmem:[%s769 + $0x10] sm:$0xff]
        %v773 = vld [vmem:[%s769 + $0x18] sm:$0xff]
        %v774 = vstv %s767
        %v775 = vmul.f32 %v774, %v770
        %v776 = vmul.f32 %v774, %v771
        %v777 = vmul.f32 %v774, %v772
        %v778 = vmul.f32 %v774, %v773
        %v779 = vadd.f32 %v761, %v775
        %v780 = vadd.f32 %v762, %v776
        %v781 = vadd.f32 %v763, %v777
        %v782 = vadd.f32 %v764, %v778
        %s783 = sadd.s32 %s549, 65
        %s784 = sld [smem:[#allocation2 + %s783]]
        %s785 = sld [smem:[#allocation4 + %s783]]
        %s786 = smul.u32 %s784, 32
        %s787 = scalar_lea.vmem %s420, %s786
        %v788 = vld [vmem:[%s787] sm:$0xff]
        %v789 = vld [vmem:[%s787 + $0x8] sm:$0xff]
        %v790 = vld [vmem:[%s787 + $0x10] sm:$0xff]
        %v791 = vld [vmem:[%s787 + $0x18] sm:$0xff]
        %v792 = vstv %s785
        %v793 = vmul.f32 %v792, %v788
        %v794 = vmul.f32 %v792, %v789
        %v795 = vmul.f32 %v792, %v790
        %v796 = vmul.f32 %v792, %v791
        %v797 = vadd.f32 %v779, %v793
        %v798 = vadd.f32 %v780, %v794
        %v799 = vadd.f32 %v781, %v795
        %v800 = vadd.f32 %v782, %v796
        %s801 = sadd.s32 %s549, 97
        %s802 = sld [smem:[#allocation2 + %s801]]
        %s803 = sld [smem:[#allocation4 + %s801]]
        %s804 = smul.u32 %s802, 32
        %s805 = scalar_lea.vmem %s420, %s804
        %v806 = vld [vmem:[%s805] sm:$0xff]
        %v807 = vld [vmem:[%s805 + $0x8] sm:$0xff]
        %v808 = vld [vmem:[%s805 + $0x10] sm:$0xff]
        %v809 = vld [vmem:[%s805 + $0x18] sm:$0xff]
        %v810 = vstv %s803
        %v811 = vmul.f32 %v810, %v806
        %v812 = vmul.f32 %v810, %v807
        %v813 = vmul.f32 %v810, %v808
        %v814 = vmul.f32 %v810, %v809
        %v815 = vadd.f32 %v797, %v811
        %v816 = vadd.f32 %v798, %v812
        %v817 = vadd.f32 %v799, %v813
        %v818 = vadd.f32 %v800, %v814
        %s819 = sadd.s32 %s549, 129
        %s820 = sld [smem:[#allocation2 + %s819]]
        %s821 = sld [smem:[#allocation4 + %s819]]
        %s822 = smul.u32 %s820, 32
        %s823 = scalar_lea.vmem %s425, %s822
        %v824 = vld [vmem:[%s823] sm:$0xff]
        %v825 = vld [vmem:[%s823 + $0x8] sm:$0xff]
        %v826 = vld [vmem:[%s823 + $0x10] sm:$0xff]
        %v827 = vld [vmem:[%s823 + $0x18] sm:$0xff]
        %v828 = vstv %s821
        %v829 = vmul.f32 %v828, %v824
        %v830 = vmul.f32 %v828, %v825
        %v831 = vmul.f32 %v828, %v826
        %v832 = vmul.f32 %v828, %v827
        %v833 = vadd.f32 %v815, %v829
        %v834 = vadd.f32 %v816, %v830
        %v835 = vadd.f32 %v817, %v831
        %v836 = vadd.f32 %v818, %v832
        %s837 = sadd.s32 %s549, 161
        %s838 = sld [smem:[#allocation2 + %s837]]
        %s839 = sld [smem:[#allocation4 + %s837]]
        %s840 = smul.u32 %s838, 32
        %s841 = scalar_lea.vmem %s425, %s840
        %v842 = vld [vmem:[%s841] sm:$0xff]
        %v843 = vld [vmem:[%s841 + $0x8] sm:$0xff]
        %v844 = vld [vmem:[%s841 + $0x10] sm:$0xff]
        %v845 = vld [vmem:[%s841 + $0x18] sm:$0xff]
        %v846 = vstv %s839
        %v847 = vmul.f32 %v846, %v842
        %v848 = vmul.f32 %v846, %v843
        %v849 = vmul.f32 %v846, %v844
        %v850 = vmul.f32 %v846, %v845
        %v851 = vadd.f32 %v833, %v847
        %v852 = vadd.f32 %v834, %v848
        %v853 = vadd.f32 %v835, %v849
        %v854 = vadd.f32 %v836, %v850
        %v855 = vmax.f32 %v653, %v851
        %v856 = vmax.f32 %v654, %v852
        %v857 = vmax.f32 %v655, %v853
        %v858 = vmax.f32 %v656, %v854
        %859 = vst [vmem:[%s435] sm:$0xff] %v855
        %860 = vst [vmem:[%s435 + $0x8] sm:$0xff] %v856
        %861 = vst [vmem:[%s435 + $0x10] sm:$0xff] %v857
        %862 = vst [vmem:[%s435 + $0x18] sm:$0xff] %v858
        %s863 = scalar_lea.vmem %s409, 64
        %v864 = vld [vmem:[%s863] sm:$0xff]
        %v865 = vld [vmem:[%s863 + $0x8] sm:$0xff]
        %v866 = vld [vmem:[%s863 + $0x10] sm:$0xff]
        %v867 = vld [vmem:[%s863 + $0x18] sm:$0xff]
        %868 = vmatprep.subr.mxu0 0.0
        %869 = vmatpush1.msra.mxu0 %v437
        %870 = vmatprep.subr.mxu0 0.0
        %871 = vmatpush1.msra.mxu0 %v438
        %872 = vmatprep.subr.mxu0 0.0
        %873 = vmatpush1.msra.mxu0 %v439
        %874 = vmatprep.subr.mxu0 0.0
        %875 = vmatpush1.msra.mxu0 %v440
        %876 = vmatprep.subr.mxu0 0.0
        %877 = vmatpush1.msra.mxu0 %v441
        %878 = vmatprep.subr.mxu0 0.0
        %879 = vmatpush1.msra.mxu0 %v442
        %880 = vmatprep.subr.mxu0 0.0
        %881 = vmatpush1.msra.mxu0 %v443
        %882 = vmatprep.subr.mxu0 0.0
        %883 = vmatpush1.msra.mxu0 %v444
        %884 = vmatprep.subr.mxu0 0.0
        %885 = vmatpush1.msra.mxu0 %v445
        %886 = vmatprep.subr.mxu0 0.0
        %887 = vmatpush1.msra.mxu0 %v446
        %888 = vmatprep.subr.mxu0 0.0
        %889 = vmatpush1.msra.mxu0 %v447
        %890 = vmatprep.subr.mxu0 0.0
        %891 = vmatpush1.msra.mxu0 %v448
        %892 = vmatprep.subr.mxu0 0.0
        %893 = vmatpush1.msra.mxu0 %v449
        %894 = vmatprep.subr.mxu0 0.0
        %895 = vmatpush1.msra.mxu0 %v450
        %896 = vmatprep.subr.mxu0 0.0
        %897 = vmatpush1.msra.mxu0 %v451
        %898 = vmatprep.subr.mxu0 0.0
        %899 = vmatpush1.msra.mxu0 %v452
        %900 = vmatprep.subr.mxu0 0.0
        %901 = vmatpush1.msra.mxu0 0.0
        %902 = vmatprep.subr.mxu0 0.0
        %903 = vmatpush1.msra.mxu0 0.0
        %904 = vmatprep.subr.mxu0 0.0
        %905 = vmatpush1.msra.mxu0 0.0
        %906 = vmatprep.subr.mxu0 0.0
        %907 = vmatpush1.msra.mxu0 0.0
        %908 = vmatprep.subr.mxu0 0.0
        %909 = vmatpush1.msra.mxu0 0.0
        %910 = vmatprep.subr.mxu0 0.0
        %911 = vmatpush1.msra.mxu0 0.0
        %912 = vmatprep.subr.mxu0 0.0
        %913 = vmatpush1.msra.mxu0 0.0
        %914 = vmatprep.subr.mxu0 0.0
        %915 = vmatpush1.msra.mxu0 0.0
        %916 = vmatprep.subr.mxu0 0.0
        %917 = vmatpush1.msra.mxu0 0.0
        %918 = vmatprep.subr.mxu0 0.0
        %919 = vmatpush1.msra.mxu0 0.0
        %920 = vmatprep.subr.mxu0 0.0
        %921 = vmatpush1.msra.mxu0 0.0
        %922 = vmatprep.subr.mxu0 0.0
        %923 = vmatpush1.msra.mxu0 0.0
        %924 = vmatprep.subr.mxu0 0.0
        %925 = vmatpush1.msra.mxu0 0.0
        %926 = vmatprep.subr.mxu0 0.0
        %927 = vmatpush1.msra.mxu0 0.0
        %928 = vmatprep.subr.mxu0 0.0
        %929 = vmatpush1.msra.mxu0 0.0
        %930 = vmatprep.subr.mxu0 0.0
        %931 = vmatpush1.msra.mxu0 0.0
        %932 = vmatprep.mubr.f32.mxu0 0.0
        %933 = vmatmul.mubr.f32.gmra.mrb[0].mxu0 %v864
        %v934 = vpop.f32.mrb[0].mxu0
        %v935 = vadd.f32 %v458, %v934
        %v936 = vpop.f32.mrb[0].mxu0
        %937 = vmatprep.mubr.f32.mxu0 0.0
        %938 = vmatmul.mubr.f32.gmra.mrb[0].mxu0 %v865
        %v939 = vpop.f32.mrb[0].mxu0
        %v940 = vadd.f32 %v458, %v939
        %v941 = vpop.f32.mrb[0].mxu0
        %942 = vmatprep.mubr.f32.mxu0 0.0
        %943 = vmatmul.mubr.f32.gmra.mrb[0].mxu0 %v866
        %v944 = vpop.f32.mrb[0].mxu0
        %v945 = vadd.f32 %v458, %v944
        %v946 = vpop.f32.mrb[0].mxu0
        %947 = vmatprep.mubr.f32.mxu0 0.0
        %948 = vmatmul.mubr.f32.gmra.mrb[0].mxu0 %v867
        %v949 = vpop.f32.mrb[0].mxu0
        %v950 = vadd.f32 %v458, %v949
        %v951 = vpop.f32.mrb[0].mxu0
        %952 = vdwg.mxu0
        %s953 = sadd.s32 %s549, 2
        %s954 = sld [smem:[#allocation2 + %s953]]
        %s955 = sld [smem:[#allocation4 + %s953]]
        %s956 = smul.u32 %s954, 32
        %s957 = scalar_lea.vmem %s415, %s956
        %v958 = vld [vmem:[%s957] sm:$0xff]
        %v959 = vld [vmem:[%s957 + $0x8] sm:$0xff]
        %v960 = vld [vmem:[%s957 + $0x10] sm:$0xff]
        %v961 = vld [vmem:[%s957 + $0x18] sm:$0xff]
        %v962 = vstv %s955
        %v963 = vmul.f32 %v962, %v958
        %v964 = vmul.f32 %v962, %v959
        %v965 = vmul.f32 %v962, %v960
        %v966 = vmul.f32 %v962, %v961
        %v967 = vadd.f32 %v935, %v963
        %v968 = vadd.f32 %v940, %v964
        %v969 = vadd.f32 %v945, %v965
        %v970 = vadd.f32 %v950, %v966
        %s971 = sadd.s32 %s549, 34
        %s972 = sld [smem:[#allocation2 + %s971]]
        %s973 = sld [smem:[#allocation4 + %s971]]
        %s974 = smul.u32 %s972, 32
        %s975 = scalar_lea.vmem %s415, %s974
        %v976 = vld [vmem:[%s975] sm:$0xff]
        %v977 = vld [vmem:[%s975 + $0x8] sm:$0xff]
        %v978 = vld [vmem:[%s975 + $0x10] sm:$0xff]
        %v979 = vld [vmem:[%s975 + $0x18] sm:$0xff]
        %v980 = vstv %s973
        %v981 = vmul.f32 %v980, %v976
        %v982 = vmul.f32 %v980, %v977
        %v983 = vmul.f32 %v980, %v978
        %v984 = vmul.f32 %v980, %v979
        %v985 = vadd.f32 %v967, %v981
        %v986 = vadd.f32 %v968, %v982
        %v987 = vadd.f32 %v969, %v983
        %v988 = vadd.f32 %v970, %v984
        %s989 = sadd.s32 %s549, 66
        %s990 = sld [smem:[#allocation2 + %s989]]
        %s991 = sld [smem:[#allocation4 + %s989]]
        %s992 = smul.u32 %s990, 32
        %s993 = scalar_lea.vmem %s420, %s992
        %v994 = vld [vmem:[%s993] sm:$0xff]
        %v995 = vld [vmem:[%s993 + $0x8] sm:$0xff]
        %v996 = vld [vmem:[%s993 + $0x10] sm:$0xff]
        %v997 = vld [vmem:[%s993 + $0x18] sm:$0xff]
        %v998 = vstv %s991
        %v999 = vmul.f32 %v998, %v994
        %v1000 = vmul.f32 %v998, %v995
        %v1001 = vmul.f32 %v998, %v996
        %v1002 = vmul.f32 %v998, %v997
        %v1003 = vadd.f32 %v985, %v999
        %v1004 = vadd.f32 %v986, %v1000
        %v1005 = vadd.f32 %v987, %v1001
        %v1006 = vadd.f32 %v988, %v1002
        %s1007 = sadd.s32 %s549, 98
        %s1008 = sld [smem:[#allocation2 + %s1007]]
        %s1009 = sld [smem:[#allocation4 + %s1007]]
        %s1010 = smul.u32 %s1008, 32
        %s1011 = scalar_lea.vmem %s420, %s1010
        %v1012 = vld [vmem:[%s1011] sm:$0xff]
        %v1013 = vld [vmem:[%s1011 + $0x8] sm:$0xff]
        %v1014 = vld [vmem:[%s1011 + $0x10] sm:$0xff]
        %v1015 = vld [vmem:[%s1011 + $0x18] sm:$0xff]
        %v1016 = vstv %s1009
        %v1017 = vmul.f32 %v1016, %v1012
        %v1018 = vmul.f32 %v1016, %v1013
        %v1019 = vmul.f32 %v1016, %v1014
        %v1020 = vmul.f32 %v1016, %v1015
        %v1021 = vadd.f32 %v1003, %v1017
        %v1022 = vadd.f32 %v1004, %v1018
        %v1023 = vadd.f32 %v1005, %v1019
        %v1024 = vadd.f32 %v1006, %v1020
        %s1025 = sadd.s32 %s549, 130
        %s1026 = sld [smem:[#allocation2 + %s1025]]
        %s1027 = sld [smem:[#allocation4 + %s1025]]
        %s1028 = smul.u32 %s1026, 32
        %s1029 = scalar_lea.vmem %s425, %s1028
        %v1030 = vld [vmem:[%s1029] sm:$0xff]
        %v1031 = vld [vmem:[%s1029 + $0x8] sm:$0xff]
        %v1032 = vld [vmem:[%s1029 + $0x10] sm:$0xff]
        %v1033 = vld [vmem:[%s1029 + $0x18] sm:$0xff]
        %v1034 = vstv %s1027
        %v1035 = vmul.f32 %v1034, %v1030
        %v1036 = vmul.f32 %v1034, %v1031
        %v1037 = vmul.f32 %v1034, %v1032
        %v1038 = vmul.f32 %v1034, %v1033
        %v1039 = vadd.f32 %v1021, %v1035
        %v1040 = vadd.f32 %v1022, %v1036
        %v1041 = vadd.f32 %v1023, %v1037
        %v1042 = vadd.f32 %v1024, %v1038
        %s1043 = sadd.s32 %s549, 162
        %s1044 = sld [smem:[#allocation2 + %s1043]]
        %s1045 = sld [smem:[#allocation4 + %s1043]]
        %s1046 = smul.u32 %s1044, 32
        %s1047 = scalar_lea.vmem %s425, %s1046
        %v1048 = vld [vmem:[%s1047] sm:$0xff]
        %v1049 = vld [vmem:[%s1047 + $0x8] sm:$0xff]
        %v1050 = vld [vmem:[%s1047 + $0x10] sm:$0xff]
        %v1051 = vld [vmem:[%s1047 + $0x18] sm:$0xff]
        %v1052 = vstv %s1045
        %v1053 = vmul.f32 %v1052, %v1048
        %v1054 = vmul.f32 %v1052, %v1049
        %v1055 = vmul.f32 %v1052, %v1050
        %v1056 = vmul.f32 %v1052, %v1051
        %v1057 = vadd.f32 %v1039, %v1053
        %v1058 = vadd.f32 %v1040, %v1054
        %v1059 = vadd.f32 %v1041, %v1055
        %v1060 = vadd.f32 %v1042, %v1056
        %s1061 = scalar_lea.vmem %s409, 96
        %v1062 = vld [vmem:[%s1061] sm:$0xff]
        %v1063 = vld [vmem:[%s1061 + $0x8] sm:$0xff]
        %v1064 = vld [vmem:[%s1061 + $0x10] sm:$0xff]
        %v1065 = vld [vmem:[%s1061 + $0x18] sm:$0xff]
        %1066 = vmatprep.subr.mxu0 0.0
        %1067 = vmatpush1.msra.mxu0 %v437
        %1068 = vmatprep.subr.mxu0 0.0
        %1069 = vmatpush1.msra.mxu0 %v438
        %1070 = vmatprep.subr.mxu0 0.0
        %1071 = vmatpush1.msra.mxu0 %v439
        %1072 = vmatprep.subr.mxu0 0.0
        %1073 = vmatpush1.msra.mxu0 %v440
        %1074 = vmatprep.subr.mxu0 0.0
        %1075 = vmatpush1.msra.mxu0 %v441
        %1076 = vmatprep.subr.mxu0 0.0
        %1077 = vmatpush1.msra.mxu0 %v442
        %1078 = vmatprep.subr.mxu0 0.0
        %1079 = vmatpush1.msra.mxu0 %v443
        %1080 = vmatprep.subr.mxu0 0.0
        %1081 = vmatpush1.msra.mxu0 %v444
        %1082 = vmatprep.subr.mxu0 0.0
        %1083 = vmatpush1.msra.mxu0 %v445
        %1084 = vmatprep.subr.mxu0 0.0
        %1085 = vmatpush1.msra.mxu0 %v446
        %1086 = vmatprep.subr.mxu0 0.0
        %1087 = vmatpush1.msra.mxu0 %v447
        %1088 = vmatprep.subr.mxu0 0.0
        %1089 = vmatpush1.msra.mxu0 %v448
        %1090 = vmatprep.subr.mxu0 0.0
        %1091 = vmatpush1.msra.mxu0 %v449
        %1092 = vmatprep.subr.mxu0 0.0
        %1093 = vmatpush1.msra.mxu0 %v450
        %1094 = vmatprep.subr.mxu0 0.0
        %1095 = vmatpush1.msra.mxu0 %v451
        %1096 = vmatprep.subr.mxu0 0.0
        %1097 = vmatpush1.msra.mxu0 %v452
        %1098 = vmatprep.subr.mxu0 0.0
        %1099 = vmatpush1.msra.mxu0 0.0
        %1100 = vmatprep.subr.mxu0 0.0
        %1101 = vmatpush1.msra.mxu0 0.0
        %1102 = vmatprep.subr.mxu0 0.0
        %1103 = vmatpush1.msra.mxu0 0.0
        %1104 = vmatprep.subr.mxu0 0.0
        %1105 = vmatpush1.msra.mxu0 0.0
        %1106 = vmatprep.subr.mxu0 0.0
        %1107 = vmatpush1.msra.mxu0 0.0
        %1108 = vmatprep.subr.mxu0 0.0
        %1109 = vmatpush1.msra.mxu0 0.0
        %1110 = vmatprep.subr.mxu0 0.0
        %1111 = vmatpush1.msra.mxu0 0.0
        %1112 = vmatprep.subr.mxu0 0.0
        %1113 = vmatpush1.msra.mxu0 0.0
        %1114 = vmatprep.subr.mxu0 0.0
        %1115 = vmatpush1.msra.mxu0 0.0
        %1116 = vmatprep.subr.mxu0 0.0
        %1117 = vmatpush1.msra.mxu0 0.0
        %1118 = vmatprep.subr.mxu0 0.0
        %1119 = vmatpush1.msra.mxu0 0.0
        %1120 = vmatprep.subr.mxu0 0.0
        %1121 = vmatpush1.msra.mxu0 0.0
        %1122 = vmatprep.subr.mxu0 0.0
        %1123 = vmatpush1.msra.mxu0 0.0
        %1124 = vmatprep.subr.mxu0 0.0
        %1125 = vmatpush1.msra.mxu0 0.0
        %1126 = vmatprep.subr.mxu0 0.0
        %1127 = vmatpush1.msra.mxu0 0.0
        %1128 = vmatprep.subr.mxu0 0.0
        %1129 = vmatpush1.msra.mxu0 0.0
        %1130 = vmatprep.mubr.f32.mxu0 0.0
        %1131 = vmatmul.mubr.f32.gmra.mrb[0].mxu0 %v1062
        %v1132 = vpop.f32.mrb[0].mxu0
        %v1133 = vadd.f32 %v458, %v1132
        %v1134 = vpop.f32.mrb[0].mxu0
        %1135 = vmatprep.mubr.f32.mxu0 0.0
        %1136 = vmatmul.mubr.f32.gmra.mrb[0].mxu0 %v1063
        %v1137 = vpop.f32.mrb[0].mxu0
        %v1138 = vadd.f32 %v458, %v1137
        %v1139 = vpop.f32.mrb[0].mxu0
        %1140 = vmatprep.mubr.f32.mxu0 0.0
        %1141 = vmatmul.mubr.f32.gmra.mrb[0].mxu0 %v1064
        %v1142 = vpop.f32.mrb[0].mxu0
        %v1143 = vadd.f32 %v458, %v1142
        %v1144 = vpop.f32.mrb[0].mxu0
        %1145 = vmatprep.mubr.f32.mxu0 0.0
        %1146 = vmatmul.mubr.f32.gmra.mrb[0].mxu0 %v1065
        %v1147 = vpop.f32.mrb[0].mxu0
        %v1148 = vadd.f32 %v458, %v1147
        %v1149 = vpop.f32.mrb[0].mxu0
        %1150 = vdwg.mxu0
        %s1151 = sadd.s32 %s549, 3
        %s1152 = sld [smem:[#allocation2 + %s1151]]
        %s1153 = sld [smem:[#allocation4 + %s1151]]
        %s1154 = smul.u32 %s1152, 32
        %s1155 = scalar_lea.vmem %s415, %s1154
        %v1156 = vld [vmem:[%s1155] sm:$0xff]
        %v1157 = vld [vmem:[%s1155 + $0x8] sm:$0xff]
        %v1158 = vld [vmem:[%s1155 + $0x10] sm:$0xff]
        %v1159 = vld [vmem:[%s1155 + $0x18] sm:$0xff]
        %v1160 = vstv %s1153
        %v1161 = vmul.f32 %v1160, %v1156
        %v1162 = vmul.f32 %v1160, %v1157
        %v1163 = vmul.f32 %v1160, %v1158
        %v1164 = vmul.f32 %v1160, %v1159
        %v1165 = vadd.f32 %v1133, %v1161
        %v1166 = vadd.f32 %v1138, %v1162
        %v1167 = vadd.f32 %v1143, %v1163
        %v1168 = vadd.f32 %v1148, %v1164
        %s1169 = sadd.s32 %s549, 35
        %s1170 = sld [smem:[#allocation2 + %s1169]]
        %s1171 = sld [smem:[#allocation4 + %s1169]]
        %s1172 = smul.u32 %s1170, 32
        %s1173 = scalar_lea.vmem %s415, %s1172
        %v1174 = vld [vmem:[%s1173] sm:$0xff]
        %v1175 = vld [vmem:[%s1173 + $0x8] sm:$0xff]
        %v1176 = vld [vmem:[%s1173 + $0x10] sm:$0xff]
        %v1177 = vld [vmem:[%s1173 + $0x18] sm:$0xff]
        %v1178 = vstv %s1171
        %v1179 = vmul.f32 %v1178, %v1174
        %v1180 = vmul.f32 %v1178, %v1175
        %v1181 = vmul.f32 %v1178, %v1176
        %v1182 = vmul.f32 %v1178, %v1177
        %v1183 = vadd.f32 %v1165, %v1179
        %v1184 = vadd.f32 %v1166, %v1180
        %v1185 = vadd.f32 %v1167, %v1181
        %v1186 = vadd.f32 %v1168, %v1182
        %s1187 = sadd.s32 %s549, 67
        %s1188 = sld [smem:[#allocation2 + %s1187]]
        %s1189 = sld [smem:[#allocation4 + %s1187]]
        %s1190 = smul.u32 %s1188, 32
        %s1191 = scalar_lea.vmem %s420, %s1190
        %v1192 = vld [vmem:[%s1191] sm:$0xff]
        %v1193 = vld [vmem:[%s1191 + $0x8] sm:$0xff]
        %v1194 = vld [vmem:[%s1191 + $0x10] sm:$0xff]
        %v1195 = vld [vmem:[%s1191 + $0x18] sm:$0xff]
        %v1196 = vstv %s1189
        %v1197 = vmul.f32 %v1196, %v1192
        %v1198 = vmul.f32 %v1196, %v1193
        %v1199 = vmul.f32 %v1196, %v1194
        %v1200 = vmul.f32 %v1196, %v1195
        %v1201 = vadd.f32 %v1183, %v1197
        %v1202 = vadd.f32 %v1184, %v1198
        %v1203 = vadd.f32 %v1185, %v1199
        %v1204 = vadd.f32 %v1186, %v1200
        %s1205 = sadd.s32 %s549, 99
        %s1206 = sld [smem:[#allocation2 + %s1205]]
        %s1207 = sld [smem:[#allocation4 + %s1205]]
        %s1208 = smul.u32 %s1206, 32
        %s1209 = scalar_lea.vmem %s420, %s1208
        %v1210 = vld [vmem:[%s1209] sm:$0xff]
        %v1211 = vld [vmem:[%s1209 + $0x8] sm:$0xff]
        %v1212 = vld [vmem:[%s1209 + $0x10] sm:$0xff]
        %v1213 = vld [vmem:[%s1209 + $0x18] sm:$0xff]
        %v1214 = vstv %s1207
        %v1215 = vmul.f32 %v1214, %v1210
        %v1216 = vmul.f32 %v1214, %v1211
        %v1217 = vmul.f32 %v1214, %v1212
        %v1218 = vmul.f32 %v1214, %v1213
        %v1219 = vadd.f32 %v1201, %v1215
        %v1220 = vadd.f32 %v1202, %v1216
        %v1221 = vadd.f32 %v1203, %v1217
        %v1222 = vadd.f32 %v1204, %v1218
        %s1223 = sadd.s32 %s549, 131
        %s1224 = sld [smem:[#allocation2 + %s1223]]
        %s1225 = sld [smem:[#allocation4 + %s1223]]
        %s1226 = smul.u32 %s1224, 32
        %s1227 = scalar_lea.vmem %s425, %s1226
        %v1228 = vld [vmem:[%s1227] sm:$0xff]
        %v1229 = vld [vmem:[%s1227 + $0x8] sm:$0xff]
        %v1230 = vld [vmem:[%s1227 + $0x10] sm:$0xff]
        %v1231 = vld [vmem:[%s1227 + $0x18] sm:$0xff]
        %v1232 = vstv %s1225
        %v1233 = vmul.f32 %v1232, %v1228
        %v1234 = vmul.f32 %v1232, %v1229
        %v1235 = vmul.f32 %v1232, %v1230
        %v1236 = vmul.f32 %v1232, %v1231
        %v1237 = vadd.f32 %v1219, %v1233
        %v1238 = vadd.f32 %v1220, %v1234
        %v1239 = vadd.f32 %v1221, %v1235
        %v1240 = vadd.f32 %v1222, %v1236
        %s1241 = sadd.s32 %s549, 163
        %s1242 = sld [smem:[#allocation2 + %s1241]]
        %s1243 = sld [smem:[#allocation4 + %s1241]]
        %s1244 = smul.u32 %s1242, 32
        %s1245 = scalar_lea.vmem %s425, %s1244
        %v1246 = vld [vmem:[%s1245] sm:$0xff]
        %v1247 = vld [vmem:[%s1245 + $0x8] sm:$0xff]
        %v1248 = vld [vmem:[%s1245 + $0x10] sm:$0xff]
        %v1249 = vld [vmem:[%s1245 + $0x18] sm:$0xff]
        %v1250 = vstv %s1243
        %v1251 = vmul.f32 %v1250, %v1246
        %v1252 = vmul.f32 %v1250, %v1247
        %v1253 = vmul.f32 %v1250, %v1248
        %v1254 = vmul.f32 %v1250, %v1249
        %v1255 = vadd.f32 %v1237, %v1251
        %v1256 = vadd.f32 %v1238, %v1252
        %v1257 = vadd.f32 %v1239, %v1253
        %v1258 = vadd.f32 %v1240, %v1254
        %v1259 = vmax.f32 %v1057, %v1255
        %v1260 = vmax.f32 %v1058, %v1256
        %v1261 = vmax.f32 %v1059, %v1257
        %v1262 = vmax.f32 %v1060, %v1258
        %s1263 = scalar_lea.vmem %s435, 32
        %1264 = vst [vmem:[%s1263] sm:$0xff] %v1259
        %1265 = vst [vmem:[%s1263 + $0x8] sm:$0xff] %v1260
        %1266 = vst [vmem:[%s1263 + $0x10] sm:$0xff] %v1261
        %1267 = vst [vmem:[%s1263 + $0x18] sm:$0xff] %v1262
        %s1268 = scalar_lea.vmem %s409, 128
        %v1269 = vld [vmem:[%s1268] sm:$0xff]
        %v1270 = vld [vmem:[%s1268 + $0x8] sm:$0xff]
        %v1271 = vld [vmem:[%s1268 + $0x10] sm:$0xff]
        %v1272 = vld [vmem:[%s1268 + $0x18] sm:$0xff]
        %1273 = vmatprep.subr.mxu0 0.0
        %1274 = vmatpush1.msra.mxu0 %v437
        %1275 = vmatprep.subr.mxu0 0.0
        %1276 = vmatpush1.msra.mxu0 %v438
        %1277 = vmatprep.subr.mxu0 0.0
        %1278 = vmatpush1.msra.mxu0 %v439
        %1279 = vmatprep.subr.mxu0 0.0
        %1280 = vmatpush1.msra.mxu0 %v440
        %1281 = vmatprep.subr.mxu0 0.0
        %1282 = vmatpush1.msra.mxu0 %v441
        %1283 = vmatprep.subr.mxu0 0.0
        %1284 = vmatpush1.msra.mxu0 %v442
        %1285 = vmatprep.subr.mxu0 0.0
        %1286 = vmatpush1.msra.mxu0 %v443
        %1287 = vmatprep.subr.mxu0 0.0
        %1288 = vmatpush1.msra.mxu0 %v444
        %1289 = vmatprep.subr.mxu0 0.0
        %1290 = vmatpush1.msra.mxu0 %v445
        %1291 = vmatprep.subr.mxu0 0.0
        %1292 = vmatpush1.msra.mxu0 %v446
        %1293 = vmatprep.subr.mxu0 0.0
        %1294 = vmatpush1.msra.mxu0 %v447
        %1295 = vmatprep.subr.mxu0 0.0
        %1296 = vmatpush1.msra.mxu0 %v448
        %1297 = vmatprep.subr.mxu0 0.0
        %1298 = vmatpush1.msra.mxu0 %v449
        %1299 = vmatprep.subr.mxu0 0.0
        %1300 = vmatpush1.msra.mxu0 %v450
        %1301 = vmatprep.subr.mxu0 0.0
        %1302 = vmatpush1.msra.mxu0 %v451
        %1303 = vmatprep.subr.mxu0 0.0
        %1304 = vmatpush1.msra.mxu0 %v452
        %1305 = vmatprep.subr.mxu0 0.0
        %1306 = vmatpush1.msra.mxu0 0.0
        %1307 = vmatprep.subr.mxu0 0.0
        %1308 = vmatpush1.msra.mxu0 0.0
        %1309 = vmatprep.subr.mxu0 0.0
        %1310 = vmatpush1.msra.mxu0 0.0
        %1311 = vmatprep.subr.mxu0 0.0
        %1312 = vmatpush1.msra.mxu0 0.0
        %1313 = vmatprep.subr.mxu0 0.0
        %1314 = vmatpush1.msra.mxu0 0.0
        %1315 = vmatprep.subr.mxu0 0.0
        %1316 = vmatpush1.msra.mxu0 0.0
        %1317 = vmatprep.subr.mxu0 0.0
        %1318 = vmatpush1.msra.mxu0 0.0
        %1319 = vmatprep.subr.mxu0 0.0
        %1320 = vmatpush1.msra.mxu0 0.0
        %1321 = vmatprep.subr.mxu0 0.0
        %1322 = vmatpush1.msra.mxu0 0.0
        %1323 = vmatprep.subr.mxu0 0.0
        %1324 = vmatpush1.msra.mxu0 0.0
        %1325 = vmatprep.subr.mxu0 0.0
        %1326 = vmatpush1.msra.mxu0 0.0
        %1327 = vmatprep.subr.mxu0 0.0
        %1328 = vmatpush1.msra.mxu0 0.0
        %1329 = vmatprep.subr.mxu0 0.0
        %1330 = vmatpush1.msra.mxu0 0.0
        %1331 = vmatprep.subr.mxu0 0.0
        %1332 = vmatpush1.msra.mxu0 0.0
        %1333 = vmatprep.subr.mxu0 0.0
        %1334 = vmatpush1.msra.mxu0 0.0
        %1335 = vmatprep.subr.mxu0 0.0
        %1336 = vmatpush1.msra.mxu0 0.0
        %1337 = vmatprep.mubr.f32.mxu0 0.0
        %1338 = vmatmul.mubr.f32.gmra.mrb[0].mxu0 %v1269
        %v1339 = vpop.f32.mrb[0].mxu0
        %v1340 = vadd.f32 %v458, %v1339
        %v1341 = vpop.f32.mrb[0].mxu0
        %1342 = vmatprep.mubr.f32.mxu0 0.0
        %1343 = vmatmul.mubr.f32.gmra.mrb[0].mxu0 %v1270
        %v1344 = vpop.f32.mrb[0].mxu0
        %v1345 = vadd.f32 %v458, %v1344
        %v1346 = vpop.f32.mrb[0].mxu0
        %1347 = vmatprep.mubr.f32.mxu0 0.0
        %1348 = vmatmul.mubr.f32.gmra.mrb[0].mxu0 %v1271
        %v1349 = vpop.f32.mrb[0].mxu0
        %v1350 = vadd.f32 %v458, %v1349
        %v1351 = vpop.f32.mrb[0].mxu0
        %1352 = vmatprep.mubr.f32.mxu0 0.0
        %1353 = vmatmul.mubr.f32.gmra.mrb[0].mxu0 %v1272
        %v1354 = vpop.f32.mrb[0].mxu0
        %v1355 = vadd.f32 %v458, %v1354
        %v1356 = vpop.f32.mrb[0].mxu0
        %1357 = vdwg.mxu0
        %s1358 = sadd.s32 %s549, 4
        %s1359 = sld [smem:[#allocation2 + %s1358]]
        %s1360 = sld [smem:[#allocation4 + %s1358]]
        %s1361 = smul.u32 %s1359, 32
        %s1362 = scalar_lea.vmem %s415, %s1361
        %v1363 = vld [vmem:[%s1362] sm:$0xff]
        %v1364 = vld [vmem:[%s1362 + $0x8] sm:$0xff]
        %v1365 = vld [vmem:[%s1362 + $0x10] sm:$0xff]
        %v1366 = vld [vmem:[%s1362 + $0x18] sm:$0xff]
        %v1367 = vstv %s1360
        %v1368 = vmul.f32 %v1367, %v1363
        %v1369 = vmul.f32 %v1367, %v1364
        %v1370 = vmul.f32 %v1367, %v1365
        %v1371 = vmul.f32 %v1367, %v1366
        %v1372 = vadd.f32 %v1340, %v1368
        %v1373 = vadd.f32 %v1345, %v1369
        %v1374 = vadd.f32 %v1350, %v1370
        %v1375 = vadd.f32 %v1355, %v1371
        %s1376 = sadd.s32 %s549, 36
        %s1377 = sld [smem:[#allocation2 + %s1376]]
        %s1378 = sld [smem:[#allocation4 + %s1376]]
        %s1379 = smul.u32 %s1377, 32
        %s1380 = scalar_lea.vmem %s415, %s1379
        %v1381 = vld [vmem:[%s1380] sm:$0xff]
        %v1382 = vld [vmem:[%s1380 + $0x8] sm:$0xff]
        %v1383 = vld [vmem:[%s1380 + $0x10] sm:$0xff]
        %v1384 = vld [vmem:[%s1380 + $0x18] sm:$0xff]
        %v1385 = vstv %s1378
        %v1386 = vmul.f32 %v1385, %v1381
        %v1387 = vmul.f32 %v1385, %v1382
        %v1388 = vmul.f32 %v1385, %v1383
        %v1389 = vmul.f32 %v1385, %v1384
        %v1390 = vadd.f32 %v1372, %v1386
        %v1391 = vadd.f32 %v1373, %v1387
        %v1392 = vadd.f32 %v1374, %v1388
        %v1393 = vadd.f32 %v1375, %v1389
        %s1394 = sadd.s32 %s549, 68
        %s1395 = sld [smem:[#allocation2 + %s1394]]
        %s1396 = sld [smem:[#allocation4 + %s1394]]
        %s1397 = smul.u32 %s1395, 32
        %s1398 = scalar_lea.vmem %s420, %s1397
        %v1399 = vld [vmem:[%s1398] sm:$0xff]
        %v1400 = vld [vmem:[%s1398 + $0x8] sm:$0xff]
        %v1401 = vld [vmem:[%s1398 + $0x10] sm:$0xff]
        %v1402 = vld [vmem:[%s1398 + $0x18] sm:$0xff]
        %v1403 = vstv %s1396
        %v1404 = vmul.f32 %v1403, %v1399
        %v1405 = vmul.f32 %v1403, %v1400
        %v1406 = vmul.f32 %v1403, %v1401
        %v1407 = vmul.f32 %v1403, %v1402
        %v1408 = vadd.f32 %v1390, %v1404
        %v1409 = vadd.f32 %v1391, %v1405
        %v1410 = vadd.f32 %v1392, %v1406
        %v1411 = vadd.f32 %v1393, %v1407
        %s1412 = sadd.s32 %s549, 100
        %s1413 = sld [smem:[#allocation2 + %s1412]]
        %s1414 = sld [smem:[#allocation4 + %s1412]]
        %s1415 = smul.u32 %s1413, 32
        %s1416 = scalar_lea.vmem %s420, %s1415
        %v1417 = vld [vmem:[%s1416] sm:$0xff]
        %v1418 = vld [vmem:[%s1416 + $0x8] sm:$0xff]
        %v1419 = vld [vmem:[%s1416 + $0x10] sm:$0xff]
        %v1420 = vld [vmem:[%s1416 + $0x18] sm:$0xff]
        %v1421 = vstv %s1414
        %v1422 = vmul.f32 %v1421, %v1417
        %v1423 = vmul.f32 %v1421, %v1418
        %v1424 = vmul.f32 %v1421, %v1419
        %v1425 = vmul.f32 %v1421, %v1420
        %v1426 = vadd.f32 %v1408, %v1422
        %v1427 = vadd.f32 %v1409, %v1423
        %v1428 = vadd.f32 %v1410, %v1424
        %v1429 = vadd.f32 %v1411, %v1425
        %s1430 = sadd.s32 %s549, 132
        %s1431 = sld [smem:[#allocation2 + %s1430]]
        %s1432 = sld [smem:[#allocation4 + %s1430]]
        %s1433 = smul.u32 %s1431, 32
        %s1434 = scalar_lea.vmem %s425, %s1433
        %v1435 = vld [vmem:[%s1434] sm:$0xff]
        %v1436 = vld [vmem:[%s1434 + $0x8] sm:$0xff]
        %v1437 = vld [vmem:[%s1434 + $0x10] sm:$0xff]
        %v1438 = vld [vmem:[%s1434 + $0x18] sm:$0xff]
        %v1439 = vstv %s1432
        %v1440 = vmul.f32 %v1439, %v1435
        %v1441 = vmul.f32 %v1439, %v1436
        %v1442 = vmul.f32 %v1439, %v1437
        %v1443 = vmul.f32 %v1439, %v1438
        %v1444 = vadd.f32 %v1426, %v1440
        %v1445 = vadd.f32 %v1427, %v1441
        %v1446 = vadd.f32 %v1428, %v1442
        %v1447 = vadd.f32 %v1429, %v1443
        %s1448 = sadd.s32 %s549, 164
        %s1449 = sld [smem:[#allocation2 + %s1448]]
        %s1450 = sld [smem:[#allocation4 + %s1448]]
        %s1451 = smul.u32 %s1449, 32
        %s1452 = scalar_lea.vmem %s425, %s1451
        %v1453 = vld [vmem:[%s1452] sm:$0xff]
        %v1454 = vld [vmem:[%s1452 + $0x8] sm:$0xff]
        %v1455 = vld [vmem:[%s1452 + $0x10] sm:$0xff]
        %v1456 = vld [vmem:[%s1452 + $0x18] sm:$0xff]
        %v1457 = vstv %s1450
        %v1458 = vmul.f32 %v1457, %v1453
        %v1459 = vmul.f32 %v1457, %v1454
        %v1460 = vmul.f32 %v1457, %v1455
        %v1461 = vmul.f32 %v1457, %v1456
        %v1462 = vadd.f32 %v1444, %v1458
        %v1463 = vadd.f32 %v1445, %v1459
        %v1464 = vadd.f32 %v1446, %v1460
        %v1465 = vadd.f32 %v1447, %v1461
        %s1466 = scalar_lea.vmem %s409, 160
        %v1467 = vld [vmem:[%s1466] sm:$0xff]
        %v1468 = vld [vmem:[%s1466 + $0x8] sm:$0xff]
        %v1469 = vld [vmem:[%s1466 + $0x10] sm:$0xff]
        %v1470 = vld [vmem:[%s1466 + $0x18] sm:$0xff]
        %1471 = vmatprep.subr.mxu0 0.0
        %1472 = vmatpush1.msra.mxu0 %v437
        %1473 = vmatprep.subr.mxu0 0.0
        %1474 = vmatpush1.msra.mxu0 %v438
        %1475 = vmatprep.subr.mxu0 0.0
        %1476 = vmatpush1.msra.mxu0 %v439
        %1477 = vmatprep.subr.mxu0 0.0
        %1478 = vmatpush1.msra.mxu0 %v440
        %1479 = vmatprep.subr.mxu0 0.0
        %1480 = vmatpush1.msra.mxu0 %v441
        %1481 = vmatprep.subr.mxu0 0.0
        %1482 = vmatpush1.msra.mxu0 %v442
        %1483 = vmatprep.subr.mxu0 0.0
        %1484 = vmatpush1.msra.mxu0 %v443
        %1485 = vmatprep.subr.mxu0 0.0
        %1486 = vmatpush1.msra.mxu0 %v444
        %1487 = vmatprep.subr.mxu0 0.0
        %1488 = vmatpush1.msra.mxu0 %v445
        %1489 = vmatprep.subr.mxu0 0.0
        %1490 = vmatpush1.msra.mxu0 %v446
        %1491 = vmatprep.subr.mxu0 0.0
        %1492 = vmatpush1.msra.mxu0 %v447
        %1493 = vmatprep.subr.mxu0 0.0
        %1494 = vmatpush1.msra.mxu0 %v448
        %1495 = vmatprep.subr.mxu0 0.0
        %1496 = vmatpush1.msra.mxu0 %v449
        %1497 = vmatprep.subr.mxu0 0.0
        %1498 = vmatpush1.msra.mxu0 %v450
        %1499 = vmatprep.subr.mxu0 0.0
        %1500 = vmatpush1.msra.mxu0 %v451
        %1501 = vmatprep.subr.mxu0 0.0
        %1502 = vmatpush1.msra.mxu0 %v452
        %1503 = vmatprep.subr.mxu0 0.0
        %1504 = vmatpush1.msra.mxu0 0.0
        %1505 = vmatprep.subr.mxu0 0.0
        %1506 = vmatpush1.msra.mxu0 0.0
        %1507 = vmatprep.subr.mxu0 0.0
        %1508 = vmatpush1.msra.mxu0 0.0
        %1509 = vmatprep.subr.mxu0 0.0
        %1510 = vmatpush1.msra.mxu0 0.0
        %1511 = vmatprep.subr.mxu0 0.0
        %1512 = vmatpush1.msra.mxu0 0.0
        %1513 = vmatprep.subr.mxu0 0.0
        %1514 = vmatpush1.msra.mxu0 0.0
        %1515 = vmatprep.subr.mxu0 0.0
        %1516 = vmatpush1.msra.mxu0 0.0
        %1517 = vmatprep.subr.mxu0 0.0
        %1518 = vmatpush1.msra.mxu0 0.0
        %1519 = vmatprep.subr.mxu0 0.0
        %1520 = vmatpush1.msra.mxu0 0.0
        %1521 = vmatprep.subr.mxu0 0.0
        %1522 = vmatpush1.msra.mxu0 0.0
        %1523 = vmatprep.subr.mxu0 0.0
        %1524 = vmatpush1.msra.mxu0 0.0
        %1525 = vmatprep.subr.mxu0 0.0
        %1526 = vmatpush1.msra.mxu0 0.0
        %1527 = vmatprep.subr.mxu0 0.0
        %1528 = vmatpush1.msra.mxu0 0.0
        %1529 = vmatprep.subr.mxu0 0.0
        %1530 = vmatpush1.msra.mxu0 0.0
        %1531 = vmatprep.subr.mxu0 0.0
        %1532 = vmatpush1.msra.mxu0 0.0
        %1533 = vmatprep.subr.mxu0 0.0
        %1534 = vmatpush1.msra.mxu0 0.0
        %1535 = vmatprep.mubr.f32.mxu0 0.0
        %1536 = vmatmul.mubr.f32.gmra.mrb[0].mxu0 %v1467
        %v1537 = vpop.f32.mrb[0].mxu0
        %v1538 = vadd.f32 %v458, %v1537
        %v1539 = vpop.f32.mrb[0].mxu0
        %1540 = vmatprep.mubr.f32.mxu0 0.0
        %1541 = vmatmul.mubr.f32.gmra.mrb[0].mxu0 %v1468
        %v1542 = vpop.f32.mrb[0].mxu0
        %v1543 = vadd.f32 %v458, %v1542
        %v1544 = vpop.f32.mrb[0].mxu0
        %1545 = vmatprep.mubr.f32.mxu0 0.0
        %1546 = vmatmul.mubr.f32.gmra.mrb[0].mxu0 %v1469
        %v1547 = vpop.f32.mrb[0].mxu0
        %v1548 = vadd.f32 %v458, %v1547
        %v1549 = vpop.f32.mrb[0].mxu0
        %1550 = vmatprep.mubr.f32.mxu0 0.0
        %1551 = vmatmul.mubr.f32.gmra.mrb[0].mxu0 %v1470
        %v1552 = vpop.f32.mrb[0].mxu0
        %v1553 = vadd.f32 %v458, %v1552
        %v1554 = vpop.f32.mrb[0].mxu0
        %1555 = vdwg.mxu0
        %s1556 = sadd.s32 %s549, 5
        %s1557 = sld [smem:[#allocation2 + %s1556]]
        %s1558 = sld [smem:[#allocation4 + %s1556]]
        %s1559 = smul.u32 %s1557, 32
        %s1560 = scalar_lea.vmem %s415, %s1559
        %v1561 = vld [vmem:[%s1560] sm:$0xff]
        %v1562 = vld [vmem:[%s1560 + $0x8] sm:$0xff]
        %v1563 = vld [vmem:[%s1560 + $0x10] sm:$0xff]
        %v1564 = vld [vmem:[%s1560 + $0x18] sm:$0xff]
        %v1565 = vstv %s1558
        %v1566 = vmul.f32 %v1565, %v1561
        %v1567 = vmul.f32 %v1565, %v1562
        %v1568 = vmul.f32 %v1565, %v1563
        %v1569 = vmul.f32 %v1565, %v1564
        %v1570 = vadd.f32 %v1538, %v1566
        %v1571 = vadd.f32 %v1543, %v1567
        %v1572 = vadd.f32 %v1548, %v1568
        %v1573 = vadd.f32 %v1553, %v1569
        %s1574 = sadd.s32 %s549, 37
        %s1575 = sld [smem:[#allocation2 + %s1574]]
        %s1576 = sld [smem:[#allocation4 + %s1574]]
        %s1577 = smul.u32 %s1575, 32
        %s1578 = scalar_lea.vmem %s415, %s1577
        %v1579 = vld [vmem:[%s1578] sm:$0xff]
        %v1580 = vld [vmem:[%s1578 + $0x8] sm:$0xff]
        %v1581 = vld [vmem:[%s1578 + $0x10] sm:$0xff]
        %v1582 = vld [vmem:[%s1578 + $0x18] sm:$0xff]
        %v1583 = vstv %s1576
        %v1584 = vmul.f32 %v1583, %v1579
        %v1585 = vmul.f32 %v1583, %v1580
        %v1586 = vmul.f32 %v1583, %v1581
        %v1587 = vmul.f32 %v1583, %v1582
        %v1588 = vadd.f32 %v1570, %v1584
        %v1589 = vadd.f32 %v1571, %v1585
        %v1590 = vadd.f32 %v1572, %v1586
        %v1591 = vadd.f32 %v1573, %v1587
        %s1592 = sadd.s32 %s549, 69
        %s1593 = sld [smem:[#allocation2 + %s1592]]
        %s1594 = sld [smem:[#allocation4 + %s1592]]
        %s1595 = smul.u32 %s1593, 32
        %s1596 = scalar_lea.vmem %s420, %s1595
        %v1597 = vld [vmem:[%s1596] sm:$0xff]
        %v1598 = vld [vmem:[%s1596 + $0x8] sm:$0xff]
        %v1599 = vld [vmem:[%s1596 + $0x10] sm:$0xff]
        %v1600 = vld [vmem:[%s1596 + $0x18] sm:$0xff]
        %v1601 = vstv %s1594
        %v1602 = vmul.f32 %v1601, %v1597
        %v1603 = vmul.f32 %v1601, %v1598
        %v1604 = vmul.f32 %v1601, %v1599
        %v1605 = vmul.f32 %v1601, %v1600
        %v1606 = vadd.f32 %v1588, %v1602
        %v1607 = vadd.f32 %v1589, %v1603
        %v1608 = vadd.f32 %v1590, %v1604
        %v1609 = vadd.f32 %v1591, %v1605
        %s1610 = sadd.s32 %s549, 101
        %s1611 = sld [smem:[#allocation2 + %s1610]]
        %s1612 = sld [smem:[#allocation4 + %s1610]]
        %s1613 = smul.u32 %s1611, 32
        %s1614 = scalar_lea.vmem %s420, %s1613
        %v1615 = vld [vmem:[%s1614] sm:$0xff]
        %v1616 = vld [vmem:[%s1614 + $0x8] sm:$0xff]
        %v1617 = vld [vmem:[%s1614 + $0x10] sm:$0xff]
        %v1618 = vld [vmem:[%s1614 + $0x18] sm:$0xff]
        %v1619 = vstv %s1612
        %v1620 = vmul.f32 %v1619, %v1615
        %v1621 = vmul.f32 %v1619, %v1616
        %v1622 = vmul.f32 %v1619, %v1617
        %v1623 = vmul.f32 %v1619, %v1618
        %v1624 = vadd.f32 %v1606, %v1620
        %v1625 = vadd.f32 %v1607, %v1621
        %v1626 = vadd.f32 %v1608, %v1622
        %v1627 = vadd.f32 %v1609, %v1623
        %s1628 = sadd.s32 %s549, 133
        %s1629 = sld [smem:[#allocation2 + %s1628]]
        %s1630 = sld [smem:[#allocation4 + %s1628]]
        %s1631 = smul.u32 %s1629, 32
        %s1632 = scalar_lea.vmem %s425, %s1631
        %v1633 = vld [vmem:[%s1632] sm:$0xff]
        %v1634 = vld [vmem:[%s1632 + $0x8] sm:$0xff]
        %v1635 = vld [vmem:[%s1632 + $0x10] sm:$0xff]
        %v1636 = vld [vmem:[%s1632 + $0x18] sm:$0xff]
        %v1637 = vstv %s1630
        %v1638 = vmul.f32 %v1637, %v1633
        %v1639 = vmul.f32 %v1637, %v1634
        %v1640 = vmul.f32 %v1637, %v1635
        %v1641 = vmul.f32 %v1637, %v1636
        %v1642 = vadd.f32 %v1624, %v1638
        %v1643 = vadd.f32 %v1625, %v1639
        %v1644 = vadd.f32 %v1626, %v1640
        %v1645 = vadd.f32 %v1627, %v1641
        %s1646 = sadd.s32 %s549, 165
        %s1647 = sld [smem:[#allocation2 + %s1646]]
        %s1648 = sld [smem:[#allocation4 + %s1646]]
        %s1649 = smul.u32 %s1647, 32
        %s1650 = scalar_lea.vmem %s425, %s1649
        %v1651 = vld [vmem:[%s1650] sm:$0xff]
        %v1652 = vld [vmem:[%s1650 + $0x8] sm:$0xff]
        %v1653 = vld [vmem:[%s1650 + $0x10] sm:$0xff]
        %v1654 = vld [vmem:[%s1650 + $0x18] sm:$0xff]
        %v1655 = vstv %s1648
        %v1656 = vmul.f32 %v1655, %v1651
        %v1657 = vmul.f32 %v1655, %v1652
        %v1658 = vmul.f32 %v1655, %v1653
        %v1659 = vmul.f32 %v1655, %v1654
        %v1660 = vadd.f32 %v1642, %v1656
        %v1661 = vadd.f32 %v1643, %v1657
        %v1662 = vadd.f32 %v1644, %v1658
        %v1663 = vadd.f32 %v1645, %v1659
        %v1664 = vmax.f32 %v1462, %v1660
        %v1665 = vmax.f32 %v1463, %v1661
        %v1666 = vmax.f32 %v1464, %v1662
        %v1667 = vmax.f32 %v1465, %v1663
        %s1668 = scalar_lea.vmem %s435, 64
        %1669 = vst [vmem:[%s1668] sm:$0xff] %v1664
        %1670 = vst [vmem:[%s1668 + $0x8] sm:$0xff] %v1665
        %1671 = vst [vmem:[%s1668 + $0x10] sm:$0xff] %v1666
        %1672 = vst [vmem:[%s1668 + $0x18] sm:$0xff] %v1667
        %s1673 = scalar_lea.vmem %s409, 192
        %v1674 = vld [vmem:[%s1673] sm:$0xff]
        %v1675 = vld [vmem:[%s1673 + $0x8] sm:$0xff]
        %v1676 = vld [vmem:[%s1673 + $0x10] sm:$0xff]
        %v1677 = vld [vmem:[%s1673 + $0x18] sm:$0xff]
        %1678 = vmatprep.subr.mxu0 0.0
        %1679 = vmatpush1.msra.mxu0 %v437
        %1680 = vmatprep.subr.mxu0 0.0
        %1681 = vmatpush1.msra.mxu0 %v438
        %1682 = vmatprep.subr.mxu0 0.0
        %1683 = vmatpush1.msra.mxu0 %v439
        %1684 = vmatprep.subr.mxu0 0.0
        %1685 = vmatpush1.msra.mxu0 %v440
        %1686 = vmatprep.subr.mxu0 0.0
        %1687 = vmatpush1.msra.mxu0 %v441
        %1688 = vmatprep.subr.mxu0 0.0
        %1689 = vmatpush1.msra.mxu0 %v442
        %1690 = vmatprep.subr.mxu0 0.0
        %1691 = vmatpush1.msra.mxu0 %v443
        %1692 = vmatprep.subr.mxu0 0.0
        %1693 = vmatpush1.msra.mxu0 %v444
        %1694 = vmatprep.subr.mxu0 0.0
        %1695 = vmatpush1.msra.mxu0 %v445
        %1696 = vmatprep.subr.mxu0 0.0
        %1697 = vmatpush1.msra.mxu0 %v446
        %1698 = vmatprep.subr.mxu0 0.0
        %1699 = vmatpush1.msra.mxu0 %v447
        %1700 = vmatprep.subr.mxu0 0.0
        %1701 = vmatpush1.msra.mxu0 %v448
        %1702 = vmatprep.subr.mxu0 0.0
        %1703 = vmatpush1.msra.mxu0 %v449
        %1704 = vmatprep.subr.mxu0 0.0
        %1705 = vmatpush1.msra.mxu0 %v450
        %1706 = vmatprep.subr.mxu0 0.0
        %1707 = vmatpush1.msra.mxu0 %v451
        %1708 = vmatprep.subr.mxu0 0.0
        %1709 = vmatpush1.msra.mxu0 %v452
        %1710 = vmatprep.subr.mxu0 0.0
        %1711 = vmatpush1.msra.mxu0 0.0
        %1712 = vmatprep.subr.mxu0 0.0
        %1713 = vmatpush1.msra.mxu0 0.0
        %1714 = vmatprep.subr.mxu0 0.0
        %1715 = vmatpush1.msra.mxu0 0.0
        %1716 = vmatprep.subr.mxu0 0.0
        %1717 = vmatpush1.msra.mxu0 0.0
        %1718 = vmatprep.subr.mxu0 0.0
        %1719 = vmatpush1.msra.mxu0 0.0
        %1720 = vmatprep.subr.mxu0 0.0
        %1721 = vmatpush1.msra.mxu0 0.0
        %1722 = vmatprep.subr.mxu0 0.0
        %1723 = vmatpush1.msra.mxu0 0.0
        %1724 = vmatprep.subr.mxu0 0.0
        %1725 = vmatpush1.msra.mxu0 0.0
        %1726 = vmatprep.subr.mxu0 0.0
        %1727 = vmatpush1.msra.mxu0 0.0
        %1728 = vmatprep.subr.mxu0 0.0
        %1729 = vmatpush1.msra.mxu0 0.0
        %1730 = vmatprep.subr.mxu0 0.0
        %1731 = vmatpush1.msra.mxu0 0.0
        %1732 = vmatprep.subr.mxu0 0.0
        %1733 = vmatpush1.msra.mxu0 0.0
        %1734 = vmatprep.subr.mxu0 0.0
        %1735 = vmatpush1.msra.mxu0 0.0
        %1736 = vmatprep.subr.mxu0 0.0
        %1737 = vmatpush1.msra.mxu0 0.0
        %1738 = vmatprep.subr.mxu0 0.0
        %1739 = vmatpush1.msra.mxu0 0.0
        %1740 = vmatprep.subr.mxu0 0.0
        %1741 = vmatpush1.msra.mxu0 0.0
        %1742 = vmatprep.mubr.f32.mxu0 0.0
        %1743 = vmatmul.mubr.f32.gmra.mrb[0].mxu0 %v1674
        %v1744 = vpop.f32.mrb[0].mxu0
        %v1745 = vadd.f32 %v458, %v1744
        %v1746 = vpop.f32.mrb[0].mxu0
        %1747 = vmatprep.mubr.f32.mxu0 0.0
        %1748 = vmatmul.mubr.f32.gmra.mrb[0].mxu0 %v1675
        %v1749 = vpop.f32.mrb[0].mxu0
        %v1750 = vadd.f32 %v458, %v1749
        %v1751 = vpop.f32.mrb[0].mxu0
        %1752 = vmatprep.mubr.f32.mxu0 0.0
        %1753 = vmatmul.mubr.f32.gmra.mrb[0].mxu0 %v1676
        %v1754 = vpop.f32.mrb[0].mxu0
        %v1755 = vadd.f32 %v458, %v1754
        %v1756 = vpop.f32.mrb[0].mxu0
        %1757 = vmatprep.mubr.f32.mxu0 0.0
        %1758 = vmatmul.mubr.f32.gmra.mrb[0].mxu0 %v1677
        %v1759 = vpop.f32.mrb[0].mxu0
        %v1760 = vadd.f32 %v458, %v1759
        %v1761 = vpop.f32.mrb[0].mxu0
        %1762 = vdwg.mxu0
        %s1763 = sadd.s32 %s549, 6
        %s1764 = sld [smem:[#allocation2 + %s1763]]
        %s1765 = sld [smem:[#allocation4 + %s1763]]
        %s1766 = smul.u32 %s1764, 32
        %s1767 = scalar_lea.vmem %s415, %s1766
        %v1768 = vld [vmem:[%s1767] sm:$0xff]
        %v1769 = vld [vmem:[%s1767 + $0x8] sm:$0xff]
        %v1770 = vld [vmem:[%s1767 + $0x10] sm:$0xff]
        %v1771 = vld [vmem:[%s1767 + $0x18] sm:$0xff]
        %v1772 = vstv %s1765
        %v1773 = vmul.f32 %v1772, %v1768
        %v1774 = vmul.f32 %v1772, %v1769
        %v1775 = vmul.f32 %v1772, %v1770
        %v1776 = vmul.f32 %v1772, %v1771
        %v1777 = vadd.f32 %v1745, %v1773
        %v1778 = vadd.f32 %v1750, %v1774
        %v1779 = vadd.f32 %v1755, %v1775
        %v1780 = vadd.f32 %v1760, %v1776
        %s1781 = sadd.s32 %s549, 38
        %s1782 = sld [smem:[#allocation2 + %s1781]]
        %s1783 = sld [smem:[#allocation4 + %s1781]]
        %s1784 = smul.u32 %s1782, 32
        %s1785 = scalar_lea.vmem %s415, %s1784
        %v1786 = vld [vmem:[%s1785] sm:$0xff]
        %v1787 = vld [vmem:[%s1785 + $0x8] sm:$0xff]
        %v1788 = vld [vmem:[%s1785 + $0x10] sm:$0xff]
        %v1789 = vld [vmem:[%s1785 + $0x18] sm:$0xff]
        %v1790 = vstv %s1783
        %v1791 = vmul.f32 %v1790, %v1786
        %v1792 = vmul.f32 %v1790, %v1787
        %v1793 = vmul.f32 %v1790, %v1788
        %v1794 = vmul.f32 %v1790, %v1789
        %v1795 = vadd.f32 %v1777, %v1791
        %v1796 = vadd.f32 %v1778, %v1792
        %v1797 = vadd.f32 %v1779, %v1793
        %v1798 = vadd.f32 %v1780, %v1794
        %s1799 = sadd.s32 %s549, 70
        %s1800 = sld [smem:[#allocation2 + %s1799]]
        %s1801 = sld [smem:[#allocation4 + %s1799]]
        %s1802 = smul.u32 %s1800, 32
        %s1803 = scalar_lea.vmem %s420, %s1802
        %v1804 = vld [vmem:[%s1803] sm:$0xff]
        %v1805 = vld [vmem:[%s1803 + $0x8] sm:$0xff]
        %v1806 = vld [vmem:[%s1803 + $0x10] sm:$0xff]
        %v1807 = vld [vmem:[%s1803 + $0x18] sm:$0xff]
        %v1808 = vstv %s1801
        %v1809 = vmul.f32 %v1808, %v1804
        %v1810 = vmul.f32 %v1808, %v1805
        %v1811 = vmul.f32 %v1808, %v1806
        %v1812 = vmul.f32 %v1808, %v1807
        %v1813 = vadd.f32 %v1795, %v1809
        %v1814 = vadd.f32 %v1796, %v1810
        %v1815 = vadd.f32 %v1797, %v1811
        %v1816 = vadd.f32 %v1798, %v1812
        %s1817 = sadd.s32 %s549, 102
        %s1818 = sld [smem:[#allocation2 + %s1817]]
        %s1819 = sld [smem:[#allocation4 + %s1817]]
        %s1820 = smul.u32 %s1818, 32
        %s1821 = scalar_lea.vmem %s420, %s1820
        %v1822 = vld [vmem:[%s1821] sm:$0xff]
        %v1823 = vld [vmem:[%s1821 + $0x8] sm:$0xff]
        %v1824 = vld [vmem:[%s1821 + $0x10] sm:$0xff]
        %v1825 = vld [vmem:[%s1821 + $0x18] sm:$0xff]
        %v1826 = vstv %s1819
        %v1827 = vmul.f32 %v1826, %v1822
        %v1828 = vmul.f32 %v1826, %v1823
        %v1829 = vmul.f32 %v1826, %v1824
        %v1830 = vmul.f32 %v1826, %v1825
        %v1831 = vadd.f32 %v1813, %v1827
        %v1832 = vadd.f32 %v1814, %v1828
        %v1833 = vadd.f32 %v1815, %v1829
        %v1834 = vadd.f32 %v1816, %v1830
        %s1835 = sadd.s32 %s549, 134
        %s1836 = sld [smem:[#allocation2 + %s1835]]
        %s1837 = sld [smem:[#allocation4 + %s1835]]
        %s1838 = smul.u32 %s1836, 32
        %s1839 = scalar_lea.vmem %s425, %s1838
        %v1840 = vld [vmem:[%s1839] sm:$0xff]
        %v1841 = vld [vmem:[%s1839 + $0x8] sm:$0xff]
        %v1842 = vld [vmem:[%s1839 + $0x10] sm:$0xff]
        %v1843 = vld [vmem:[%s1839 + $0x18] sm:$0xff]
        %v1844 = vstv %s1837
        %v1845 = vmul.f32 %v1844, %v1840
        %v1846 = vmul.f32 %v1844, %v1841
        %v1847 = vmul.f32 %v1844, %v1842
        %v1848 = vmul.f32 %v1844, %v1843
        %v1849 = vadd.f32 %v1831, %v1845
        %v1850 = vadd.f32 %v1832, %v1846
        %v1851 = vadd.f32 %v1833, %v1847
        %v1852 = vadd.f32 %v1834, %v1848
        %s1853 = sadd.s32 %s549, 166
        %s1854 = sld [smem:[#allocation2 + %s1853]]
        %s1855 = sld [smem:[#allocation4 + %s1853]]
        %s1856 = smul.u32 %s1854, 32
        %s1857 = scalar_lea.vmem %s425, %s1856
        %v1858 = vld [vmem:[%s1857] sm:$0xff]
        %v1859 = vld [vmem:[%s1857 + $0x8] sm:$0xff]
        %v1860 = vld [vmem:[%s1857 + $0x10] sm:$0xff]
        %v1861 = vld [vmem:[%s1857 + $0x18] sm:$0xff]
        %v1862 = vstv %s1855
        %v1863 = vmul.f32 %v1862, %v1858
        %v1864 = vmul.f32 %v1862, %v1859
        %v1865 = vmul.f32 %v1862, %v1860
        %v1866 = vmul.f32 %v1862, %v1861
        %v1867 = vadd.f32 %v1849, %v1863
        %v1868 = vadd.f32 %v1850, %v1864
        %v1869 = vadd.f32 %v1851, %v1865
        %v1870 = vadd.f32 %v1852, %v1866
        %s1871 = scalar_lea.vmem %s409, 224
        %v1872 = vld [vmem:[%s1871] sm:$0xff]
        %v1873 = vld [vmem:[%s1871 + $0x8] sm:$0xff]
        %v1874 = vld [vmem:[%s1871 + $0x10] sm:$0xff]
        %v1875 = vld [vmem:[%s1871 + $0x18] sm:$0xff]
        %1876 = vmatprep.subr.mxu0 0.0
        %1877 = vmatpush1.msra.mxu0 %v437
        %1878 = vmatprep.subr.mxu0 0.0
        %1879 = vmatpush1.msra.mxu0 %v438
        %1880 = vmatprep.subr.mxu0 0.0
        %1881 = vmatpush1.msra.mxu0 %v439
        %1882 = vmatprep.subr.mxu0 0.0
        %1883 = vmatpush1.msra.mxu0 %v440
        %1884 = vmatprep.subr.mxu0 0.0
        %1885 = vmatpush1.msra.mxu0 %v441
        %1886 = vmatprep.subr.mxu0 0.0
        %1887 = vmatpush1.msra.mxu0 %v442
        %1888 = vmatprep.subr.mxu0 0.0
        %1889 = vmatpush1.msra.mxu0 %v443
        %1890 = vmatprep.subr.mxu0 0.0
        %1891 = vmatpush1.msra.mxu0 %v444
        %1892 = vmatprep.subr.mxu0 0.0
        %1893 = vmatpush1.msra.mxu0 %v445
        %1894 = vmatprep.subr.mxu0 0.0
        %1895 = vmatpush1.msra.mxu0 %v446
        %1896 = vmatprep.subr.mxu0 0.0
        %1897 = vmatpush1.msra.mxu0 %v447
        %1898 = vmatprep.subr.mxu0 0.0
        %1899 = vmatpush1.msra.mxu0 %v448
        %1900 = vmatprep.subr.mxu0 0.0
        %1901 = vmatpush1.msra.mxu0 %v449
        %1902 = vmatprep.subr.mxu0 0.0
        %1903 = vmatpush1.msra.mxu0 %v450
        %1904 = vmatprep.subr.mxu0 0.0
        %1905 = vmatpush1.msra.mxu0 %v451
        %1906 = vmatprep.subr.mxu0 0.0
        %1907 = vmatpush1.msra.mxu0 %v452
        %1908 = vmatprep.subr.mxu0 0.0
        %1909 = vmatpush1.msra.mxu0 0.0
        %1910 = vmatprep.subr.mxu0 0.0
        %1911 = vmatpush1.msra.mxu0 0.0
        %1912 = vmatprep.subr.mxu0 0.0
        %1913 = vmatpush1.msra.mxu0 0.0
        %1914 = vmatprep.subr.mxu0 0.0
        %1915 = vmatpush1.msra.mxu0 0.0
        %1916 = vmatprep.subr.mxu0 0.0
        %1917 = vmatpush1.msra.mxu0 0.0
        %1918 = vmatprep.subr.mxu0 0.0
        %1919 = vmatpush1.msra.mxu0 0.0
        %1920 = vmatprep.subr.mxu0 0.0
        %1921 = vmatpush1.msra.mxu0 0.0
        %1922 = vmatprep.subr.mxu0 0.0
        %1923 = vmatpush1.msra.mxu0 0.0
        %1924 = vmatprep.subr.mxu0 0.0
        %1925 = vmatpush1.msra.mxu0 0.0
        %1926 = vmatprep.subr.mxu0 0.0
        %1927 = vmatpush1.msra.mxu0 0.0
        %1928 = vmatprep.subr.mxu0 0.0
        %1929 = vmatpush1.msra.mxu0 0.0
        %1930 = vmatprep.subr.mxu0 0.0
        %1931 = vmatpush1.msra.mxu0 0.0
        %1932 = vmatprep.subr.mxu0 0.0
        %1933 = vmatpush1.msra.mxu0 0.0
        %1934 = vmatprep.subr.mxu0 0.0
        %1935 = vmatpush1.msra.mxu0 0.0
        %1936 = vmatprep.subr.mxu0 0.0
        %1937 = vmatpush1.msra.mxu0 0.0
        %1938 = vmatprep.subr.mxu0 0.0
        %1939 = vmatpush1.msra.mxu0 0.0
        %1940 = vmatprep.mubr.f32.mxu0 0.0
        %1941 = vmatmul.mubr.f32.gmra.mrb[0].mxu0 %v1872
        %v1942 = vpop.f32.mrb[0].mxu0
        %v1943 = vadd.f32 %v458, %v1942
        %v1944 = vpop.f32.mrb[0].mxu0
        %1945 = vmatprep.mubr.f32.mxu0 0.0
        %1946 = vmatmul.mubr.f32.gmra.mrb[0].mxu0 %v1873
        %v1947 = vpop.f32.mrb[0].mxu0
        %v1948 = vadd.f32 %v458, %v1947
        %v1949 = vpop.f32.mrb[0].mxu0
        %1950 = vmatprep.mubr.f32.mxu0 0.0
        %1951 = vmatmul.mubr.f32.gmra.mrb[0].mxu0 %v1874
        %v1952 = vpop.f32.mrb[0].mxu0
        %v1953 = vadd.f32 %v458, %v1952
        %v1954 = vpop.f32.mrb[0].mxu0
        %1955 = vmatprep.mubr.f32.mxu0 0.0
        %1956 = vmatmul.mubr.f32.gmra.mrb[0].mxu0 %v1875
        %v1957 = vpop.f32.mrb[0].mxu0
        %v1958 = vadd.f32 %v458, %v1957
        %v1959 = vpop.f32.mrb[0].mxu0
        %1960 = vdwg.mxu0
        %s1961 = sadd.s32 %s549, 7
        %s1962 = sld [smem:[#allocation2 + %s1961]]
        %s1963 = sld [smem:[#allocation4 + %s1961]]
        %s1964 = smul.u32 %s1962, 32
        %s1965 = scalar_lea.vmem %s415, %s1964
        %v1966 = vld [vmem:[%s1965] sm:$0xff]
        %v1967 = vld [vmem:[%s1965 + $0x8] sm:$0xff]
        %v1968 = vld [vmem:[%s1965 + $0x10] sm:$0xff]
        %v1969 = vld [vmem:[%s1965 + $0x18] sm:$0xff]
        %v1970 = vstv %s1963
        %v1971 = vmul.f32 %v1970, %v1966
        %v1972 = vmul.f32 %v1970, %v1967
        %v1973 = vmul.f32 %v1970, %v1968
        %v1974 = vmul.f32 %v1970, %v1969
        %v1975 = vadd.f32 %v1943, %v1971
        %v1976 = vadd.f32 %v1948, %v1972
        %v1977 = vadd.f32 %v1953, %v1973
        %v1978 = vadd.f32 %v1958, %v1974
        %s1979 = sadd.s32 %s549, 39
        %s1980 = sld [smem:[#allocation2 + %s1979]]
        %s1981 = sld [smem:[#allocation4 + %s1979]]
        %s1982 = smul.u32 %s1980, 32
        %s1983 = scalar_lea.vmem %s415, %s1982
        %v1984 = vld [vmem:[%s1983] sm:$0xff]
        %v1985 = vld [vmem:[%s1983 + $0x8] sm:$0xff]
        %v1986 = vld [vmem:[%s1983 + $0x10] sm:$0xff]
        %v1987 = vld [vmem:[%s1983 + $0x18] sm:$0xff]
        %v1988 = vstv %s1981
        %v1989 = vmul.f32 %v1988, %v1984
        %v1990 = vmul.f32 %v1988, %v1985
        %v1991 = vmul.f32 %v1988, %v1986
        %v1992 = vmul.f32 %v1988, %v1987
        %v1993 = vadd.f32 %v1975, %v1989
        %v1994 = vadd.f32 %v1976, %v1990
        %v1995 = vadd.f32 %v1977, %v1991
        %v1996 = vadd.f32 %v1978, %v1992
        %s1997 = sadd.s32 %s549, 71
        %s1998 = sld [smem:[#allocation2 + %s1997]]
        %s1999 = sld [smem:[#allocation4 + %s1997]]
        %s2000 = smul.u32 %s1998, 32
        %s2001 = scalar_lea.vmem %s420, %s2000
        %v2002 = vld [vmem:[%s2001] sm:$0xff]
        %v2003 = vld [vmem:[%s2001 + $0x8] sm:$0xff]
        %v2004 = vld [vmem:[%s2001 + $0x10] sm:$0xff]
        %v2005 = vld [vmem:[%s2001 + $0x18] sm:$0xff]
        %v2006 = vstv %s1999
        %v2007 = vmul.f32 %v2006, %v2002
        %v2008 = vmul.f32 %v2006, %v2003
        %v2009 = vmul.f32 %v2006, %v2004
        %v2010 = vmul.f32 %v2006, %v2005
        %v2011 = vadd.f32 %v1993, %v2007
        %v2012 = vadd.f32 %v1994, %v2008
        %v2013 = vadd.f32 %v1995, %v2009
        %v2014 = vadd.f32 %v1996, %v2010
        %s2015 = sadd.s32 %s549, 103
        %s2016 = sld [smem:[#allocation2 + %s2015]]
        %s2017 = sld [smem:[#allocation4 + %s2015]]
        %s2018 = smul.u32 %s2016, 32
        %s2019 = scalar_lea.vmem %s420, %s2018
        %v2020 = vld [vmem:[%s2019] sm:$0xff]
        %v2021 = vld [vmem:[%s2019 + $0x8] sm:$0xff]
        %v2022 = vld [vmem:[%s2019 + $0x10] sm:$0xff]
        %v2023 = vld [vmem:[%s2019 + $0x18] sm:$0xff]
        %v2024 = vstv %s2017
        %v2025 = vmul.f32 %v2024, %v2020
        %v2026 = vmul.f32 %v2024, %v2021
        %v2027 = vmul.f32 %v2024, %v2022
        %v2028 = vmul.f32 %v2024, %v2023
        %v2029 = vadd.f32 %v2011, %v2025
        %v2030 = vadd.f32 %v2012, %v2026
        %v2031 = vadd.f32 %v2013, %v2027
        %v2032 = vadd.f32 %v2014, %v2028
        %s2033 = sadd.s32 %s549, 135
        %s2034 = sld [smem:[#allocation2 + %s2033]]
        %s2035 = sld [smem:[#allocation4 + %s2033]]
        %s2036 = smul.u32 %s2034, 32
        %s2037 = scalar_lea.vmem %s425, %s2036
        %v2038 = vld [vmem:[%s2037] sm:$0xff]
        %v2039 = vld [vmem:[%s2037 + $0x8] sm:$0xff]
        %v2040 = vld [vmem:[%s2037 + $0x10] sm:$0xff]
        %v2041 = vld [vmem:[%s2037 + $0x18] sm:$0xff]
        %v2042 = vstv %s2035
        %v2043 = vmul.f32 %v2042, %v2038
        %v2044 = vmul.f32 %v2042, %v2039
        %v2045 = vmul.f32 %v2042, %v2040
        %v2046 = vmul.f32 %v2042, %v2041
        %v2047 = vadd.f32 %v2029, %v2043
        %v2048 = vadd.f32 %v2030, %v2044
        %v2049 = vadd.f32 %v2031, %v2045
        %v2050 = vadd.f32 %v2032, %v2046
        %s2051 = sadd.s32 %s549, 167
        %s2052 = sld [smem:[#allocation2 + %s2051]]
        %s2053 = sld [smem:[#allocation4 + %s2051]]
        %s2054 = smul.u32 %s2052, 32
        %s2055 = scalar_lea.vmem %s425, %s2054
        %v2056 = vld [vmem:[%s2055] sm:$0xff]
        %v2057 = vld [vmem:[%s2055 + $0x8] sm:$0xff]
        %v2058 = vld [vmem:[%s2055 + $0x10] sm:$0xff]
        %v2059 = vld [vmem:[%s2055 + $0x18] sm:$0xff]
        %v2060 = vstv %s2053
        %v2061 = vmul.f32 %v2060, %v2056
        %v2062 = vmul.f32 %v2060, %v2057
        %v2063 = vmul.f32 %v2060, %v2058
        %v2064 = vmul.f32 %v2060, %v2059
        %v2065 = vadd.f32 %v2047, %v2061
        %v2066 = vadd.f32 %v2048, %v2062
        %v2067 = vadd.f32 %v2049, %v2063
        %v2068 = vadd.f32 %v2050, %v2064
        %v2069 = vmax.f32 %v1867, %v2065
        %v2070 = vmax.f32 %v1868, %v2066
        %v2071 = vmax.f32 %v1869, %v2067
        %v2072 = vmax.f32 %v1870, %v2068
        %s2073 = scalar_lea.vmem %s435, 96
        %2074 = vst [vmem:[%s2073] sm:$0xff] %v2069
        %2075 = vst [vmem:[%s2073 + $0x8] sm:$0xff] %v2070
        %2076 = vst [vmem:[%s2073 + $0x10] sm:$0xff] %v2071
        %2077 = vst [vmem:[%s2073 + $0x18] sm:$0xff] %v2072
        %s2078 = smul.u32 4, %s26
        %p2079 = scmp.lt.s32.totalorder %s25, 1
        %s2080 = scalar_select %p2079, %s25, 1
        %p2081 = scmp.lt.s32.totalorder %s2078, 15
        %s2082 = scalar_select %p2081, %s2078, 15
        %s2083 = smul.addr %s2082, 4
        %s2084 = smul.addr %s2080, 64
        %s2085 = sadd.s32 %s2083, %s2084
        %s2086 = smul.addr %s2085, 8
        %s2087 = scalar_lea.vmem %s8, %s2086
        // Predicated region
        $region61: #{pspool_forward.14} parent=51 // pred_check
          %p2088 = pneg %p243
        $region62: #{pspool_forward.14} parent=51 // pred_check_branch
          %2090 = sbr.rel (%p2088) target = $region64
        $region63: #{pspool_forward.14} parent=51 // pred_region
          %s2091 = smul.u32 4, %s26
        $region64: #{pspool_forward.14} parent=51 // pred_fallthru
          _
      $region52: #{pspool_forward.14} parent=5 // pred_fallthru
        _
      %p2092 = scmp.le.s32.totalorder 2, %s16
      // Predicated region
      $region65: #{pspool_forward.14} parent=5 // pred_check
        %p2093 = pneg %p2092
      $region66: #{pspool_forward.14} parent=5 // pred_check_branch
        %2095 = sbr.rel (%p2093) target = $region68
      $region67: #{pspool_forward.14} parent=5 // pred_region
        %s2096 = ssub.s32 %s16, 2
        // Predicated region
        $region69: #{pspool_forward.14} parent=67 // pred_check
          %p2097 = pneg %p249
        $region70: #{pspool_forward.14} parent=67 // pred_check_branch
          %2099 = sbr.rel (%p2097) target = $region72
        $region71: #{pspool_forward.14} parent=67 // pred_region
          %s2100 = smul.u32 4, %s28
          %p2101 = scmp.lt.s32.totalorder %s27, 1
          %s2102 = scalar_select %p2101, %s27, 1
          %p2103 = scmp.lt.s32.totalorder %s2100, 15
          %s2104 = scalar_select %p2103, %s2100, 15
          %s2105 = smul.addr %s2104, 4
          %s2106 = smul.addr %s2102, 64
          %s2107 = sadd.s32 %s2105, %s2106
          %s2108 = smul.addr %s2107, 8
          %s2109 = scalar_lea.vmem %s8, %s2108
        $region72: #{pspool_forward.14} parent=67 // pred_fallthru
          _
      $region68: #{pspool_forward.14} parent=5 // pred_fallthru
        _
    $region6: #{pspool_forward.14} parent=1 // loop_footer
      %s20 = sadd.s32 1, %s16
    $region7: #{pspool_forward.14} parent=1 // loop_footer_branch
      %15 = sbr.rel target = $region3
    $region8: #{pspool_forward.14} parent=1 // loop_exit
      _
    %2110 = vsyncpa [#allocation3], 1
    %s2111 = scalar_lea.sflag [#allocation3], 1
    %2112 = vsyncpa %s2111, 1
    %2113 = vsyncpa [#allocation5], 1

</llo_original>
